<compile_context>
chip_gen: v7x
topology: tpu7x:2x2x1
jax: 0.10.0
libtpu: 0.0.40
codegen_flags: <defaults>
</compile_context>

<pallas_src>
import jax
import jax.numpy as jnp
from jax.experimental import pallas as pl
from jax.experimental.pallas import tpu as pltpu


def _round_up(v, m):
    return (v + m - 1) // m * m


def _vmem_budget_bytes():
    """Per-generation VMEM budget: ~75% of physical, capped at 96 MiB.

    v7x (64 MiB physical) -> 48 MiB; v5e/v6e (128 MiB) -> 96 MiB.
    Falls back to a v7x-safe default if the query is unavailable."""
    cap = 64 * 1024 * 1024
    try:
        cap = int(pltpu.get_tpu_info().vmem_capacity_bytes)
    except Exception:
        pass
    return min((cap * 3) // 4, 96 * 1024 * 1024)


def _strip_vmem_bytes(TH, W, Cp, Cop):
    """Rough per-call VMEM footprint for a strip height TH (bf16 activations)."""
    act = 2                                       # bf16
    in_strip = TH * (W + 2) * Cp * act            # interior block
    halo = 2 * (W + 2) * Cp * act                 # two 1-row halo blocks
    out_strip = TH * W * Cop * 4                  # f32 output block
    xpad = (TH + 2) * (W + 2) * Cp * act          # scratch
    acc = TH * W * Cp * 4                         # f32 accumulator scratch
    weights = (9 * Cp * Cp + 2 * Cp * Cop) * act + Cop * 4
    # inputs/outputs double-buffered by the pipeline; weights conservatively x2
    return 2 * (in_strip + halo + out_strip) + xpad + acc + 2 * weights


def _pick_strip_h(H, W, Cp, Cop, vmem_budget, max_strip_h):
    """Largest divisor of H <= max_strip_h whose footprint fits the budget."""
    best = 1
    for d in range(1, H + 1):
        if H % d:
            continue
        if d > max_strip_h:
            break
        if _strip_vmem_bytes(d, W, Cp, Cop) <= vmem_budget:
            best = d
    return best


def basic_res_block_kernel(x_ref, top_ref, bot_ref, w1_ref, w2_ref, wid_ref,
                           bid_ref, out_ref, xpad_ref, acc_ref):
    # x_ref   : (1, TH, W+2, Cp) bf16 -- one H-strip, already W-halo'd (zeros)
    # top_ref : (1, 1,  W+2, Cp) bf16 -- row just above the strip (clamped)
    # bot_ref : (1, 1,  W+2, Cp) bf16 -- row just below the strip (clamped)
    # w1_ref  : (9, Cp, Cp)      bf16 -- conv1 3x3 taps, [ky*3+kx, ci, co]
    # w2_ref  : (Cp, Cop)        bf16 -- conv2 1x1
    # wid_ref : (Cp, Cop)        bf16 -- conv_identity 1x1
    # bid_ref : (1, Cop)         f32  -- conv_identity bias
    # out_ref : (1, TH, W, Cop)  f32
    # xpad_ref: (TH+2, W+2, Cp)  bf16 scratch -- halo'd strip
    # acc_ref : (TH*W, Cp)       f32  scratch -- conv1 accumulator
    TH = x_ref.shape[1]
    Cp = x_ref.shape[3]
    W = out_ref.shape[2]
    Cop = out_ref.shape[3]

    s = pl.program_id(1)
    ns = pl.num_programs(1)

    # ---- assemble the halo'd strip in VMEM (no full zero-fill) ----
    # Interior rows: row-slab-aligned copy (W halo already present from HBM).
    xpad_ref[1:TH + 1, :, :] = x_ref[0]
    # Top/bottom halo rows: masked every step (safe under megacore sharding).
    tmask = (s > 0).astype(jnp.bfloat16)
    bmask = (s < ns - 1).astype(jnp.bfloat16)
    xpad_ref[0:1, :, :] = top_ref[0] * tmask
    xpad_ref[TH + 1:TH + 2, :, :] = bot_ref[0] * bmask

    # ---- conv1: 3x3 pad=1 bias=False as nine accumulated MXU matmuls ----
    # Taps are sliced straight from the scratch ref (no im2col concatenate,
    # no full-xpad value load); accumulation stays in f32.
    def tap(dy, dx):
        return xpad_ref[dy:dy + TH, dx:dx + W, :].reshape(TH * W, Cp)

    acc_ref[...] = jnp.dot(tap(0, 0), w1_ref[0],
                           preferred_element_type=jnp.float32)
    for t in range(1, 9):
        dy, dx = divmod(t, 3)
        acc_ref[...] += jnp.dot(tap(dy, dx), w1_ref[t],
                                preferred_element_type=jnp.float32)

    h1 = jnp.maximum(acc_ref[...], 0.0).astype(jnp.bfloat16)

    # ---- conv2: 1x1 bias=False, then ReLU ----
    h2 = jnp.maximum(
        jnp.dot(h1, w2_ref[...], preferred_element_type=jnp.float32), 0.0)

    # ---- conv_identity: 1x1 with bias, then ReLU ----
    xin = xpad_ref[1:TH + 1, 1:W + 1, :].reshape(TH * W, Cp)
    ident = jnp.dot(xin, wid_ref[...],
                    preferred_element_type=jnp.float32) + bid_ref[...]
    ident = jnp.maximum(ident, 0.0)

    # ---- residual add + final ReLU; lane-dense store ----
    out = jnp.maximum(h2 + ident, 0.0)
    out_ref[0] = out.reshape(TH, W, Cop).astype(out_ref.dtype)


def basic_res_block(x_nchw, w1_oihw, w2_oihw, wid_oihw, bid, *, max_strip_h=64):
    """x_nchw: (N, Cin, H, W) float32.  Returns (N, Cout, H, W)."""
    N, Cin, H, W = x_nchw.shape
    Cout = w2_oihw.shape[0]
    Cp = _round_up(Cin, 128)     # lane-dense channel widths (no-op for the
    Cop = _round_up(Cout, 128)   # ResNet-scale channels used in production)

    budget = _vmem_budget_bytes()
    TH = _pick_strip_h(H, W, Cp, Cop, (budget * 3) // 5, max_strip_h)
    ns = H // TH

    # ---- glue: NHWC, channel zero-pad, W halo pre-pad, bf16 activations ----
    x = jnp.transpose(x_nchw, (0, 2, 3, 1)).astype(jnp.float32)      # NHWC
    x = jnp.pad(x, ((0, 0), (0, 0), (1, 1), (0, Cp - Cin)))          # W halo
    x = x.astype(jnp.bfloat16)                                        # (N,H,W+2,Cp)

    w1 = jnp.transpose(w1_oihw, (2, 3, 1, 0))                         # (3,3,I,O)
    w1 = jnp.pad(w1, ((0, 0), (0, 0), (0, Cp - Cin), (0, Cp - Cin)))
    w1 = w1.reshape(9, Cp, Cp).astype(jnp.bfloat16)

    w2 = jnp.transpose(w2_oihw, (2, 3, 1, 0))[0, 0]                   # (Cin,Cout)
    w2 = jnp.pad(w2, ((0, Cp - Cin), (0, Cop - Cout))).astype(jnp.bfloat16)
    wid = jnp.transpose(wid_oihw, (2, 3, 1, 0))[0, 0]
    wid = jnp.pad(wid, ((0, Cp - Cin), (0, Cop - Cout))).astype(jnp.bfloat16)
    bid2 = jnp.pad(bid.reshape(1, Cout),
                   ((0, 0), (0, Cop - Cout))).astype(jnp.float32)

    flops = 2 * N * H * W * (9 * Cp * Cp + 2 * Cp * Cop)
    bytes_accessed = (x.size * 2 + N * H * W * Cop * 4
                      + (w1.size + w2.size + wid.size) * 2 + bid2.size * 4)

    Wp = W + 2
    out_nhwc = pl.pallas_call(
        basic_res_block_kernel,
        out_shape=jax.ShapeDtypeStruct((N, H, W, Cop), jnp.float32),
        grid_spec=pltpu.PrefetchScalarGridSpec(
            num_scalar_prefetch=0,
            grid=(N, ns),                      # batch x H-row-strips
            in_specs=[
                # interior strip (already W-halo'd)
                pl.BlockSpec((1, TH, Wp, Cp), lambda n, s: (n, s, 0, 0)),
                # halo row above (clamped at the top edge; masked in-kernel)
                pl.BlockSpec((1, 1, Wp, Cp),
                             lambda n, s: (n, jnp.maximum(s * TH - 1, 0), 0, 0)),
                # halo row below (clamped at the bottom edge; masked in-kernel)
                pl.BlockSpec((1, 1, Wp, Cp),
                             lambda n, s: (n, jnp.minimum(s * TH + TH, H - 1), 0, 0)),
                # weights / bias: constant block index -> stay resident in VMEM
                pl.BlockSpec((9, Cp, Cp), lambda n, s: (0, 0, 0)),
                pl.BlockSpec((Cp, Cop), lambda n, s: (0, 0)),
                pl.BlockSpec((Cp, Cop), lambda n, s: (0, 0)),
                pl.BlockSpec((1, Cop), lambda n, s: (0, 0)),
            ],
            out_specs=pl.BlockSpec((1, TH, W, Cop), lambda n, s: (n, s, 0, 0)),
            scratch_shapes=[
                pltpu.VMEM((TH + 2, Wp, Cp), jnp.bfloat16),   # halo'd strip
                pltpu.VMEM((TH * W, Cp), jnp.float32),        # conv1 accumulator
            ],
        ),
        compiler_params=pltpu.CompilerParams(
            dimension_semantics=("parallel", "parallel"),   # megacore-shardable
            vmem_limit_bytes=budget,
        ),
        cost_estimate=pl.CostEstimate(
            flops=flops, transcendentals=0, bytes_accessed=bytes_accessed),
    )(x, x, x, w1, w2, wid, bid2)

    out = out_nhwc[..., :Cout]                         # drop padded channels
    return jnp.transpose(out, (0, 3, 1, 2)).astype(x_nchw.dtype)


def ref_forward(x, w1, w2, wid, bid):
    """Pure-JAX f32 reference matching the PyTorch forward (NCHW / OIHW)."""
    dn = ("NCHW", "OIHW", "NCHW")
    h = jax.lax.conv_general_dilated(x, w1, (1, 1), "SAME", dimension_numbers=dn)
    h = jax.nn.relu(h)
    h = jax.lax.conv_general_dilated(h, w2, (1, 1), "VALID", dimension_numbers=dn)
    h = jax.nn.relu(h)
    ident = jax.lax.conv_general_dilated(x, wid, (1, 1), "VALID",
                                         dimension_numbers=dn)
    ident = jax.nn.relu(ident + bid[None, :, None, None])
    return jax.nn.relu(h + ident)


def _run_case(key, N, Cin, Cout, H, W, max_strip_h=64):
    kx, k1, k2, k3, k4 = jax.random.split(key, 5)
    x = jax.random.normal(kx, (N, Cin, H, W), jnp.float32)
    w1 = jax.random.normal(k1, (Cin, Cin, 3, 3), jnp.float32) * 0.2   # conv1
    w2 = jax.random.normal(k2, (Cout, Cin, 1, 1), jnp.float32) * 0.2  # conv2
    wid = jax.random.normal(k3, (Cout, Cin, 1, 1), jnp.float32) * 0.2  # conv_identity
    bid = jax.random.normal(k4, (Cout,), jnp.float32) * 0.1            # identity bias

    out = jax.block_until_ready(
        basic_res_block(x, w1, w2, wid, bid, max_strip_h=max_strip_h))
    ref = ref_forward(x, w1, w2, wid, bid)
    assert out.shape == (N, Cout, H, W)
    err = jnp.max(jnp.abs(out - ref))
    # bf16 MXU operands with f32 accumulation -> relaxed tolerance.
    assert jnp.allclose(out, ref, atol=5e-2, rtol=5e-2), f"max err {err}"


if __name__ == "__main__":
    key = jax.random.PRNGKey(0)
    k_a, k_b, k_c = jax.random.split(key, 3)

    # Main case: default (largest-divisor) strips -> one big strip per image.
    _run_case(k_a, N=2, Cin=4, Cout=8, H=16, W=16)
    # Same shapes forced to 2 strips/image -> exercises the halo-row logic.
    _run_case(k_b, N=2, Cin=4, Cout=8, H=16, W=16, max_strip_h=8)
    # Awkward channel counts (pad to 128 lanes), single strip.
    _run_case(k_c, N=1, Cin=3, Cout=5, H=8, W=8)

    print("KERNEL_OK")
</pallas_src>

<mosaic_0001>
module attributes {stable_mosaic.version = 11 : i64} {
  func.func @basic_res_block_kernel(%arg0: i32, %arg1: i32, %arg2: memref<1x16x18x128xbf16, #tpu.memory_space<vmem>>, %arg3: memref<1x1x18x128xbf16, #tpu.memory_space<vmem>>, %arg4: memref<1x1x18x128xbf16, #tpu.memory_space<vmem>>, %arg5: memref<9x128x128xbf16, #tpu.memory_space<vmem>>, %arg6: memref<128x128xbf16, #tpu.memory_space<vmem>>, %arg7: memref<128x128xbf16, #tpu.memory_space<vmem>>, %arg8: memref<1x128xf32, #tpu.memory_space<vmem>>, %arg9: memref<1x16x16x128xf32, #tpu.memory_space<vmem>>, %arg10: memref<18x18x128xbf16, #tpu.memory_space<vmem>>, %arg11: memref<256x128xf32, #tpu.memory_space<vmem>>) attributes {dimension_semantics = [#tpu.dimension_semantics<parallel>, #tpu.dimension_semantics<parallel>], iteration_bounds = array<i64: 2, 1>, scalar_prefetch = 0 : i64, scratch_operands = 2 : i64, tpu.core_type = #tpu.core_type<tc>, window_params = [{transform_indices = @transform_0, window_bounds = array<i64: 1, 16, 18, 128>}, {transform_indices = @transform_1, window_bounds = array<i64: 1, 1, 18, 128>}, {transform_indices = @transform_2, window_bounds = array<i64: 1, 1, 18, 128>}, {pipeline_mode = #tpu.pipeline_mode<synchronous>, transform_indices = @transform_3, window_bounds = array<i64: 9, 128, 128>}, {pipeline_mode = #tpu.pipeline_mode<synchronous>, transform_indices = @transform_4, window_bounds = array<i64: 128, 128>}, {pipeline_mode = #tpu.pipeline_mode<synchronous>, transform_indices = @transform_5, window_bounds = array<i64: 128, 128>}, {pipeline_mode = #tpu.pipeline_mode<synchronous>, transform_indices = @transform_6, window_bounds = array<i64: 1, 128>}, {transform_indices = @transform_7, window_bounds = array<i64: 1, 16, 16, 128>}]} {
    %c0 = arith.constant 0 : index
    %c0_0 = arith.constant 0 : index
    %c0_1 = arith.constant 0 : index
    %c0_2 = arith.constant 0 : index
    %0 = vector.load %arg2[%c0, %c0_0, %c0_1, %c0_2] : memref<1x16x18x128xbf16, #tpu.memory_space<vmem>>, vector<1x16x18x128xbf16>
    %1 = vector.shape_cast %0 : vector<1x16x18x128xbf16> to vector<16x18x128xbf16>
    %c1 = arith.constant 1 : index
    %c0_3 = arith.constant 0 : index
    %c0_4 = arith.constant 0 : index
    %2 = vector.load %arg10[%c1, %c0_3, %c0_4] : memref<18x18x128xbf16, #tpu.memory_space<vmem>>, vector<16x18x128xbf16>
    tpu.vector_store %arg10[%c1, %c0_3, %c0_4], %1 {strides = array<i32>} : memref<18x18x128xbf16, #tpu.memory_space<vmem>>, vector<16x18x128xbf16>,
    %c0_i32 = arith.constant 0 : i32
    %3 = arith.cmpi sgt, %arg1, %c0_i32 : i32
    %4 = arith.extui %3 : i1 to i32
    %5 = arith.sitofp %4 : i32 to f32
    %6 = arith.truncf %5 : f32 to bf16
    %c0_i32_5 = arith.constant 0 : i32
    %7 = arith.cmpi slt, %arg1, %c0_i32_5 : i32
    %8 = arith.extui %7 : i1 to i32
    %9 = arith.sitofp %8 : i32 to f32
    %10 = arith.truncf %9 : f32 to bf16
    %c0_6 = arith.constant 0 : index
    %c0_7 = arith.constant 0 : index
    %c0_8 = arith.constant 0 : index
    %c0_9 = arith.constant 0 : index
    %11 = vector.load %arg3[%c0_6, %c0_7, %c0_8, %c0_9] : memref<1x1x18x128xbf16, #tpu.memory_space<vmem>>, vector<1x1x18x128xbf16>
    %12 = vector.shape_cast %11 : vector<1x1x18x128xbf16> to vector<1x18x128xbf16>
    %13 = vector.broadcast %6 : bf16 to vector<1x18x128xbf16>
    %14 = arith.mulf %12, %13 : vector<1x18x128xbf16>
    %c0_10 = arith.constant 0 : index
    %c0_11 = arith.constant 0 : index
    %c0_12 = arith.constant 0 : index
    %15 = vector.load %arg10[%c0_10, %c0_11, %c0_12] : memref<18x18x128xbf16, #tpu.memory_space<vmem>>, vector<1x18x128xbf16>
    tpu.vector_store %arg10[%c0_10, %c0_11, %c0_12], %14 {strides = array<i32>} : memref<18x18x128xbf16, #tpu.memory_space<vmem>>, vector<1x18x128xbf16>,
    %c0_13 = arith.constant 0 : index
    %c0_14 = arith.constant 0 : index
    %c0_15 = arith.constant 0 : index
    %c0_16 = arith.constant 0 : index
    %16 = vector.load %arg4[%c0_13, %c0_14, %c0_15, %c0_16] : memref<1x1x18x128xbf16, #tpu.memory_space<vmem>>, vector<1x1x18x128xbf16>
    %17 = vector.shape_cast %16 : vector<1x1x18x128xbf16> to vector<1x18x128xbf16>
    %18 = vector.broadcast %10 : bf16 to vector<1x18x128xbf16>
    %19 = arith.mulf %17, %18 : vector<1x18x128xbf16>
    %c17 = arith.constant 17 : index
    %c0_17 = arith.constant 0 : index
    %c0_18 = arith.constant 0 : index
    %20 = vector.load %arg10[%c17, %c0_17, %c0_18] : memref<18x18x128xbf16, #tpu.memory_space<vmem>>, vector<1x18x128xbf16>
    tpu.vector_store %arg10[%c17, %c0_17, %c0_18], %19 {strides = array<i32>} : memref<18x18x128xbf16, #tpu.memory_space<vmem>>, vector<1x18x128xbf16>,
    %c0_19 = arith.constant 0 : index
    %c0_20 = arith.constant 0 : index
    %c0_21 = arith.constant 0 : index
    %21 = vector.load %arg10[%c0_19, %c0_20, %c0_21] : memref<18x18x128xbf16, #tpu.memory_space<vmem>>, vector<16x16x128xbf16>
    %22 = vector.shape_cast %21 : vector<16x16x128xbf16> to vector<256x128xbf16>
    %c0_22 = arith.constant 0 : index
    %c0_23 = arith.constant 0 : index
    %c0_24 = arith.constant 0 : index
    %23 = vector.load %arg5[%c0_22, %c0_23, %c0_24] : memref<9x128x128xbf16, #tpu.memory_space<vmem>>, vector<1x128x128xbf16>
    %24 = vector.shape_cast %23 : vector<1x128x128xbf16> to vector<128x128xbf16>
    %cst = arith.constant dense<0.000000e+00> : vector<256x128xf32>
    %25 = tpu.matmul %22, %24, %cst {dimension_numbers = #tpu.dot_dimension_numbers<[1], [0], [0], [1], [0, 0, 1, 1], [], []>} : vector<256x128xbf16>, vector<128x128xbf16>, vector<256x128xf32> -> vector<256x128xf32>
    %c0_25 = arith.constant 0 : index
    %c0_26 = arith.constant 0 : index
    %26 = vector.load %arg11[%c0_25, %c0_26] : memref<256x128xf32, #tpu.memory_space<vmem>>, vector<256x128xf32>
    tpu.vector_store %arg11[%c0_25, %c0_26], %25 {strides = array<i32>} : memref<256x128xf32, #tpu.memory_space<vmem>>, vector<256x128xf32>,
    %c0_27 = arith.constant 0 : index
    %c0_28 = arith.constant 0 : index
    %27 = vector.load %arg11[%c0_27, %c0_28] : memref<256x128xf32, #tpu.memory_space<vmem>>, vector<256x128xf32>
    %c0_29 = arith.constant 0 : index
    %c1_30 = arith.constant 1 : index
    %c0_31 = arith.constant 0 : index
    %28 = vector.load %arg10[%c0_29, %c1_30, %c0_31] : memref<18x18x128xbf16, #tpu.memory_space<vmem>>, vector<16x16x128xbf16>
    %29 = vector.shape_cast %28 : vector<16x16x128xbf16> to vector<256x128xbf16>
    %c1_32 = arith.constant 1 : index
    %c0_33 = arith.constant 0 : index
    %c0_34 = arith.constant 0 : index
    %30 = vector.load %arg5[%c1_32, %c0_33, %c0_34] : memref<9x128x128xbf16, #tpu.memory_space<vmem>>, vector<1x128x128xbf16>
    %31 = vector.shape_cast %30 : vector<1x128x128xbf16> to vector<128x128xbf16>
    %cst_35 = arith.constant dense<0.000000e+00> : vector<256x128xf32>
    %32 = tpu.matmul %29, %31, %cst_35 {dimension_numbers = #tpu.dot_dimension_numbers<[1], [0], [0], [1], [0, 0, 1, 1], [], []>} : vector<256x128xbf16>, vector<128x128xbf16>, vector<256x128xf32> -> vector<256x128xf32>
    %33 = arith.addf %27, %32 : vector<256x128xf32>
    %c0_36 = arith.constant 0 : index
    %c0_37 = arith.constant 0 : index
    %34 = vector.load %arg11[%c0_36, %c0_37] : memref<256x128xf32, #tpu.memory_space<vmem>>, vector<256x128xf32>
    tpu.vector_store %arg11[%c0_36, %c0_37], %33 {strides = array<i32>} : memref<256x128xf32, #tpu.memory_space<vmem>>, vector<256x128xf32>,
    %c0_38 = arith.constant 0 : index
    %c0_39 = arith.constant 0 : index
    %35 = vector.load %arg11[%c0_38, %c0_39] : memref<256x128xf32, #tpu.memory_space<vmem>>, vector<256x128xf32>
    %c0_40 = arith.constant 0 : index
    %c2 = arith.constant 2 : index
    %c0_41 = arith.constant 0 : index
    %36 = vector.load %arg10[%c0_40, %c2, %c0_41] : memref<18x18x128xbf16, #tpu.memory_space<vmem>>, vector<16x16x128xbf16>
    %37 = vector.shape_cast %36 : vector<16x16x128xbf16> to vector<256x128xbf16>
    %c2_42 = arith.constant 2 : index
    %c0_43 = arith.constant 0 : index
    %c0_44 = arith.constant 0 : index
    %38 = vector.load %arg5[%c2_42, %c0_43, %c0_44] : memref<9x128x128xbf16, #tpu.memory_space<vmem>>, vector<1x128x128xbf16>
    %39 = vector.shape_cast %38 : vector<1x128x128xbf16> to vector<128x128xbf16>
    %cst_45 = arith.constant dense<0.000000e+00> : vector<256x128xf32>
    %40 = tpu.matmul %37, %39, %cst_45 {dimension_numbers = #tpu.dot_dimension_numbers<[1], [0], [0], [1], [0, 0, 1, 1], [], []>} : vector<256x128xbf16>, vector<128x128xbf16>, vector<256x128xf32> -> vector<256x128xf32>
    %41 = arith.addf %35, %40 : vector<256x128xf32>
    %c0_46 = arith.constant 0 : index
    %c0_47 = arith.constant 0 : index
    %42 = vector.load %arg11[%c0_46, %c0_47] : memref<256x128xf32, #tpu.memory_space<vmem>>, vector<256x128xf32>
    tpu.vector_store %arg11[%c0_46, %c0_47], %41 {strides = array<i32>} : memref<256x128xf32, #tpu.memory_space<vmem>>, vector<256x128xf32>,
    %c0_48 = arith.constant 0 : index
    %c0_49 = arith.constant 0 : index
    %43 = vector.load %arg11[%c0_48, %c0_49] : memref<256x128xf32, #tpu.memory_space<vmem>>, vector<256x128xf32>
    %c1_50 = arith.constant 1 : index
    %c0_51 = arith.constant 0 : index
    %c0_52 = arith.constant 0 : index
    %44 = vector.load %arg10[%c1_50, %c0_51, %c0_52] : memref<18x18x128xbf16, #tpu.memory_space<vmem>>, vector<16x16x128xbf16>
    %45 = vector.shape_cast %44 : vector<16x16x128xbf16> to vector<256x128xbf16>
    %c3 = arith.constant 3 : index
    %c0_53 = arith.constant 0 : index
    %c0_54 = arith.constant 0 : index
    %46 = vector.load %arg5[%c3, %c0_53, %c0_54] : memref<9x128x128xbf16, #tpu.memory_space<vmem>>, vector<1x128x128xbf16>
    %47 = vector.shape_cast %46 : vector<1x128x128xbf16> to vector<128x128xbf16>
    %cst_55 = arith.constant dense<0.000000e+00> : vector<256x128xf32>
    %48 = tpu.matmul %45, %47, %cst_55 {dimension_numbers = #tpu.dot_dimension_numbers<[1], [0], [0], [1], [0, 0, 1, 1], [], []>} : vector<256x128xbf16>, vector<128x128xbf16>, vector<256x128xf32> -> vector<256x128xf32>
    %49 = arith.addf %43, %48 : vector<256x128xf32>
    %c0_56 = arith.constant 0 : index
    %c0_57 = arith.constant 0 : index
    %50 = vector.load %arg11[%c0_56, %c0_57] : memref<256x128xf32, #tpu.memory_space<vmem>>, vector<256x128xf32>
    tpu.vector_store %arg11[%c0_56, %c0_57], %49 {strides = array<i32>} : memref<256x128xf32, #tpu.memory_space<vmem>>, vector<256x128xf32>,
    %c0_58 = arith.constant 0 : index
    %c0_59 = arith.constant 0 : index
    %51 = vector.load %arg11[%c0_58, %c0_59] : memref<256x128xf32, #tpu.memory_space<vmem>>, vector<256x128xf32>
    %c1_60 = arith.constant 1 : index
    %c1_61 = arith.constant 1 : index
    %c0_62 = arith.constant 0 : index
    %52 = vector.load %arg10[%c1_60, %c1_61, %c0_62] : memref<18x18x128xbf16, #tpu.memory_space<vmem>>, vector<16x16x128xbf16>
    %53 = vector.shape_cast %52 : vector<16x16x128xbf16> to vector<256x128xbf16>
    %c4 = arith.constant 4 : index
    %c0_63 = arith.constant 0 : index
    %c0_64 = arith.constant 0 : index
    %54 = vector.load %arg5[%c4, %c0_63, %c0_64] : memref<9x128x128xbf16, #tpu.memory_space<vmem>>, vector<1x128x128xbf16>
    %55 = vector.shape_cast %54 : vector<1x128x128xbf16> to vector<128x128xbf16>
    %cst_65 = arith.constant dense<0.000000e+00> : vector<256x128xf32>
    %56 = tpu.matmul %53, %55, %cst_65 {dimension_numbers = #tpu.dot_dimension_numbers<[1], [0], [0], [1], [0, 0, 1, 1], [], []>} : vector<256x128xbf16>, vector<128x128xbf16>, vector<256x128xf32> -> vector<256x128xf32>
    %57 = arith.addf %51, %56 : vector<256x128xf32>
    %c0_66 = arith.constant 0 : index
    %c0_67 = arith.constant 0 : index
    %58 = vector.load %arg11[%c0_66, %c0_67] : memref<256x128xf32, #tpu.memory_space<vmem>>, vector<256x128xf32>
    tpu.vector_store %arg11[%c0_66, %c0_67], %57 {strides = array<i32>} : memref<256x128xf32, #tpu.memory_space<vmem>>, vector<256x128xf32>,
    %c0_68 = arith.constant 0 : index
    %c0_69 = arith.constant 0 : index
    %59 = vector.load %arg11[%c0_68, %c0_69] : memref<256x128xf32, #tpu.memory_space<vmem>>, vector<256x128xf32>
    %c1_70 = arith.constant 1 : index
    %c2_71 = arith.constant 2 : index
    %c0_72 = arith.constant 0 : index
    %60 = vector.load %arg10[%c1_70, %c2_71, %c0_72] : memref<18x18x128xbf16, #tpu.memory_space<vmem>>, vector<16x16x128xbf16>
    %61 = vector.shape_cast %60 : vector<16x16x128xbf16> to vector<256x128xbf16>
    %c5 = arith.constant 5 : index
    %c0_73 = arith.constant 0 : index
    %c0_74 = arith.constant 0 : index
    %62 = vector.load %arg5[%c5, %c0_73, %c0_74] : memref<9x128x128xbf16, #tpu.memory_space<vmem>>, vector<1x128x128xbf16>
    %63 = vector.shape_cast %62 : vector<1x128x128xbf16> to vector<128x128xbf16>
    %cst_75 = arith.constant dense<0.000000e+00> : vector<256x128xf32>
    %64 = tpu.matmul %61, %63, %cst_75 {dimension_numbers = #tpu.dot_dimension_numbers<[1], [0], [0], [1], [0, 0, 1, 1], [], []>} : vector<256x128xbf16>, vector<128x128xbf16>, vector<256x128xf32> -> vector<256x128xf32>
    %65 = arith.addf %59, %64 : vector<256x128xf32>
    %c0_76 = arith.constant 0 : index
    %c0_77 = arith.constant 0 : index
    %66 = vector.load %arg11[%c0_76, %c0_77] : memref<256x128xf32, #tpu.memory_space<vmem>>, vector<256x128xf32>
    tpu.vector_store %arg11[%c0_76, %c0_77], %65 {strides = array<i32>} : memref<256x128xf32, #tpu.memory_space<vmem>>, vector<256x128xf32>,
    %c0_78 = arith.constant 0 : index
    %c0_79 = arith.constant 0 : index
    %67 = vector.load %arg11[%c0_78, %c0_79] : memref<256x128xf32, #tpu.memory_space<vmem>>, vector<256x128xf32>
    %c2_80 = arith.constant 2 : index
    %c0_81 = arith.constant 0 : index
    %c0_82 = arith.constant 0 : index
    %68 = vector.load %arg10[%c2_80, %c0_81, %c0_82] : memref<18x18x128xbf16, #tpu.memory_space<vmem>>, vector<16x16x128xbf16>
    %69 = vector.shape_cast %68 : vector<16x16x128xbf16> to vector<256x128xbf16>
    %c6 = arith.constant 6 : index
    %c0_83 = arith.constant 0 : index
    %c0_84 = arith.constant 0 : index
    %70 = vector.load %arg5[%c6, %c0_83, %c0_84] : memref<9x128x128xbf16, #tpu.memory_space<vmem>>, vector<1x128x128xbf16>
    %71 = vector.shape_cast %70 : vector<1x128x128xbf16> to vector<128x128xbf16>
    %cst_85 = arith.constant dense<0.000000e+00> : vector<256x128xf32>
    %72 = tpu.matmul %69, %71, %cst_85 {dimension_numbers = #tpu.dot_dimension_numbers<[1], [0], [0], [1], [0, 0, 1, 1], [], []>} : vector<256x128xbf16>, vector<128x128xbf16>, vector<256x128xf32> -> vector<256x128xf32>
    %73 = arith.addf %67, %72 : vector<256x128xf32>
    %c0_86 = arith.constant 0 : index
    %c0_87 = arith.constant 0 : index
    %74 = vector.load %arg11[%c0_86, %c0_87] : memref<256x128xf32, #tpu.memory_space<vmem>>, vector<256x128xf32>
    tpu.vector_store %arg11[%c0_86, %c0_87], %73 {strides = array<i32>} : memref<256x128xf32, #tpu.memory_space<vmem>>, vector<256x128xf32>,
    %c0_88 = arith.constant 0 : index
    %c0_89 = arith.constant 0 : index
    %75 = vector.load %arg11[%c0_88, %c0_89] : memref<256x128xf32, #tpu.memory_space<vmem>>, vector<256x128xf32>
    %c2_90 = arith.constant 2 : index
    %c1_91 = arith.constant 1 : index
    %c0_92 = arith.constant 0 : index
    %76 = vector.load %arg10[%c2_90, %c1_91, %c0_92] : memref<18x18x128xbf16, #tpu.memory_space<vmem>>, vector<16x16x128xbf16>
    %77 = vector.shape_cast %76 : vector<16x16x128xbf16> to vector<256x128xbf16>
    %c7 = arith.constant 7 : index
    %c0_93 = arith.constant 0 : index
    %c0_94 = arith.constant 0 : index
    %78 = vector.load %arg5[%c7, %c0_93, %c0_94] : memref<9x128x128xbf16, #tpu.memory_space<vmem>>, vector<1x128x128xbf16>
    %79 = vector.shape_cast %78 : vector<1x128x128xbf16> to vector<128x128xbf16>
    %cst_95 = arith.constant dense<0.000000e+00> : vector<256x128xf32>
    %80 = tpu.matmul %77, %79, %cst_95 {dimension_numbers = #tpu.dot_dimension_numbers<[1], [0], [0], [1], [0, 0, 1, 1], [], []>} : vector<256x128xbf16>, vector<128x128xbf16>, vector<256x128xf32> -> vector<256x128xf32>
    %81 = arith.addf %75, %80 : vector<256x128xf32>
    %c0_96 = arith.constant 0 : index
    %c0_97 = arith.constant 0 : index
    %82 = vector.load %arg11[%c0_96, %c0_97] : memref<256x128xf32, #tpu.memory_space<vmem>>, vector<256x128xf32>
    tpu.vector_store %arg11[%c0_96, %c0_97], %81 {strides = array<i32>} : memref<256x128xf32, #tpu.memory_space<vmem>>, vector<256x128xf32>,
    %c0_98 = arith.constant 0 : index
    %c0_99 = arith.constant 0 : index
    %83 = vector.load %arg11[%c0_98, %c0_99] : memref<256x128xf32, #tpu.memory_space<vmem>>, vector<256x128xf32>
    %c2_100 = arith.constant 2 : index
    %c2_101 = arith.constant 2 : index
    %c0_102 = arith.constant 0 : index
    %84 = vector.load %arg10[%c2_100, %c2_101, %c0_102] : memref<18x18x128xbf16, #tpu.memory_space<vmem>>, vector<16x16x128xbf16>
    %85 = vector.shape_cast %84 : vector<16x16x128xbf16> to vector<256x128xbf16>
    %c8 = arith.constant 8 : index
    %c0_103 = arith.constant 0 : index
    %c0_104 = arith.constant 0 : index
    %86 = vector.load %arg5[%c8, %c0_103, %c0_104] : memref<9x128x128xbf16, #tpu.memory_space<vmem>>, vector<1x128x128xbf16>
    %87 = vector.shape_cast %86 : vector<1x128x128xbf16> to vector<128x128xbf16>
    %cst_105 = arith.constant dense<0.000000e+00> : vector<256x128xf32>
    %88 = tpu.matmul %85, %87, %cst_105 {dimension_numbers = #tpu.dot_dimension_numbers<[1], [0], [0], [1], [0, 0, 1, 1], [], []>} : vector<256x128xbf16>, vector<128x128xbf16>, vector<256x128xf32> -> vector<256x128xf32>
    %89 = arith.addf %83, %88 : vector<256x128xf32>
    %c0_106 = arith.constant 0 : index
    %c0_107 = arith.constant 0 : index
    %90 = vector.load %arg11[%c0_106, %c0_107] : memref<256x128xf32, #tpu.memory_space<vmem>>, vector<256x128xf32>
    tpu.vector_store %arg11[%c0_106, %c0_107], %89 {strides = array<i32>} : memref<256x128xf32, #tpu.memory_space<vmem>>, vector<256x128xf32>,
    %c0_108 = arith.constant 0 : index
    %c0_109 = arith.constant 0 : index
    %91 = vector.load %arg11[%c0_108, %c0_109] : memref<256x128xf32, #tpu.memory_space<vmem>>, vector<256x128xf32>
    %cst_110 = arith.constant 0.000000e+00 : f32
    %92 = vector.broadcast %cst_110 : f32 to vector<256x128xf32>
    %93 = arith.maximumf %91, %92 : vector<256x128xf32>
    %94 = arith.truncf %93 : vector<256x128xf32> to vector<256x128xbf16>
    %c0_111 = arith.constant 0 : index
    %c0_112 = arith.constant 0 : index
    %95 = vector.load %arg6[%c0_111, %c0_112] : memref<128x128xbf16, #tpu.memory_space<vmem>>, vector<128x128xbf16>
    %cst_113 = arith.constant dense<0.000000e+00> : vector<256x128xf32>
    %96 = tpu.matmul %94, %95, %cst_113 {dimension_numbers = #tpu.dot_dimension_numbers<[1], [0], [0], [1], [0, 0, 1, 1], [], []>} : vector<256x128xbf16>, vector<128x128xbf16>, vector<256x128xf32> -> vector<256x128xf32>
    %cst_114 = arith.constant 0.000000e+00 : f32
    %97 = vector.broadcast %cst_114 : f32 to vector<256x128xf32>
    %98 = arith.maximumf %96, %97 : vector<256x128xf32>
    %c1_115 = arith.constant 1 : index
    %c1_116 = arith.constant 1 : index
    %c0_117 = arith.constant 0 : index
    %99 = vector.load %arg10[%c1_115, %c1_116, %c0_117] : memref<18x18x128xbf16, #tpu.memory_space<vmem>>, vector<16x16x128xbf16>
    %100 = vector.shape_cast %99 : vector<16x16x128xbf16> to vector<256x128xbf16>
    %c0_118 = arith.constant 0 : index
    %c0_119 = arith.constant 0 : index
    %101 = vector.load %arg7[%c0_118, %c0_119] : memref<128x128xbf16, #tpu.memory_space<vmem>>, vector<128x128xbf16>
    %cst_120 = arith.constant dense<0.000000e+00> : vector<256x128xf32>
    %102 = tpu.matmul %100, %101, %cst_120 {dimension_numbers = #tpu.dot_dimension_numbers<[1], [0], [0], [1], [0, 0, 1, 1], [], []>} : vector<256x128xbf16>, vector<128x128xbf16>, vector<256x128xf32> -> vector<256x128xf32>
    %c0_121 = arith.constant 0 : index
    %c0_122 = arith.constant 0 : index
    %103 = vector.load %arg8[%c0_121, %c0_122] : memref<1x128xf32, #tpu.memory_space<vmem>>, vector<1x128xf32>
    %104 = vector.broadcast %103 : vector<1x128xf32> to vector<256x128xf32>
    %105 = arith.addf %102, %104 : vector<256x128xf32>
    %cst_123 = arith.constant 0.000000e+00 : f32
    %106 = vector.broadcast %cst_123 : f32 to vector<256x128xf32>
    %107 = arith.maximumf %105, %106 : vector<256x128xf32>
    %108 = arith.addf %98, %107 : vector<256x128xf32>
    %cst_124 = arith.constant 0.000000e+00 : f32
    %109 = vector.broadcast %cst_124 : f32 to vector<256x128xf32>
    %110 = arith.maximumf %108, %109 : vector<256x128xf32>
    %111 = vector.shape_cast %110 : vector<256x128xf32> to vector<16x16x128xf32>
    %c0_125 = arith.constant 0 : index
    %c0_126 = arith.constant 0 : index
    %c0_127 = arith.constant 0 : index
    %c0_128 = arith.constant 0 : index
    %112 = vector.load %arg9[%c0_125, %c0_126, %c0_127, %c0_128] : memref<1x16x16x128xf32, #tpu.memory_space<vmem>>, vector<1x16x16x128xf32>
    %113 = vector.shape_cast %112 : vector<1x16x16x128xf32> to vector<16x16x128xf32>
    %114 = vector.shape_cast %111 : vector<16x16x128xf32> to vector<1x16x16x128xf32>
    tpu.vector_store %arg9[%c0_125, %c0_126, %c0_127, %c0_128], %114 {strides = array<i32>} : memref<1x16x16x128xf32, #tpu.memory_space<vmem>>, vector<1x16x16x128xf32>,
    return
  }
  func.func @transform_0(%arg0: i32, %arg1: i32) -> (i32, i32, i32, i32) {
    %c0_i32 = arith.constant 0 : i32
    %c0_i32_0 = arith.constant 0 : i32
    %c0_i32_1 = arith.constant 0 : i32
    return %arg0, %arg1, %c0_i32, %c0_i32_0 : i32, i32, i32, i32
  }
  func.func @transform_1(%arg0: i32, %arg1: i32) -> (i32, i32, i32, i32) {
    %c16_i32 = arith.constant 16 : i32
    %0 = arith.muli %arg1, %c16_i32 : i32
    %c1_i32 = arith.constant 1 : i32
    %1 = arith.subi %0, %c1_i32 : i32
    %c0_i32 = arith.constant 0 : i32
    %2 = arith.maxsi %1, %c0_i32 : i32
    %c0_i32_0 = arith.constant 0 : i32
    %c0_i32_1 = arith.constant 0 : i32
    %c0_i32_2 = arith.constant 0 : i32
    return %arg0, %2, %c0_i32_0, %c0_i32_1 : i32, i32, i32, i32
  }
  func.func @transform_2(%arg0: i32, %arg1: i32) -> (i32, i32, i32, i32) {
    %c16_i32 = arith.constant 16 : i32
    %0 = arith.muli %arg1, %c16_i32 : i32
    %c16_i32_0 = arith.constant 16 : i32
    %1 = arith.addi %0, %c16_i32_0 : i32
    %c15_i32 = arith.constant 15 : i32
    %2 = arith.minsi %1, %c15_i32 : i32
    %c0_i32 = arith.constant 0 : i32
    %c0_i32_1 = arith.constant 0 : i32
    %c0_i32_2 = arith.constant 0 : i32
    return %arg0, %2, %c0_i32, %c0_i32_1 : i32, i32, i32, i32
  }
  func.func @transform_3(%arg0: i32, %arg1: i32) -> (i32, i32, i32) {
    %c0_i32 = arith.constant 0 : i32
    %c0_i32_0 = arith.constant 0 : i32
    %c0_i32_1 = arith.constant 0 : i32
    %c0_i32_2 = arith.constant 0 : i32
    return %c0_i32, %c0_i32_0, %c0_i32_1 : i32, i32, i32
  }
  func.func @transform_4(%arg0: i32, %arg1: i32) -> (i32, i32) {
    %c0_i32 = arith.constant 0 : i32
    %c0_i32_0 = arith.constant 0 : i32
    %c0_i32_1 = arith.constant 0 : i32
    return %c0_i32, %c0_i32_0 : i32, i32
  }
  func.func @transform_5(%arg0: i32, %arg1: i32) -> (i32, i32) {
    %c0_i32 = arith.constant 0 : i32
    %c0_i32_0 = arith.constant 0 : i32
    %c0_i32_1 = arith.constant 0 : i32
    return %c0_i32, %c0_i32_0 : i32, i32
  }
  func.func @transform_6(%arg0: i32, %arg1: i32) -> (i32, i32) {
    %c0_i32 = arith.constant 0 : i32
    %c0_i32_0 = arith.constant 0 : i32
    %c0_i32_1 = arith.constant 0 : i32
    return %c0_i32, %c0_i32_0 : i32, i32
  }
  func.func @transform_7(%arg0: i32, %arg1: i32) -> (i32, i32, i32, i32) {
    %c0_i32 = arith.constant 0 : i32
    %c0_i32_0 = arith.constant 0 : i32
    %c0_i32_1 = arith.constant 0 : i32
    return %arg0, %arg1, %c0_i32, %c0_i32_0 : i32, i32, i32, i32
  }
}

</mosaic_0001>

<llo_original>
// kernel: tpu_custom_call.1
$region0: #{tpu_custom_call.1}
  #allocation0 [shape = 'u32[]', space=smem, size = 0x4, offset = 0x4, fixed_abs, tag = 'smem constant byte address 0x4 - core index']
  #allocation1 [shape = 'u32[144,128]{1,0:T(1,128)}', space=vmem, size = 0x12000, scoped, tag = 'internal scratch']
  #allocation2 [shape = 'bf16[18,18,128]{2,1,0:T(8,128)(2,1)}', space=vmem, size = 0x1b000, scoped, tag = 'scratch operand']
  #allocation3 [shape = 'f32[256,128]{1,0:T(8,128)}', space=vmem, size = 0x20000, scoped, tag = 'scratch operand']
  %s0 = inlined_call_operand.vmem [shape: bf16[2,16,18,128], index: 0, kind: input, shape index: {}]
  %s1 = inlined_call_operand.vmem [shape: bf16[2,16,18,128], index: 1, kind: input, shape index: {}]
  %s2 = inlined_call_operand.vmem [shape: bf16[2,16,18,128], index: 2, kind: input, shape index: {}]
  %s3 = inlined_call_operand.vmem [shape: bf16[9,128,128], index: 3, kind: input, shape index: {}]
  %s4 = inlined_call_operand.vmem [shape: bf16[128,128], index: 4, kind: input, shape index: {}]
  %s5 = inlined_call_operand.vmem [shape: bf16[128,128], index: 5, kind: input, shape index: {}]
  %s6 = inlined_call_operand.vmem [shape: f32[1,128], index: 6, kind: input, shape index: {}]
  %s7 = inlined_call_operand.hbm [shape: f32[2,16,16,128], index: 7, kind: output, shape index: {}]
  %s8 = sld [smem:[#allocation0]]
  $region61: #{tpu_custom_call.1} parent=0
    _
  %s10 = ssub.s32 1, %s8
  %s11 = scalar_select 0, %s10, %s8
  $region1: #{tpu_custom_call.1} parent=0
    #allocation4 [shape = 'u8[262144]{0}', space=vmem, size = 0x40000, scoped, tag = 'output window, operand 0']
    #allocation5 [shape = 's32[2]{0}', space=sflag, size = 0x8, scoped, tag = 'scoped memory for tpu_custom_call.1']
    %12 = vsyncpa [#allocation5], 0
    %s13 = scalar_lea.sflag [#allocation5], 1
    %14 = vsyncpa %s13, 0
    loop: start=0, step=1, limit=4
    $region2: #{tpu_custom_call.1} parent=1 // loop_pre_header
      _
    $region3: #{tpu_custom_call.1} parent=1 // loop_header
      %s16 = sphi 0, %s20
      %p17 = scmp.ge.s32.totalorder %s16, 4
      %s23 = sphi 0, %s35
      %s24 = sphi 0, %s31
      %s25 = sphi 0, %s23
      %s26 = sphi 0, %s24
      %s27 = sphi 0, %s25
      %s28 = sphi 0, %s26
      %s40 = sphi 0, %s42
      %s43 = sphi 0, %s40
      %s44 = sphi 0, %s43
      %s60 = sphi 0, %s44
      %s76 = sphi 0, %s78
      %s79 = sphi 0, %s76
      %s80 = sphi 0, %s79
      %s96 = sphi 0, %s80
      %s112 = sphi 0, %s114
      %s115 = sphi 0, %s112
      %s116 = sphi 0, %s115
      %s132 = sphi 0, %s116
      %s136 = sphi 0, %s136
      %s138 = sphi 0, %s136
      %s139 = sphi 0, %s138
      %s153 = sphi 0, %s139
      %s157 = sphi 0, %s157
      %s159 = sphi 0, %s157
      %s160 = sphi 0, %s159
      %s174 = sphi 0, %s160
      %s178 = sphi 0, %s178
      %s180 = sphi 0, %s178
      %s181 = sphi 0, %s180
      %s195 = sphi 0, %s181
      %s199 = sphi 0, %s199
      %s201 = sphi 0, %s199
      %s202 = sphi 0, %s201
      %s216 = sphi 0, %s202
      %s224 = sphi 0, %s226
      %s227 = sphi 0, %s224
      %s228 = sphi 0, %s227
      %s244 = sphi 0, %s228
    $region4: #{tpu_custom_call.1} parent=1 // loop_header_branch
      %19 = sbr.rel (%p17) target = $region8
    $region5: #{tpu_custom_call.1} parent=1 // loop_body
      %s21 = ssub.s32 %s16, 1
      %s22 = ssub.s32 %s16, 2
      %s29 = sadd.s32 1, %s24
      %p30 = scmp.ge.s32.totalorder %s29, 1
      %s31 = scalar_select %p30, 0, %s29
      %s32 = sadd.s32 1, %s23
      %s33 = scalar_select %p30, %s32, %s23
      %p34 = scmp.ge.s32.totalorder %s33, 2
      %s35 = scalar_select %p34, 0, %s33
      %s36 = ssub.s32 %s23, %s35
      %s37 = ssub.s32 %s24, %s31
      %s38 = sor.u32 %s36, %s37
      %p39 = scmp.eq.s32.totalorder %s38, 0
      %s41 = sadd.s32 %s40, 1
      %s42 = scalar_select %p39, %s40, %s41
      %p45 = pneg %p39
      %p46 = scmp.eq.s32.totalorder %s16, 1
      %p47 = por %p45, %p46
      %p48 = scmp.ne.s32.totalorder %s40, %s43
      %p49 = scmp.eq.s32.totalorder %s16, 0
      %p50 = por %p48, %p49
      %p51 = scmp.ne.s32.totalorder %s40, %s43
      %p52 = scmp.eq.s32.totalorder %s21, 1
      %p53 = por %p51, %p52
      %p54 = scmp.ne.s32.totalorder %s43, %s44
      %p55 = scmp.eq.s32.totalorder %s21, 0
      %p56 = por %p54, %p55
      %p57 = scmp.ne.s32.totalorder %s43, %s44
      %p58 = scmp.eq.s32.totalorder %s22, 1
      %p59 = por %p57, %p58
      %p61 = scmp.ne.s32.totalorder %s44, %s60
      %p62 = scmp.eq.s32.totalorder %s22, 0
      %p63 = por %p61, %p62
      %s64 = smul.u32 %s24, 16
      %s65 = ssub.s32 %s64, 1
      %p66 = scmp.gt.s32.totalorder %s65, 0
      %s67 = scalar_select %p66, %s65, 0
      %s68 = smul.u32 %s31, 16
      %s69 = ssub.s32 %s68, 1
      %p70 = scmp.gt.s32.totalorder %s69, 0
      %s71 = scalar_select %p70, %s69, 0
      %s72 = ssub.s32 %s23, %s35
      %s73 = ssub.s32 %s67, %s71
      %s74 = sor.u32 %s72, %s73
      %p75 = scmp.eq.s32.totalorder %s74, 0
      %s77 = sadd.s32 %s76, 1
      %s78 = scalar_select %p75, %s76, %s77
      %p81 = pneg %p75
      %p82 = scmp.eq.s32.totalorder %s16, 1
      %p83 = por %p81, %p82
      %p84 = scmp.ne.s32.totalorder %s76, %s79
      %p85 = scmp.eq.s32.totalorder %s16, 0
      %p86 = por %p84, %p85
      %p87 = scmp.ne.s32.totalorder %s76, %s79
      %p88 = scmp.eq.s32.totalorder %s21, 1
      %p89 = por %p87, %p88
      %p90 = scmp.ne.s32.totalorder %s79, %s80
      %p91 = scmp.eq.s32.totalorder %s21, 0
      %p92 = por %p90, %p91
      %p93 = scmp.ne.s32.totalorder %s79, %s80
      %p94 = scmp.eq.s32.totalorder %s22, 1
      %p95 = por %p93, %p94
      %p97 = scmp.ne.s32.totalorder %s80, %s96
      %p98 = scmp.eq.s32.totalorder %s22, 0
      %p99 = por %p97, %p98
      %s100 = smul.u32 %s24, 16
      %s101 = sadd.s32 %s100, 16
      %p102 = scmp.lt.s32.totalorder %s101, 15
      %s103 = scalar_select %p102, %s101, 15
      %s104 = smul.u32 %s31, 16
      %s105 = sadd.s32 %s104, 16
      %p106 = scmp.lt.s32.totalorder %s105, 15
      %s107 = scalar_select %p106, %s105, 15
      %s108 = ssub.s32 %s23, %s35
      %s109 = ssub.s32 %s103, %s107
      %s110 = sor.u32 %s108, %s109
      %p111 = scmp.eq.s32.totalorder %s110, 0
      %s113 = sadd.s32 %s112, 1
      %s114 = scalar_select %p111, %s112, %s113
      %p117 = pneg %p111
      %p118 = scmp.eq.s32.totalorder %s16, 1
      %p119 = por %p117, %p118
      %p120 = scmp.ne.s32.totalorder %s112, %s115
      %p121 = scmp.eq.s32.totalorder %s16, 0
      %p122 = por %p120, %p121
      %p123 = scmp.ne.s32.totalorder %s112, %s115
      %p124 = scmp.eq.s32.totalorder %s21, 1
      %p125 = por %p123, %p124
      %p126 = scmp.ne.s32.totalorder %s115, %s116
      %p127 = scmp.eq.s32.totalorder %s21, 0
      %p128 = por %p126, %p127
      %p129 = scmp.ne.s32.totalorder %s115, %s116
      %p130 = scmp.eq.s32.totalorder %s22, 1
      %p131 = por %p129, %p130
      %p133 = scmp.ne.s32.totalorder %s116, %s132
      %p134 = scmp.eq.s32.totalorder %s22, 0
      %p135 = por %p133, %p134
      %s137 = sadd.s32 %s136, 1
      %p140 = scmp.eq.s32.totalorder %s16, 1
      %p141 = scmp.ne.s32.totalorder %s136, %s138
      %p142 = scmp.eq.s32.totalorder %s16, 0
      %p143 = por %p141, %p142
      %p144 = scmp.ne.s32.totalorder %s136, %s138
      %p145 = scmp.eq.s32.totalorder %s21, 1
      %p146 = por %p144, %p145
      %p147 = scmp.ne.s32.totalorder %s138, %s139
      %p148 = scmp.eq.s32.totalorder %s21, 0
      %p149 = por %p147, %p148
      %p150 = scmp.ne.s32.totalorder %s138, %s139
      %p151 = scmp.eq.s32.totalorder %s22, 1
      %p152 = por %p150, %p151
      %p154 = scmp.ne.s32.totalorder %s139, %s153
      %p155 = scmp.eq.s32.totalorder %s22, 0
      %p156 = por %p154, %p155
      %s158 = sadd.s32 %s157, 1
      %p161 = scmp.eq.s32.totalorder %s16, 1
      %p162 = scmp.ne.s32.totalorder %s157, %s159
      %p163 = scmp.eq.s32.totalorder %s16, 0
      %p164 = por %p162, %p163
      %p165 = scmp.ne.s32.totalorder %s157, %s159
      %p166 = scmp.eq.s32.totalorder %s21, 1
      %p167 = por %p165, %p166
      %p168 = scmp.ne.s32.totalorder %s159, %s160
      %p169 = scmp.eq.s32.totalorder %s21, 0
      %p170 = por %p168, %p169
      %p171 = scmp.ne.s32.totalorder %s159, %s160
      %p172 = scmp.eq.s32.totalorder %s22, 1
      %p173 = por %p171, %p172
      %p175 = scmp.ne.s32.totalorder %s160, %s174
      %p176 = scmp.eq.s32.totalorder %s22, 0
      %p177 = por %p175, %p176
      %s179 = sadd.s32 %s178, 1
      %p182 = scmp.eq.s32.totalorder %s16, 1
      %p183 = scmp.ne.s32.totalorder %s178, %s180
      %p184 = scmp.eq.s32.totalorder %s16, 0
      %p185 = por %p183, %p184
      %p186 = scmp.ne.s32.totalorder %s178, %s180
      %p187 = scmp.eq.s32.totalorder %s21, 1
      %p188 = por %p186, %p187
      %p189 = scmp.ne.s32.totalorder %s180, %s181
      %p190 = scmp.eq.s32.totalorder %s21, 0
      %p191 = por %p189, %p190
      %p192 = scmp.ne.s32.totalorder %s180, %s181
      %p193 = scmp.eq.s32.totalorder %s22, 1
      %p194 = por %p192, %p193
      %p196 = scmp.ne.s32.totalorder %s181, %s195
      %p197 = scmp.eq.s32.totalorder %s22, 0
      %p198 = por %p196, %p197
      %s200 = sadd.s32 %s199, 1
      %p203 = scmp.eq.s32.totalorder %s16, 1
      %p204 = scmp.ne.s32.totalorder %s199, %s201
      %p205 = scmp.eq.s32.totalorder %s16, 0
      %p206 = por %p204, %p205
      %p207 = scmp.ne.s32.totalorder %s199, %s201
      %p208 = scmp.eq.s32.totalorder %s21, 1
      %p209 = por %p207, %p208
      %p210 = scmp.ne.s32.totalorder %s201, %s202
      %p211 = scmp.eq.s32.totalorder %s21, 0
      %p212 = por %p210, %p211
      %p213 = scmp.ne.s32.totalorder %s201, %s202
      %p214 = scmp.eq.s32.totalorder %s22, 1
      %p215 = por %p213, %p214
      %p217 = scmp.ne.s32.totalorder %s202, %s216
      %p218 = scmp.eq.s32.totalorder %s22, 0
      %p219 = por %p217, %p218
      %s220 = ssub.s32 %s23, %s35
      %s221 = ssub.s32 %s24, %s31
      %s222 = sor.u32 %s220, %s221
      %p223 = scmp.eq.s32.totalorder %s222, 0
      %s225 = sadd.s32 %s224, 1
      %s226 = scalar_select %p223, %s224, %s225
      %p229 = pneg %p223
      %p230 = scmp.eq.s32.totalorder %s16, 1
      %p231 = por %p229, %p230
      %p232 = scmp.ne.s32.totalorder %s224, %s227
      %p233 = scmp.eq.s32.totalorder %s16, 0
      %p234 = por %p232, %p233
      %p235 = scmp.ne.s32.totalorder %s224, %s227
      %p236 = scmp.eq.s32.totalorder %s21, 1
      %p237 = por %p235, %p236
      %p238 = scmp.ne.s32.totalorder %s227, %s228
      %p239 = scmp.eq.s32.totalorder %s21, 0
      %p240 = por %p238, %p239
      %p241 = scmp.ne.s32.totalorder %s227, %s228
      %p242 = scmp.eq.s32.totalorder %s22, 1
      %p243 = por %p241, %p242
      %p245 = scmp.ne.s32.totalorder %s228, %s244
      %p246 = scmp.eq.s32.totalorder %s22, 0
      %p247 = por %p245, %p246
      %p248 = scmp.le.s32.totalorder 1, %s16
      %p249 = scmp.lt.s32.totalorder %s16, 3
      %p250 = pnand %p248, %p249
      %p251 = pneg %p250
      // Predicated region
      $region9: #{tpu_custom_call.1} parent=5 // pred_check
        _
      $region10: #{tpu_custom_call.1} parent=5 // pred_check_branch
        %253 = sbr.rel (%p250) target = $region12
      $region11: #{tpu_custom_call.1} parent=5 // pred_region
        %s254 = ssub.s32 %s16, 1
        // Predicated region
        $region13: #{tpu_custom_call.1} parent=11 // pred_check
          %p255 = pneg %p149
        $region14: #{tpu_custom_call.1} parent=11 // pred_check_branch
          %257 = sbr.rel (%p255) target = $region16
        $region15: #{tpu_custom_call.1} parent=11 // pred_region
          _
        $region16: #{tpu_custom_call.1} parent=11 // pred_fallthru
          _
        // Predicated region
        $region17: #{tpu_custom_call.1} parent=11 // pred_check
          %p258 = pneg %p170
        $region18: #{tpu_custom_call.1} parent=11 // pred_check_branch
          %260 = sbr.rel (%p258) target = $region20
        $region19: #{tpu_custom_call.1} parent=11 // pred_region
          _
        $region20: #{tpu_custom_call.1} parent=11 // pred_fallthru
          _
        // Predicated region
        $region21: #{tpu_custom_call.1} parent=11 // pred_check
          %p261 = pneg %p191
        $region22: #{tpu_custom_call.1} parent=11 // pred_check_branch
          %263 = sbr.rel (%p261) target = $region24
        $region23: #{tpu_custom_call.1} parent=11 // pred_region
          _
        $region24: #{tpu_custom_call.1} parent=11 // pred_fallthru
          _
        // Predicated region
        $region25: #{tpu_custom_call.1} parent=11 // pred_check
          %p264 = pneg %p212
        $region26: #{tpu_custom_call.1} parent=11 // pred_check_branch
          %266 = sbr.rel (%p264) target = $region28
        $region27: #{tpu_custom_call.1} parent=11 // pred_region
          _
        $region28: #{tpu_custom_call.1} parent=11 // pred_fallthru
          _
      $region12: #{tpu_custom_call.1} parent=5 // pred_fallthru
        _
      %p267 = scmp.lt.s32.totalorder %s16, 2
      // Predicated region
      $region29: #{tpu_custom_call.1} parent=5 // pred_check
        %p268 = pneg %p267
      $region30: #{tpu_custom_call.1} parent=5 // pred_check_branch
        %270 = sbr.rel (%p268) target = $region32
      $region31: #{tpu_custom_call.1} parent=5 // pred_region
        // Predicated region
        $region33: #{tpu_custom_call.1} parent=31 // pred_check
          %p271 = pneg %p50
        $region34: #{tpu_custom_call.1} parent=31 // pred_check_branch
          %273 = sbr.rel (%p271) target = $region36
        $region35: #{tpu_custom_call.1} parent=31 // pred_region
          %s274 = smul.u32 16, %s24
          %p275 = scmp.lt.s32.totalorder %s23, 1
          %s276 = scalar_select %p275, %s23, 1
          %p277 = scmp.lt.s32.totalorder %s274, 15
          %s278 = scalar_select %p277, %s274, 15
          %s279 = smul.addr %s278, 3
          %s280 = smul.addr %s276, 48
          %s281 = sadd.s32 %s279, %s280
          %s282 = smul.addr %s281, 4
          %s283 = scalar_lea.vmem %s0, %s282
          %s284 = smul.u32 16, %s24
        $region36: #{tpu_custom_call.1} parent=31 // pred_fallthru
          _
        // Predicated region
        $region37: #{tpu_custom_call.1} parent=31 // pred_check
          %p285 = pneg %p86
        $region38: #{tpu_custom_call.1} parent=31 // pred_check_branch
          %287 = sbr.rel (%p285) target = $region40
        $region39: #{tpu_custom_call.1} parent=31 // pred_region
          %s288 = smul.u32 %s24, 16
          %s289 = ssub.s32 %s288, 1
          %p290 = scmp.gt.s32.totalorder %s289, 0
          %s291 = scalar_select %p290, %s289, 0
          %p292 = scmp.lt.s32.totalorder %s23, 1
          %s293 = scalar_select %p292, %s23, 1
          %p294 = scmp.lt.s32.totalorder %s291, 15
          %s295 = scalar_select %p294, %s291, 15
          %s296 = smul.addr %s295, 3
          %s297 = smul.addr %s293, 48
          %s298 = sadd.s32 %s296, %s297
          %s299 = smul.addr %s298, 4
          %s300 = scalar_lea.vmem %s1, %s299
          %s301 = smul.u32 %s24, 16
          %s302 = ssub.s32 %s301, 1
          %p303 = scmp.gt.s32.totalorder %s302, 0
          %s304 = scalar_select %p303, %s302, 0
        $region40: #{tpu_custom_call.1} parent=31 // pred_fallthru
          _
        // Predicated region
        $region41: #{tpu_custom_call.1} parent=31 // pred_check
          %p305 = pneg %p122
        $region42: #{tpu_custom_call.1} parent=31 // pred_check_branch
          %307 = sbr.rel (%p305) target = $region44
        $region43: #{tpu_custom_call.1} parent=31 // pred_region
          %s308 = smul.u32 %s24, 16
          %s309 = sadd.s32 %s308, 16
          %p310 = scmp.lt.s32.totalorder %s309, 15
          %s311 = scalar_select %p310, %s309, 15
          %p312 = scmp.lt.s32.totalorder %s23, 1
          %s313 = scalar_select %p312, %s23, 1
          %p314 = scmp.lt.s32.totalorder %s311, 15
          %s315 = scalar_select %p314, %s311, 15
          %s316 = smul.addr %s315, 3
          %s317 = smul.addr %s313, 48
          %s318 = sadd.s32 %s316, %s317
          %s319 = smul.addr %s318, 4
          %s320 = scalar_lea.vmem %s2, %s319
          %s321 = smul.u32 %s24, 16
          %s322 = sadd.s32 %s321, 16
          %p323 = scmp.lt.s32.totalorder %s322, 15
          %s324 = scalar_select %p323, %s322, 15
        $region44: #{tpu_custom_call.1} parent=31 // pred_fallthru
          _
      $region32: #{tpu_custom_call.1} parent=5 // pred_fallthru
        _
      %p325 = scmp.le.s32.totalorder 1, %s16
      %p326 = scmp.lt.s32.totalorder %s16, 3
      %p327 = pnand %p325, %p326
      %p328 = pneg %p327
      // Predicated region
      $region45: #{tpu_custom_call.1} parent=5 // pred_check
        _
      $region46: #{tpu_custom_call.1} parent=5 // pred_check_branch
        %330 = sbr.rel (%p327) target = $region48
      $region47: #{tpu_custom_call.1} parent=5 // pred_region
        %s331 = ssub.s32 %s16, 1
        %s332 = smul.u32 16, %s26
        %p333 = scmp.lt.s32.totalorder %s25, 1
        %s334 = scalar_select %p333, %s25, 1
        %p335 = scmp.lt.s32.totalorder %s332, 15
        %s336 = scalar_select %p335, %s332, 15
        %s337 = smul.addr %s336, 3
        %s338 = smul.addr %s334, 48
        %s339 = sadd.s32 %s337, %s338
        %s340 = smul.addr %s339, 4
        %s341 = scalar_lea.vmem %s0, %s340
        %p342 = pneg %p56
        %p343 = pneg %p53
        %s344 = smul.u32 %s26, 16
        %s345 = ssub.s32 %s344, 1
        %p346 = scmp.gt.s32.totalorder %s345, 0
        %s347 = scalar_select %p346, %s345, 0
        %p348 = scmp.lt.s32.totalorder %s25, 1
        %s349 = scalar_select %p348, %s25, 1
        %p350 = scmp.lt.s32.totalorder %s347, 15
        %s351 = scalar_select %p350, %s347, 15
        %s352 = smul.addr %s351, 3
        %s353 = smul.addr %s349, 48
        %s354 = sadd.s32 %s352, %s353
        %s355 = smul.addr %s354, 4
        %s356 = scalar_lea.vmem %s1, %s355
        %p357 = pneg %p92
        %p358 = pneg %p89
        %s359 = smul.u32 %s26, 16
        %s360 = sadd.s32 %s359, 16
        %p361 = scmp.lt.s32.totalorder %s360, 15
        %s362 = scalar_select %p361, %s360, 15
        %p363 = scmp.lt.s32.totalorder %s25, 1
        %s364 = scalar_select %p363, %s25, 1
        %p365 = scmp.lt.s32.totalorder %s362, 15
        %s366 = scalar_select %p365, %s362, 15
        %s367 = smul.addr %s366, 3
        %s368 = smul.addr %s364, 48
        %s369 = sadd.s32 %s367, %s368
        %s370 = smul.addr %s369, 4
        %s371 = scalar_lea.vmem %s2, %s370
        %p372 = pneg %p128
        %p373 = pneg %p125
        %p374 = pneg %p149
        %p375 = pneg %p146
        %p376 = pneg %p170
        %p377 = pneg %p167
        %p378 = pneg %p191
        %p379 = pneg %p188
        %p380 = pneg %p212
        %p381 = pneg %p209
        %p382 = pneg %p240
        %p383 = pneg %p237
        %s384 = sand.u32 %s227, 1
        %s385 = scalar_lea.sflag [#allocation5], %s384
        %s386 = sand.u32 %s227, 1
        %s387 = smul.addr %s386, 256
        %s388 = scalar_lea.vmem [#allocation4], %s387
        %s389 = smul.u32 16, %s26
        %p390 = scmp.lt.s32.totalorder %s25, 1
        %s391 = scalar_select %p390, %s25, 1
        %p392 = scmp.lt.s32.totalorder %s389, 15
        %s393 = scalar_select %p392, %s389, 15
        %s394 = smul.addr %s393, 3
        %s395 = smul.addr %s391, 48
        %s396 = sadd.s32 %s394, %s395
        %s397 = smul.addr %s396, 4
        %s398 = scalar_lea.vmem %s0, %s397
        %s399 = smul.u32 16, %s26
        %s400 = smul.u32 %s26, 16
        %s401 = ssub.s32 %s400, 1
        %p402 = scmp.gt.s32.totalorder %s401, 0
        %s403 = scalar_select %p402, %s401, 0
        %p404 = scmp.lt.s32.totalorder %s25, 1
        %s405 = scalar_select %p404, %s25, 1
        %p406 = scmp.lt.s32.totalorder %s403, 15
        %s407 = scalar_select %p406, %s403, 15
        %s408 = smul.addr %s407, 3
        %s409 = smul.addr %s405, 48
        %s410 = sadd.s32 %s408, %s409
        %s411 = smul.addr %s410, 4
        %s412 = scalar_lea.vmem %s1, %s411
        %s413 = smul.u32 %s26, 16
        %s414 = ssub.s32 %s413, 1
        %p415 = scmp.gt.s32.totalorder %s414, 0
        %s416 = scalar_select %p415, %s414, 0
        %s417 = smul.u32 %s26, 16
        %s418 = sadd.s32 %s417, 16
        %p419 = scmp.lt.s32.totalorder %s418, 15
        %s420 = scalar_select %p419, %s418, 15
        %p421 = scmp.lt.s32.totalorder %s25, 1
        %s422 = scalar_select %p421, %s25, 1
        %p423 = scmp.lt.s32.totalorder %s420, 15
        %s424 = scalar_select %p423, %s420, 15
        %s425 = smul.addr %s424, 3
        %s426 = smul.addr %s422, 48
        %s427 = sadd.s32 %s425, %s426
        %s428 = smul.addr %s427, 4
        %s429 = scalar_lea.vmem %s2, %s428
        %s430 = smul.u32 %s26, 16
        %s431 = sadd.s32 %s430, 16
        %p432 = scmp.lt.s32.totalorder %s431, 15
        %s433 = scalar_select %p432, %s431, 15
        %s434 = smul.u32 16, %s26
        %v436 = vld [vmem:[%s398] sm:$0xf]
        %v437 = vld [vmem:[%s398 + $0x4] sm:$0xf]
        %v438 = vld [vmem:[%s398 + $0x8] sm:$0x1]
        %v439 = vld [vmem:[%s398 + $0xc] sm:$0xf]
        %v440 = vld [vmem:[%s398 + $0x10] sm:$0xf]
        %v441 = vld [vmem:[%s398 + $0x14] sm:$0x1]
        %v442 = vld [vmem:[%s398 + $0x18] sm:$0xf]
        %v443 = vld [vmem:[%s398 + $0x1c] sm:$0xf]
        %v444 = vld [vmem:[%s398 + $0x20] sm:$0x1]
        %v445 = vld [vmem:[%s398 + $0x24] sm:$0xf]
        %v446 = vld [vmem:[%s398 + $0x28] sm:$0xf]
        %v447 = vld [vmem:[%s398 + $0x2c] sm:$0x1]
        %v448 = vld [vmem:[%s398 + $0x30] sm:$0xf]
        %v449 = vld [vmem:[%s398 + $0x34] sm:$0xf]
        %v450 = vld [vmem:[%s398 + $0x38] sm:$0x1]
        %v451 = vld [vmem:[%s398 + $0x3c] sm:$0xf]
        %v452 = vld [vmem:[%s398 + $0x40] sm:$0xf]
        %v453 = vld [vmem:[%s398 + $0x44] sm:$0x1]
        %v454 = vld [vmem:[%s398 + $0x48] sm:$0xf]
        %v455 = vld [vmem:[%s398 + $0x4c] sm:$0xf]
        %v456 = vld [vmem:[%s398 + $0x50] sm:$0x1]
        %v457 = vld [vmem:[%s398 + $0x54] sm:$0xf]
        %v458 = vld [vmem:[%s398 + $0x58] sm:$0xf]
        %v459 = vld [vmem:[%s398 + $0x5c] sm:$0x1]
        %v460 = vld [vmem:[%s398 + $0x60] sm:$0xf]
        %v461 = vld [vmem:[%s398 + $0x64] sm:$0xf]
        %v462 = vld [vmem:[%s398 + $0x68] sm:$0x1]
        %v463 = vld [vmem:[%s398 + $0x6c] sm:$0xf]
        %v464 = vld [vmem:[%s398 + $0x70] sm:$0xf]
        %v465 = vld [vmem:[%s398 + $0x74] sm:$0x1]
        %v466 = vld [vmem:[%s398 + $0x78] sm:$0xf]
        %v467 = vld [vmem:[%s398 + $0x7c] sm:$0xf]
        %v468 = vld [vmem:[%s398 + $0x80] sm:$0x1]
        %v469 = vld [vmem:[%s398 + $0x84] sm:$0xf]
        %v470 = vld [vmem:[%s398 + $0x88] sm:$0xf]
        %v471 = vld [vmem:[%s398 + $0x8c] sm:$0x1]
        %v472 = vld [vmem:[%s398 + $0x90] sm:$0xf]
        %v473 = vld [vmem:[%s398 + $0x94] sm:$0xf]
        %v474 = vld [vmem:[%s398 + $0x98] sm:$0x1]
        %v475 = vld [vmem:[%s398 + $0x9c] sm:$0xf]
        %v476 = vld [vmem:[%s398 + $0xa0] sm:$0xf]
        %v477 = vld [vmem:[%s398 + $0xa4] sm:$0x1]
        %v478 = vld [vmem:[%s398 + $0xa8] sm:$0xf]
        %v479 = vld [vmem:[%s398 + $0xac] sm:$0xf]
        %v480 = vld [vmem:[%s398 + $0xb0] sm:$0x1]
        %v481 = vld [vmem:[%s398 + $0xb4] sm:$0xf]
        %v482 = vld [vmem:[%s398 + $0xb8] sm:$0xf]
        %v483 = vld [vmem:[%s398 + $0xbc] sm:$0x1]
        %s484 = scalar_lea.vmem [#allocation2], 12
        %485 = vst [vmem:[%s484] sm:$0xf] %v436
        %486 = vst [vmem:[%s484 + $0x4] sm:$0xf] %v437
        %487 = vst [vmem:[%s484 + $0x8] sm:$0x1] %v438
        %488 = vst [vmem:[%s484 + $0xc] sm:$0xf] %v439
        %489 = vst [vmem:[%s484 + $0x10] sm:$0xf] %v440
        %490 = vst [vmem:[%s484 + $0x14] sm:$0x1] %v441
        %491 = vst [vmem:[%s484 + $0x18] sm:$0xf] %v442
        %492 = vst [vmem:[%s484 + $0x1c] sm:$0xf] %v443
        %493 = vst [vmem:[%s484 + $0x20] sm:$0x1] %v444
        %494 = vst [vmem:[%s484 + $0x24] sm:$0xf] %v445
        %495 = vst [vmem:[%s484 + $0x28] sm:$0xf] %v446
        %496 = vst [vmem:[%s484 + $0x2c] sm:$0x1] %v447
        %497 = vst [vmem:[%s484 + $0x30] sm:$0xf] %v448
        %498 = vst [vmem:[%s484 + $0x34] sm:$0xf] %v449
        %499 = vst [vmem:[%s484 + $0x38] sm:$0x1] %v450
        %500 = vst [vmem:[%s484 + $0x3c] sm:$0xf] %v451
        %501 = vst [vmem:[%s484 + $0x40] sm:$0xf] %v452
        %502 = vst [vmem:[%s484 + $0x44] sm:$0x1] %v453
        %503 = vst [vmem:[%s484 + $0x48] sm:$0xf] %v454
        %504 = vst [vmem:[%s484 + $0x4c] sm:$0xf] %v455
        %505 = vst [vmem:[%s484 + $0x50] sm:$0x1] %v456
        %506 = vst [vmem:[%s484 + $0x54] sm:$0xf] %v457
        %507 = vst [vmem:[%s484 + $0x58] sm:$0xf] %v458
        %508 = vst [vmem:[%s484 + $0x5c] sm:$0x1] %v459
        %509 = vst [vmem:[%s484 + $0x60] sm:$0xf] %v460
        %510 = vst [vmem:[%s484 + $0x64] sm:$0xf] %v461
        %511 = vst [vmem:[%s484 + $0x68] sm:$0x1] %v462
        %512 = vst [vmem:[%s484 + $0x6c] sm:$0xf] %v463
        %513 = vst [vmem:[%s484 + $0x70] sm:$0xf] %v464
        %514 = vst [vmem:[%s484 + $0x74] sm:$0x1] %v465
        %515 = vst [vmem:[%s484 + $0x78] sm:$0xf] %v466
        %516 = vst [vmem:[%s484 + $0x7c] sm:$0xf] %v467
        %517 = vst [vmem:[%s484 + $0x80] sm:$0x1] %v468
        %518 = vst [vmem:[%s484 + $0x84] sm:$0xf] %v469
        %519 = vst [vmem:[%s484 + $0x88] sm:$0xf] %v470
        %520 = vst [vmem:[%s484 + $0x8c] sm:$0x1] %v471
        %521 = vst [vmem:[%s484 + $0x90] sm:$0xf] %v472
        %522 = vst [vmem:[%s484 + $0x94] sm:$0xf] %v473
        %523 = vst [vmem:[%s484 + $0x98] sm:$0x1] %v474
        %524 = vst [vmem:[%s484 + $0x9c] sm:$0xf] %v475
        %525 = vst [vmem:[%s484 + $0xa0] sm:$0xf] %v476
        %526 = vst [vmem:[%s484 + $0xa4] sm:$0x1] %v477
        %527 = vst [vmem:[%s484 + $0xa8] sm:$0xf] %v478
        %528 = vst [vmem:[%s484 + $0xac] sm:$0xf] %v479
        %529 = vst [vmem:[%s484 + $0xb0] sm:$0x1] %v480
        %530 = vst [vmem:[%s484 + $0xb4] sm:$0xf] %v481
        %531 = vst [vmem:[%s484 + $0xb8] sm:$0xf] %v482
        %532 = vst [vmem:[%s484 + $0xbc] sm:$0x1] %v483
        %p533 = scmp.gt.s32.totalorder %s26, 0
        %s534 = scalar_select %p533, 1, 0
        %s535 = scvt.s32.f32 %s534
        %p537 = scmp.ne.f32.partialorder %s535, %s535
        %s538 = sshrl.u32 %s535, 16
        %s539 = sand.u32 %s538, 1
        %s540 = sadd.s32 32767, %s539
        %s541 = sadd.s32 %s535, %s540
        %s542 = sand.u32 %s541, 4294901760
        %s543 = scalar_select %p537, 2143289344, %s542
        %s545 = sshrl.u32 %s543, 16
        %p546 = scmp.lt.s32.totalorder %s26, 0
        %s547 = scalar_select %p546, 1, 0
        %s548 = scvt.s32.f32 %s547
        %p550 = scmp.ne.f32.partialorder %s548, %s548
        %s551 = sshrl.u32 %s548, 16
        %s552 = sand.u32 %s551, 1
        %s553 = sadd.s32 32767, %s552
        %s554 = sadd.s32 %s548, %s553
        %s555 = sand.u32 %s554, 4294901760
        %s556 = scalar_select %p550, 2143289344, %s555
        %s558 = sshrl.u32 %s556, 16
        %v559 = vld [vmem:[%s412] sm:$0xf]
        %v560 = vld [vmem:[%s412 + $0x4] sm:$0xf]
        %v561 = vld [vmem:[%s412 + $0x8] sm:$0x1]
        %s562 = sshll.u32 %s545, 16
        %s563 = sor.u32 %s545, %s562
        %v564 = vstv %s563
        %v566 = vmul.bf16 %v559, %v564
        %v567 = vmul.bf16 %v560, %v564
        %v568 = vmul.bf16 %v561, %v564
        %569 = vst [vmem:[#allocation2] sm:$0xf] %v566
        %570 = vst [vmem:[#allocation2 + $0x4] sm:$0xf] %v567
        %571 = vst [vmem:[#allocation2 + $0x8] sm:$0x1] %v568
        %v572 = vld [vmem:[%s429] sm:$0xf]
        %v573 = vld [vmem:[%s429 + $0x4] sm:$0xf]
        %v574 = vld [vmem:[%s429 + $0x8] sm:$0x1]
        %s575 = sshll.u32 %s558, 16
        %s576 = sor.u32 %s558, %s575
        %v577 = vstv %s576
        %v579 = vmul.bf16 %v572, %v577
        %v580 = vmul.bf16 %v573, %v577
        %v581 = vmul.bf16 %v574, %v577
        %s582 = scalar_lea.vmem [#allocation2], 204
        %583 = vst [vmem:[%s582] sm:$0xf] %v579
        %584 = vst [vmem:[%s582 + $0x4] sm:$0xf] %v580
        %585 = vst [vmem:[%s582 + $0x8] sm:$0x1] %v581
        %v586 = vld [vmem:[#allocation2] sm:$0xf]
        %v587 = vld [vmem:[#allocation2 + $0x4] sm:$0xf]
        %v588 = vld [vmem:[#allocation2 + $0xc] sm:$0xf]
        %v589 = vld [vmem:[#allocation2 + $0x10] sm:$0xf]
        %v590 = vld [vmem:[#allocation2 + $0x18] sm:$0xf]
        %v591 = vld [vmem:[#allocation2 + $0x1c] sm:$0xf]
        %v592 = vld [vmem:[#allocation2 + $0x24] sm:$0xf]
        %v593 = vld [vmem:[#allocation2 + $0x28] sm:$0xf]
        %v594 = vld [vmem:[#allocation2 + $0x30] sm:$0xf]
        %v595 = vld [vmem:[#allocation2 + $0x34] sm:$0xf]
        %v596 = vld [vmem:[#allocation2 + $0x3c] sm:$0xf]
        %v597 = vld [vmem:[#allocation2 + $0x40] sm:$0xf]
        %v598 = vld [vmem:[#allocation2 + $0x48] sm:$0xf]
        %v599 = vld [vmem:[#allocation2 + $0x4c] sm:$0xf]
        %v600 = vld [vmem:[#allocation2 + $0x54] sm:$0xf]
        %v601 = vld [vmem:[#allocation2 + $0x58] sm:$0xf]
        %v602 = vld [vmem:[#allocation2 + $0x60] sm:$0xf]
        %v603 = vld [vmem:[#allocation2 + $0x64] sm:$0xf]
        %v604 = vld [vmem:[#allocation2 + $0x6c] sm:$0xf]
        %v605 = vld [vmem:[#allocation2 + $0x70] sm:$0xf]
        %v606 = vld [vmem:[#allocation2 + $0x78] sm:$0xf]
        %v607 = vld [vmem:[#allocation2 + $0x7c] sm:$0xf]
        %v608 = vld [vmem:[#allocation2 + $0x84] sm:$0xf]
        %v609 = vld [vmem:[#allocation2 + $0x88] sm:$0xf]
        %v610 = vld [vmem:[#allocation2 + $0x90] sm:$0xf]
        %v611 = vld [vmem:[#allocation2 + $0x94] sm:$0xf]
        %v612 = vld [vmem:[#allocation2 + $0x9c] sm:$0xf]
        %v613 = vld [vmem:[#allocation2 + $0xa0] sm:$0xf]
        %v614 = vld [vmem:[#allocation2 + $0xa8] sm:$0xf]
        %v615 = vld [vmem:[#allocation2 + $0xac] sm:$0xf]
        %v616 = vld [vmem:[#allocation2 + $0xb4] sm:$0xf]
        %v617 = vld [vmem:[#allocation2 + $0xb8] sm:$0xf]
        %v618 = vld [vmem:[%s3] sm:$0xf]
        %v619 = vld [vmem:[%s3 + $0x4] sm:$0xf]
        %v620 = vld [vmem:[%s3 + $0x8] sm:$0xf]
        %v621 = vld [vmem:[%s3 + $0xc] sm:$0xf]
        %v622 = vld [vmem:[%s3 + $0x10] sm:$0xf]
        %v623 = vld [vmem:[%s3 + $0x14] sm:$0xf]
        %v624 = vld [vmem:[%s3 + $0x18] sm:$0xf]
        %v625 = vld [vmem:[%s3 + $0x1c] sm:$0xf]
        %v626 = vld [vmem:[%s3 + $0x20] sm:$0xf]
        %v627 = vld [vmem:[%s3 + $0x24] sm:$0xf]
        %v628 = vld [vmem:[%s3 + $0x28] sm:$0xf]
        %v629 = vld [vmem:[%s3 + $0x2c] sm:$0xf]
        %v630 = vld [vmem:[%s3 + $0x30] sm:$0xf]
        %v631 = vld [vmem:[%s3 + $0x34] sm:$0xf]
        %v632 = vld [vmem:[%s3 + $0x38] sm:$0xf]
        %v633 = vld [vmem:[%s3 + $0x3c] sm:$0xf]
        %v666 = vunpack.c.l.b16 %v586
        %v667 = vunpack.c.l.b16 %v587
        %v668 = vunpack.c.l.b16 %v588
        %v669 = vunpack.c.l.b16 %v589
        %v670 = vunpack.c.l.b16 %v590
        %v671 = vunpack.c.l.b16 %v591
        %v672 = vunpack.c.l.b16 %v592
        %v673 = vunpack.c.l.b16 %v593
        %v674 = vunpack.c.l.b16 %v594
        %v675 = vunpack.c.l.b16 %v595
        %v676 = vunpack.c.l.b16 %v596
        %v677 = vunpack.c.l.b16 %v597
        %v678 = vunpack.c.l.b16 %v598
        %v679 = vunpack.c.l.b16 %v599
        %v680 = vunpack.c.l.b16 %v600
        %v681 = vunpack.c.l.b16 %v601
        %v682 = vunpack.c.l.b16 %v602
        %v683 = vunpack.c.l.b16 %v603
        %v684 = vunpack.c.l.b16 %v604
        %v685 = vunpack.c.l.b16 %v605
        %v686 = vunpack.c.l.b16 %v606
        %v687 = vunpack.c.l.b16 %v607
        %v688 = vunpack.c.l.b16 %v608
        %v689 = vunpack.c.l.b16 %v609
        %v690 = vunpack.c.l.b16 %v610
        %v691 = vunpack.c.l.b16 %v611
        %v692 = vunpack.c.l.b16 %v612
        %v693 = vunpack.c.l.b16 %v613
        %v694 = vunpack.c.l.b16 %v614
        %v695 = vunpack.c.l.b16 %v615
        %v696 = vunpack.c.l.b16 %v616
        %v697 = vunpack.c.l.b16 %v617
        %v698 = vpack.c.b16 %v667, %v666
        %v699 = vpack.c.b16 %v669, %v668
        %v700 = vpack.c.b16 %v671, %v670
        %v701 = vpack.c.b16 %v673, %v672
        %v702 = vpack.c.b16 %v675, %v674
        %v703 = vpack.c.b16 %v677, %v676
        %v704 = vpack.c.b16 %v679, %v678
        %v705 = vpack.c.b16 %v681, %v680
        %v706 = vpack.c.b16 %v683, %v682
        %v707 = vpack.c.b16 %v685, %v684
        %v708 = vpack.c.b16 %v687, %v686
        %v709 = vpack.c.b16 %v689, %v688
        %v710 = vpack.c.b16 %v691, %v690
        %v711 = vpack.c.b16 %v693, %v692
        %v712 = vpack.c.b16 %v695, %v694
        %v713 = vpack.c.b16 %v697, %v696
        %v746 = vunpack.c.l.b16 %v618
        %v747 = vunpack.c.l.b16 %v619
        %v748 = vunpack.c.l.b16 %v620
        %v749 = vunpack.c.l.b16 %v621
        %v750 = vunpack.c.l.b16 %v622
        %v751 = vunpack.c.l.b16 %v623
        %v752 = vunpack.c.l.b16 %v624
        %v753 = vunpack.c.l.b16 %v625
        %v754 = vunpack.c.l.b16 %v626
        %v755 = vunpack.c.l.b16 %v627
        %v756 = vunpack.c.l.b16 %v628
        %v757 = vunpack.c.l.b16 %v629
        %v758 = vunpack.c.l.b16 %v630
        %v759 = vunpack.c.l.b16 %v631
        %v760 = vunpack.c.l.b16 %v632
        %v761 = vunpack.c.l.b16 %v633
        %v762 = vpack.c.b16 %v747, %v746
        %v763 = vpack.c.b16 %v749, %v748
        %v764 = vpack.c.b16 %v751, %v750
        %v765 = vpack.c.b16 %v753, %v752
        %v766 = vpack.c.b16 %v755, %v754
        %v767 = vpack.c.b16 %v757, %v756
        %v768 = vpack.c.b16 %v759, %v758
        %v769 = vpack.c.b16 %v761, %v760
        %778 = vmatprep.subr.bf16.mxu0 0
        %779 = vmatpush1.bf16.msra.mxu0 %v762
        %780 = vmatprep.subr.bf16.mxu0 0
        %781 = vmatpush1.bf16.msra.mxu0 %v763
        %782 = vmatprep.subr.bf16.mxu0 0
        %783 = vmatpush1.bf16.msra.mxu0 %v764
        %784 = vmatprep.subr.bf16.mxu0 0
        %785 = vmatpush1.bf16.msra.mxu0 %v765
        %786 = vmatprep.subr.bf16.mxu0 0
        %787 = vmatpush1.bf16.msra.mxu0 %v766
        %788 = vmatprep.subr.bf16.mxu0 0
        %789 = vmatpush1.bf16.msra.mxu0 %v767
        %790 = vmatprep.subr.bf16.mxu0 0
        %791 = vmatpush1.bf16.msra.mxu0 %v768
        %792 = vmatprep.subr.bf16.mxu0 0
        %793 = vmatpush1.bf16.msra.mxu0 %v769
        %794 = vmatprep.subr.bf16.mxu0 0
        %795 = vmatpush1.bf16.msra.mxu0 0
        %796 = vmatprep.subr.bf16.mxu0 0
        %797 = vmatpush1.bf16.msra.mxu0 0
        %798 = vmatprep.subr.bf16.mxu0 0
        %799 = vmatpush1.bf16.msra.mxu0 0
        %800 = vmatprep.subr.bf16.mxu0 0
        %801 = vmatpush1.bf16.msra.mxu0 0
        %802 = vmatprep.subr.bf16.mxu0 0
        %803 = vmatpush1.bf16.msra.mxu0 0
        %804 = vmatprep.subr.bf16.mxu0 0
        %805 = vmatpush1.bf16.msra.mxu0 0
        %806 = vmatprep.subr.bf16.mxu0 0
        %807 = vmatpush1.bf16.msra.mxu0 0
        %808 = vmatprep.subr.bf16.mxu0 0
        %809 = vmatpush1.bf16.msra.mxu0 0
        %810 = vmatprep.mubr.bf16.mxu0 0
        %811 = vmatmul.mubr.bf16.gmra.mrb[0].mxu0 %v698
        %v812 = vpop.f32.mrb[0].mxu0
        %v813 = vadd.f32 0.0, %v812
        %v814 = vpop.f32.mrb[0].mxu0
        %v815 = vpop.f32.mrb[0].mxu0
        %v816 = vadd.f32 0.0, %v815
        %v817 = vpop.f32.mrb[0].mxu0
        %818 = vmatprep.mubr.bf16.mxu0 0
        %819 = vmatmul.mubr.bf16.gmra.mrb[0].mxu0 %v699
        %v820 = vpop.f32.mrb[0].mxu0
        %v821 = vadd.f32 0.0, %v820
        %v822 = vpop.f32.mrb[0].mxu0
        %v823 = vpop.f32.mrb[0].mxu0
        %v824 = vadd.f32 0.0, %v823
        %v825 = vpop.f32.mrb[0].mxu0
        %826 = vmatprep.mubr.bf16.mxu0 0
        %827 = vmatmul.mubr.bf16.gmra.mrb[0].mxu0 %v700
        %v828 = vpop.f32.mrb[0].mxu0
        %v829 = vadd.f32 0.0, %v828
        %v830 = vpop.f32.mrb[0].mxu0
        %v831 = vpop.f32.mrb[0].mxu0
        %v832 = vadd.f32 0.0, %v831
        %v833 = vpop.f32.mrb[0].mxu0
        %834 = vmatprep.mubr.bf16.mxu0 0
        %835 = vmatmul.mubr.bf16.gmra.mrb[0].mxu0 %v701
        %v836 = vpop.f32.mrb[0].mxu0
        %v837 = vadd.f32 0.0, %v836
        %v838 = vpop.f32.mrb[0].mxu0
        %v839 = vpop.f32.mrb[0].mxu0
        %v840 = vadd.f32 0.0, %v839
        %v841 = vpop.f32.mrb[0].mxu0
        %842 = vmatprep.mubr.bf16.mxu0 0
        %843 = vmatmul.mubr.bf16.gmra.mrb[0].mxu0 %v702
        %v844 = vpop.f32.mrb[0].mxu0
        %v845 = vadd.f32 0.0, %v844
        %v846 = vpop.f32.mrb[0].mxu0
        %v847 = vpop.f32.mrb[0].mxu0
        %v848 = vadd.f32 0.0, %v847
        %v849 = vpop.f32.mrb[0].mxu0
        %850 = vmatprep.mubr.bf16.mxu0 0
        %851 = vmatmul.mubr.bf16.gmra.mrb[0].mxu0 %v703
        %v852 = vpop.f32.mrb[0].mxu0
        %v853 = vadd.f32 0.0, %v852
        %v854 = vpop.f32.mrb[0].mxu0
        %v855 = vpop.f32.mrb[0].mxu0
        %v856 = vadd.f32 0.0, %v855
        %v857 = vpop.f32.mrb[0].mxu0
        %858 = vmatprep.mubr.bf16.mxu0 0
        %859 = vmatmul.mubr.bf16.gmra.mrb[0].mxu0 %v704
        %v860 = vpop.f32.mrb[0].mxu0
        %v861 = vadd.f32 0.0, %v860
        %v862 = vpop.f32.mrb[0].mxu0
        %v863 = vpop.f32.mrb[0].mxu0
        %v864 = vadd.f32 0.0, %v863
        %v865 = vpop.f32.mrb[0].mxu0
        %866 = vmatprep.mubr.bf16.mxu0 0
        %867 = vmatmul.mubr.bf16.gmra.mrb[0].mxu0 %v705
        %v868 = vpop.f32.mrb[0].mxu0
        %v869 = vadd.f32 0.0, %v868
        %v870 = vpop.f32.mrb[0].mxu0
        %v871 = vpop.f32.mrb[0].mxu0
        %v872 = vadd.f32 0.0, %v871
        %v873 = vpop.f32.mrb[0].mxu0
        %874 = vmatprep.mubr.bf16.mxu0 0
        %875 = vmatmul.mubr.bf16.gmra.mrb[0].mxu0 %v706
        %v876 = vpop.f32.mrb[0].mxu0
        %v877 = vadd.f32 0.0, %v876
        %v878 = vpop.f32.mrb[0].mxu0
        %v879 = vpop.f32.mrb[0].mxu0
        %v880 = vadd.f32 0.0, %v879
        %v881 = vpop.f32.mrb[0].mxu0
        %882 = vmatprep.mubr.bf16.mxu0 0
        %883 = vmatmul.mubr.bf16.gmra.mrb[0].mxu0 %v707
        %v884 = vpop.f32.mrb[0].mxu0
        %v885 = vadd.f32 0.0, %v884
        %v886 = vpop.f32.mrb[0].mxu0
        %v887 = vpop.f32.mrb[0].mxu0
        %v888 = vadd.f32 0.0, %v887
        %v889 = vpop.f32.mrb[0].mxu0
        %890 = vmatprep.mubr.bf16.mxu0 0
        %891 = vmatmul.mubr.bf16.gmra.mrb[0].mxu0 %v708
        %v892 = vpop.f32.mrb[0].mxu0
        %v893 = vadd.f32 0.0, %v892
        %v894 = vpop.f32.mrb[0].mxu0
        %v895 = vpop.f32.mrb[0].mxu0
        %v896 = vadd.f32 0.0, %v895
        %v897 = vpop.f32.mrb[0].mxu0
        %898 = vmatprep.mubr.bf16.mxu0 0
        %899 = vmatmul.mubr.bf16.gmra.mrb[0].mxu0 %v709
        %v900 = vpop.f32.mrb[0].mxu0
        %v901 = vadd.f32 0.0, %v900
        %v902 = vpop.f32.mrb[0].mxu0
        %v903 = vpop.f32.mrb[0].mxu0
        %v904 = vadd.f32 0.0, %v903
        %v905 = vpop.f32.mrb[0].mxu0
        %906 = vmatprep.mubr.bf16.mxu0 0
        %907 = vmatmul.mubr.bf16.gmra.mrb[0].mxu0 %v710
        %v908 = vpop.f32.mrb[0].mxu0
        %v909 = vadd.f32 0.0, %v908
        %v910 = vpop.f32.mrb[0].mxu0
        %v911 = vpop.f32.mrb[0].mxu0
        %v912 = vadd.f32 0.0, %v911
        %v913 = vpop.f32.mrb[0].mxu0
        %914 = vmatprep.mubr.bf16.mxu0 0
        %915 = vmatmul.mubr.bf16.gmra.mrb[0].mxu0 %v711
        %v916 = vpop.f32.mrb[0].mxu0
        %v917 = vadd.f32 0.0, %v916
        %v918 = vpop.f32.mrb[0].mxu0
        %v919 = vpop.f32.mrb[0].mxu0
        %v920 = vadd.f32 0.0, %v919
        %v921 = vpop.f32.mrb[0].mxu0
        %922 = vmatprep.mubr.bf16.mxu0 0
        %923 = vmatmul.mubr.bf16.gmra.mrb[0].mxu0 %v712
        %v924 = vpop.f32.mrb[0].mxu0
        %v925 = vadd.f32 0.0, %v924
        %v926 = vpop.f32.mrb[0].mxu0
        %v927 = vpop.f32.mrb[0].mxu0
        %v928 = vadd.f32 0.0, %v927
        %v929 = vpop.f32.mrb[0].mxu0
        %930 = vmatprep.mubr.bf16.mxu0 0
        %931 = vmatmul.mubr.bf16.gmra.mrb[0].mxu0 %v713
        %v932 = vpop.f32.mrb[0].mxu0
        %v933 = vadd.f32 0.0, %v932
        %v934 = vpop.f32.mrb[0].mxu0
        %v935 = vpop.f32.mrb[0].mxu0
        %v936 = vadd.f32 0.0, %v935
        %v937 = vpop.f32.mrb[0].mxu0
        %938 = vdwg.mxu0
        %939 = vst [vmem:[#allocation3] sm:$0xff] %v813
        %940 = vst [vmem:[#allocation3 + $0x8] sm:$0xff] %v816
        %941 = vst [vmem:[#allocation3 + $0x10] sm:$0xff] %v821
        %942 = vst [vmem:[#allocation3 + $0x18] sm:$0xff] %v824
        %943 = vst [vmem:[#allocation3 + $0x20] sm:$0xff] %v829
        %944 = vst [vmem:[#allocation3 + $0x28] sm:$0xff] %v832
        %945 = vst [vmem:[#allocation3 + $0x30] sm:$0xff] %v837
        %946 = vst [vmem:[#allocation3 + $0x38] sm:$0xff] %v840
        %947 = vst [vmem:[#allocation3 + $0x40] sm:$0xff] %v845
        %948 = vst [vmem:[#allocation3 + $0x48] sm:$0xff] %v848
        %949 = vst [vmem:[#allocation3 + $0x50] sm:$0xff] %v853
        %950 = vst [vmem:[#allocation3 + $0x58] sm:$0xff] %v856
        %951 = vst [vmem:[#allocation3 + $0x60] sm:$0xff] %v861
        %952 = vst [vmem:[#allocation3 + $0x68] sm:$0xff] %v864
        %953 = vst [vmem:[#allocation3 + $0x70] sm:$0xff] %v869
        %954 = vst [vmem:[#allocation3 + $0x78] sm:$0xff] %v872
        %955 = vst [vmem:[#allocation3 + $0x80] sm:$0xff] %v877
        %956 = vst [vmem:[#allocation3 + $0x88] sm:$0xff] %v880
        %957 = vst [vmem:[#allocation3 + $0x90] sm:$0xff] %v885
        %958 = vst [vmem:[#allocation3 + $0x98] sm:$0xff] %v888
        %959 = vst [vmem:[#allocation3 + $0xa0] sm:$0xff] %v893
        %960 = vst [vmem:[#allocation3 + $0xa8] sm:$0xff] %v896
        %961 = vst [vmem:[#allocation3 + $0xb0] sm:$0xff] %v901
        %962 = vst [vmem:[#allocation3 + $0xb8] sm:$0xff] %v904
        %963 = vst [vmem:[#allocation3 + $0xc0] sm:$0xff] %v909
        %964 = vst [vmem:[#allocation3 + $0xc8] sm:$0xff] %v912
        %965 = vst [vmem:[#allocation3 + $0xd0] sm:$0xff] %v917
        %966 = vst [vmem:[#allocation3 + $0xd8] sm:$0xff] %v920
        %967 = vst [vmem:[#allocation3 + $0xe0] sm:$0xff] %v925
        %968 = vst [vmem:[#allocation3 + $0xe8] sm:$0xff] %v928
        %969 = vst [vmem:[#allocation3 + $0xf0] sm:$0xff] %v933
        %970 = vst [vmem:[#allocation3 + $0xf8] sm:$0xff] %v936
        %v971 = vld [vmem:[#allocation3] sm:$0xff]
        %v972 = vld [vmem:[#allocation3 + $0x8] sm:$0xff]
        %v973 = vld [vmem:[#allocation3 + $0x10] sm:$0xff]
        %v974 = vld [vmem:[#allocation3 + $0x18] sm:$0xff]
        %v975 = vld [vmem:[#allocation3 + $0x20] sm:$0xff]
        %v976 = vld [vmem:[#allocation3 + $0x28] sm:$0xff]
        %v977 = vld [vmem:[#allocation3 + $0x30] sm:$0xff]
        %v978 = vld [vmem:[#allocation3 + $0x38] sm:$0xff]
        %v979 = vld [vmem:[#allocation3 + $0x40] sm:$0xff]
        %v980 = vld [vmem:[#allocation3 + $0x48] sm:$0xff]
        %v981 = vld [vmem:[#allocation3 + $0x50] sm:$0xff]
        %v982 = vld [vmem:[#allocation3 + $0x58] sm:$0xff]
        %v983 = vld [vmem:[#allocation3 + $0x60] sm:$0xff]
        %v984 = vld [vmem:[#allocation3 + $0x68] sm:$0xff]
        %v985 = vld [vmem:[#allocation3 + $0x70] sm:$0xff]
        %v986 = vld [vmem:[#allocation3 + $0x78] sm:$0xff]
        %v987 = vld [vmem:[#allocation3 + $0x80] sm:$0xff]
        %v988 = vld [vmem:[#allocation3 + $0x88] sm:$0xff]
        %v989 = vld [vmem:[#allocation3 + $0x90] sm:$0xff]
        %v990 = vld [vmem:[#allocation3 + $0x98] sm:$0xff]
        %v991 = vld [vmem:[#allocation3 + $0xa0] sm:$0xff]
        %v992 = vld [vmem:[#allocation3 + $0xa8] sm:$0xff]
        %v993 = vld [vmem:[#allocation3 + $0xb0] sm:$0xff]
        %v994 = vld [vmem:[#allocation3 + $0xb8] sm:$0xff]
        %v995 = vld [vmem:[#allocation3 + $0xc0] sm:$0xff]
        %v996 = vld [vmem:[#allocation3 + $0xc8] sm:$0xff]
        %v997 = vld [vmem:[#allocation3 + $0xd0] sm:$0xff]
        %v998 = vld [vmem:[#allocation3 + $0xd8] sm:$0xff]
        %v999 = vld [vmem:[#allocation3 + $0xe0] sm:$0xff]
        %v1000 = vld [vmem:[#allocation3 + $0xe8] sm:$0xff]
        %v1001 = vld [vmem:[#allocation3 + $0xf0] sm:$0xff]
        %v1002 = vld [vmem:[#allocation3 + $0xf8] sm:$0xff]
        %v1003 = vld [vmem:[#allocation2] sm:$0xf]
        %v1004 = vld [vmem:[#allocation2 + $0x4] sm:$0xf]
        %v1005 = vld [vmem:[#allocation2 + $0x8] sm:$0x1]
        %v1006 = vld [vmem:[#allocation2 + $0xc] sm:$0xf]
        %v1007 = vld [vmem:[#allocation2 + $0x10] sm:$0xf]
        %v1008 = vld [vmem:[#allocation2 + $0x14] sm:$0x1]
        %v1009 = vld [vmem:[#allocation2 + $0x18] sm:$0xf]
        %v1010 = vld [vmem:[#allocation2 + $0x1c] sm:$0xf]
        %v1011 = vld [vmem:[#allocation2 + $0x20] sm:$0x1]
        %v1012 = vld [vmem:[#allocation2 + $0x24] sm:$0xf]
        %v1013 = vld [vmem:[#allocation2 + $0x28] sm:$0xf]
        %v1014 = vld [vmem:[#allocation2 + $0x2c] sm:$0x1]
        %v1015 = vld [vmem:[#allocation2 + $0x30] sm:$0xf]
        %v1016 = vld [vmem:[#allocation2 + $0x34] sm:$0xf]
        %v1017 = vld [vmem:[#allocation2 + $0x38] sm:$0x1]
        %v1018 = vld [vmem:[#allocation2 + $0x3c] sm:$0xf]
        %v1019 = vld [vmem:[#allocation2 + $0x40] sm:$0xf]
        %v1020 = vld [vmem:[#allocation2 + $0x44] sm:$0x1]
        %v1021 = vld [vmem:[#allocation2 + $0x48] sm:$0xf]
        %v1022 = vld [vmem:[#allocation2 + $0x4c] sm:$0xf]
        %v1023 = vld [vmem:[#allocation2 + $0x50] sm:$0x1]
        %v1024 = vld [vmem:[#allocation2 + $0x54] sm:$0xf]
        %v1025 = vld [vmem:[#allocation2 + $0x58] sm:$0xf]
        %v1026 = vld [vmem:[#allocation2 + $0x5c] sm:$0x1]
        %v1027 = vld [vmem:[#allocation2 + $0x60] sm:$0xf]
        %v1028 = vld [vmem:[#allocation2 + $0x64] sm:$0xf]
        %v1029 = vld [vmem:[#allocation2 + $0x68] sm:$0x1]
        %v1030 = vld [vmem:[#allocation2 + $0x6c] sm:$0xf]
        %v1031 = vld [vmem:[#allocation2 + $0x70] sm:$0xf]
        %v1032 = vld [vmem:[#allocation2 + $0x74] sm:$0x1]
        %v1033 = vld [vmem:[#allocation2 + $0x78] sm:$0xf]
        %v1034 = vld [vmem:[#allocation2 + $0x7c] sm:$0xf]
        %v1035 = vld [vmem:[#allocation2 + $0x80] sm:$0x1]
        %v1036 = vld [vmem:[#allocation2 + $0x84] sm:$0xf]
        %v1037 = vld [vmem:[#allocation2 + $0x88] sm:$0xf]
        %v1038 = vld [vmem:[#allocation2 + $0x8c] sm:$0x1]
        %v1039 = vld [vmem:[#allocation2 + $0x90] sm:$0xf]
        %v1040 = vld [vmem:[#allocation2 + $0x94] sm:$0xf]
        %v1041 = vld [vmem:[#allocation2 + $0x98] sm:$0x1]
        %v1042 = vld [vmem:[#allocation2 + $0x9c] sm:$0xf]
        %v1043 = vld [vmem:[#allocation2 + $0xa0] sm:$0xf]
        %v1044 = vld [vmem:[#allocation2 + $0xa4] sm:$0x1]
        %v1045 = vld [vmem:[#allocation2 + $0xa8] sm:$0xf]
        %v1046 = vld [vmem:[#allocation2 + $0xac] sm:$0xf]
        %v1047 = vld [vmem:[#allocation2 + $0xb0] sm:$0x1]
        %v1048 = vld [vmem:[#allocation2 + $0xb4] sm:$0xf]
        %v1049 = vld [vmem:[#allocation2 + $0xb8] sm:$0xf]
        %v1050 = vld [vmem:[#allocation2 + $0xbc] sm:$0x1]
        %vm1051 = vsmask.f32 3328
        %vm1052 = vsmask.f32 7440
        %vm1053 = vmor %vm1051, %vm1052
        %v1055 = vshrl.u32 %v1003, 16
        %v1057 = vrot.slane %v1055, 4
        %v1058 = vshll.u32 %v1003, 16
        %v1060 = vrot.slane %v1058, 5
        %v1061 = vor.u32 %v1057, %v1060
        %v1062 = vrot.slane %v1061, 4
        %v1064 = vshll.u32 %v1004, 16
        %v1066 = vrot.slane %v1064, 5
        %v1067 = vsel %vm1053, %v1062, %v1066
        %v1068 = vshrl.u32 %v1004, 16
        %v1070 = vrot.slane %v1068, 4
        %v1071 = vor.u32 %v1070, %v1066
        %v1072 = vrot.slane %v1071, 4
        %v1074 = vshll.u32 %v1005, 16
        %v1076 = vrot.slane %v1074, 5
        %v1077 = vsel %vm1053, %v1072, %v1076
        %v1079 = vshrl.u32 %v1006, 16
        %v1081 = vrot.slane %v1079, 4
        %v1082 = vshll.u32 %v1006, 16
        %v1084 = vrot.slane %v1082, 5
        %v1085 = vor.u32 %v1081, %v1084
        %v1086 = vrot.slane %v1085, 4
        %v1088 = vshll.u32 %v1007, 16
        %v1090 = vrot.slane %v1088, 5
        %v1091 = vsel %vm1053, %v1086, %v1090
        %v1092 = vshrl.u32 %v1007, 16
        %v1094 = vrot.slane %v1092, 4
        %v1095 = vor.u32 %v1094, %v1090
        %v1096 = vrot.slane %v1095, 4
        %v1098 = vshll.u32 %v1008, 16
        %v1100 = vrot.slane %v1098, 5
        %v1101 = vsel %vm1053, %v1096, %v1100
        %v1103 = vshrl.u32 %v1009, 16
        %v1105 = vrot.slane %v1103, 4
        %v1106 = vshll.u32 %v1009, 16
        %v1108 = vrot.slane %v1106, 5
        %v1109 = vor.u32 %v1105, %v1108
        %v1110 = vrot.slane %v1109, 4
        %v1112 = vshll.u32 %v1010, 16
        %v1114 = vrot.slane %v1112, 5
        %v1115 = vsel %vm1053, %v1110, %v1114
        %v1116 = vshrl.u32 %v1010, 16
        %v1118 = vrot.slane %v1116, 4
        %v1119 = vor.u32 %v1118, %v1114
        %v1120 = vrot.slane %v1119, 4
        %v1122 = vshll.u32 %v1011, 16
        %v1124 = vrot.slane %v1122, 5
        %v1125 = vsel %vm1053, %v1120, %v1124
        %v1127 = vshrl.u32 %v1012, 16
        %v1129 = vrot.slane %v1127, 4
        %v1130 = vshll.u32 %v1012, 16
        %v1132 = vrot.slane %v1130, 5
        %v1133 = vor.u32 %v1129, %v1132
        %v1134 = vrot.slane %v1133, 4
        %v1136 = vshll.u32 %v1013, 16
        %v1138 = vrot.slane %v1136, 5
        %v1139 = vsel %vm1053, %v1134, %v1138
        %v1140 = vshrl.u32 %v1013, 16
        %v1142 = vrot.slane %v1140, 4
        %v1143 = vor.u32 %v1142, %v1138
        %v1144 = vrot.slane %v1143, 4
        %v1146 = vshll.u32 %v1014, 16
        %v1148 = vrot.slane %v1146, 5
        %v1149 = vsel %vm1053, %v1144, %v1148
        %v1151 = vshrl.u32 %v1015, 16
        %v1153 = vrot.slane %v1151, 4
        %v1154 = vshll.u32 %v1015, 16
        %v1156 = vrot.slane %v1154, 5
        %v1157 = vor.u32 %v1153, %v1156
        %v1158 = vrot.slane %v1157, 4
        %v1160 = vshll.u32 %v1016, 16
        %v1162 = vrot.slane %v1160, 5
        %v1163 = vsel %vm1053, %v1158, %v1162
        %v1164 = vshrl.u32 %v1016, 16
        %v1166 = vrot.slane %v1164, 4
        %v1167 = vor.u32 %v1166, %v1162
        %v1168 = vrot.slane %v1167, 4
        %v1170 = vshll.u32 %v1017, 16
        %v1172 = vrot.slane %v1170, 5
        %v1173 = vsel %vm1053, %v1168, %v1172
        %v1175 = vshrl.u32 %v1018, 16
        %v1177 = vrot.slane %v1175, 4
        %v1178 = vshll.u32 %v1018, 16
        %v1180 = vrot.slane %v1178, 5
        %v1181 = vor.u32 %v1177, %v1180
        %v1182 = vrot.slane %v1181, 4
        %v1184 = vshll.u32 %v1019, 16
        %v1186 = vrot.slane %v1184, 5
        %v1187 = vsel %vm1053, %v1182, %v1186
        %v1188 = vshrl.u32 %v1019, 16
        %v1190 = vrot.slane %v1188, 4
        %v1191 = vor.u32 %v1190, %v1186
        %v1192 = vrot.slane %v1191, 4
        %v1194 = vshll.u32 %v1020, 16
        %v1196 = vrot.slane %v1194, 5
        %v1197 = vsel %vm1053, %v1192, %v1196
        %v1199 = vshrl.u32 %v1021, 16
        %v1201 = vrot.slane %v1199, 4
        %v1202 = vshll.u32 %v1021, 16
        %v1204 = vrot.slane %v1202, 5
        %v1205 = vor.u32 %v1201, %v1204
        %v1206 = vrot.slane %v1205, 4
        %v1208 = vshll.u32 %v1022, 16
        %v1210 = vrot.slane %v1208, 5
        %v1211 = vsel %vm1053, %v1206, %v1210
        %v1212 = vshrl.u32 %v1022, 16
        %v1214 = vrot.slane %v1212, 4
        %v1215 = vor.u32 %v1214, %v1210
        %v1216 = vrot.slane %v1215, 4
        %v1218 = vshll.u32 %v1023, 16
        %v1220 = vrot.slane %v1218, 5
        %v1221 = vsel %vm1053, %v1216, %v1220
        %v1223 = vshrl.u32 %v1024, 16
        %v1225 = vrot.slane %v1223, 4
        %v1226 = vshll.u32 %v1024, 16
        %v1228 = vrot.slane %v1226, 5
        %v1229 = vor.u32 %v1225, %v1228
        %v1230 = vrot.slane %v1229, 4
        %v1232 = vshll.u32 %v1025, 16
        %v1234 = vrot.slane %v1232, 5
        %v1235 = vsel %vm1053, %v1230, %v1234
        %v1236 = vshrl.u32 %v1025, 16
        %v1238 = vrot.slane %v1236, 4
        %v1239 = vor.u32 %v1238, %v1234
        %v1240 = vrot.slane %v1239, 4
        %v1242 = vshll.u32 %v1026, 16
        %v1244 = vrot.slane %v1242, 5
        %v1245 = vsel %vm1053, %v1240, %v1244
        %v1247 = vshrl.u32 %v1027, 16
        %v1249 = vrot.slane %v1247, 4
        %v1250 = vshll.u32 %v1027, 16
        %v1252 = vrot.slane %v1250, 5
        %v1253 = vor.u32 %v1249, %v1252
        %v1254 = vrot.slane %v1253, 4
        %v1256 = vshll.u32 %v1028, 16
        %v1258 = vrot.slane %v1256, 5
        %v1259 = vsel %vm1053, %v1254, %v1258
        %v1260 = vshrl.u32 %v1028, 16
        %v1262 = vrot.slane %v1260, 4
        %v1263 = vor.u32 %v1262, %v1258
        %v1264 = vrot.slane %v1263, 4
        %v1266 = vshll.u32 %v1029, 16
        %v1268 = vrot.slane %v1266, 5
        %v1269 = vsel %vm1053, %v1264, %v1268
        %v1271 = vshrl.u32 %v1030, 16
        %v1273 = vrot.slane %v1271, 4
        %v1274 = vshll.u32 %v1030, 16
        %v1276 = vrot.slane %v1274, 5
        %v1277 = vor.u32 %v1273, %v1276
        %v1278 = vrot.slane %v1277, 4
        %v1280 = vshll.u32 %v1031, 16
        %v1282 = vrot.slane %v1280, 5
        %v1283 = vsel %vm1053, %v1278, %v1282
        %v1284 = vshrl.u32 %v1031, 16
        %v1286 = vrot.slane %v1284, 4
        %v1287 = vor.u32 %v1286, %v1282
        %v1288 = vrot.slane %v1287, 4
        %v1290 = vshll.u32 %v1032, 16
        %v1292 = vrot.slane %v1290, 5
        %v1293 = vsel %vm1053, %v1288, %v1292
        %v1295 = vshrl.u32 %v1033, 16
        %v1297 = vrot.slane %v1295, 4
        %v1298 = vshll.u32 %v1033, 16
        %v1300 = vrot.slane %v1298, 5
        %v1301 = vor.u32 %v1297, %v1300
        %v1302 = vrot.slane %v1301, 4
        %v1304 = vshll.u32 %v1034, 16
        %v1306 = vrot.slane %v1304, 5
        %v1307 = vsel %vm1053, %v1302, %v1306
        %v1308 = vshrl.u32 %v1034, 16
        %v1310 = vrot.slane %v1308, 4
        %v1311 = vor.u32 %v1310, %v1306
        %v1312 = vrot.slane %v1311, 4
        %v1314 = vshll.u32 %v1035, 16
        %v1316 = vrot.slane %v1314, 5
        %v1317 = vsel %vm1053, %v1312, %v1316
        %v1319 = vshrl.u32 %v1036, 16
        %v1321 = vrot.slane %v1319, 4
        %v1322 = vshll.u32 %v1036, 16
        %v1324 = vrot.slane %v1322, 5
        %v1325 = vor.u32 %v1321, %v1324
        %v1326 = vrot.slane %v1325, 4
        %v1328 = vshll.u32 %v1037, 16
        %v1330 = vrot.slane %v1328, 5
        %v1331 = vsel %vm1053, %v1326, %v1330
        %v1332 = vshrl.u32 %v1037, 16
        %v1334 = vrot.slane %v1332, 4
        %v1335 = vor.u32 %v1334, %v1330
        %v1336 = vrot.slane %v1335, 4
        %v1338 = vshll.u32 %v1038, 16
        %v1340 = vrot.slane %v1338, 5
        %v1341 = vsel %vm1053, %v1336, %v1340
        %v1343 = vshrl.u32 %v1039, 16
        %v1345 = vrot.slane %v1343, 4
        %v1346 = vshll.u32 %v1039, 16
        %v1348 = vrot.slane %v1346, 5
        %v1349 = vor.u32 %v1345, %v1348
        %v1350 = vrot.slane %v1349, 4
        %v1352 = vshll.u32 %v1040, 16
        %v1354 = vrot.slane %v1352, 5
        %v1355 = vsel %vm1053, %v1350, %v1354
        %v1356 = vshrl.u32 %v1040, 16
        %v1358 = vrot.slane %v1356, 4
        %v1359 = vor.u32 %v1358, %v1354
        %v1360 = vrot.slane %v1359, 4
        %v1362 = vshll.u32 %v1041, 16
        %v1364 = vrot.slane %v1362, 5
        %v1365 = vsel %vm1053, %v1360, %v1364
        %v1367 = vshrl.u32 %v1042, 16
        %v1369 = vrot.slane %v1367, 4
        %v1370 = vshll.u32 %v1042, 16
        %v1372 = vrot.slane %v1370, 5
        %v1373 = vor.u32 %v1369, %v1372
        %v1374 = vrot.slane %v1373, 4
        %v1376 = vshll.u32 %v1043, 16
        %v1378 = vrot.slane %v1376, 5
        %v1379 = vsel %vm1053, %v1374, %v1378
        %v1380 = vshrl.u32 %v1043, 16
        %v1382 = vrot.slane %v1380, 4
        %v1383 = vor.u32 %v1382, %v1378
        %v1384 = vrot.slane %v1383, 4
        %v1386 = vshll.u32 %v1044, 16
        %v1388 = vrot.slane %v1386, 5
        %v1389 = vsel %vm1053, %v1384, %v1388
        %v1391 = vshrl.u32 %v1045, 16
        %v1393 = vrot.slane %v1391, 4
        %v1394 = vshll.u32 %v1045, 16
        %v1396 = vrot.slane %v1394, 5
        %v1397 = vor.u32 %v1393, %v1396
        %v1398 = vrot.slane %v1397, 4
        %v1400 = vshll.u32 %v1046, 16
        %v1402 = vrot.slane %v1400, 5
        %v1403 = vsel %vm1053, %v1398, %v1402
        %v1404 = vshrl.u32 %v1046, 16
        %v1406 = vrot.slane %v1404, 4
        %v1407 = vor.u32 %v1406, %v1402
        %v1408 = vrot.slane %v1407, 4
        %v1410 = vshll.u32 %v1047, 16
        %v1412 = vrot.slane %v1410, 5
        %v1413 = vsel %vm1053, %v1408, %v1412
        %v1415 = vshrl.u32 %v1048, 16
        %v1417 = vrot.slane %v1415, 4
        %v1418 = vshll.u32 %v1048, 16
        %v1420 = vrot.slane %v1418, 5
        %v1421 = vor.u32 %v1417, %v1420
        %v1422 = vrot.slane %v1421, 4
        %v1424 = vshll.u32 %v1049, 16
        %v1426 = vrot.slane %v1424, 5
        %v1427 = vsel %vm1053, %v1422, %v1426
        %v1428 = vshrl.u32 %v1049, 16
        %v1430 = vrot.slane %v1428, 4
        %v1431 = vor.u32 %v1430, %v1426
        %v1432 = vrot.slane %v1431, 4
        %v1434 = vshll.u32 %v1050, 16
        %v1436 = vrot.slane %v1434, 5
        %v1437 = vsel %vm1053, %v1432, %v1436
        %s1438 = scalar_lea.vmem %s3, 64
        %v1439 = vld [vmem:[%s1438] sm:$0xf]
        %v1440 = vld [vmem:[%s1438 + $0x4] sm:$0xf]
        %v1441 = vld [vmem:[%s1438 + $0x8] sm:$0xf]
        %v1442 = vld [vmem:[%s1438 + $0xc] sm:$0xf]
        %v1443 = vld [vmem:[%s1438 + $0x10] sm:$0xf]
        %v1444 = vld [vmem:[%s1438 + $0x14] sm:$0xf]
        %v1445 = vld [vmem:[%s1438 + $0x18] sm:$0xf]
        %v1446 = vld [vmem:[%s1438 + $0x1c] sm:$0xf]
        %v1447 = vld [vmem:[%s1438 + $0x20] sm:$0xf]
        %v1448 = vld [vmem:[%s1438 + $0x24] sm:$0xf]
        %v1449 = vld [vmem:[%s1438 + $0x28] sm:$0xf]
        %v1450 = vld [vmem:[%s1438 + $0x2c] sm:$0xf]
        %v1451 = vld [vmem:[%s1438 + $0x30] sm:$0xf]
        %v1452 = vld [vmem:[%s1438 + $0x34] sm:$0xf]
        %v1453 = vld [vmem:[%s1438 + $0x38] sm:$0xf]
        %v1454 = vld [vmem:[%s1438 + $0x3c] sm:$0xf]
        %v1455 = vunpack.c.l.b16 %v1067
        %v1456 = vunpack.c.l.b16 %v1077
        %v1457 = vunpack.c.l.b16 %v1091
        %v1458 = vunpack.c.l.b16 %v1101
        %v1459 = vunpack.c.l.b16 %v1115
        %v1460 = vunpack.c.l.b16 %v1125
        %v1461 = vunpack.c.l.b16 %v1139
        %v1462 = vunpack.c.l.b16 %v1149
        %v1463 = vunpack.c.l.b16 %v1163
        %v1464 = vunpack.c.l.b16 %v1173
        %v1465 = vunpack.c.l.b16 %v1187
        %v1466 = vunpack.c.l.b16 %v1197
        %v1467 = vunpack.c.l.b16 %v1211
        %v1468 = vunpack.c.l.b16 %v1221
        %v1469 = vunpack.c.l.b16 %v1235
        %v1470 = vunpack.c.l.b16 %v1245
        %v1471 = vunpack.c.l.b16 %v1259
        %v1472 = vunpack.c.l.b16 %v1269
        %v1473 = vunpack.c.l.b16 %v1283
        %v1474 = vunpack.c.l.b16 %v1293
        %v1475 = vunpack.c.l.b16 %v1307
        %v1476 = vunpack.c.l.b16 %v1317
        %v1477 = vunpack.c.l.b16 %v1331
        %v1478 = vunpack.c.l.b16 %v1341
        %v1479 = vunpack.c.l.b16 %v1355
        %v1480 = vunpack.c.l.b16 %v1365
        %v1481 = vunpack.c.l.b16 %v1379
        %v1482 = vunpack.c.l.b16 %v1389
        %v1483 = vunpack.c.l.b16 %v1403
        %v1484 = vunpack.c.l.b16 %v1413
        %v1485 = vunpack.c.l.b16 %v1427
        %v1486 = vunpack.c.l.b16 %v1437
        %v1487 = vpack.c.b16 %v1456, %v1455
        %v1488 = vpack.c.b16 %v1458, %v1457
        %v1489 = vpack.c.b16 %v1460, %v1459
        %v1490 = vpack.c.b16 %v1462, %v1461
        %v1491 = vpack.c.b16 %v1464, %v1463
        %v1492 = vpack.c.b16 %v1466, %v1465
        %v1493 = vpack.c.b16 %v1468, %v1467
        %v1494 = vpack.c.b16 %v1470, %v1469
        %v1495 = vpack.c.b16 %v1472, %v1471
        %v1496 = vpack.c.b16 %v1474, %v1473
        %v1497 = vpack.c.b16 %v1476, %v1475
        %v1498 = vpack.c.b16 %v1478, %v1477
        %v1499 = vpack.c.b16 %v1480, %v1479
        %v1500 = vpack.c.b16 %v1482, %v1481
        %v1501 = vpack.c.b16 %v1484, %v1483
        %v1502 = vpack.c.b16 %v1486, %v1485
        %v1535 = vunpack.c.l.b16 %v1439
        %v1536 = vunpack.c.l.b16 %v1440
        %v1537 = vunpack.c.l.b16 %v1441
        %v1538 = vunpack.c.l.b16 %v1442
        %v1539 = vunpack.c.l.b16 %v1443
        %v1540 = vunpack.c.l.b16 %v1444
        %v1541 = vunpack.c.l.b16 %v1445
        %v1542 = vunpack.c.l.b16 %v1446
        %v1543 = vunpack.c.l.b16 %v1447
        %v1544 = vunpack.c.l.b16 %v1448
        %v1545 = vunpack.c.l.b16 %v1449
        %v1546 = vunpack.c.l.b16 %v1450
        %v1547 = vunpack.c.l.b16 %v1451
        %v1548 = vunpack.c.l.b16 %v1452
        %v1549 = vunpack.c.l.b16 %v1453
        %v1550 = vunpack.c.l.b16 %v1454
        %v1551 = vpack.c.b16 %v1536, %v1535
        %v1552 = vpack.c.b16 %v1538, %v1537
        %v1553 = vpack.c.b16 %v1540, %v1539
        %v1554 = vpack.c.b16 %v1542, %v1541
        %v1555 = vpack.c.b16 %v1544, %v1543
        %v1556 = vpack.c.b16 %v1546, %v1545
        %v1557 = vpack.c.b16 %v1548, %v1547
        %v1558 = vpack.c.b16 %v1550, %v1549
        %1567 = vmatprep.subr.bf16.mxu0 0
        %1568 = vmatpush1.bf16.msra.mxu0 %v1551
        %1569 = vmatprep.subr.bf16.mxu0 0
        %1570 = vmatpush1.bf16.msra.mxu0 %v1552
        %1571 = vmatprep.subr.bf16.mxu0 0
        %1572 = vmatpush1.bf16.msra.mxu0 %v1553
        %1573 = vmatprep.subr.bf16.mxu0 0
        %1574 = vmatpush1.bf16.msra.mxu0 %v1554
        %1575 = vmatprep.subr.bf16.mxu0 0
        %1576 = vmatpush1.bf16.msra.mxu0 %v1555
        %1577 = vmatprep.subr.bf16.mxu0 0
        %1578 = vmatpush1.bf16.msra.mxu0 %v1556
        %1579 = vmatprep.subr.bf16.mxu0 0
        %1580 = vmatpush1.bf16.msra.mxu0 %v1557
        %1581 = vmatprep.subr.bf16.mxu0 0
        %1582 = vmatpush1.bf16.msra.mxu0 %v1558
        %1583 = vmatprep.subr.bf16.mxu0 0
        %1584 = vmatpush1.bf16.msra.mxu0 0
        %1585 = vmatprep.subr.bf16.mxu0 0
        %1586 = vmatpush1.bf16.msra.mxu0 0
        %1587 = vmatprep.subr.bf16.mxu0 0
        %1588 = vmatpush1.bf16.msra.mxu0 0
        %1589 = vmatprep.subr.bf16.mxu0 0
        %1590 = vmatpush1.bf16.msra.mxu0 0
        %1591 = vmatprep.subr.bf16.mxu0 0
        %1592 = vmatpush1.bf16.msra.mxu0 0
        %1593 = vmatprep.subr.bf16.mxu0 0
        %1594 = vmatpush1.bf16.msra.mxu0 0
        %1595 = vmatprep.subr.bf16.mxu0 0
        %1596 = vmatpush1.bf16.msra.mxu0 0
        %1597 = vmatprep.subr.bf16.mxu0 0
        %1598 = vmatpush1.bf16.msra.mxu0 0
        %1599 = vmatprep.mubr.bf16.mxu0 0
        %1600 = vmatmul.mubr.bf16.gmra.mrb[0].mxu0 %v1487
        %v1601 = vpop.f32.mrb[0].mxu0
        %v1602 = vadd.f32 0.0, %v1601
        %v1603 = vpop.f32.mrb[0].mxu0
        %v1604 = vpop.f32.mrb[0].mxu0
        %v1605 = vadd.f32 0.0, %v1604
        %v1606 = vpop.f32.mrb[0].mxu0
        %1607 = vmatprep.mubr.bf16.mxu0 0
        %1608 = vmatmul.mubr.bf16.gmra.mrb[0].mxu0 %v1488
        %v1609 = vpop.f32.mrb[0].mxu0
        %v1610 = vadd.f32 0.0, %v1609
        %v1611 = vpop.f32.mrb[0].mxu0
        %v1612 = vpop.f32.mrb[0].mxu0
        %v1613 = vadd.f32 0.0, %v1612
        %v1614 = vpop.f32.mrb[0].mxu0
        %1615 = vmatprep.mubr.bf16.mxu0 0
        %1616 = vmatmul.mubr.bf16.gmra.mrb[0].mxu0 %v1489
        %v1617 = vpop.f32.mrb[0].mxu0
        %v1618 = vadd.f32 0.0, %v1617
        %v1619 = vpop.f32.mrb[0].mxu0
        %v1620 = vpop.f32.mrb[0].mxu0
        %v1621 = vadd.f32 0.0, %v1620
        %v1622 = vpop.f32.mrb[0].mxu0
        %1623 = vmatprep.mubr.bf16.mxu0 0
        %1624 = vmatmul.mubr.bf16.gmra.mrb[0].mxu0 %v1490
        %v1625 = vpop.f32.mrb[0].mxu0
        %v1626 = vadd.f32 0.0, %v1625
        %v1627 = vpop.f32.mrb[0].mxu0
        %v1628 = vpop.f32.mrb[0].mxu0
        %v1629 = vadd.f32 0.0, %v1628
        %v1630 = vpop.f32.mrb[0].mxu0
        %1631 = vmatprep.mubr.bf16.mxu0 0
        %1632 = vmatmul.mubr.bf16.gmra.mrb[0].mxu0 %v1491
        %v1633 = vpop.f32.mrb[0].mxu0
        %v1634 = vadd.f32 0.0, %v1633
        %v1635 = vpop.f32.mrb[0].mxu0
        %v1636 = vpop.f32.mrb[0].mxu0
        %v1637 = vadd.f32 0.0, %v1636
        %v1638 = vpop.f32.mrb[0].mxu0
        %1639 = vmatprep.mubr.bf16.mxu0 0
        %1640 = vmatmul.mubr.bf16.gmra.mrb[0].mxu0 %v1492
        %v1641 = vpop.f32.mrb[0].mxu0
        %v1642 = vadd.f32 0.0, %v1641
        %v1643 = vpop.f32.mrb[0].mxu0
        %v1644 = vpop.f32.mrb[0].mxu0
        %v1645 = vadd.f32 0.0, %v1644
        %v1646 = vpop.f32.mrb[0].mxu0
        %1647 = vmatprep.mubr.bf16.mxu0 0
        %1648 = vmatmul.mubr.bf16.gmra.mrb[0].mxu0 %v1493
        %v1649 = vpop.f32.mrb[0].mxu0
        %v1650 = vadd.f32 0.0, %v1649
        %v1651 = vpop.f32.mrb[0].mxu0
        %v1652 = vpop.f32.mrb[0].mxu0
        %v1653 = vadd.f32 0.0, %v1652
        %v1654 = vpop.f32.mrb[0].mxu0
        %1655 = vmatprep.mubr.bf16.mxu0 0
        %1656 = vmatmul.mubr.bf16.gmra.mrb[0].mxu0 %v1494
        %v1657 = vpop.f32.mrb[0].mxu0
        %v1658 = vadd.f32 0.0, %v1657
        %v1659 = vpop.f32.mrb[0].mxu0
        %v1660 = vpop.f32.mrb[0].mxu0
        %v1661 = vadd.f32 0.0, %v1660
        %v1662 = vpop.f32.mrb[0].mxu0
        %1663 = vmatprep.mubr.bf16.mxu0 0
        %1664 = vmatmul.mubr.bf16.gmra.mrb[0].mxu0 %v1495
        %v1665 = vpop.f32.mrb[0].mxu0
        %v1666 = vadd.f32 0.0, %v1665
        %v1667 = vpop.f32.mrb[0].mxu0
        %v1668 = vpop.f32.mrb[0].mxu0
        %v1669 = vadd.f32 0.0, %v1668
        %v1670 = vpop.f32.mrb[0].mxu0
        %1671 = vmatprep.mubr.bf16.mxu0 0
        %1672 = vmatmul.mubr.bf16.gmra.mrb[0].mxu0 %v1496
        %v1673 = vpop.f32.mrb[0].mxu0
        %v1674 = vadd.f32 0.0, %v1673
        %v1675 = vpop.f32.mrb[0].mxu0
        %v1676 = vpop.f32.mrb[0].mxu0
        %v1677 = vadd.f32 0.0, %v1676
        %v1678 = vpop.f32.mrb[0].mxu0
        %1679 = vmatprep.mubr.bf16.mxu0 0
        %1680 = vmatmul.mubr.bf16.gmra.mrb[0].mxu0 %v1497
        %v1681 = vpop.f32.mrb[0].mxu0
        %v1682 = vadd.f32 0.0, %v1681
        %v1683 = vpop.f32.mrb[0].mxu0
        %v1684 = vpop.f32.mrb[0].mxu0
        %v1685 = vadd.f32 0.0, %v1684
        %v1686 = vpop.f32.mrb[0].mxu0
        %1687 = vmatprep.mubr.bf16.mxu0 0
        %1688 = vmatmul.mubr.bf16.gmra.mrb[0].mxu0 %v1498
        %v1689 = vpop.f32.mrb[0].mxu0
        %v1690 = vadd.f32 0.0, %v1689
        %v1691 = vpop.f32.mrb[0].mxu0
        %v1692 = vpop.f32.mrb[0].mxu0
        %v1693 = vadd.f32 0.0, %v1692
        %v1694 = vpop.f32.mrb[0].mxu0
        %1695 = vmatprep.mubr.bf16.mxu0 0
        %1696 = vmatmul.mubr.bf16.gmra.mrb[0].mxu0 %v1499
        %v1697 = vpop.f32.mrb[0].mxu0
        %v1698 = vadd.f32 0.0, %v1697
        %v1699 = vpop.f32.mrb[0].mxu0
        %v1700 = vpop.f32.mrb[0].mxu0
        %v1701 = vadd.f32 0.0, %v1700
        %v1702 = vpop.f32.mrb[0].mxu0
        %1703 = vmatprep.mubr.bf16.mxu0 0
        %1704 = vmatmul.mubr.bf16.gmra.mrb[0].mxu0 %v1500
        %v1705 = vpop.f32.mrb[0].mxu0
        %v1706 = vadd.f32 0.0, %v1705
        %v1707 = vpop.f32.mrb[0].mxu0
        %v1708 = vpop.f32.mrb[0].mxu0
        %v1709 = vadd.f32 0.0, %v1708
        %v1710 = vpop.f32.mrb[0].mxu0
        %1711 = vmatprep.mubr.bf16.mxu0 0
        %1712 = vmatmul.mubr.bf16.gmra.mrb[0].mxu0 %v1501
        %v1713 = vpop.f32.mrb[0].mxu0
        %v1714 = vadd.f32 0.0, %v1713
        %v1715 = vpop.f32.mrb[0].mxu0
        %v1716 = vpop.f32.mrb[0].mxu0
        %v1717 = vadd.f32 0.0, %v1716
        %v1718 = vpop.f32.mrb[0].mxu0
        %1719 = vmatprep.mubr.bf16.mxu0 0
        %1720 = vmatmul.mubr.bf16.gmra.mrb[0].mxu0 %v1502
        %v1721 = vpop.f32.mrb[0].mxu0
        %v1722 = vadd.f32 0.0, %v1721
        %v1723 = vpop.f32.mrb[0].mxu0
        %v1724 = vpop.f32.mrb[0].mxu0
        %v1725 = vadd.f32 0.0, %v1724
        %v1726 = vpop.f32.mrb[0].mxu0
        %1727 = vdwg.mxu0
        %v1728 = vadd.f32 %v971, %v1602
        %v1729 = vadd.f32 %v972, %v1605
        %v1730 = vadd.f32 %v973, %v1610
        %v1731 = vadd.f32 %v974, %v1613
        %v1732 = vadd.f32 %v975, %v1618
        %v1733 = vadd.f32 %v976, %v1621
        %v1734 = vadd.f32 %v977, %v1626
        %v1735 = vadd.f32 %v978, %v1629
        %v1736 = vadd.f32 %v979, %v1634
        %v1737 = vadd.f32 %v980, %v1637
        %v1738 = vadd.f32 %v981, %v1642
        %v1739 = vadd.f32 %v982, %v1645
        %v1740 = vadd.f32 %v983, %v1650
        %v1741 = vadd.f32 %v984, %v1653
        %v1742 = vadd.f32 %v985, %v1658
        %v1743 = vadd.f32 %v986, %v1661
        %v1744 = vadd.f32 %v987, %v1666
        %v1745 = vadd.f32 %v988, %v1669
        %v1746 = vadd.f32 %v989, %v1674
        %v1747 = vadd.f32 %v990, %v1677
        %v1748 = vadd.f32 %v991, %v1682
        %v1749 = vadd.f32 %v992, %v1685
        %v1750 = vadd.f32 %v993, %v1690
        %v1751 = vadd.f32 %v994, %v1693
        %v1752 = vadd.f32 %v995, %v1698
        %v1753 = vadd.f32 %v996, %v1701
        %v1754 = vadd.f32 %v997, %v1706
        %v1755 = vadd.f32 %v998, %v1709
        %v1756 = vadd.f32 %v999, %v1714
        %v1757 = vadd.f32 %v1000, %v1717
        %v1758 = vadd.f32 %v1001, %v1722
        %v1759 = vadd.f32 %v1002, %v1725
        %1760 = vst [vmem:[#allocation3] sm:$0xff] %v1728
        %1761 = vst [vmem:[#allocation3 + $0x8] sm:$0xff] %v1729
        %1762 = vst [vmem:[#allocation3 + $0x10] sm:$0xff] %v1730
        %1763 = vst [vmem:[#allocation3 + $0x18] sm:$0xff] %v1731
        %1764 = vst [vmem:[#allocation3 + $0x20] sm:$0xff] %v1732
        %1765 = vst [vmem:[#allocation3 + $0x28] sm:$0xff] %v1733
        %1766 = vst [vmem:[#allocation3 + $0x30] sm:$0xff] %v1734
        %1767 = vst [vmem:[#allocation3 + $0x38] sm:$0xff] %v1735
        %1768 = vst [vmem:[#allocation3 + $0x40] sm:$0xff] %v1736
        %1769 = vst [vmem:[#allocation3 + $0x48] sm:$0xff] %v1737
        %1770 = vst [vmem:[#allocation3 + $0x50] sm:$0xff] %v1738
        %1771 = vst [vmem:[#allocation3 + $0x58] sm:$0xff] %v1739
        %1772 = vst [vmem:[#allocation3 + $0x60] sm:$0xff] %v1740
        %1773 = vst [vmem:[#allocation3 + $0x68] sm:$0xff] %v1741
        %1774 = vst [vmem:[#allocation3 + $0x70] sm:$0xff] %v1742
        %1775 = vst [vmem:[#allocation3 + $0x78] sm:$0xff] %v1743
        %1776 = vst [vmem:[#allocation3 + $0x80] sm:$0xff] %v1744
        %1777 = vst [vmem:[#allocation3 + $0x88] sm:$0xff] %v1745
        %1778 = vst [vmem:[#allocation3 + $0x90] sm:$0xff] %v1746
        %1779 = vst [vmem:[#allocation3 + $0x98] sm:$0xff] %v1747
        %1780 = vst [vmem:[#allocation3 + $0xa0] sm:$0xff] %v1748
        %1781 = vst [vmem:[#allocation3 + $0xa8] sm:$0xff] %v1749
        %1782 = vst [vmem:[#allocation3 + $0xb0] sm:$0xff] %v1750
        %1783 = vst [vmem:[#allocation3 + $0xb8] sm:$0xff] %v1751
        %1784 = vst [vmem:[#allocation3 + $0xc0] sm:$0xff] %v1752
        %1785 = vst [vmem:[#allocation3 + $0xc8] sm:$0xff] %v1753
        %1786 = vst [vmem:[#allocation3 + $0xd0] sm:$0xff] %v1754
        %1787 = vst [vmem:[#allocation3 + $0xd8] sm:$0xff] %v1755
        %1788 = vst [vmem:[#allocation3 + $0xe0] sm:$0xff] %v1756
        %1789 = vst [vmem:[#allocation3 + $0xe8] sm:$0xff] %v1757
        %1790 = vst [vmem:[#allocation3 + $0xf0] sm:$0xff] %v1758
        %1791 = vst [vmem:[#allocation3 + $0xf8] sm:$0xff] %v1759
        %v1792 = vld [vmem:[#allocation3] sm:$0xff]
        %v1793 = vld [vmem:[#allocation3 + $0x8] sm:$0xff]
        %v1794 = vld [vmem:[#allocation3 + $0x10] sm:$0xff]
        %v1795 = vld [vmem:[#allocation3 + $0x18] sm:$0xff]
        %v1796 = vld [vmem:[#allocation3 + $0x20] sm:$0xff]
        %v1797 = vld [vmem:[#allocation3 + $0x28] sm:$0xff]
        %v1798 = vld [vmem:[#allocation3 + $0x30] sm:$0xff]
        %v1799 = vld [vmem:[#allocation3 + $0x38] sm:$0xff]
        %v1800 = vld [vmem:[#allocation3 + $0x40] sm:$0xff]
        %v1801 = vld [vmem:[#allocation3 + $0x48] sm:$0xff]
        %v1802 = vld [vmem:[#allocation3 + $0x50] sm:$0xff]
        %v1803 = vld [vmem:[#allocation3 + $0x58] sm:$0xff]
        %v1804 = vld [vmem:[#allocation3 + $0x60] sm:$0xff]
        %v1805 = vld [vmem:[#allocation3 + $0x68] sm:$0xff]
        %v1806 = vld [vmem:[#allocation3 + $0x70] sm:$0xff]
        %v1807 = vld [vmem:[#allocation3 + $0x78] sm:$0xff]
        %v1808 = vld [vmem:[#allocation3 + $0x80] sm:$0xff]
        %v1809 = vld [vmem:[#allocation3 + $0x88] sm:$0xff]
        %v1810 = vld [vmem:[#allocation3 + $0x90] sm:$0xff]
        %v1811 = vld [vmem:[#allocation3 + $0x98] sm:$0xff]
        %v1812 = vld [vmem:[#allocation3 + $0xa0] sm:$0xff]
        %v1813 = vld [vmem:[#allocation3 + $0xa8] sm:$0xff]
        %v1814 = vld [vmem:[#allocation3 + $0xb0] sm:$0xff]
        %v1815 = vld [vmem:[#allocation3 + $0xb8] sm:$0xff]
        %v1816 = vld [vmem:[#allocation3 + $0xc0] sm:$0xff]
        %v1817 = vld [vmem:[#allocation3 + $0xc8] sm:$0xff]
        %v1818 = vld [vmem:[#allocation3 + $0xd0] sm:$0xff]
        %v1819 = vld [vmem:[#allocation3 + $0xd8] sm:$0xff]
        %v1820 = vld [vmem:[#allocation3 + $0xe0] sm:$0xff]
        %v1821 = vld [vmem:[#allocation3 + $0xe8] sm:$0xff]
        %v1822 = vld [vmem:[#allocation3 + $0xf0] sm:$0xff]
        %v1823 = vld [vmem:[#allocation3 + $0xf8] sm:$0xff]
        %v1824 = vld [vmem:[#allocation2] sm:$0xe]
        %v1825 = vld [vmem:[#allocation2 + $0x4] sm:$0xf]
        %v1826 = vld [vmem:[#allocation2 + $0x8] sm:$0x1]
        %v1827 = vld [vmem:[#allocation2 + $0xc] sm:$0xe]
        %v1828 = vld [vmem:[#allocation2 + $0x10] sm:$0xf]
        %v1829 = vld [vmem:[#allocation2 + $0x14] sm:$0x1]
        %v1830 = vld [vmem:[#allocation2 + $0x18] sm:$0xe]
        %v1831 = vld [vmem:[#allocation2 + $0x1c] sm:$0xf]
        %v1832 = vld [vmem:[#allocation2 + $0x20] sm:$0x1]
        %v1833 = vld [vmem:[#allocation2 + $0x24] sm:$0xe]
        %v1834 = vld [vmem:[#allocation2 + $0x28] sm:$0xf]
        %v1835 = vld [vmem:[#allocation2 + $0x2c] sm:$0x1]
        %v1836 = vld [vmem:[#allocation2 + $0x30] sm:$0xe]
        %v1837 = vld [vmem:[#allocation2 + $0x34] sm:$0xf]
        %v1838 = vld [vmem:[#allocation2 + $0x38] sm:$0x1]
        %v1839 = vld [vmem:[#allocation2 + $0x3c] sm:$0xe]
        %v1840 = vld [vmem:[#allocation2 + $0x40] sm:$0xf]
        %v1841 = vld [vmem:[#allocation2 + $0x44] sm:$0x1]
        %v1842 = vld [vmem:[#allocation2 + $0x48] sm:$0xe]
        %v1843 = vld [vmem:[#allocation2 + $0x4c] sm:$0xf]
        %v1844 = vld [vmem:[#allocation2 + $0x50] sm:$0x1]
        %v1845 = vld [vmem:[#allocation2 + $0x54] sm:$0xe]
        %v1846 = vld [vmem:[#allocation2 + $0x58] sm:$0xf]
        %v1847 = vld [vmem:[#allocation2 + $0x5c] sm:$0x1]
        %v1848 = vld [vmem:[#allocation2 + $0x60] sm:$0xe]
        %v1849 = vld [vmem:[#allocation2 + $0x64] sm:$0xf]
        %v1850 = vld [vmem:[#allocation2 + $0x68] sm:$0x1]
        %v1851 = vld [vmem:[#allocation2 + $0x6c] sm:$0xe]
        %v1852 = vld [vmem:[#allocation2 + $0x70] sm:$0xf]
        %v1853 = vld [vmem:[#allocation2 + $0x74] sm:$0x1]
        %v1854 = vld [vmem:[#allocation2 + $0x78] sm:$0xe]
        %v1855 = vld [vmem:[#allocation2 + $0x7c] sm:$0xf]
        %v1856 = vld [vmem:[#allocation2 + $0x80] sm:$0x1]
        %v1857 = vld [vmem:[#allocation2 + $0x84] sm:$0xe]
        %v1858 = vld [vmem:[#allocation2 + $0x88] sm:$0xf]
        %v1859 = vld [vmem:[#allocation2 + $0x8c] sm:$0x1]
        %v1860 = vld [vmem:[#allocation2 + $0x90] sm:$0xe]
        %v1861 = vld [vmem:[#allocation2 + $0x94] sm:$0xf]
        %v1862 = vld [vmem:[#allocation2 + $0x98] sm:$0x1]
        %v1863 = vld [vmem:[#allocation2 + $0x9c] sm:$0xe]
        %v1864 = vld [vmem:[#allocation2 + $0xa0] sm:$0xf]
        %v1865 = vld [vmem:[#allocation2 + $0xa4] sm:$0x1]
        %v1866 = vld [vmem:[#allocation2 + $0xa8] sm:$0xe]
        %v1867 = vld [vmem:[#allocation2 + $0xac] sm:$0xf]
        %v1868 = vld [vmem:[#allocation2 + $0xb0] sm:$0x1]
        %v1869 = vld [vmem:[#allocation2 + $0xb4] sm:$0xe]
        %v1870 = vld [vmem:[#allocation2 + $0xb8] sm:$0xf]
        %v1871 = vld [vmem:[#allocation2 + $0xbc] sm:$0x1]
        %vm1920 = vcmask 1042432
        %vm1921 = vcmask 1046532
        %vm1922 = vmor %vm1920, %vm1921
        %v1923 = vrot.slane %v1824, 5
        %v1924 = vrot.slane %v1923, 4
        %v1925 = vrot.slane %v1825, 5
        %v1926 = vsel %vm1922, %v1924, %v1925
        %v1927 = vrot.slane %v1925, 4
        %v1928 = vrot.slane %v1826, 5
        %v1929 = vsel %vm1922, %v1927, %v1928
        %v1930 = vrot.slane %v1827, 5
        %v1931 = vrot.slane %v1930, 4
        %v1932 = vrot.slane %v1828, 5
        %v1933 = vsel %vm1922, %v1931, %v1932
        %v1934 = vrot.slane %v1932, 4
        %v1935 = vrot.slane %v1829, 5
        %v1936 = vsel %vm1922, %v1934, %v1935
        %v1937 = vrot.slane %v1830, 5
        %v1938 = vrot.slane %v1937, 4
        %v1939 = vrot.slane %v1831, 5
        %v1940 = vsel %vm1922, %v1938, %v1939
        %v1941 = vrot.slane %v1939, 4
        %v1942 = vrot.slane %v1832, 5
        %v1943 = vsel %vm1922, %v1941, %v1942
        %v1944 = vrot.slane %v1833, 5
        %v1945 = vrot.slane %v1944, 4
        %v1946 = vrot.slane %v1834, 5
        %v1947 = vsel %vm1922, %v1945, %v1946
        %v1948 = vrot.slane %v1946, 4
        %v1949 = vrot.slane %v1835, 5
        %v1950 = vsel %vm1922, %v1948, %v1949
        %v1951 = vrot.slane %v1836, 5
        %v1952 = vrot.slane %v1951, 4
        %v1953 = vrot.slane %v1837, 5
        %v1954 = vsel %vm1922, %v1952, %v1953
        %v1955 = vrot.slane %v1953, 4
        %v1956 = vrot.slane %v1838, 5
        %v1957 = vsel %vm1922, %v1955, %v1956
        %v1958 = vrot.slane %v1839, 5
        %v1959 = vrot.slane %v1958, 4
        %v1960 = vrot.slane %v1840, 5
        %v1961 = vsel %vm1922, %v1959, %v1960
        %v1962 = vrot.slane %v1960, 4
        %v1963 = vrot.slane %v1841, 5
        %v1964 = vsel %vm1922, %v1962, %v1963
        %v1965 = vrot.slane %v1842, 5
        %v1966 = vrot.slane %v1965, 4
        %v1967 = vrot.slane %v1843, 5
        %v1968 = vsel %vm1922, %v1966, %v1967
        %v1969 = vrot.slane %v1967, 4
        %v1970 = vrot.slane %v1844, 5
        %v1971 = vsel %vm1922, %v1969, %v1970
        %v1972 = vrot.slane %v1845, 5
        %v1973 = vrot.slane %v1972, 4
        %v1974 = vrot.slane %v1846, 5
        %v1975 = vsel %vm1922, %v1973, %v1974
        %v1976 = vrot.slane %v1974, 4
        %v1977 = vrot.slane %v1847, 5
        %v1978 = vsel %vm1922, %v1976, %v1977
        %v1979 = vrot.slane %v1848, 5
        %v1980 = vrot.slane %v1979, 4
        %v1981 = vrot.slane %v1849, 5
        %v1982 = vsel %vm1922, %v1980, %v1981
        %v1983 = vrot.slane %v1981, 4
        %v1984 = vrot.slane %v1850, 5
        %v1985 = vsel %vm1922, %v1983, %v1984
        %v1986 = vrot.slane %v1851, 5
        %v1987 = vrot.slane %v1986, 4
        %v1988 = vrot.slane %v1852, 5
        %v1989 = vsel %vm1922, %v1987, %v1988
        %v1990 = vrot.slane %v1988, 4
        %v1991 = vrot.slane %v1853, 5
        %v1992 = vsel %vm1922, %v1990, %v1991
        %v1993 = vrot.slane %v1854, 5
        %v1994 = vrot.slane %v1993, 4
        %v1995 = vrot.slane %v1855, 5
        %v1996 = vsel %vm1922, %v1994, %v1995
        %v1997 = vrot.slane %v1995, 4
        %v1998 = vrot.slane %v1856, 5
        %v1999 = vsel %vm1922, %v1997, %v1998
        %v2000 = vrot.slane %v1857, 5
        %v2001 = vrot.slane %v2000, 4
        %v2002 = vrot.slane %v1858, 5
        %v2003 = vsel %vm1922, %v2001, %v2002
        %v2004 = vrot.slane %v2002, 4
        %v2005 = vrot.slane %v1859, 5
        %v2006 = vsel %vm1922, %v2004, %v2005
        %v2007 = vrot.slane %v1860, 5
        %v2008 = vrot.slane %v2007, 4
        %v2009 = vrot.slane %v1861, 5
        %v2010 = vsel %vm1922, %v2008, %v2009
        %v2011 = vrot.slane %v2009, 4
        %v2012 = vrot.slane %v1862, 5
        %v2013 = vsel %vm1922, %v2011, %v2012
        %v2014 = vrot.slane %v1863, 5
        %v2015 = vrot.slane %v2014, 4
        %v2016 = vrot.slane %v1864, 5
        %v2017 = vsel %vm1922, %v2015, %v2016
        %v2018 = vrot.slane %v2016, 4
        %v2019 = vrot.slane %v1865, 5
        %v2020 = vsel %vm1922, %v2018, %v2019
        %v2021 = vrot.slane %v1866, 5
        %v2022 = vrot.slane %v2021, 4
        %v2023 = vrot.slane %v1867, 5
        %v2024 = vsel %vm1922, %v2022, %v2023
        %v2025 = vrot.slane %v2023, 4
        %v2026 = vrot.slane %v1868, 5
        %v2027 = vsel %vm1922, %v2025, %v2026
        %v2028 = vrot.slane %v1869, 5
        %v2029 = vrot.slane %v2028, 4
        %v2030 = vrot.slane %v1870, 5
        %v2031 = vsel %vm1922, %v2029, %v2030
        %v2032 = vrot.slane %v2030, 4
        %v2033 = vrot.slane %v1871, 5
        %v2034 = vsel %vm1922, %v2032, %v2033
        %s2035 = scalar_lea.vmem %s3, 128
        %v2036 = vld [vmem:[%s2035] sm:$0xf]
        %v2037 = vld [vmem:[%s2035 + $0x4] sm:$0xf]
        %v2038 = vld [vmem:[%s2035 + $0x8] sm:$0xf]
        %v2039 = vld [vmem:[%s2035 + $0xc] sm:$0xf]
        %v2040 = vld [vmem:[%s2035 + $0x10] sm:$0xf]
        %v2041 = vld [vmem:[%s2035 + $0x14] sm:$0xf]
        %v2042 = vld [vmem:[%s2035 + $0x18] sm:$0xf]
        %v2043 = vld [vmem:[%s2035 + $0x1c] sm:$0xf]
        %v2044 = vld [vmem:[%s2035 + $0x20] sm:$0xf]
        %v2045 = vld [vmem:[%s2035 + $0x24] sm:$0xf]
        %v2046 = vld [vmem:[%s2035 + $0x28] sm:$0xf]
        %v2047 = vld [vmem:[%s2035 + $0x2c] sm:$0xf]
        %v2048 = vld [vmem:[%s2035 + $0x30] sm:$0xf]
        %v2049 = vld [vmem:[%s2035 + $0x34] sm:$0xf]
        %v2050 = vld [vmem:[%s2035 + $0x38] sm:$0xf]
        %v2051 = vld [vmem:[%s2035 + $0x3c] sm:$0xf]
        %v2052 = vunpack.c.l.b16 %v1926
        %v2053 = vunpack.c.l.b16 %v1929
        %v2054 = vunpack.c.l.b16 %v1933
        %v2055 = vunpack.c.l.b16 %v1936
        %v2056 = vunpack.c.l.b16 %v1940
        %v2057 = vunpack.c.l.b16 %v1943
        %v2058 = vunpack.c.l.b16 %v1947
        %v2059 = vunpack.c.l.b16 %v1950
        %v2060 = vunpack.c.l.b16 %v1954
        %v2061 = vunpack.c.l.b16 %v1957
        %v2062 = vunpack.c.l.b16 %v1961
        %v2063 = vunpack.c.l.b16 %v1964
        %v2064 = vunpack.c.l.b16 %v1968
        %v2065 = vunpack.c.l.b16 %v1971
        %v2066 = vunpack.c.l.b16 %v1975
        %v2067 = vunpack.c.l.b16 %v1978
        %v2068 = vunpack.c.l.b16 %v1982
        %v2069 = vunpack.c.l.b16 %v1985
        %v2070 = vunpack.c.l.b16 %v1989
        %v2071 = vunpack.c.l.b16 %v1992
        %v2072 = vunpack.c.l.b16 %v1996
        %v2073 = vunpack.c.l.b16 %v1999
        %v2074 = vunpack.c.l.b16 %v2003
        %v2075 = vunpack.c.l.b16 %v2006
        %v2076 = vunpack.c.l.b16 %v2010
        %v2077 = vunpack.c.l.b16 %v2013
        %v2078 = vunpack.c.l.b16 %v2017
        %v2079 = vunpack.c.l.b16 %v2020
        %v2080 = vunpack.c.l.b16 %v2024
        %v2081 = vunpack.c.l.b16 %v2027
        %v2082 = vunpack.c.l.b16 %v2031
        %v2083 = vunpack.c.l.b16 %v2034
        %v2084 = vpack.c.b16 %v2053, %v2052
        %v2085 = vpack.c.b16 %v2055, %v2054
        %v2086 = vpack.c.b16 %v2057, %v2056
        %v2087 = vpack.c.b16 %v2059, %v2058
        %v2088 = vpack.c.b16 %v2061, %v2060
        %v2089 = vpack.c.b16 %v2063, %v2062
        %v2090 = vpack.c.b16 %v2065, %v2064
        %v2091 = vpack.c.b16 %v2067, %v2066
        %v2092 = vpack.c.b16 %v2069, %v2068
        %v2093 = vpack.c.b16 %v2071, %v2070
        %v2094 = vpack.c.b16 %v2073, %v2072
        %v2095 = vpack.c.b16 %v2075, %v2074
        %v2096 = vpack.c.b16 %v2077, %v2076
        %v2097 = vpack.c.b16 %v2079, %v2078
        %v2098 = vpack.c.b16 %v2081, %v2080
        %v2099 = vpack.c.b16 %v2083, %v2082
        %v2132 = vunpack.c.l.b16 %v2036
        %v2133 = vunpack.c.l.b16 %v2037
        %v2134 = vunpack.c.l.b16 %v2038
        %v2135 = vunpack.c.l.b16 %v2039
        %v2136 = vunpack.c.l.b16 %v2040
        %v2137 = vunpack.c.l.b16 %v2041
        %v2138 = vunpack.c.l.b16 %v2042
        %v2139 = vunpack.c.l.b16 %v2043
        %v2140 = vunpack.c.l.b16 %v2044
        %v2141 = vunpack.c.l.b16 %v2045
        %v2142 = vunpack.c.l.b16 %v2046
        %v2143 = vunpack.c.l.b16 %v2047
        %v2144 = vunpack.c.l.b16 %v2048
        %v2145 = vunpack.c.l.b16 %v2049
        %v2146 = vunpack.c.l.b16 %v2050
        %v2147 = vunpack.c.l.b16 %v2051
        %v2148 = vpack.c.b16 %v2133, %v2132
        %v2149 = vpack.c.b16 %v2135, %v2134
        %v2150 = vpack.c.b16 %v2137, %v2136
        %v2151 = vpack.c.b16 %v2139, %v2138
        %v2152 = vpack.c.b16 %v2141, %v2140
        %v2153 = vpack.c.b16 %v2143, %v2142
        %v2154 = vpack.c.b16 %v2145, %v2144
        %v2155 = vpack.c.b16 %v2147, %v2146
        %2164 = vmatprep.subr.bf16.mxu0 0
        %2165 = vmatpush1.bf16.msra.mxu0 %v2148
        %2166 = vmatprep.subr.bf16.mxu0 0
        %2167 = vmatpush1.bf16.msra.mxu0 %v2149
        %2168 = vmatprep.subr.bf16.mxu0 0
        %2169 = vmatpush1.bf16.msra.mxu0 %v2150
        %2170 = vmatprep.subr.bf16.mxu0 0
        %2171 = vmatpush1.bf16.msra.mxu0 %v2151
        %2172 = vmatprep.subr.bf16.mxu0 0
        %2173 = vmatpush1.bf16.msra.mxu0 %v2152
        %2174 = vmatprep.subr.bf16.mxu0 0
        %2175 = vmatpush1.bf16.msra.mxu0 %v2153
        %2176 = vmatprep.subr.bf16.mxu0 0
        %2177 = vmatpush1.bf16.msra.mxu0 %v2154
        %2178 = vmatprep.subr.bf16.mxu0 0
        %2179 = vmatpush1.bf16.msra.mxu0 %v2155
        %2180 = vmatprep.subr.bf16.mxu0 0
        %2181 = vmatpush1.bf16.msra.mxu0 0
        %2182 = vmatprep.subr.bf16.mxu0 0
        %2183 = vmatpush1.bf16.msra.mxu0 0
        %2184 = vmatprep.subr.bf16.mxu0 0
        %2185 = vmatpush1.bf16.msra.mxu0 0
        %2186 = vmatprep.subr.bf16.mxu0 0
        %2187 = vmatpush1.bf16.msra.mxu0 0
        %2188 = vmatprep.subr.bf16.mxu0 0
        %2189 = vmatpush1.bf16.msra.mxu0 0
        %2190 = vmatprep.subr.bf16.mxu0 0
        %2191 = vmatpush1.bf16.msra.mxu0 0
        %2192 = vmatprep.subr.bf16.mxu0 0
        %2193 = vmatpush1.bf16.msra.mxu0 0
        %2194 = vmatprep.subr.bf16.mxu0 0
        %2195 = vmatpush1.bf16.msra.mxu0 0
        %2196 = vmatprep.mubr.bf16.mxu0 0
        %2197 = vmatmul.mubr.bf16.gmra.mrb[0].mxu0 %v2084
        %v2198 = vpop.f32.mrb[0].mxu0
        %v2199 = vadd.f32 0.0, %v2198
        %v2200 = vpop.f32.mrb[0].mxu0
        %v2201 = vpop.f32.mrb[0].mxu0
        %v2202 = vadd.f32 0.0, %v2201
        %v2203 = vpop.f32.mrb[0].mxu0
        %2204 = vmatprep.mubr.bf16.mxu0 0
        %2205 = vmatmul.mubr.bf16.gmra.mrb[0].mxu0 %v2085
        %v2206 = vpop.f32.mrb[0].mxu0
        %v2207 = vadd.f32 0.0, %v2206
        %v2208 = vpop.f32.mrb[0].mxu0
        %v2209 = vpop.f32.mrb[0].mxu0
        %v2210 = vadd.f32 0.0, %v2209
        %v2211 = vpop.f32.mrb[0].mxu0
        %2212 = vmatprep.mubr.bf16.mxu0 0
        %2213 = vmatmul.mubr.bf16.gmra.mrb[0].mxu0 %v2086
        %v2214 = vpop.f32.mrb[0].mxu0
        %v2215 = vadd.f32 0.0, %v2214
        %v2216 = vpop.f32.mrb[0].mxu0
        %v2217 = vpop.f32.mrb[0].mxu0
        %v2218 = vadd.f32 0.0, %v2217
        %v2219 = vpop.f32.mrb[0].mxu0
        %2220 = vmatprep.mubr.bf16.mxu0 0
        %2221 = vmatmul.mubr.bf16.gmra.mrb[0].mxu0 %v2087
        %v2222 = vpop.f32.mrb[0].mxu0
        %v2223 = vadd.f32 0.0, %v2222
        %v2224 = vpop.f32.mrb[0].mxu0
        %v2225 = vpop.f32.mrb[0].mxu0
        %v2226 = vadd.f32 0.0, %v2225
        %v2227 = vpop.f32.mrb[0].mxu0
        %2228 = vmatprep.mubr.bf16.mxu0 0
        %2229 = vmatmul.mubr.bf16.gmra.mrb[0].mxu0 %v2088
        %v2230 = vpop.f32.mrb[0].mxu0
        %v2231 = vadd.f32 0.0, %v2230
        %v2232 = vpop.f32.mrb[0].mxu0
        %v2233 = vpop.f32.mrb[0].mxu0
        %v2234 = vadd.f32 0.0, %v2233
        %v2235 = vpop.f32.mrb[0].mxu0
        %2236 = vmatprep.mubr.bf16.mxu0 0
        %2237 = vmatmul.mubr.bf16.gmra.mrb[0].mxu0 %v2089
        %v2238 = vpop.f32.mrb[0].mxu0
        %v2239 = vadd.f32 0.0, %v2238
        %v2240 = vpop.f32.mrb[0].mxu0
        %v2241 = vpop.f32.mrb[0].mxu0
        %v2242 = vadd.f32 0.0, %v2241
        %v2243 = vpop.f32.mrb[0].mxu0
        %2244 = vmatprep.mubr.bf16.mxu0 0
        %2245 = vmatmul.mubr.bf16.gmra.mrb[0].mxu0 %v2090
        %v2246 = vpop.f32.mrb[0].mxu0
        %v2247 = vadd.f32 0.0, %v2246
        %v2248 = vpop.f32.mrb[0].mxu0
        %v2249 = vpop.f32.mrb[0].mxu0
        %v2250 = vadd.f32 0.0, %v2249
        %v2251 = vpop.f32.mrb[0].mxu0
        %2252 = vmatprep.mubr.bf16.mxu0 0
        %2253 = vmatmul.mubr.bf16.gmra.mrb[0].mxu0 %v2091
        %v2254 = vpop.f32.mrb[0].mxu0
        %v2255 = vadd.f32 0.0, %v2254
        %v2256 = vpop.f32.mrb[0].mxu0
        %v2257 = vpop.f32.mrb[0].mxu0
        %v2258 = vadd.f32 0.0, %v2257
        %v2259 = vpop.f32.mrb[0].mxu0
        %2260 = vmatprep.mubr.bf16.mxu0 0
        %2261 = vmatmul.mubr.bf16.gmra.mrb[0].mxu0 %v2092
        %v2262 = vpop.f32.mrb[0].mxu0
        %v2263 = vadd.f32 0.0, %v2262
        %v2264 = vpop.f32.mrb[0].mxu0
        %v2265 = vpop.f32.mrb[0].mxu0
        %v2266 = vadd.f32 0.0, %v2265
        %v2267 = vpop.f32.mrb[0].mxu0
        %2268 = vmatprep.mubr.bf16.mxu0 0
        %2269 = vmatmul.mubr.bf16.gmra.mrb[0].mxu0 %v2093
        %v2270 = vpop.f32.mrb[0].mxu0
        %v2271 = vadd.f32 0.0, %v2270
        %v2272 = vpop.f32.mrb[0].mxu0
        %v2273 = vpop.f32.mrb[0].mxu0
        %v2274 = vadd.f32 0.0, %v2273
        %v2275 = vpop.f32.mrb[0].mxu0
        %2276 = vmatprep.mubr.bf16.mxu0 0
        %2277 = vmatmul.mubr.bf16.gmra.mrb[0].mxu0 %v2094
        %v2278 = vpop.f32.mrb[0].mxu0
        %v2279 = vadd.f32 0.0, %v2278
        %v2280 = vpop.f32.mrb[0].mxu0
        %v2281 = vpop.f32.mrb[0].mxu0
        %v2282 = vadd.f32 0.0, %v2281
        %v2283 = vpop.f32.mrb[0].mxu0
        %2284 = vmatprep.mubr.bf16.mxu0 0
        %2285 = vmatmul.mubr.bf16.gmra.mrb[0].mxu0 %v2095
        %v2286 = vpop.f32.mrb[0].mxu0
        %v2287 = vadd.f32 0.0, %v2286
        %v2288 = vpop.f32.mrb[0].mxu0
        %v2289 = vpop.f32.mrb[0].mxu0
        %v2290 = vadd.f32 0.0, %v2289
        %v2291 = vpop.f32.mrb[0].mxu0
        %2292 = vmatprep.mubr.bf16.mxu0 0
        %2293 = vmatmul.mubr.bf16.gmra.mrb[0].mxu0 %v2096
        %v2294 = vpop.f32.mrb[0].mxu0
        %v2295 = vadd.f32 0.0, %v2294
        %v2296 = vpop.f32.mrb[0].mxu0
        %v2297 = vpop.f32.mrb[0].mxu0
        %v2298 = vadd.f32 0.0, %v2297
        %v2299 = vpop.f32.mrb[0].mxu0
        %2300 = vmatprep.mubr.bf16.mxu0 0
        %2301 = vmatmul.mubr.bf16.gmra.mrb[0].mxu0 %v2097
        %v2302 = vpop.f32.mrb[0].mxu0
        %v2303 = vadd.f32 0.0, %v2302
        %v2304 = vpop.f32.mrb[0].mxu0
        %v2305 = vpop.f32.mrb[0].mxu0
        %v2306 = vadd.f32 0.0, %v2305
        %v2307 = vpop.f32.mrb[0].mxu0
        %2308 = vmatprep.mubr.bf16.mxu0 0
        %2309 = vmatmul.mubr.bf16.gmra.mrb[0].mxu0 %v2098
        %v2310 = vpop.f32.mrb[0].mxu0
        %v2311 = vadd.f32 0.0, %v2310
        %v2312 = vpop.f32.mrb[0].mxu0
        %v2313 = vpop.f32.mrb[0].mxu0
        %v2314 = vadd.f32 0.0, %v2313
        %v2315 = vpop.f32.mrb[0].mxu0
        %2316 = vmatprep.mubr.bf16.mxu0 0
        %2317 = vmatmul.mubr.bf16.gmra.mrb[0].mxu0 %v2099
        %v2318 = vpop.f32.mrb[0].mxu0
        %v2319 = vadd.f32 0.0, %v2318
        %v2320 = vpop.f32.mrb[0].mxu0
        %v2321 = vpop.f32.mrb[0].mxu0
        %v2322 = vadd.f32 0.0, %v2321
        %v2323 = vpop.f32.mrb[0].mxu0
        %2324 = vdwg.mxu0
        %v2325 = vadd.f32 %v1792, %v2199
        %v2326 = vadd.f32 %v1793, %v2202
        %v2327 = vadd.f32 %v1794, %v2207
        %v2328 = vadd.f32 %v1795, %v2210
        %v2329 = vadd.f32 %v1796, %v2215
        %v2330 = vadd.f32 %v1797, %v2218
        %v2331 = vadd.f32 %v1798, %v2223
        %v2332 = vadd.f32 %v1799, %v2226
        %v2333 = vadd.f32 %v1800, %v2231
        %v2334 = vadd.f32 %v1801, %v2234
        %v2335 = vadd.f32 %v1802, %v2239
        %v2336 = vadd.f32 %v1803, %v2242
        %v2337 = vadd.f32 %v1804, %v2247
        %v2338 = vadd.f32 %v1805, %v2250
        %v2339 = vadd.f32 %v1806, %v2255
        %v2340 = vadd.f32 %v1807, %v2258
        %v2341 = vadd.f32 %v1808, %v2263
        %v2342 = vadd.f32 %v1809, %v2266
        %v2343 = vadd.f32 %v1810, %v2271
        %v2344 = vadd.f32 %v1811, %v2274
        %v2345 = vadd.f32 %v1812, %v2279
        %v2346 = vadd.f32 %v1813, %v2282
        %v2347 = vadd.f32 %v1814, %v2287
        %v2348 = vadd.f32 %v1815, %v2290
        %v2349 = vadd.f32 %v1816, %v2295
        %v2350 = vadd.f32 %v1817, %v2298
        %v2351 = vadd.f32 %v1818, %v2303
        %v2352 = vadd.f32 %v1819, %v2306
        %v2353 = vadd.f32 %v1820, %v2311
        %v2354 = vadd.f32 %v1821, %v2314
        %v2355 = vadd.f32 %v1822, %v2319
        %v2356 = vadd.f32 %v1823, %v2322
        %2357 = vst [vmem:[#allocation3] sm:$0xff] %v2325
        %2358 = vst [vmem:[#allocation3 + $0x8] sm:$0xff] %v2326
        %2359 = vst [vmem:[#allocation3 + $0x10] sm:$0xff] %v2327
        %2360 = vst [vmem:[#allocation3 + $0x18] sm:$0xff] %v2328
        %2361 = vst [vmem:[#allocation3 + $0x20] sm:$0xff] %v2329
        %2362 = vst [vmem:[#allocation3 + $0x28] sm:$0xff] %v2330
        %2363 = vst [vmem:[#allocation3 + $0x30] sm:$0xff] %v2331
        %2364 = vst [vmem:[#allocation3 + $0x38] sm:$0xff] %v2332
        %2365 = vst [vmem:[#allocation3 + $0x40] sm:$0xff] %v2333
        %2366 = vst [vmem:[#allocation3 + $0x48] sm:$0xff] %v2334
        %2367 = vst [vmem:[#allocation3 + $0x50] sm:$0xff] %v2335
        %2368 = vst [vmem:[#allocation3 + $0x58] sm:$0xff] %v2336
        %2369 = vst [vmem:[#allocation3 + $0x60] sm:$0xff] %v2337
        %2370 = vst [vmem:[#allocation3 + $0x68] sm:$0xff] %v2338
        %2371 = vst [vmem:[#allocation3 + $0x70] sm:$0xff] %v2339
        %2372 = vst [vmem:[#allocation3 + $0x78] sm:$0xff] %v2340
        %2373 = vst [vmem:[#allocation3 + $0x80] sm:$0xff] %v2341
        %2374 = vst [vmem:[#allocation3 + $0x88] sm:$0xff] %v2342
        %2375 = vst [vmem:[#allocation3 + $0x90] sm:$0xff] %v2343
        %2376 = vst [vmem:[#allocation3 + $0x98] sm:$0xff] %v2344
        %2377 = vst [vmem:[#allocation3 + $0xa0] sm:$0xff] %v2345
        %2378 = vst [vmem:[#allocation3 + $0xa8] sm:$0xff] %v2346
        %2379 = vst [vmem:[#allocation3 + $0xb0] sm:$0xff] %v2347
        %2380 = vst [vmem:[#allocation3 + $0xb8] sm:$0xff] %v2348
        %2381 = vst [vmem:[#allocation3 + $0xc0] sm:$0xff] %v2349
        %2382 = vst [vmem:[#allocation3 + $0xc8] sm:$0xff] %v2350
        %2383 = vst [vmem:[#allocation3 + $0xd0] sm:$0xff] %v2351
        %2384 = vst [vmem:[#allocation3 + $0xd8] sm:$0xff] %v2352
        %2385 = vst [vmem:[#allocation3 + $0xe0] sm:$0xff] %v2353
        %2386 = vst [vmem:[#allocation3 + $0xe8] sm:$0xff] %v2354
        %2387 = vst [vmem:[#allocation3 + $0xf0] sm:$0xff] %v2355
        %2388 = vst [vmem:[#allocation3 + $0xf8] sm:$0xff] %v2356
        %v2389 = vld [vmem:[#allocation3] sm:$0xff]
        %v2390 = vld [vmem:[#allocation3 + $0x8] sm:$0xff]
        %v2391 = vld [vmem:[#allocation3 + $0x10] sm:$0xff]
        %v2392 = vld [vmem:[#allocation3 + $0x18] sm:$0xff]
        %v2393 = vld [vmem:[#allocation3 + $0x20] sm:$0xff]
        %v2394 = vld [vmem:[#allocation3 + $0x28] sm:$0xff]
        %v2395 = vld [vmem:[#allocation3 + $0x30] sm:$0xff]
        %v2396 = vld [vmem:[#allocation3 + $0x38] sm:$0xff]
        %v2397 = vld [vmem:[#allocation3 + $0x40] sm:$0xff]
        %v2398 = vld [vmem:[#allocation3 + $0x48] sm:$0xff]
        %v2399 = vld [vmem:[#allocation3 + $0x50] sm:$0xff]
        %v2400 = vld [vmem:[#allocation3 + $0x58] sm:$0xff]
        %v2401 = vld [vmem:[#allocation3 + $0x60] sm:$0xff]
        %v2402 = vld [vmem:[#allocation3 + $0x68] sm:$0xff]
        %v2403 = vld [vmem:[#allocation3 + $0x70] sm:$0xff]
        %v2404 = vld [vmem:[#allocation3 + $0x78] sm:$0xff]
        %v2405 = vld [vmem:[#allocation3 + $0x80] sm:$0xff]
        %v2406 = vld [vmem:[#allocation3 + $0x88] sm:$0xff]
        %v2407 = vld [vmem:[#allocation3 + $0x90] sm:$0xff]
        %v2408 = vld [vmem:[#allocation3 + $0x98] sm:$0xff]
        %v2409 = vld [vmem:[#allocation3 + $0xa0] sm:$0xff]
        %v2410 = vld [vmem:[#allocation3 + $0xa8] sm:$0xff]
        %v2411 = vld [vmem:[#allocation3 + $0xb0] sm:$0xff]
        %v2412 = vld [vmem:[#allocation3 + $0xb8] sm:$0xff]
        %v2413 = vld [vmem:[#allocation3 + $0xc0] sm:$0xff]
        %v2414 = vld [vmem:[#allocation3 + $0xc8] sm:$0xff]
        %v2415 = vld [vmem:[#allocation3 + $0xd0] sm:$0xff]
        %v2416 = vld [vmem:[#allocation3 + $0xd8] sm:$0xff]
        %v2417 = vld [vmem:[#allocation3 + $0xe0] sm:$0xff]
        %v2418 = vld [vmem:[#allocation3 + $0xe8] sm:$0xff]
        %v2419 = vld [vmem:[#allocation3 + $0xf0] sm:$0xff]
        %v2420 = vld [vmem:[#allocation3 + $0xf8] sm:$0xff]
        %v2421 = vld [vmem:[%s484] sm:$0xf]
        %v2422 = vld [vmem:[%s484 + $0x4] sm:$0xf]
        %v2423 = vld [vmem:[%s484 + $0xc] sm:$0xf]
        %v2424 = vld [vmem:[%s484 + $0x10] sm:$0xf]
        %v2425 = vld [vmem:[%s484 + $0x18] sm:$0xf]
        %v2426 = vld [vmem:[%s484 + $0x1c] sm:$0xf]
        %v2427 = vld [vmem:[%s484 + $0x24] sm:$0xf]
        %v2428 = vld [vmem:[%s484 + $0x28] sm:$0xf]
        %v2429 = vld [vmem:[%s484 + $0x30] sm:$0xf]
        %v2430 = vld [vmem:[%s484 + $0x34] sm:$0xf]
        %v2431 = vld [vmem:[%s484 + $0x3c] sm:$0xf]
        %v2432 = vld [vmem:[%s484 + $0x40] sm:$0xf]
        %v2433 = vld [vmem:[%s484 + $0x48] sm:$0xf]
        %v2434 = vld [vmem:[%s484 + $0x4c] sm:$0xf]
        %v2435 = vld [vmem:[%s484 + $0x54] sm:$0xf]
        %v2436 = vld [vmem:[%s484 + $0x58] sm:$0xf]
        %v2437 = vld [vmem:[%s484 + $0x60] sm:$0xf]
        %v2438 = vld [vmem:[%s484 + $0x64] sm:$0xf]
        %v2439 = vld [vmem:[%s484 + $0x6c] sm:$0xf]
        %v2440 = vld [vmem:[%s484 + $0x70] sm:$0xf]
        %v2441 = vld [vmem:[%s484 + $0x78] sm:$0xf]
        %v2442 = vld [vmem:[%s484 + $0x7c] sm:$0xf]
        %v2443 = vld [vmem:[%s484 + $0x84] sm:$0xf]
        %v2444 = vld [vmem:[%s484 + $0x88] sm:$0xf]
        %v2445 = vld [vmem:[%s484 + $0x90] sm:$0xf]
        %v2446 = vld [vmem:[%s484 + $0x94] sm:$0xf]
        %v2447 = vld [vmem:[%s484 + $0x9c] sm:$0xf]
        %v2448 = vld [vmem:[%s484 + $0xa0] sm:$0xf]
        %v2449 = vld [vmem:[%s484 + $0xa8] sm:$0xf]
        %v2450 = vld [vmem:[%s484 + $0xac] sm:$0xf]
        %v2451 = vld [vmem:[%s484 + $0xb4] sm:$0xf]
        %v2452 = vld [vmem:[%s484 + $0xb8] sm:$0xf]
        %s2453 = scalar_lea.vmem %s3, 192
        %v2454 = vld [vmem:[%s2453] sm:$0xf]
        %v2455 = vld [vmem:[%s2453 + $0x4] sm:$0xf]
        %v2456 = vld [vmem:[%s2453 + $0x8] sm:$0xf]
        %v2457 = vld [vmem:[%s2453 + $0xc] sm:$0xf]
        %v2458 = vld [vmem:[%s2453 + $0x10] sm:$0xf]
        %v2459 = vld [vmem:[%s2453 + $0x14] sm:$0xf]
        %v2460 = vld [vmem:[%s2453 + $0x18] sm:$0xf]
        %v2461 = vld [vmem:[%s2453 + $0x1c] sm:$0xf]
        %v2462 = vld [vmem:[%s2453 + $0x20] sm:$0xf]
        %v2463 = vld [vmem:[%s2453 + $0x24] sm:$0xf]
        %v2464 = vld [vmem:[%s2453 + $0x28] sm:$0xf]
        %v2465 = vld [vmem:[%s2453 + $0x2c] sm:$0xf]
        %v2466 = vld [vmem:[%s2453 + $0x30] sm:$0xf]
        %v2467 = vld [vmem:[%s2453 + $0x34] sm:$0xf]
        %v2468 = vld [vmem:[%s2453 + $0x38] sm:$0xf]
        %v2469 = vld [vmem:[%s2453 + $0x3c] sm:$0xf]
        %v2502 = vunpack.c.l.b16 %v2421
        %v2503 = vunpack.c.l.b16 %v2422
        %v2504 = vunpack.c.l.b16 %v2423
        %v2505 = vunpack.c.l.b16 %v2424
        %v2506 = vunpack.c.l.b16 %v2425
        %v2507 = vunpack.c.l.b16 %v2426
        %v2508 = vunpack.c.l.b16 %v2427
        %v2509 = vunpack.c.l.b16 %v2428
        %v2510 = vunpack.c.l.b16 %v2429
        %v2511 = vunpack.c.l.b16 %v2430
        %v2512 = vunpack.c.l.b16 %v2431
        %v2513 = vunpack.c.l.b16 %v2432
        %v2514 = vunpack.c.l.b16 %v2433
        %v2515 = vunpack.c.l.b16 %v2434
        %v2516 = vunpack.c.l.b16 %v2435
        %v2517 = vunpack.c.l.b16 %v2436
        %v2518 = vunpack.c.l.b16 %v2437
        %v2519 = vunpack.c.l.b16 %v2438
        %v2520 = vunpack.c.l.b16 %v2439
        %v2521 = vunpack.c.l.b16 %v2440
        %v2522 = vunpack.c.l.b16 %v2441
        %v2523 = vunpack.c.l.b16 %v2442
        %v2524 = vunpack.c.l.b16 %v2443
        %v2525 = vunpack.c.l.b16 %v2444
        %v2526 = vunpack.c.l.b16 %v2445
        %v2527 = vunpack.c.l.b16 %v2446
        %v2528 = vunpack.c.l.b16 %v2447
        %v2529 = vunpack.c.l.b16 %v2448
        %v2530 = vunpack.c.l.b16 %v2449
        %v2531 = vunpack.c.l.b16 %v2450
        %v2532 = vunpack.c.l.b16 %v2451
        %v2533 = vunpack.c.l.b16 %v2452
        %v2534 = vpack.c.b16 %v2503, %v2502
        %v2535 = vpack.c.b16 %v2505, %v2504
        %v2536 = vpack.c.b16 %v2507, %v2506
        %v2537 = vpack.c.b16 %v2509, %v2508
        %v2538 = vpack.c.b16 %v2511, %v2510
        %v2539 = vpack.c.b16 %v2513, %v2512
        %v2540 = vpack.c.b16 %v2515, %v2514
        %v2541 = vpack.c.b16 %v2517, %v2516
        %v2542 = vpack.c.b16 %v2519, %v2518
        %v2543 = vpack.c.b16 %v2521, %v2520
        %v2544 = vpack.c.b16 %v2523, %v2522
        %v2545 = vpack.c.b16 %v2525, %v2524
        %v2546 = vpack.c.b16 %v2527, %v2526
        %v2547 = vpack.c.b16 %v2529, %v2528
        %v2548 = vpack.c.b16 %v2531, %v2530
        %v2549 = vpack.c.b16 %v2533, %v2532
        %v2582 = vunpack.c.l.b16 %v2454
        %v2583 = vunpack.c.l.b16 %v2455
        %v2584 = vunpack.c.l.b16 %v2456
        %v2585 = vunpack.c.l.b16 %v2457
        %v2586 = vunpack.c.l.b16 %v2458
        %v2587 = vunpack.c.l.b16 %v2459
        %v2588 = vunpack.c.l.b16 %v2460
        %v2589 = vunpack.c.l.b16 %v2461
        %v2590 = vunpack.c.l.b16 %v2462
        %v2591 = vunpack.c.l.b16 %v2463
        %v2592 = vunpack.c.l.b16 %v2464
        %v2593 = vunpack.c.l.b16 %v2465
        %v2594 = vunpack.c.l.b16 %v2466
        %v2595 = vunpack.c.l.b16 %v2467
        %v2596 = vunpack.c.l.b16 %v2468
        %v2597 = vunpack.c.l.b16 %v2469
        %v2598 = vpack.c.b16 %v2583, %v2582
        %v2599 = vpack.c.b16 %v2585, %v2584
        %v2600 = vpack.c.b16 %v2587, %v2586
        %v2601 = vpack.c.b16 %v2589, %v2588
        %v2602 = vpack.c.b16 %v2591, %v2590
        %v2603 = vpack.c.b16 %v2593, %v2592
        %v2604 = vpack.c.b16 %v2595, %v2594
        %v2605 = vpack.c.b16 %v2597, %v2596
        %2614 = vmatprep.subr.bf16.mxu0 0
        %2615 = vmatpush1.bf16.msra.mxu0 %v2598
        %2616 = vmatprep.subr.bf16.mxu0 0
        %2617 = vmatpush1.bf16.msra.mxu0 %v2599
        %2618 = vmatprep.subr.bf16.mxu0 0
        %2619 = vmatpush1.bf16.msra.mxu0 %v2600
        %2620 = vmatprep.subr.bf16.mxu0 0
        %2621 = vmatpush1.bf16.msra.mxu0 %v2601
        %2622 = vmatprep.subr.bf16.mxu0 0
        %2623 = vmatpush1.bf16.msra.mxu0 %v2602
        %2624 = vmatprep.subr.bf16.mxu0 0
        %2625 = vmatpush1.bf16.msra.mxu0 %v2603
        %2626 = vmatprep.subr.bf16.mxu0 0
        %2627 = vmatpush1.bf16.msra.mxu0 %v2604
        %2628 = vmatprep.subr.bf16.mxu0 0
        %2629 = vmatpush1.bf16.msra.mxu0 %v2605
        %2630 = vmatprep.subr.bf16.mxu0 0
        %2631 = vmatpush1.bf16.msra.mxu0 0
        %2632 = vmatprep.subr.bf16.mxu0 0
        %2633 = vmatpush1.bf16.msra.mxu0 0
        %2634 = vmatprep.subr.bf16.mxu0 0
        %2635 = vmatpush1.bf16.msra.mxu0 0
        %2636 = vmatprep.subr.bf16.mxu0 0
        %2637 = vmatpush1.bf16.msra.mxu0 0
        %2638 = vmatprep.subr.bf16.mxu0 0
        %2639 = vmatpush1.bf16.msra.mxu0 0
        %2640 = vmatprep.subr.bf16.mxu0 0
        %2641 = vmatpush1.bf16.msra.mxu0 0
        %2642 = vmatprep.subr.bf16.mxu0 0
        %2643 = vmatpush1.bf16.msra.mxu0 0
        %2644 = vmatprep.subr.bf16.mxu0 0
        %2645 = vmatpush1.bf16.msra.mxu0 0
        %2646 = vmatprep.mubr.bf16.mxu0 0
        %2647 = vmatmul.mubr.bf16.gmra.mrb[0].mxu0 %v2534
        %v2648 = vpop.f32.mrb[0].mxu0
        %v2649 = vadd.f32 0.0, %v2648
        %v2650 = vpop.f32.mrb[0].mxu0
        %v2651 = vpop.f32.mrb[0].mxu0
        %v2652 = vadd.f32 0.0, %v2651
        %v2653 = vpop.f32.mrb[0].mxu0
        %2654 = vmatprep.mubr.bf16.mxu0 0
        %2655 = vmatmul.mubr.bf16.gmra.mrb[0].mxu0 %v2535
        %v2656 = vpop.f32.mrb[0].mxu0
        %v2657 = vadd.f32 0.0, %v2656
        %v2658 = vpop.f32.mrb[0].mxu0
        %v2659 = vpop.f32.mrb[0].mxu0
        %v2660 = vadd.f32 0.0, %v2659
        %v2661 = vpop.f32.mrb[0].mxu0
        %2662 = vmatprep.mubr.bf16.mxu0 0
        %2663 = vmatmul.mubr.bf16.gmra.mrb[0].mxu0 %v2536
        %v2664 = vpop.f32.mrb[0].mxu0
        %v2665 = vadd.f32 0.0, %v2664
        %v2666 = vpop.f32.mrb[0].mxu0
        %v2667 = vpop.f32.mrb[0].mxu0
        %v2668 = vadd.f32 0.0, %v2667
        %v2669 = vpop.f32.mrb[0].mxu0
        %2670 = vmatprep.mubr.bf16.mxu0 0
        %2671 = vmatmul.mubr.bf16.gmra.mrb[0].mxu0 %v2537
        %v2672 = vpop.f32.mrb[0].mxu0
        %v2673 = vadd.f32 0.0, %v2672
        %v2674 = vpop.f32.mrb[0].mxu0
        %v2675 = vpop.f32.mrb[0].mxu0
        %v2676 = vadd.f32 0.0, %v2675
        %v2677 = vpop.f32.mrb[0].mxu0
        %2678 = vmatprep.mubr.bf16.mxu0 0
        %2679 = vmatmul.mubr.bf16.gmra.mrb[0].mxu0 %v2538
        %v2680 = vpop.f32.mrb[0].mxu0
        %v2681 = vadd.f32 0.0, %v2680
        %v2682 = vpop.f32.mrb[0].mxu0
        %v2683 = vpop.f32.mrb[0].mxu0
        %v2684 = vadd.f32 0.0, %v2683
        %v2685 = vpop.f32.mrb[0].mxu0
        %2686 = vmatprep.mubr.bf16.mxu0 0
        %2687 = vmatmul.mubr.bf16.gmra.mrb[0].mxu0 %v2539
        %v2688 = vpop.f32.mrb[0].mxu0
        %v2689 = vadd.f32 0.0, %v2688
        %v2690 = vpop.f32.mrb[0].mxu0
        %v2691 = vpop.f32.mrb[0].mxu0
        %v2692 = vadd.f32 0.0, %v2691
        %v2693 = vpop.f32.mrb[0].mxu0
        %2694 = vmatprep.mubr.bf16.mxu0 0
        %2695 = vmatmul.mubr.bf16.gmra.mrb[0].mxu0 %v2540
        %v2696 = vpop.f32.mrb[0].mxu0
        %v2697 = vadd.f32 0.0, %v2696
        %v2698 = vpop.f32.mrb[0].mxu0
        %v2699 = vpop.f32.mrb[0].mxu0
        %v2700 = vadd.f32 0.0, %v2699
        %v2701 = vpop.f32.mrb[0].mxu0
        %2702 = vmatprep.mubr.bf16.mxu0 0
        %2703 = vmatmul.mubr.bf16.gmra.mrb[0].mxu0 %v2541
        %v2704 = vpop.f32.mrb[0].mxu0
        %v2705 = vadd.f32 0.0, %v2704
        %v2706 = vpop.f32.mrb[0].mxu0
        %v2707 = vpop.f32.mrb[0].mxu0
        %v2708 = vadd.f32 0.0, %v2707
        %v2709 = vpop.f32.mrb[0].mxu0
        %2710 = vmatprep.mubr.bf16.mxu0 0
        %2711 = vmatmul.mubr.bf16.gmra.mrb[0].mxu0 %v2542
        %v2712 = vpop.f32.mrb[0].mxu0
        %v2713 = vadd.f32 0.0, %v2712
        %v2714 = vpop.f32.mrb[0].mxu0
        %v2715 = vpop.f32.mrb[0].mxu0
        %v2716 = vadd.f32 0.0, %v2715
        %v2717 = vpop.f32.mrb[0].mxu0
        %2718 = vmatprep.mubr.bf16.mxu0 0
        %2719 = vmatmul.mubr.bf16.gmra.mrb[0].mxu0 %v2543
        %v2720 = vpop.f32.mrb[0].mxu0
        %v2721 = vadd.f32 0.0, %v2720
        %v2722 = vpop.f32.mrb[0].mxu0
        %v2723 = vpop.f32.mrb[0].mxu0
        %v2724 = vadd.f32 0.0, %v2723
        %v2725 = vpop.f32.mrb[0].mxu0
        %2726 = vmatprep.mubr.bf16.mxu0 0
        %2727 = vmatmul.mubr.bf16.gmra.mrb[0].mxu0 %v2544
        %v2728 = vpop.f32.mrb[0].mxu0
        %v2729 = vadd.f32 0.0, %v2728
        %v2730 = vpop.f32.mrb[0].mxu0
        %v2731 = vpop.f32.mrb[0].mxu0
        %v2732 = vadd.f32 0.0, %v2731
        %v2733 = vpop.f32.mrb[0].mxu0
        %2734 = vmatprep.mubr.bf16.mxu0 0
        %2735 = vmatmul.mubr.bf16.gmra.mrb[0].mxu0 %v2545
        %v2736 = vpop.f32.mrb[0].mxu0
        %v2737 = vadd.f32 0.0, %v2736
        %v2738 = vpop.f32.mrb[0].mxu0
        %v2739 = vpop.f32.mrb[0].mxu0
        %v2740 = vadd.f32 0.0, %v2739
        %v2741 = vpop.f32.mrb[0].mxu0
        %2742 = vmatprep.mubr.bf16.mxu0 0
        %2743 = vmatmul.mubr.bf16.gmra.mrb[0].mxu0 %v2546
        %v2744 = vpop.f32.mrb[0].mxu0
        %v2745 = vadd.f32 0.0, %v2744
        %v2746 = vpop.f32.mrb[0].mxu0
        %v2747 = vpop.f32.mrb[0].mxu0
        %v2748 = vadd.f32 0.0, %v2747
        %v2749 = vpop.f32.mrb[0].mxu0
        %2750 = vmatprep.mubr.bf16.mxu0 0
        %2751 = vmatmul.mubr.bf16.gmra.mrb[0].mxu0 %v2547
        %v2752 = vpop.f32.mrb[0].mxu0
        %v2753 = vadd.f32 0.0, %v2752
        %v2754 = vpop.f32.mrb[0].mxu0
        %v2755 = vpop.f32.mrb[0].mxu0
        %v2756 = vadd.f32 0.0, %v2755
        %v2757 = vpop.f32.mrb[0].mxu0
        %2758 = vmatprep.mubr.bf16.mxu0 0
        %2759 = vmatmul.mubr.bf16.gmra.mrb[0].mxu0 %v2548
        %v2760 = vpop.f32.mrb[0].mxu0
        %v2761 = vadd.f32 0.0, %v2760
        %v2762 = vpop.f32.mrb[0].mxu0
        %v2763 = vpop.f32.mrb[0].mxu0
        %v2764 = vadd.f32 0.0, %v2763
        %v2765 = vpop.f32.mrb[0].mxu0
        %2766 = vmatprep.mubr.bf16.mxu0 0
        %2767 = vmatmul.mubr.bf16.gmra.mrb[0].mxu0 %v2549
        %v2768 = vpop.f32.mrb[0].mxu0
        %v2769 = vadd.f32 0.0, %v2768
        %v2770 = vpop.f32.mrb[0].mxu0
        %v2771 = vpop.f32.mrb[0].mxu0
        %v2772 = vadd.f32 0.0, %v2771
        %v2773 = vpop.f32.mrb[0].mxu0
        %2774 = vdwg.mxu0
        %v2775 = vadd.f32 %v2389, %v2649
        %v2776 = vadd.f32 %v2390, %v2652
        %v2777 = vadd.f32 %v2391, %v2657
        %v2778 = vadd.f32 %v2392, %v2660
        %v2779 = vadd.f32 %v2393, %v2665
        %v2780 = vadd.f32 %v2394, %v2668
        %v2781 = vadd.f32 %v2395, %v2673
        %v2782 = vadd.f32 %v2396, %v2676
        %v2783 = vadd.f32 %v2397, %v2681
        %v2784 = vadd.f32 %v2398, %v2684
        %v2785 = vadd.f32 %v2399, %v2689
        %v2786 = vadd.f32 %v2400, %v2692
        %v2787 = vadd.f32 %v2401, %v2697
        %v2788 = vadd.f32 %v2402, %v2700
        %v2789 = vadd.f32 %v2403, %v2705
        %v2790 = vadd.f32 %v2404, %v2708
        %v2791 = vadd.f32 %v2405, %v2713
        %v2792 = vadd.f32 %v2406, %v2716
        %v2793 = vadd.f32 %v2407, %v2721
        %v2794 = vadd.f32 %v2408, %v2724
        %v2795 = vadd.f32 %v2409, %v2729
        %v2796 = vadd.f32 %v2410, %v2732
        %v2797 = vadd.f32 %v2411, %v2737
        %v2798 = vadd.f32 %v2412, %v2740
        %v2799 = vadd.f32 %v2413, %v2745
        %v2800 = vadd.f32 %v2414, %v2748
        %v2801 = vadd.f32 %v2415, %v2753
        %v2802 = vadd.f32 %v2416, %v2756
        %v2803 = vadd.f32 %v2417, %v2761
        %v2804 = vadd.f32 %v2418, %v2764
        %v2805 = vadd.f32 %v2419, %v2769
        %v2806 = vadd.f32 %v2420, %v2772
        %2807 = vst [vmem:[#allocation3] sm:$0xff] %v2775
        %2808 = vst [vmem:[#allocation3 + $0x8] sm:$0xff] %v2776
        %2809 = vst [vmem:[#allocation3 + $0x10] sm:$0xff] %v2777
        %2810 = vst [vmem:[#allocation3 + $0x18] sm:$0xff] %v2778
        %2811 = vst [vmem:[#allocation3 + $0x20] sm:$0xff] %v2779
        %2812 = vst [vmem:[#allocation3 + $0x28] sm:$0xff] %v2780
        %2813 = vst [vmem:[#allocation3 + $0x30] sm:$0xff] %v2781
        %2814 = vst [vmem:[#allocation3 + $0x38] sm:$0xff] %v2782
        %2815 = vst [vmem:[#allocation3 + $0x40] sm:$0xff] %v2783
        %2816 = vst [vmem:[#allocation3 + $0x48] sm:$0xff] %v2784
        %2817 = vst [vmem:[#allocation3 + $0x50] sm:$0xff] %v2785
        %2818 = vst [vmem:[#allocation3 + $0x58] sm:$0xff] %v2786
        %2819 = vst [vmem:[#allocation3 + $0x60] sm:$0xff] %v2787
        %2820 = vst [vmem:[#allocation3 + $0x68] sm:$0xff] %v2788
        %2821 = vst [vmem:[#allocation3 + $0x70] sm:$0xff] %v2789
        %2822 = vst [vmem:[#allocation3 + $0x78] sm:$0xff] %v2790
        %2823 = vst [vmem:[#allocation3 + $0x80] sm:$0xff] %v2791
        %2824 = vst [vmem:[#allocation3 + $0x88] sm:$0xff] %v2792
        %2825 = vst [vmem:[#allocation3 + $0x90] sm:$0xff] %v2793
        %2826 = vst [vmem:[#allocation3 + $0x98] sm:$0xff] %v2794
        %2827 = vst [vmem:[#allocation3 + $0xa0] sm:$0xff] %v2795
        %2828 = vst [vmem:[#allocation3 + $0xa8] sm:$0xff] %v2796
        %2829 = vst [vmem:[#allocation3 + $0xb0] sm:$0xff] %v2797
        %2830 = vst [vmem:[#allocation3 + $0xb8] sm:$0xff] %v2798
        %2831 = vst [vmem:[#allocation3 + $0xc0] sm:$0xff] %v2799
        %2832 = vst [vmem:[#allocation3 + $0xc8] sm:$0xff] %v2800
        %2833 = vst [vmem:[#allocation3 + $0xd0] sm:$0xff] %v2801
        %2834 = vst [vmem:[#allocation3 + $0xd8] sm:$0xff] %v2802
        %2835 = vst [vmem:[#allocation3 + $0xe0] sm:$0xff] %v2803
        %2836 = vst [vmem:[#allocation3 + $0xe8] sm:$0xff] %v2804
        %2837 = vst [vmem:[#allocation3 + $0xf0] sm:$0xff] %v2805
        %2838 = vst [vmem:[#allocation3 + $0xf8] sm:$0xff] %v2806
        %v2839 = vld [vmem:[#allocation3] sm:$0xff]
        %v2840 = vld [vmem:[#allocation3 + $0x8] sm:$0xff]
        %v2841 = vld [vmem:[#allocation3 + $0x10] sm:$0xff]
        %v2842 = vld [vmem:[#allocation3 + $0x18] sm:$0xff]
        %v2843 = vld [vmem:[#allocation3 + $0x20] sm:$0xff]
        %v2844 = vld [vmem:[#allocation3 + $0x28] sm:$0xff]
        %v2845 = vld [vmem:[#allocation3 + $0x30] sm:$0xff]
        %v2846 = vld [vmem:[#allocation3 + $0x38] sm:$0xff]
        %v2847 = vld [vmem:[#allocation3 + $0x40] sm:$0xff]
        %v2848 = vld [vmem:[#allocation3 + $0x48] sm:$0xff]
        %v2849 = vld [vmem:[#allocation3 + $0x50] sm:$0xff]
        %v2850 = vld [vmem:[#allocation3 + $0x58] sm:$0xff]
        %v2851 = vld [vmem:[#allocation3 + $0x60] sm:$0xff]
        %v2852 = vld [vmem:[#allocation3 + $0x68] sm:$0xff]
        %v2853 = vld [vmem:[#allocation3 + $0x70] sm:$0xff]
        %v2854 = vld [vmem:[#allocation3 + $0x78] sm:$0xff]
        %v2855 = vld [vmem:[#allocation3 + $0x80] sm:$0xff]
        %v2856 = vld [vmem:[#allocation3 + $0x88] sm:$0xff]
        %v2857 = vld [vmem:[#allocation3 + $0x90] sm:$0xff]
        %v2858 = vld [vmem:[#allocation3 + $0x98] sm:$0xff]
        %v2859 = vld [vmem:[#allocation3 + $0xa0] sm:$0xff]
        %v2860 = vld [vmem:[#allocation3 + $0xa8] sm:$0xff]
        %v2861 = vld [vmem:[#allocation3 + $0xb0] sm:$0xff]
        %v2862 = vld [vmem:[#allocation3 + $0xb8] sm:$0xff]
        %v2863 = vld [vmem:[#allocation3 + $0xc0] sm:$0xff]
        %v2864 = vld [vmem:[#allocation3 + $0xc8] sm:$0xff]
        %v2865 = vld [vmem:[#allocation3 + $0xd0] sm:$0xff]
        %v2866 = vld [vmem:[#allocation3 + $0xd8] sm:$0xff]
        %v2867 = vld [vmem:[#allocation3 + $0xe0] sm:$0xff]
        %v2868 = vld [vmem:[#allocation3 + $0xe8] sm:$0xff]
        %v2869 = vld [vmem:[#allocation3 + $0xf0] sm:$0xff]
        %v2870 = vld [vmem:[#allocation3 + $0xf8] sm:$0xff]
        %v2871 = vld [vmem:[%s484] sm:$0xf]
        %v2872 = vld [vmem:[%s484 + $0x4] sm:$0xf]
        %v2873 = vld [vmem:[%s484 + $0x8] sm:$0x1]
        %v2874 = vld [vmem:[%s484 + $0xc] sm:$0xf]
        %v2875 = vld [vmem:[%s484 + $0x10] sm:$0xf]
        %v2876 = vld [vmem:[%s484 + $0x14] sm:$0x1]
        %v2877 = vld [vmem:[%s484 + $0x18] sm:$0xf]
        %v2878 = vld [vmem:[%s484 + $0x1c] sm:$0xf]
        %v2879 = vld [vmem:[%s484 + $0x20] sm:$0x1]
        %v2880 = vld [vmem:[%s484 + $0x24] sm:$0xf]
        %v2881 = vld [vmem:[%s484 + $0x28] sm:$0xf]
        %v2882 = vld [vmem:[%s484 + $0x2c] sm:$0x1]
        %v2883 = vld [vmem:[%s484 + $0x30] sm:$0xf]
        %v2884 = vld [vmem:[%s484 + $0x34] sm:$0xf]
        %v2885 = vld [vmem:[%s484 + $0x38] sm:$0x1]
        %v2886 = vld [vmem:[%s484 + $0x3c] sm:$0xf]
        %v2887 = vld [vmem:[%s484 + $0x40] sm:$0xf]
        %v2888 = vld [vmem:[%s484 + $0x44] sm:$0x1]
        %v2889 = vld [vmem:[%s484 + $0x48] sm:$0xf]
        %v2890 = vld [vmem:[%s484 + $0x4c] sm:$0xf]
        %v2891 = vld [vmem:[%s484 + $0x50] sm:$0x1]
        %v2892 = vld [vmem:[%s484 + $0x54] sm:$0xf]
        %v2893 = vld [vmem:[%s484 + $0x58] sm:$0xf]
        %v2894 = vld [vmem:[%s484 + $0x5c] sm:$0x1]
        %v2895 = vld [vmem:[%s484 + $0x60] sm:$0xf]
        %v2896 = vld [vmem:[%s484 + $0x64] sm:$0xf]
        %v2897 = vld [vmem:[%s484 + $0x68] sm:$0x1]
        %v2898 = vld [vmem:[%s484 + $0x6c] sm:$0xf]
        %v2899 = vld [vmem:[%s484 + $0x70] sm:$0xf]
        %v2900 = vld [vmem:[%s484 + $0x74] sm:$0x1]
        %v2901 = vld [vmem:[%s484 + $0x78] sm:$0xf]
        %v2902 = vld [vmem:[%s484 + $0x7c] sm:$0xf]
        %v2903 = vld [vmem:[%s484 + $0x80] sm:$0x1]
        %v2904 = vld [vmem:[%s484 + $0x84] sm:$0xf]
        %v2905 = vld [vmem:[%s484 + $0x88] sm:$0xf]
        %v2906 = vld [vmem:[%s484 + $0x8c] sm:$0x1]
        %v2907 = vld [vmem:[%s484 + $0x90] sm:$0xf]
        %v2908 = vld [vmem:[%s484 + $0x94] sm:$0xf]
        %v2909 = vld [vmem:[%s484 + $0x98] sm:$0x1]
        %v2910 = vld [vmem:[%s484 + $0x9c] sm:$0xf]
        %v2911 = vld [vmem:[%s484 + $0xa0] sm:$0xf]
        %v2912 = vld [vmem:[%s484 + $0xa4] sm:$0x1]
        %v2913 = vld [vmem:[%s484 + $0xa8] sm:$0xf]
        %v2914 = vld [vmem:[%s484 + $0xac] sm:$0xf]
        %v2915 = vld [vmem:[%s484 + $0xb0] sm:$0x1]
        %v2916 = vld [vmem:[%s484 + $0xb4] sm:$0xf]
        %v2917 = vld [vmem:[%s484 + $0xb8] sm:$0xf]
        %v2918 = vld [vmem:[%s484 + $0xbc] sm:$0x1]
        %v2920 = vshrl.u32 %v2871, 16
        %v2922 = vrot.slane %v2920, 4
        %v2923 = vshll.u32 %v2871, 16
        %v2925 = vrot.slane %v2923, 5
        %v2926 = vor.u32 %v2922, %v2925
        %v2927 = vrot.slane %v2926, 4
        %v2929 = vshll.u32 %v2872, 16
        %v2931 = vrot.slane %v2929, 5
        %v2932 = vsel %vm1053, %v2927, %v2931
        %v2933 = vshrl.u32 %v2872, 16
        %v2935 = vrot.slane %v2933, 4
        %v2936 = vor.u32 %v2935, %v2931
        %v2937 = vrot.slane %v2936, 4
        %v2939 = vshll.u32 %v2873, 16
        %v2941 = vrot.slane %v2939, 5
        %v2942 = vsel %vm1053, %v2937, %v2941
        %v2944 = vshrl.u32 %v2874, 16
        %v2946 = vrot.slane %v2944, 4
        %v2947 = vshll.u32 %v2874, 16
        %v2949 = vrot.slane %v2947, 5
        %v2950 = vor.u32 %v2946, %v2949
        %v2951 = vrot.slane %v2950, 4
        %v2953 = vshll.u32 %v2875, 16
        %v2955 = vrot.slane %v2953, 5
        %v2956 = vsel %vm1053, %v2951, %v2955
        %v2957 = vshrl.u32 %v2875, 16
        %v2959 = vrot.slane %v2957, 4
        %v2960 = vor.u32 %v2959, %v2955
        %v2961 = vrot.slane %v2960, 4
        %v2963 = vshll.u32 %v2876, 16
        %v2965 = vrot.slane %v2963, 5
        %v2966 = vsel %vm1053, %v2961, %v2965
        %v2968 = vshrl.u32 %v2877, 16
        %v2970 = vrot.slane %v2968, 4
        %v2971 = vshll.u32 %v2877, 16
        %v2973 = vrot.slane %v2971, 5
        %v2974 = vor.u32 %v2970, %v2973
        %v2975 = vrot.slane %v2974, 4
        %v2977 = vshll.u32 %v2878, 16
        %v2979 = vrot.slane %v2977, 5
        %v2980 = vsel %vm1053, %v2975, %v2979
        %v2981 = vshrl.u32 %v2878, 16
        %v2983 = vrot.slane %v2981, 4
        %v2984 = vor.u32 %v2983, %v2979
        %v2985 = vrot.slane %v2984, 4
        %v2987 = vshll.u32 %v2879, 16
        %v2989 = vrot.slane %v2987, 5
        %v2990 = vsel %vm1053, %v2985, %v2989
        %v2992 = vshrl.u32 %v2880, 16
        %v2994 = vrot.slane %v2992, 4
        %v2995 = vshll.u32 %v2880, 16
        %v2997 = vrot.slane %v2995, 5
        %v2998 = vor.u32 %v2994, %v2997
        %v2999 = vrot.slane %v2998, 4
        %v3001 = vshll.u32 %v2881, 16
        %v3003 = vrot.slane %v3001, 5
        %v3004 = vsel %vm1053, %v2999, %v3003
        %v3005 = vshrl.u32 %v2881, 16
        %v3007 = vrot.slane %v3005, 4
        %v3008 = vor.u32 %v3007, %v3003
        %v3009 = vrot.slane %v3008, 4
        %v3011 = vshll.u32 %v2882, 16
        %v3013 = vrot.slane %v3011, 5
        %v3014 = vsel %vm1053, %v3009, %v3013
        %v3016 = vshrl.u32 %v2883, 16
        %v3018 = vrot.slane %v3016, 4
        %v3019 = vshll.u32 %v2883, 16
        %v3021 = vrot.slane %v3019, 5
        %v3022 = vor.u32 %v3018, %v3021
        %v3023 = vrot.slane %v3022, 4
        %v3025 = vshll.u32 %v2884, 16
        %v3027 = vrot.slane %v3025, 5
        %v3028 = vsel %vm1053, %v3023, %v3027
        %v3029 = vshrl.u32 %v2884, 16
        %v3031 = vrot.slane %v3029, 4
        %v3032 = vor.u32 %v3031, %v3027
        %v3033 = vrot.slane %v3032, 4
        %v3035 = vshll.u32 %v2885, 16
        %v3037 = vrot.slane %v3035, 5
        %v3038 = vsel %vm1053, %v3033, %v3037
        %v3040 = vshrl.u32 %v2886, 16
        %v3042 = vrot.slane %v3040, 4
        %v3043 = vshll.u32 %v2886, 16
        %v3045 = vrot.slane %v3043, 5
        %v3046 = vor.u32 %v3042, %v3045
        %v3047 = vrot.slane %v3046, 4
        %v3049 = vshll.u32 %v2887, 16
        %v3051 = vrot.slane %v3049, 5
        %v3052 = vsel %vm1053, %v3047, %v3051
        %v3053 = vshrl.u32 %v2887, 16
        %v3055 = vrot.slane %v3053, 4
        %v3056 = vor.u32 %v3055, %v3051
        %v3057 = vrot.slane %v3056, 4
        %v3059 = vshll.u32 %v2888, 16
        %v3061 = vrot.slane %v3059, 5
        %v3062 = vsel %vm1053, %v3057, %v3061
        %v3064 = vshrl.u32 %v2889, 16
        %v3066 = vrot.slane %v3064, 4
        %v3067 = vshll.u32 %v2889, 16
        %v3069 = vrot.slane %v3067, 5
        %v3070 = vor.u32 %v3066, %v3069
        %v3071 = vrot.slane %v3070, 4
        %v3073 = vshll.u32 %v2890, 16
        %v3075 = vrot.slane %v3073, 5
        %v3076 = vsel %vm1053, %v3071, %v3075
        %v3077 = vshrl.u32 %v2890, 16
        %v3079 = vrot.slane %v3077, 4
        %v3080 = vor.u32 %v3079, %v3075
        %v3081 = vrot.slane %v3080, 4
        %v3083 = vshll.u32 %v2891, 16
        %v3085 = vrot.slane %v3083, 5
        %v3086 = vsel %vm1053, %v3081, %v3085
        %v3088 = vshrl.u32 %v2892, 16
        %v3090 = vrot.slane %v3088, 4
        %v3091 = vshll.u32 %v2892, 16
        %v3093 = vrot.slane %v3091, 5
        %v3094 = vor.u32 %v3090, %v3093
        %v3095 = vrot.slane %v3094, 4
        %v3097 = vshll.u32 %v2893, 16
        %v3099 = vrot.slane %v3097, 5
        %v3100 = vsel %vm1053, %v3095, %v3099
        %v3101 = vshrl.u32 %v2893, 16
        %v3103 = vrot.slane %v3101, 4
        %v3104 = vor.u32 %v3103, %v3099
        %v3105 = vrot.slane %v3104, 4
        %v3107 = vshll.u32 %v2894, 16
        %v3109 = vrot.slane %v3107, 5
        %v3110 = vsel %vm1053, %v3105, %v3109
        %v3112 = vshrl.u32 %v2895, 16
        %v3114 = vrot.slane %v3112, 4
        %v3115 = vshll.u32 %v2895, 16
        %v3117 = vrot.slane %v3115, 5
        %v3118 = vor.u32 %v3114, %v3117
        %v3119 = vrot.slane %v3118, 4
        %v3121 = vshll.u32 %v2896, 16
        %v3123 = vrot.slane %v3121, 5
        %v3124 = vsel %vm1053, %v3119, %v3123
        %v3125 = vshrl.u32 %v2896, 16
        %v3127 = vrot.slane %v3125, 4
        %v3128 = vor.u32 %v3127, %v3123
        %v3129 = vrot.slane %v3128, 4
        %v3131 = vshll.u32 %v2897, 16
        %v3133 = vrot.slane %v3131, 5
        %v3134 = vsel %vm1053, %v3129, %v3133
        %v3136 = vshrl.u32 %v2898, 16
        %v3138 = vrot.slane %v3136, 4
        %v3139 = vshll.u32 %v2898, 16
        %v3141 = vrot.slane %v3139, 5
        %v3142 = vor.u32 %v3138, %v3141
        %v3143 = vrot.slane %v3142, 4
        %v3145 = vshll.u32 %v2899, 16
        %v3147 = vrot.slane %v3145, 5
        %v3148 = vsel %vm1053, %v3143, %v3147
        %v3149 = vshrl.u32 %v2899, 16
        %v3151 = vrot.slane %v3149, 4
        %v3152 = vor.u32 %v3151, %v3147
        %v3153 = vrot.slane %v3152, 4
        %v3155 = vshll.u32 %v2900, 16
        %v3157 = vrot.slane %v3155, 5
        %v3158 = vsel %vm1053, %v3153, %v3157
        %v3160 = vshrl.u32 %v2901, 16
        %v3162 = vrot.slane %v3160, 4
        %v3163 = vshll.u32 %v2901, 16
        %v3165 = vrot.slane %v3163, 5
        %v3166 = vor.u32 %v3162, %v3165
        %v3167 = vrot.slane %v3166, 4
        %v3169 = vshll.u32 %v2902, 16
        %v3171 = vrot.slane %v3169, 5
        %v3172 = vsel %vm1053, %v3167, %v3171
        %v3173 = vshrl.u32 %v2902, 16
        %v3175 = vrot.slane %v3173, 4
        %v3176 = vor.u32 %v3175, %v3171
        %v3177 = vrot.slane %v3176, 4
        %v3179 = vshll.u32 %v2903, 16
        %v3181 = vrot.slane %v3179, 5
        %v3182 = vsel %vm1053, %v3177, %v3181
        %v3184 = vshrl.u32 %v2904, 16
        %v3186 = vrot.slane %v3184, 4
        %v3187 = vshll.u32 %v2904, 16
        %v3189 = vrot.slane %v3187, 5
        %v3190 = vor.u32 %v3186, %v3189
        %v3191 = vrot.slane %v3190, 4
        %v3193 = vshll.u32 %v2905, 16
        %v3195 = vrot.slane %v3193, 5
        %v3196 = vsel %vm1053, %v3191, %v3195
        %v3197 = vshrl.u32 %v2905, 16
        %v3199 = vrot.slane %v3197, 4
        %v3200 = vor.u32 %v3199, %v3195
        %v3201 = vrot.slane %v3200, 4
        %v3203 = vshll.u32 %v2906, 16
        %v3205 = vrot.slane %v3203, 5
        %v3206 = vsel %vm1053, %v3201, %v3205
        %v3208 = vshrl.u32 %v2907, 16
        %v3210 = vrot.slane %v3208, 4
        %v3211 = vshll.u32 %v2907, 16
        %v3213 = vrot.slane %v3211, 5
        %v3214 = vor.u32 %v3210, %v3213
        %v3215 = vrot.slane %v3214, 4
        %v3217 = vshll.u32 %v2908, 16
        %v3219 = vrot.slane %v3217, 5
        %v3220 = vsel %vm1053, %v3215, %v3219
        %v3221 = vshrl.u32 %v2908, 16
        %v3223 = vrot.slane %v3221, 4
        %v3224 = vor.u32 %v3223, %v3219
        %v3225 = vrot.slane %v3224, 4
        %v3227 = vshll.u32 %v2909, 16
        %v3229 = vrot.slane %v3227, 5
        %v3230 = vsel %vm1053, %v3225, %v3229
        %v3232 = vshrl.u32 %v2910, 16
        %v3234 = vrot.slane %v3232, 4
        %v3235 = vshll.u32 %v2910, 16
        %v3237 = vrot.slane %v3235, 5
        %v3238 = vor.u32 %v3234, %v3237
        %v3239 = vrot.slane %v3238, 4
        %v3241 = vshll.u32 %v2911, 16
        %v3243 = vrot.slane %v3241, 5
        %v3244 = vsel %vm1053, %v3239, %v3243
        %v3245 = vshrl.u32 %v2911, 16
        %v3247 = vrot.slane %v3245, 4
        %v3248 = vor.u32 %v3247, %v3243
        %v3249 = vrot.slane %v3248, 4
        %v3251 = vshll.u32 %v2912, 16
        %v3253 = vrot.slane %v3251, 5
        %v3254 = vsel %vm1053, %v3249, %v3253
        %v3256 = vshrl.u32 %v2913, 16
        %v3258 = vrot.slane %v3256, 4
        %v3259 = vshll.u32 %v2913, 16
        %v3261 = vrot.slane %v3259, 5
        %v3262 = vor.u32 %v3258, %v3261
        %v3263 = vrot.slane %v3262, 4
        %v3265 = vshll.u32 %v2914, 16
        %v3267 = vrot.slane %v3265, 5
        %v3268 = vsel %vm1053, %v3263, %v3267
        %v3269 = vshrl.u32 %v2914, 16
        %v3271 = vrot.slane %v3269, 4
        %v3272 = vor.u32 %v3271, %v3267
        %v3273 = vrot.slane %v3272, 4
        %v3275 = vshll.u32 %v2915, 16
        %v3277 = vrot.slane %v3275, 5
        %v3278 = vsel %vm1053, %v3273, %v3277
        %v3280 = vshrl.u32 %v2916, 16
        %v3282 = vrot.slane %v3280, 4
        %v3283 = vshll.u32 %v2916, 16
        %v3285 = vrot.slane %v3283, 5
        %v3286 = vor.u32 %v3282, %v3285
        %v3287 = vrot.slane %v3286, 4
        %v3289 = vshll.u32 %v2917, 16
        %v3291 = vrot.slane %v3289, 5
        %v3292 = vsel %vm1053, %v3287, %v3291
        %v3293 = vshrl.u32 %v2917, 16
        %v3295 = vrot.slane %v3293, 4
        %v3296 = vor.u32 %v3295, %v3291
        %v3297 = vrot.slane %v3296, 4
        %v3299 = vshll.u32 %v2918, 16
        %v3301 = vrot.slane %v3299, 5
        %v3302 = vsel %vm1053, %v3297, %v3301
        %s3303 = scalar_lea.vmem %s3, 256
        %v3304 = vld [vmem:[%s3303] sm:$0xf]
        %v3305 = vld [vmem:[%s3303 + $0x4] sm:$0xf]
        %v3306 = vld [vmem:[%s3303 + $0x8] sm:$0xf]
        %v3307 = vld [vmem:[%s3303 + $0xc] sm:$0xf]
        %v3308 = vld [vmem:[%s3303 + $0x10] sm:$0xf]
        %v3309 = vld [vmem:[%s3303 + $0x14] sm:$0xf]
        %v3310 = vld [vmem:[%s3303 + $0x18] sm:$0xf]
        %v3311 = vld [vmem:[%s3303 + $0x1c] sm:$0xf]
        %v3312 = vld [vmem:[%s3303 + $0x20] sm:$0xf]
        %v3313 = vld [vmem:[%s3303 + $0x24] sm:$0xf]
        %v3314 = vld [vmem:[%s3303 + $0x28] sm:$0xf]
        %v3315 = vld [vmem:[%s3303 + $0x2c] sm:$0xf]
        %v3316 = vld [vmem:[%s3303 + $0x30] sm:$0xf]
        %v3317 = vld [vmem:[%s3303 + $0x34] sm:$0xf]
        %v3318 = vld [vmem:[%s3303 + $0x38] sm:$0xf]
        %v3319 = vld [vmem:[%s3303 + $0x3c] sm:$0xf]
        %v3320 = vunpack.c.l.b16 %v2932
        %v3321 = vunpack.c.l.b16 %v2942
        %v3322 = vunpack.c.l.b16 %v2956
        %v3323 = vunpack.c.l.b16 %v2966
        %v3324 = vunpack.c.l.b16 %v2980
        %v3325 = vunpack.c.l.b16 %v2990
        %v3326 = vunpack.c.l.b16 %v3004
        %v3327 = vunpack.c.l.b16 %v3014
        %v3328 = vunpack.c.l.b16 %v3028
        %v3329 = vunpack.c.l.b16 %v3038
        %v3330 = vunpack.c.l.b16 %v3052
        %v3331 = vunpack.c.l.b16 %v3062
        %v3332 = vunpack.c.l.b16 %v3076
        %v3333 = vunpack.c.l.b16 %v3086
        %v3334 = vunpack.c.l.b16 %v3100
        %v3335 = vunpack.c.l.b16 %v3110
        %v3336 = vunpack.c.l.b16 %v3124
        %v3337 = vunpack.c.l.b16 %v3134
        %v3338 = vunpack.c.l.b16 %v3148
        %v3339 = vunpack.c.l.b16 %v3158
        %v3340 = vunpack.c.l.b16 %v3172
        %v3341 = vunpack.c.l.b16 %v3182
        %v3342 = vunpack.c.l.b16 %v3196
        %v3343 = vunpack.c.l.b16 %v3206
        %v3344 = vunpack.c.l.b16 %v3220
        %v3345 = vunpack.c.l.b16 %v3230
        %v3346 = vunpack.c.l.b16 %v3244
        %v3347 = vunpack.c.l.b16 %v3254
        %v3348 = vunpack.c.l.b16 %v3268
        %v3349 = vunpack.c.l.b16 %v3278
        %v3350 = vunpack.c.l.b16 %v3292
        %v3351 = vunpack.c.l.b16 %v3302
        %v3352 = vpack.c.b16 %v3321, %v3320
        %v3353 = vpack.c.b16 %v3323, %v3322
        %v3354 = vpack.c.b16 %v3325, %v3324
        %v3355 = vpack.c.b16 %v3327, %v3326
        %v3356 = vpack.c.b16 %v3329, %v3328
        %v3357 = vpack.c.b16 %v3331, %v3330
        %v3358 = vpack.c.b16 %v3333, %v3332
        %v3359 = vpack.c.b16 %v3335, %v3334
        %v3360 = vpack.c.b16 %v3337, %v3336
        %v3361 = vpack.c.b16 %v3339, %v3338
        %v3362 = vpack.c.b16 %v3341, %v3340
        %v3363 = vpack.c.b16 %v3343, %v3342
        %v3364 = vpack.c.b16 %v3345, %v3344
        %v3365 = vpack.c.b16 %v3347, %v3346
        %v3366 = vpack.c.b16 %v3349, %v3348
        %v3367 = vpack.c.b16 %v3351, %v3350
        %v3400 = vunpack.c.l.b16 %v3304
        %v3401 = vunpack.c.l.b16 %v3305
        %v3402 = vunpack.c.l.b16 %v3306
        %v3403 = vunpack.c.l.b16 %v3307
        %v3404 = vunpack.c.l.b16 %v3308
        %v3405 = vunpack.c.l.b16 %v3309
        %v3406 = vunpack.c.l.b16 %v3310
        %v3407 = vunpack.c.l.b16 %v3311
        %v3408 = vunpack.c.l.b16 %v3312
        %v3409 = vunpack.c.l.b16 %v3313
        %v3410 = vunpack.c.l.b16 %v3314
        %v3411 = vunpack.c.l.b16 %v3315
        %v3412 = vunpack.c.l.b16 %v3316
        %v3413 = vunpack.c.l.b16 %v3317
        %v3414 = vunpack.c.l.b16 %v3318
        %v3415 = vunpack.c.l.b16 %v3319
        %v3416 = vpack.c.b16 %v3401, %v3400
        %v3417 = vpack.c.b16 %v3403, %v3402
        %v3418 = vpack.c.b16 %v3405, %v3404
        %v3419 = vpack.c.b16 %v3407, %v3406
        %v3420 = vpack.c.b16 %v3409, %v3408
        %v3421 = vpack.c.b16 %v3411, %v3410
        %v3422 = vpack.c.b16 %v3413, %v3412
        %v3423 = vpack.c.b16 %v3415, %v3414
        %3432 = vmatprep.subr.bf16.mxu0 0
        %3433 = vmatpush1.bf16.msra.mxu0 %v3416
        %3434 = vmatprep.subr.bf16.mxu0 0
        %3435 = vmatpush1.bf16.msra.mxu0 %v3417
        %3436 = vmatprep.subr.bf16.mxu0 0
        %3437 = vmatpush1.bf16.msra.mxu0 %v3418
        %3438 = vmatprep.subr.bf16.mxu0 0
        %3439 = vmatpush1.bf16.msra.mxu0 %v3419
        %3440 = vmatprep.subr.bf16.mxu0 0
        %3441 = vmatpush1.bf16.msra.mxu0 %v3420
        %3442 = vmatprep.subr.bf16.mxu0 0
        %3443 = vmatpush1.bf16.msra.mxu0 %v3421
        %3444 = vmatprep.subr.bf16.mxu0 0
        %3445 = vmatpush1.bf16.msra.mxu0 %v3422
        %3446 = vmatprep.subr.bf16.mxu0 0
        %3447 = vmatpush1.bf16.msra.mxu0 %v3423
        %3448 = vmatprep.subr.bf16.mxu0 0
        %3449 = vmatpush1.bf16.msra.mxu0 0
        %3450 = vmatprep.subr.bf16.mxu0 0
        %3451 = vmatpush1.bf16.msra.mxu0 0
        %3452 = vmatprep.subr.bf16.mxu0 0
        %3453 = vmatpush1.bf16.msra.mxu0 0
        %3454 = vmatprep.subr.bf16.mxu0 0
        %3455 = vmatpush1.bf16.msra.mxu0 0
        %3456 = vmatprep.subr.bf16.mxu0 0
        %3457 = vmatpush1.bf16.msra.mxu0 0
        %3458 = vmatprep.subr.bf16.mxu0 0
        %3459 = vmatpush1.bf16.msra.mxu0 0
        %3460 = vmatprep.subr.bf16.mxu0 0
        %3461 = vmatpush1.bf16.msra.mxu0 0
        %3462 = vmatprep.subr.bf16.mxu0 0
        %3463 = vmatpush1.bf16.msra.mxu0 0
        %3464 = vmatprep.mubr.bf16.mxu0 0
        %3465 = vmatmul.mubr.bf16.gmra.mrb[0].mxu0 %v3352
        %v3466 = vpop.f32.mrb[0].mxu0
        %v3467 = vadd.f32 0.0, %v3466
        %v3468 = vpop.f32.mrb[0].mxu0
        %v3469 = vpop.f32.mrb[0].mxu0
        %v3470 = vadd.f32 0.0, %v3469
        %v3471 = vpop.f32.mrb[0].mxu0
        %3472 = vmatprep.mubr.bf16.mxu0 0
        %3473 = vmatmul.mubr.bf16.gmra.mrb[0].mxu0 %v3353
        %v3474 = vpop.f32.mrb[0].mxu0
        %v3475 = vadd.f32 0.0, %v3474
        %v3476 = vpop.f32.mrb[0].mxu0
        %v3477 = vpop.f32.mrb[0].mxu0
        %v3478 = vadd.f32 0.0, %v3477
        %v3479 = vpop.f32.mrb[0].mxu0
        %3480 = vmatprep.mubr.bf16.mxu0 0
        %3481 = vmatmul.mubr.bf16.gmra.mrb[0].mxu0 %v3354
        %v3482 = vpop.f32.mrb[0].mxu0
        %v3483 = vadd.f32 0.0, %v3482
        %v3484 = vpop.f32.mrb[0].mxu0
        %v3485 = vpop.f32.mrb[0].mxu0
        %v3486 = vadd.f32 0.0, %v3485
        %v3487 = vpop.f32.mrb[0].mxu0
        %3488 = vmatprep.mubr.bf16.mxu0 0
        %3489 = vmatmul.mubr.bf16.gmra.mrb[0].mxu0 %v3355
        %v3490 = vpop.f32.mrb[0].mxu0
        %v3491 = vadd.f32 0.0, %v3490
        %v3492 = vpop.f32.mrb[0].mxu0
        %v3493 = vpop.f32.mrb[0].mxu0
        %v3494 = vadd.f32 0.0, %v3493
        %v3495 = vpop.f32.mrb[0].mxu0
        %3496 = vmatprep.mubr.bf16.mxu0 0
        %3497 = vmatmul.mubr.bf16.gmra.mrb[0].mxu0 %v3356
        %v3498 = vpop.f32.mrb[0].mxu0
        %v3499 = vadd.f32 0.0, %v3498
        %v3500 = vpop.f32.mrb[0].mxu0
        %v3501 = vpop.f32.mrb[0].mxu0
        %v3502 = vadd.f32 0.0, %v3501
        %v3503 = vpop.f32.mrb[0].mxu0
        %3504 = vmatprep.mubr.bf16.mxu0 0
        %3505 = vmatmul.mubr.bf16.gmra.mrb[0].mxu0 %v3357
        %v3506 = vpop.f32.mrb[0].mxu0
        %v3507 = vadd.f32 0.0, %v3506
        %v3508 = vpop.f32.mrb[0].mxu0
        %v3509 = vpop.f32.mrb[0].mxu0
        %v3510 = vadd.f32 0.0, %v3509
        %v3511 = vpop.f32.mrb[0].mxu0
        %3512 = vmatprep.mubr.bf16.mxu0 0
        %3513 = vmatmul.mubr.bf16.gmra.mrb[0].mxu0 %v3358
        %v3514 = vpop.f32.mrb[0].mxu0
        %v3515 = vadd.f32 0.0, %v3514
        %v3516 = vpop.f32.mrb[0].mxu0
        %v3517 = vpop.f32.mrb[0].mxu0
        %v3518 = vadd.f32 0.0, %v3517
        %v3519 = vpop.f32.mrb[0].mxu0
        %3520 = vmatprep.mubr.bf16.mxu0 0
        %3521 = vmatmul.mubr.bf16.gmra.mrb[0].mxu0 %v3359
        %v3522 = vpop.f32.mrb[0].mxu0
        %v3523 = vadd.f32 0.0, %v3522
        %v3524 = vpop.f32.mrb[0].mxu0
        %v3525 = vpop.f32.mrb[0].mxu0
        %v3526 = vadd.f32 0.0, %v3525
        %v3527 = vpop.f32.mrb[0].mxu0
        %3528 = vmatprep.mubr.bf16.mxu0 0
        %3529 = vmatmul.mubr.bf16.gmra.mrb[0].mxu0 %v3360
        %v3530 = vpop.f32.mrb[0].mxu0
        %v3531 = vadd.f32 0.0, %v3530
        %v3532 = vpop.f32.mrb[0].mxu0
        %v3533 = vpop.f32.mrb[0].mxu0
        %v3534 = vadd.f32 0.0, %v3533
        %v3535 = vpop.f32.mrb[0].mxu0
        %3536 = vmatprep.mubr.bf16.mxu0 0
        %3537 = vmatmul.mubr.bf16.gmra.mrb[0].mxu0 %v3361
        %v3538 = vpop.f32.mrb[0].mxu0
        %v3539 = vadd.f32 0.0, %v3538
        %v3540 = vpop.f32.mrb[0].mxu0
        %v3541 = vpop.f32.mrb[0].mxu0
        %v3542 = vadd.f32 0.0, %v3541
        %v3543 = vpop.f32.mrb[0].mxu0
        %3544 = vmatprep.mubr.bf16.mxu0 0
        %3545 = vmatmul.mubr.bf16.gmra.mrb[0].mxu0 %v3362
        %v3546 = vpop.f32.mrb[0].mxu0
        %v3547 = vadd.f32 0.0, %v3546
        %v3548 = vpop.f32.mrb[0].mxu0
        %v3549 = vpop.f32.mrb[0].mxu0
        %v3550 = vadd.f32 0.0, %v3549
        %v3551 = vpop.f32.mrb[0].mxu0
        %3552 = vmatprep.mubr.bf16.mxu0 0
        %3553 = vmatmul.mubr.bf16.gmra.mrb[0].mxu0 %v3363
        %v3554 = vpop.f32.mrb[0].mxu0
        %v3555 = vadd.f32 0.0, %v3554
        %v3556 = vpop.f32.mrb[0].mxu0
        %v3557 = vpop.f32.mrb[0].mxu0
        %v3558 = vadd.f32 0.0, %v3557
        %v3559 = vpop.f32.mrb[0].mxu0
        %3560 = vmatprep.mubr.bf16.mxu0 0
        %3561 = vmatmul.mubr.bf16.gmra.mrb[0].mxu0 %v3364
        %v3562 = vpop.f32.mrb[0].mxu0
        %v3563 = vadd.f32 0.0, %v3562
        %v3564 = vpop.f32.mrb[0].mxu0
        %v3565 = vpop.f32.mrb[0].mxu0
        %v3566 = vadd.f32 0.0, %v3565
        %v3567 = vpop.f32.mrb[0].mxu0
        %3568 = vmatprep.mubr.bf16.mxu0 0
        %3569 = vmatmul.mubr.bf16.gmra.mrb[0].mxu0 %v3365
        %v3570 = vpop.f32.mrb[0].mxu0
        %v3571 = vadd.f32 0.0, %v3570
        %v3572 = vpop.f32.mrb[0].mxu0
        %v3573 = vpop.f32.mrb[0].mxu0
        %v3574 = vadd.f32 0.0, %v3573
        %v3575 = vpop.f32.mrb[0].mxu0
        %3576 = vmatprep.mubr.bf16.mxu0 0
        %3577 = vmatmul.mubr.bf16.gmra.mrb[0].mxu0 %v3366
        %v3578 = vpop.f32.mrb[0].mxu0
        %v3579 = vadd.f32 0.0, %v3578
        %v3580 = vpop.f32.mrb[0].mxu0
        %v3581 = vpop.f32.mrb[0].mxu0
        %v3582 = vadd.f32 0.0, %v3581
        %v3583 = vpop.f32.mrb[0].mxu0
        %3584 = vmatprep.mubr.bf16.mxu0 0
        %3585 = vmatmul.mubr.bf16.gmra.mrb[0].mxu0 %v3367
        %v3586 = vpop.f32.mrb[0].mxu0
        %v3587 = vadd.f32 0.0, %v3586
        %v3588 = vpop.f32.mrb[0].mxu0
        %v3589 = vpop.f32.mrb[0].mxu0
        %v3590 = vadd.f32 0.0, %v3589
        %v3591 = vpop.f32.mrb[0].mxu0
        %3592 = vdwg.mxu0
        %v3593 = vadd.f32 %v2839, %v3467
        %v3594 = vadd.f32 %v2840, %v3470
        %v3595 = vadd.f32 %v2841, %v3475
        %v3596 = vadd.f32 %v2842, %v3478
        %v3597 = vadd.f32 %v2843, %v3483
        %v3598 = vadd.f32 %v2844, %v3486
        %v3599 = vadd.f32 %v2845, %v3491
        %v3600 = vadd.f32 %v2846, %v3494
        %v3601 = vadd.f32 %v2847, %v3499
        %v3602 = vadd.f32 %v2848, %v3502
        %v3603 = vadd.f32 %v2849, %v3507
        %v3604 = vadd.f32 %v2850, %v3510
        %v3605 = vadd.f32 %v2851, %v3515
        %v3606 = vadd.f32 %v2852, %v3518
        %v3607 = vadd.f32 %v2853, %v3523
        %v3608 = vadd.f32 %v2854, %v3526
        %v3609 = vadd.f32 %v2855, %v3531
        %v3610 = vadd.f32 %v2856, %v3534
        %v3611 = vadd.f32 %v2857, %v3539
        %v3612 = vadd.f32 %v2858, %v3542
        %v3613 = vadd.f32 %v2859, %v3547
        %v3614 = vadd.f32 %v2860, %v3550
        %v3615 = vadd.f32 %v2861, %v3555
        %v3616 = vadd.f32 %v2862, %v3558
        %v3617 = vadd.f32 %v2863, %v3563
        %v3618 = vadd.f32 %v2864, %v3566
        %v3619 = vadd.f32 %v2865, %v3571
        %v3620 = vadd.f32 %v2866, %v3574
        %v3621 = vadd.f32 %v2867, %v3579
        %v3622 = vadd.f32 %v2868, %v3582
        %v3623 = vadd.f32 %v2869, %v3587
        %v3624 = vadd.f32 %v2870, %v3590
        %3625 = vst [vmem:[#allocation3] sm:$0xff] %v3593
        %3626 = vst [vmem:[#allocation3 + $0x8] sm:$0xff] %v3594
        %3627 = vst [vmem:[#allocation3 + $0x10] sm:$0xff] %v3595
        %3628 = vst [vmem:[#allocation3 + $0x18] sm:$0xff] %v3596
        %3629 = vst [vmem:[#allocation3 + $0x20] sm:$0xff] %v3597
        %3630 = vst [vmem:[#allocation3 + $0x28] sm:$0xff] %v3598
        %3631 = vst [vmem:[#allocation3 + $0x30] sm:$0xff] %v3599
        %3632 = vst [vmem:[#allocation3 + $0x38] sm:$0xff] %v3600
        %3633 = vst [vmem:[#allocation3 + $0x40] sm:$0xff] %v3601
        %3634 = vst [vmem:[#allocation3 + $0x48] sm:$0xff] %v3602
        %3635 = vst [vmem:[#allocation3 + $0x50] sm:$0xff] %v3603
        %3636 = vst [vmem:[#allocation3 + $0x58] sm:$0xff] %v3604
        %3637 = vst [vmem:[#allocation3 + $0x60] sm:$0xff] %v3605
        %3638 = vst [vmem:[#allocation3 + $0x68] sm:$0xff] %v3606
        %3639 = vst [vmem:[#allocation3 + $0x70] sm:$0xff] %v3607
        %3640 = vst [vmem:[#allocation3 + $0x78] sm:$0xff] %v3608
        %3641 = vst [vmem:[#allocation3 + $0x80] sm:$0xff] %v3609
        %3642 = vst [vmem:[#allocation3 + $0x88] sm:$0xff] %v3610
        %3643 = vst [vmem:[#allocation3 + $0x90] sm:$0xff] %v3611
        %3644 = vst [vmem:[#allocation3 + $0x98] sm:$0xff] %v3612
        %3645 = vst [vmem:[#allocation3 + $0xa0] sm:$0xff] %v3613
        %3646 = vst [vmem:[#allocation3 + $0xa8] sm:$0xff] %v3614
        %3647 = vst [vmem:[#allocation3 + $0xb0] sm:$0xff] %v3615
        %3648 = vst [vmem:[#allocation3 + $0xb8] sm:$0xff] %v3616
        %3649 = vst [vmem:[#allocation3 + $0xc0] sm:$0xff] %v3617
        %3650 = vst [vmem:[#allocation3 + $0xc8] sm:$0xff] %v3618
        %3651 = vst [vmem:[#allocation3 + $0xd0] sm:$0xff] %v3619
        %3652 = vst [vmem:[#allocation3 + $0xd8] sm:$0xff] %v3620
        %3653 = vst [vmem:[#allocation3 + $0xe0] sm:$0xff] %v3621
        %3654 = vst [vmem:[#allocation3 + $0xe8] sm:$0xff] %v3622
        %3655 = vst [vmem:[#allocation3 + $0xf0] sm:$0xff] %v3623
        %3656 = vst [vmem:[#allocation3 + $0xf8] sm:$0xff] %v3624
        %v3657 = vld [vmem:[#allocation3] sm:$0xff]
        %v3658 = vld [vmem:[#allocation3 + $0x8] sm:$0xff]
        %v3659 = vld [vmem:[#allocation3 + $0x10] sm:$0xff]
        %v3660 = vld [vmem:[#allocation3 + $0x18] sm:$0xff]
        %v3661 = vld [vmem:[#allocation3 + $0x20] sm:$0xff]
        %v3662 = vld [vmem:[#allocation3 + $0x28] sm:$0xff]
        %v3663 = vld [vmem:[#allocation3 + $0x30] sm:$0xff]
        %v3664 = vld [vmem:[#allocation3 + $0x38] sm:$0xff]
        %v3665 = vld [vmem:[#allocation3 + $0x40] sm:$0xff]
        %v3666 = vld [vmem:[#allocation3 + $0x48] sm:$0xff]
        %v3667 = vld [vmem:[#allocation3 + $0x50] sm:$0xff]
        %v3668 = vld [vmem:[#allocation3 + $0x58] sm:$0xff]
        %v3669 = vld [vmem:[#allocation3 + $0x60] sm:$0xff]
        %v3670 = vld [vmem:[#allocation3 + $0x68] sm:$0xff]
        %v3671 = vld [vmem:[#allocation3 + $0x70] sm:$0xff]
        %v3672 = vld [vmem:[#allocation3 + $0x78] sm:$0xff]
        %v3673 = vld [vmem:[#allocation3 + $0x80] sm:$0xff]
        %v3674 = vld [vmem:[#allocation3 + $0x88] sm:$0xff]
        %v3675 = vld [vmem:[#allocation3 + $0x90] sm:$0xff]
        %v3676 = vld [vmem:[#allocation3 + $0x98] sm:$0xff]
        %v3677 = vld [vmem:[#allocation3 + $0xa0] sm:$0xff]
        %v3678 = vld [vmem:[#allocation3 + $0xa8] sm:$0xff]
        %v3679 = vld [vmem:[#allocation3 + $0xb0] sm:$0xff]
        %v3680 = vld [vmem:[#allocation3 + $0xb8] sm:$0xff]
        %v3681 = vld [vmem:[#allocation3 + $0xc0] sm:$0xff]
        %v3682 = vld [vmem:[#allocation3 + $0xc8] sm:$0xff]
        %v3683 = vld [vmem:[#allocation3 + $0xd0] sm:$0xff]
        %v3684 = vld [vmem:[#allocation3 + $0xd8] sm:$0xff]
        %v3685 = vld [vmem:[#allocation3 + $0xe0] sm:$0xff]
        %v3686 = vld [vmem:[#allocation3 + $0xe8] sm:$0xff]
        %v3687 = vld [vmem:[#allocation3 + $0xf0] sm:$0xff]
        %v3688 = vld [vmem:[#allocation3 + $0xf8] sm:$0xff]
        %v3689 = vld [vmem:[%s484] sm:$0xe]
        %v3690 = vld [vmem:[%s484 + $0x4] sm:$0xf]
        %v3691 = vld [vmem:[%s484 + $0x8] sm:$0x1]
        %v3692 = vld [vmem:[%s484 + $0xc] sm:$0xe]
        %v3693 = vld [vmem:[%s484 + $0x10] sm:$0xf]
        %v3694 = vld [vmem:[%s484 + $0x14] sm:$0x1]
        %v3695 = vld [vmem:[%s484 + $0x18] sm:$0xe]
        %v3696 = vld [vmem:[%s484 + $0x1c] sm:$0xf]
        %v3697 = vld [vmem:[%s484 + $0x20] sm:$0x1]
        %v3698 = vld [vmem:[%s484 + $0x24] sm:$0xe]
        %v3699 = vld [vmem:[%s484 + $0x28] sm:$0xf]
        %v3700 = vld [vmem:[%s484 + $0x2c] sm:$0x1]
        %v3701 = vld [vmem:[%s484 + $0x30] sm:$0xe]
        %v3702 = vld [vmem:[%s484 + $0x34] sm:$0xf]
        %v3703 = vld [vmem:[%s484 + $0x38] sm:$0x1]
        %v3704 = vld [vmem:[%s484 + $0x3c] sm:$0xe]
        %v3705 = vld [vmem:[%s484 + $0x40] sm:$0xf]
        %v3706 = vld [vmem:[%s484 + $0x44] sm:$0x1]
        %v3707 = vld [vmem:[%s484 + $0x48] sm:$0xe]
        %v3708 = vld [vmem:[%s484 + $0x4c] sm:$0xf]
        %v3709 = vld [vmem:[%s484 + $0x50] sm:$0x1]
        %v3710 = vld [vmem:[%s484 + $0x54] sm:$0xe]
        %v3711 = vld [vmem:[%s484 + $0x58] sm:$0xf]
        %v3712 = vld [vmem:[%s484 + $0x5c] sm:$0x1]
        %v3713 = vld [vmem:[%s484 + $0x60] sm:$0xe]
        %v3714 = vld [vmem:[%s484 + $0x64] sm:$0xf]
        %v3715 = vld [vmem:[%s484 + $0x68] sm:$0x1]
        %v3716 = vld [vmem:[%s484 + $0x6c] sm:$0xe]
        %v3717 = vld [vmem:[%s484 + $0x70] sm:$0xf]
        %v3718 = vld [vmem:[%s484 + $0x74] sm:$0x1]
        %v3719 = vld [vmem:[%s484 + $0x78] sm:$0xe]
        %v3720 = vld [vmem:[%s484 + $0x7c] sm:$0xf]
        %v3721 = vld [vmem:[%s484 + $0x80] sm:$0x1]
        %v3722 = vld [vmem:[%s484 + $0x84] sm:$0xe]
        %v3723 = vld [vmem:[%s484 + $0x88] sm:$0xf]
        %v3724 = vld [vmem:[%s484 + $0x8c] sm:$0x1]
        %v3725 = vld [vmem:[%s484 + $0x90] sm:$0xe]
        %v3726 = vld [vmem:[%s484 + $0x94] sm:$0xf]
        %v3727 = vld [vmem:[%s484 + $0x98] sm:$0x1]
        %v3728 = vld [vmem:[%s484 + $0x9c] sm:$0xe]
        %v3729 = vld [vmem:[%s484 + $0xa0] sm:$0xf]
        %v3730 = vld [vmem:[%s484 + $0xa4] sm:$0x1]
        %v3731 = vld [vmem:[%s484 + $0xa8] sm:$0xe]
        %v3732 = vld [vmem:[%s484 + $0xac] sm:$0xf]
        %v3733 = vld [vmem:[%s484 + $0xb0] sm:$0x1]
        %v3734 = vld [vmem:[%s484 + $0xb4] sm:$0xe]
        %v3735 = vld [vmem:[%s484 + $0xb8] sm:$0xf]
        %v3736 = vld [vmem:[%s484 + $0xbc] sm:$0x1]
        %v3785 = vrot.slane %v3689, 5
        %v3786 = vrot.slane %v3785, 4
        %v3787 = vrot.slane %v3690, 5
        %v3788 = vsel %vm1922, %v3786, %v3787
        %v3789 = vrot.slane %v3787, 4
        %v3790 = vrot.slane %v3691, 5
        %v3791 = vsel %vm1922, %v3789, %v3790
        %v3792 = vrot.slane %v3692, 5
        %v3793 = vrot.slane %v3792, 4
        %v3794 = vrot.slane %v3693, 5
        %v3795 = vsel %vm1922, %v3793, %v3794
        %v3796 = vrot.slane %v3794, 4
        %v3797 = vrot.slane %v3694, 5
        %v3798 = vsel %vm1922, %v3796, %v3797
        %v3799 = vrot.slane %v3695, 5
        %v3800 = vrot.slane %v3799, 4
        %v3801 = vrot.slane %v3696, 5
        %v3802 = vsel %vm1922, %v3800, %v3801
        %v3803 = vrot.slane %v3801, 4
        %v3804 = vrot.slane %v3697, 5
        %v3805 = vsel %vm1922, %v3803, %v3804
        %v3806 = vrot.slane %v3698, 5
        %v3807 = vrot.slane %v3806, 4
        %v3808 = vrot.slane %v3699, 5
        %v3809 = vsel %vm1922, %v3807, %v3808
        %v3810 = vrot.slane %v3808, 4
        %v3811 = vrot.slane %v3700, 5
        %v3812 = vsel %vm1922, %v3810, %v3811
        %v3813 = vrot.slane %v3701, 5
        %v3814 = vrot.slane %v3813, 4
        %v3815 = vrot.slane %v3702, 5
        %v3816 = vsel %vm1922, %v3814, %v3815
        %v3817 = vrot.slane %v3815, 4
        %v3818 = vrot.slane %v3703, 5
        %v3819 = vsel %vm1922, %v3817, %v3818
        %v3820 = vrot.slane %v3704, 5
        %v3821 = vrot.slane %v3820, 4
        %v3822 = vrot.slane %v3705, 5
        %v3823 = vsel %vm1922, %v3821, %v3822
        %v3824 = vrot.slane %v3822, 4
        %v3825 = vrot.slane %v3706, 5
        %v3826 = vsel %vm1922, %v3824, %v3825
        %v3827 = vrot.slane %v3707, 5
        %v3828 = vrot.slane %v3827, 4
        %v3829 = vrot.slane %v3708, 5
        %v3830 = vsel %vm1922, %v3828, %v3829
        %v3831 = vrot.slane %v3829, 4
        %v3832 = vrot.slane %v3709, 5
        %v3833 = vsel %vm1922, %v3831, %v3832
        %v3834 = vrot.slane %v3710, 5
        %v3835 = vrot.slane %v3834, 4
        %v3836 = vrot.slane %v3711, 5
        %v3837 = vsel %vm1922, %v3835, %v3836
        %v3838 = vrot.slane %v3836, 4
        %v3839 = vrot.slane %v3712, 5
        %v3840 = vsel %vm1922, %v3838, %v3839
        %v3841 = vrot.slane %v3713, 5
        %v3842 = vrot.slane %v3841, 4
        %v3843 = vrot.slane %v3714, 5
        %v3844 = vsel %vm1922, %v3842, %v3843
        %v3845 = vrot.slane %v3843, 4
        %v3846 = vrot.slane %v3715, 5
        %v3847 = vsel %vm1922, %v3845, %v3846
        %v3848 = vrot.slane %v3716, 5
        %v3849 = vrot.slane %v3848, 4
        %v3850 = vrot.slane %v3717, 5
        %v3851 = vsel %vm1922, %v3849, %v3850
        %v3852 = vrot.slane %v3850, 4
        %v3853 = vrot.slane %v3718, 5
        %v3854 = vsel %vm1922, %v3852, %v3853
        %v3855 = vrot.slane %v3719, 5
        %v3856 = vrot.slane %v3855, 4
        %v3857 = vrot.slane %v3720, 5
        %v3858 = vsel %vm1922, %v3856, %v3857
        %v3859 = vrot.slane %v3857, 4
        %v3860 = vrot.slane %v3721, 5
        %v3861 = vsel %vm1922, %v3859, %v3860
        %v3862 = vrot.slane %v3722, 5
        %v3863 = vrot.slane %v3862, 4
        %v3864 = vrot.slane %v3723, 5
        %v3865 = vsel %vm1922, %v3863, %v3864
        %v3866 = vrot.slane %v3864, 4
        %v3867 = vrot.slane %v3724, 5
        %v3868 = vsel %vm1922, %v3866, %v3867
        %v3869 = vrot.slane %v3725, 5
        %v3870 = vrot.slane %v3869, 4
        %v3871 = vrot.slane %v3726, 5
        %v3872 = vsel %vm1922, %v3870, %v3871
        %v3873 = vrot.slane %v3871, 4
        %v3874 = vrot.slane %v3727, 5
        %v3875 = vsel %vm1922, %v3873, %v3874
        %v3876 = vrot.slane %v3728, 5
        %v3877 = vrot.slane %v3876, 4
        %v3878 = vrot.slane %v3729, 5
        %v3879 = vsel %vm1922, %v3877, %v3878
        %v3880 = vrot.slane %v3878, 4
        %v3881 = vrot.slane %v3730, 5
        %v3882 = vsel %vm1922, %v3880, %v3881
        %v3883 = vrot.slane %v3731, 5
        %v3884 = vrot.slane %v3883, 4
        %v3885 = vrot.slane %v3732, 5
        %v3886 = vsel %vm1922, %v3884, %v3885
        %v3887 = vrot.slane %v3885, 4
        %v3888 = vrot.slane %v3733, 5
        %v3889 = vsel %vm1922, %v3887, %v3888
        %v3890 = vrot.slane %v3734, 5
        %v3891 = vrot.slane %v3890, 4
        %v3892 = vrot.slane %v3735, 5
        %v3893 = vsel %vm1922, %v3891, %v3892
        %v3894 = vrot.slane %v3892, 4
        %v3895 = vrot.slane %v3736, 5
        %v3896 = vsel %vm1922, %v3894, %v3895
        %s3897 = scalar_lea.vmem %s3, 320
        %v3898 = vld [vmem:[%s3897] sm:$0xf]
        %v3899 = vld [vmem:[%s3897 + $0x4] sm:$0xf]
        %v3900 = vld [vmem:[%s3897 + $0x8] sm:$0xf]
        %v3901 = vld [vmem:[%s3897 + $0xc] sm:$0xf]
        %v3902 = vld [vmem:[%s3897 + $0x10] sm:$0xf]
        %v3903 = vld [vmem:[%s3897 + $0x14] sm:$0xf]
        %v3904 = vld [vmem:[%s3897 + $0x18] sm:$0xf]
        %v3905 = vld [vmem:[%s3897 + $0x1c] sm:$0xf]
        %v3906 = vld [vmem:[%s3897 + $0x20] sm:$0xf]
        %v3907 = vld [vmem:[%s3897 + $0x24] sm:$0xf]
        %v3908 = vld [vmem:[%s3897 + $0x28] sm:$0xf]
        %v3909 = vld [vmem:[%s3897 + $0x2c] sm:$0xf]
        %v3910 = vld [vmem:[%s3897 + $0x30] sm:$0xf]
        %v3911 = vld [vmem:[%s3897 + $0x34] sm:$0xf]
        %v3912 = vld [vmem:[%s3897 + $0x38] sm:$0xf]
        %v3913 = vld [vmem:[%s3897 + $0x3c] sm:$0xf]
        %v3914 = vunpack.c.l.b16 %v3788
        %v3915 = vunpack.c.l.b16 %v3791
        %v3916 = vunpack.c.l.b16 %v3795
        %v3917 = vunpack.c.l.b16 %v3798
        %v3918 = vunpack.c.l.b16 %v3802
        %v3919 = vunpack.c.l.b16 %v3805
        %v3920 = vunpack.c.l.b16 %v3809
        %v3921 = vunpack.c.l.b16 %v3812
        %v3922 = vunpack.c.l.b16 %v3816
        %v3923 = vunpack.c.l.b16 %v3819
        %v3924 = vunpack.c.l.b16 %v3823
        %v3925 = vunpack.c.l.b16 %v3826
        %v3926 = vunpack.c.l.b16 %v3830
        %v3927 = vunpack.c.l.b16 %v3833
        %v3928 = vunpack.c.l.b16 %v3837
        %v3929 = vunpack.c.l.b16 %v3840
        %v3930 = vunpack.c.l.b16 %v3844
        %v3931 = vunpack.c.l.b16 %v3847
        %v3932 = vunpack.c.l.b16 %v3851
        %v3933 = vunpack.c.l.b16 %v3854
        %v3934 = vunpack.c.l.b16 %v3858
        %v3935 = vunpack.c.l.b16 %v3861
        %v3936 = vunpack.c.l.b16 %v3865
        %v3937 = vunpack.c.l.b16 %v3868
        %v3938 = vunpack.c.l.b16 %v3872
        %v3939 = vunpack.c.l.b16 %v3875
        %v3940 = vunpack.c.l.b16 %v3879
        %v3941 = vunpack.c.l.b16 %v3882
        %v3942 = vunpack.c.l.b16 %v3886
        %v3943 = vunpack.c.l.b16 %v3889
        %v3944 = vunpack.c.l.b16 %v3893
        %v3945 = vunpack.c.l.b16 %v3896
        %v3946 = vpack.c.b16 %v3915, %v3914
        %v3947 = vpack.c.b16 %v3917, %v3916
        %v3948 = vpack.c.b16 %v3919, %v3918
        %v3949 = vpack.c.b16 %v3921, %v3920
        %v3950 = vpack.c.b16 %v3923, %v3922
        %v3951 = vpack.c.b16 %v3925, %v3924
        %v3952 = vpack.c.b16 %v3927, %v3926
        %v3953 = vpack.c.b16 %v3929, %v3928
        %v3954 = vpack.c.b16 %v3931, %v3930
        %v3955 = vpack.c.b16 %v3933, %v3932
        %v3956 = vpack.c.b16 %v3935, %v3934
        %v3957 = vpack.c.b16 %v3937, %v3936
        %v3958 = vpack.c.b16 %v3939, %v3938
        %v3959 = vpack.c.b16 %v3941, %v3940
        %v3960 = vpack.c.b16 %v3943, %v3942
        %v3961 = vpack.c.b16 %v3945, %v3944
        %v3994 = vunpack.c.l.b16 %v3898
        %v3995 = vunpack.c.l.b16 %v3899
        %v3996 = vunpack.c.l.b16 %v3900
        %v3997 = vunpack.c.l.b16 %v3901
        %v3998 = vunpack.c.l.b16 %v3902
        %v3999 = vunpack.c.l.b16 %v3903
        %v4000 = vunpack.c.l.b16 %v3904
        %v4001 = vunpack.c.l.b16 %v3905
        %v4002 = vunpack.c.l.b16 %v3906
        %v4003 = vunpack.c.l.b16 %v3907
        %v4004 = vunpack.c.l.b16 %v3908
        %v4005 = vunpack.c.l.b16 %v3909
        %v4006 = vunpack.c.l.b16 %v3910
        %v4007 = vunpack.c.l.b16 %v3911
        %v4008 = vunpack.c.l.b16 %v3912
        %v4009 = vunpack.c.l.b16 %v3913
        %v4010 = vpack.c.b16 %v3995, %v3994
        %v4011 = vpack.c.b16 %v3997, %v3996
        %v4012 = vpack.c.b16 %v3999, %v3998
        %v4013 = vpack.c.b16 %v4001, %v4000
        %v4014 = vpack.c.b16 %v4003, %v4002
        %v4015 = vpack.c.b16 %v4005, %v4004
        %v4016 = vpack.c.b16 %v4007, %v4006
        %v4017 = vpack.c.b16 %v4009, %v4008
        %4026 = vmatprep.subr.bf16.mxu0 0
        %4027 = vmatpush1.bf16.msra.mxu0 %v4010
        %4028 = vmatprep.subr.bf16.mxu0 0
        %4029 = vmatpush1.bf16.msra.mxu0 %v4011
        %4030 = vmatprep.subr.bf16.mxu0 0
        %4031 = vmatpush1.bf16.msra.mxu0 %v4012
        %4032 = vmatprep.subr.bf16.mxu0 0
        %4033 = vmatpush1.bf16.msra.mxu0 %v4013
        %4034 = vmatprep.subr.bf16.mxu0 0
        %4035 = vmatpush1.bf16.msra.mxu0 %v4014
        %4036 = vmatprep.subr.bf16.mxu0 0
        %4037 = vmatpush1.bf16.msra.mxu0 %v4015
        %4038 = vmatprep.subr.bf16.mxu0 0
        %4039 = vmatpush1.bf16.msra.mxu0 %v4016
        %4040 = vmatprep.subr.bf16.mxu0 0
        %4041 = vmatpush1.bf16.msra.mxu0 %v4017
        %4042 = vmatprep.subr.bf16.mxu0 0
        %4043 = vmatpush1.bf16.msra.mxu0 0
        %4044 = vmatprep.subr.bf16.mxu0 0
        %4045 = vmatpush1.bf16.msra.mxu0 0
        %4046 = vmatprep.subr.bf16.mxu0 0
        %4047 = vmatpush1.bf16.msra.mxu0 0
        %4048 = vmatprep.subr.bf16.mxu0 0
        %4049 = vmatpush1.bf16.msra.mxu0 0
        %4050 = vmatprep.subr.bf16.mxu0 0
        %4051 = vmatpush1.bf16.msra.mxu0 0
        %4052 = vmatprep.subr.bf16.mxu0 0
        %4053 = vmatpush1.bf16.msra.mxu0 0
        %4054 = vmatprep.subr.bf16.mxu0 0
        %4055 = vmatpush1.bf16.msra.mxu0 0
        %4056 = vmatprep.subr.bf16.mxu0 0
        %4057 = vmatpush1.bf16.msra.mxu0 0
        %4058 = vmatprep.mubr.bf16.mxu0 0
        %4059 = vmatmul.mubr.bf16.gmra.mrb[0].mxu0 %v3946
        %v4060 = vpop.f32.mrb[0].mxu0
        %v4061 = vadd.f32 0.0, %v4060
        %v4062 = vpop.f32.mrb[0].mxu0
        %v4063 = vpop.f32.mrb[0].mxu0
        %v4064 = vadd.f32 0.0, %v4063
        %v4065 = vpop.f32.mrb[0].mxu0
        %4066 = vmatprep.mubr.bf16.mxu0 0
        %4067 = vmatmul.mubr.bf16.gmra.mrb[0].mxu0 %v3947
        %v4068 = vpop.f32.mrb[0].mxu0
        %v4069 = vadd.f32 0.0, %v4068
        %v4070 = vpop.f32.mrb[0].mxu0
        %v4071 = vpop.f32.mrb[0].mxu0
        %v4072 = vadd.f32 0.0, %v4071
        %v4073 = vpop.f32.mrb[0].mxu0
        %4074 = vmatprep.mubr.bf16.mxu0 0
        %4075 = vmatmul.mubr.bf16.gmra.mrb[0].mxu0 %v3948
        %v4076 = vpop.f32.mrb[0].mxu0
        %v4077 = vadd.f32 0.0, %v4076
        %v4078 = vpop.f32.mrb[0].mxu0
        %v4079 = vpop.f32.mrb[0].mxu0
        %v4080 = vadd.f32 0.0, %v4079
        %v4081 = vpop.f32.mrb[0].mxu0
        %4082 = vmatprep.mubr.bf16.mxu0 0
        %4083 = vmatmul.mubr.bf16.gmra.mrb[0].mxu0 %v3949
        %v4084 = vpop.f32.mrb[0].mxu0
        %v4085 = vadd.f32 0.0, %v4084
        %v4086 = vpop.f32.mrb[0].mxu0
        %v4087 = vpop.f32.mrb[0].mxu0
        %v4088 = vadd.f32 0.0, %v4087
        %v4089 = vpop.f32.mrb[0].mxu0
        %4090 = vmatprep.mubr.bf16.mxu0 0
        %4091 = vmatmul.mubr.bf16.gmra.mrb[0].mxu0 %v3950
        %v4092 = vpop.f32.mrb[0].mxu0
        %v4093 = vadd.f32 0.0, %v4092
        %v4094 = vpop.f32.mrb[0].mxu0
        %v4095 = vpop.f32.mrb[0].mxu0
        %v4096 = vadd.f32 0.0, %v4095
        %v4097 = vpop.f32.mrb[0].mxu0
        %4098 = vmatprep.mubr.bf16.mxu0 0
        %4099 = vmatmul.mubr.bf16.gmra.mrb[0].mxu0 %v3951
        %v4100 = vpop.f32.mrb[0].mxu0
        %v4101 = vadd.f32 0.0, %v4100
        %v4102 = vpop.f32.mrb[0].mxu0
        %v4103 = vpop.f32.mrb[0].mxu0
        %v4104 = vadd.f32 0.0, %v4103
        %v4105 = vpop.f32.mrb[0].mxu0
        %4106 = vmatprep.mubr.bf16.mxu0 0
        %4107 = vmatmul.mubr.bf16.gmra.mrb[0].mxu0 %v3952
        %v4108 = vpop.f32.mrb[0].mxu0
        %v4109 = vadd.f32 0.0, %v4108
        %v4110 = vpop.f32.mrb[0].mxu0
        %v4111 = vpop.f32.mrb[0].mxu0
        %v4112 = vadd.f32 0.0, %v4111
        %v4113 = vpop.f32.mrb[0].mxu0
        %4114 = vmatprep.mubr.bf16.mxu0 0
        %4115 = vmatmul.mubr.bf16.gmra.mrb[0].mxu0 %v3953
        %v4116 = vpop.f32.mrb[0].mxu0
        %v4117 = vadd.f32 0.0, %v4116
        %v4118 = vpop.f32.mrb[0].mxu0
        %v4119 = vpop.f32.mrb[0].mxu0
        %v4120 = vadd.f32 0.0, %v4119
        %v4121 = vpop.f32.mrb[0].mxu0
        %4122 = vmatprep.mubr.bf16.mxu0 0
        %4123 = vmatmul.mubr.bf16.gmra.mrb[0].mxu0 %v3954
        %v4124 = vpop.f32.mrb[0].mxu0
        %v4125 = vadd.f32 0.0, %v4124
        %v4126 = vpop.f32.mrb[0].mxu0
        %v4127 = vpop.f32.mrb[0].mxu0
        %v4128 = vadd.f32 0.0, %v4127
        %v4129 = vpop.f32.mrb[0].mxu0
        %4130 = vmatprep.mubr.bf16.mxu0 0
        %4131 = vmatmul.mubr.bf16.gmra.mrb[0].mxu0 %v3955
        %v4132 = vpop.f32.mrb[0].mxu0
        %v4133 = vadd.f32 0.0, %v4132
        %v4134 = vpop.f32.mrb[0].mxu0
        %v4135 = vpop.f32.mrb[0].mxu0
        %v4136 = vadd.f32 0.0, %v4135
        %v4137 = vpop.f32.mrb[0].mxu0
        %4138 = vmatprep.mubr.bf16.mxu0 0
        %4139 = vmatmul.mubr.bf16.gmra.mrb[0].mxu0 %v3956
        %v4140 = vpop.f32.mrb[0].mxu0
        %v4141 = vadd.f32 0.0, %v4140
        %v4142 = vpop.f32.mrb[0].mxu0
        %v4143 = vpop.f32.mrb[0].mxu0
        %v4144 = vadd.f32 0.0, %v4143
        %v4145 = vpop.f32.mrb[0].mxu0
        %4146 = vmatprep.mubr.bf16.mxu0 0
        %4147 = vmatmul.mubr.bf16.gmra.mrb[0].mxu0 %v3957
        %v4148 = vpop.f32.mrb[0].mxu0
        %v4149 = vadd.f32 0.0, %v4148
        %v4150 = vpop.f32.mrb[0].mxu0
        %v4151 = vpop.f32.mrb[0].mxu0
        %v4152 = vadd.f32 0.0, %v4151
        %v4153 = vpop.f32.mrb[0].mxu0
        %4154 = vmatprep.mubr.bf16.mxu0 0
        %4155 = vmatmul.mubr.bf16.gmra.mrb[0].mxu0 %v3958
        %v4156 = vpop.f32.mrb[0].mxu0
        %v4157 = vadd.f32 0.0, %v4156
        %v4158 = vpop.f32.mrb[0].mxu0
        %v4159 = vpop.f32.mrb[0].mxu0
        %v4160 = vadd.f32 0.0, %v4159
        %v4161 = vpop.f32.mrb[0].mxu0
        %4162 = vmatprep.mubr.bf16.mxu0 0
        %4163 = vmatmul.mubr.bf16.gmra.mrb[0].mxu0 %v3959
        %v4164 = vpop.f32.mrb[0].mxu0
        %v4165 = vadd.f32 0.0, %v4164
        %v4166 = vpop.f32.mrb[0].mxu0
        %v4167 = vpop.f32.mrb[0].mxu0
        %v4168 = vadd.f32 0.0, %v4167
        %v4169 = vpop.f32.mrb[0].mxu0
        %4170 = vmatprep.mubr.bf16.mxu0 0
        %4171 = vmatmul.mubr.bf16.gmra.mrb[0].mxu0 %v3960
        %v4172 = vpop.f32.mrb[0].mxu0
        %v4173 = vadd.f32 0.0, %v4172
        %v4174 = vpop.f32.mrb[0].mxu0
        %v4175 = vpop.f32.mrb[0].mxu0
        %v4176 = vadd.f32 0.0, %v4175
        %v4177 = vpop.f32.mrb[0].mxu0
        %4178 = vmatprep.mubr.bf16.mxu0 0
        %4179 = vmatmul.mubr.bf16.gmra.mrb[0].mxu0 %v3961
        %v4180 = vpop.f32.mrb[0].mxu0
        %v4181 = vadd.f32 0.0, %v4180
        %v4182 = vpop.f32.mrb[0].mxu0
        %v4183 = vpop.f32.mrb[0].mxu0
        %v4184 = vadd.f32 0.0, %v4183
        %v4185 = vpop.f32.mrb[0].mxu0
        %4186 = vdwg.mxu0
        %v4187 = vadd.f32 %v3657, %v4061
        %v4188 = vadd.f32 %v3658, %v4064
        %v4189 = vadd.f32 %v3659, %v4069
        %v4190 = vadd.f32 %v3660, %v4072
        %v4191 = vadd.f32 %v3661, %v4077
        %v4192 = vadd.f32 %v3662, %v4080
        %v4193 = vadd.f32 %v3663, %v4085
        %v4194 = vadd.f32 %v3664, %v4088
        %v4195 = vadd.f32 %v3665, %v4093
        %v4196 = vadd.f32 %v3666, %v4096
        %v4197 = vadd.f32 %v3667, %v4101
        %v4198 = vadd.f32 %v3668, %v4104
        %v4199 = vadd.f32 %v3669, %v4109
        %v4200 = vadd.f32 %v3670, %v4112
        %v4201 = vadd.f32 %v3671, %v4117
        %v4202 = vadd.f32 %v3672, %v4120
        %v4203 = vadd.f32 %v3673, %v4125
        %v4204 = vadd.f32 %v3674, %v4128
        %v4205 = vadd.f32 %v3675, %v4133
        %v4206 = vadd.f32 %v3676, %v4136
        %v4207 = vadd.f32 %v3677, %v4141
        %v4208 = vadd.f32 %v3678, %v4144
        %v4209 = vadd.f32 %v3679, %v4149
        %v4210 = vadd.f32 %v3680, %v4152
        %v4211 = vadd.f32 %v3681, %v4157
        %v4212 = vadd.f32 %v3682, %v4160
        %v4213 = vadd.f32 %v3683, %v4165
        %v4214 = vadd.f32 %v3684, %v4168
        %v4215 = vadd.f32 %v3685, %v4173
        %v4216 = vadd.f32 %v3686, %v4176
        %v4217 = vadd.f32 %v3687, %v4181
        %v4218 = vadd.f32 %v3688, %v4184
        %4219 = vst [vmem:[#allocation3] sm:$0xff] %v4187
        %4220 = vst [vmem:[#allocation3 + $0x8] sm:$0xff] %v4188
        %4221 = vst [vmem:[#allocation3 + $0x10] sm:$0xff] %v4189
        %4222 = vst [vmem:[#allocation3 + $0x18] sm:$0xff] %v4190
        %4223 = vst [vmem:[#allocation3 + $0x20] sm:$0xff] %v4191
        %4224 = vst [vmem:[#allocation3 + $0x28] sm:$0xff] %v4192
        %4225 = vst [vmem:[#allocation3 + $0x30] sm:$0xff] %v4193
        %4226 = vst [vmem:[#allocation3 + $0x38] sm:$0xff] %v4194
        %4227 = vst [vmem:[#allocation3 + $0x40] sm:$0xff] %v4195
        %4228 = vst [vmem:[#allocation3 + $0x48] sm:$0xff] %v4196
        %4229 = vst [vmem:[#allocation3 + $0x50] sm:$0xff] %v4197
        %4230 = vst [vmem:[#allocation3 + $0x58] sm:$0xff] %v4198
        %4231 = vst [vmem:[#allocation3 + $0x60] sm:$0xff] %v4199
        %4232 = vst [vmem:[#allocation3 + $0x68] sm:$0xff] %v4200
        %4233 = vst [vmem:[#allocation3 + $0x70] sm:$0xff] %v4201
        %4234 = vst [vmem:[#allocation3 + $0x78] sm:$0xff] %v4202
        %4235 = vst [vmem:[#allocation3 + $0x80] sm:$0xff] %v4203
        %4236 = vst [vmem:[#allocation3 + $0x88] sm:$0xff] %v4204
        %4237 = vst [vmem:[#allocation3 + $0x90] sm:$0xff] %v4205
        %4238 = vst [vmem:[#allocation3 + $0x98] sm:$0xff] %v4206
        %4239 = vst [vmem:[#allocation3 + $0xa0] sm:$0xff] %v4207
        %4240 = vst [vmem:[#allocation3 + $0xa8] sm:$0xff] %v4208
        %4241 = vst [vmem:[#allocation3 + $0xb0] sm:$0xff] %v4209
        %4242 = vst [vmem:[#allocation3 + $0xb8] sm:$0xff] %v4210
        %4243 = vst [vmem:[#allocation3 + $0xc0] sm:$0xff] %v4211
        %4244 = vst [vmem:[#allocation3 + $0xc8] sm:$0xff] %v4212
        %4245 = vst [vmem:[#allocation3 + $0xd0] sm:$0xff] %v4213
        %4246 = vst [vmem:[#allocation3 + $0xd8] sm:$0xff] %v4214
        %4247 = vst [vmem:[#allocation3 + $0xe0] sm:$0xff] %v4215
        %4248 = vst [vmem:[#allocation3 + $0xe8] sm:$0xff] %v4216
        %4249 = vst [vmem:[#allocation3 + $0xf0] sm:$0xff] %v4217
        %4250 = vst [vmem:[#allocation3 + $0xf8] sm:$0xff] %v4218
        %v4251 = vld [vmem:[#allocation3] sm:$0xff]
        %v4252 = vld [vmem:[#allocation3 + $0x8] sm:$0xff]
        %v4253 = vld [vmem:[#allocation3 + $0x10] sm:$0xff]
        %v4254 = vld [vmem:[#allocation3 + $0x18] sm:$0xff]
        %v4255 = vld [vmem:[#allocation3 + $0x20] sm:$0xff]
        %v4256 = vld [vmem:[#allocation3 + $0x28] sm:$0xff]
        %v4257 = vld [vmem:[#allocation3 + $0x30] sm:$0xff]
        %v4258 = vld [vmem:[#allocation3 + $0x38] sm:$0xff]
        %v4259 = vld [vmem:[#allocation3 + $0x40] sm:$0xff]
        %v4260 = vld [vmem:[#allocation3 + $0x48] sm:$0xff]
        %v4261 = vld [vmem:[#allocation3 + $0x50] sm:$0xff]
        %v4262 = vld [vmem:[#allocation3 + $0x58] sm:$0xff]
        %v4263 = vld [vmem:[#allocation3 + $0x60] sm:$0xff]
        %v4264 = vld [vmem:[#allocation3 + $0x68] sm:$0xff]
        %v4265 = vld [vmem:[#allocation3 + $0x70] sm:$0xff]
        %v4266 = vld [vmem:[#allocation3 + $0x78] sm:$0xff]
        %v4267 = vld [vmem:[#allocation3 + $0x80] sm:$0xff]
        %v4268 = vld [vmem:[#allocation3 + $0x88] sm:$0xff]
        %v4269 = vld [vmem:[#allocation3 + $0x90] sm:$0xff]
        %v4270 = vld [vmem:[#allocation3 + $0x98] sm:$0xff]
        %v4271 = vld [vmem:[#allocation3 + $0xa0] sm:$0xff]
        %v4272 = vld [vmem:[#allocation3 + $0xa8] sm:$0xff]
        %v4273 = vld [vmem:[#allocation3 + $0xb0] sm:$0xff]
        %v4274 = vld [vmem:[#allocation3 + $0xb8] sm:$0xff]
        %v4275 = vld [vmem:[#allocation3 + $0xc0] sm:$0xff]
        %v4276 = vld [vmem:[#allocation3 + $0xc8] sm:$0xff]
        %v4277 = vld [vmem:[#allocation3 + $0xd0] sm:$0xff]
        %v4278 = vld [vmem:[#allocation3 + $0xd8] sm:$0xff]
        %v4279 = vld [vmem:[#allocation3 + $0xe0] sm:$0xff]
        %v4280 = vld [vmem:[#allocation3 + $0xe8] sm:$0xff]
        %v4281 = vld [vmem:[#allocation3 + $0xf0] sm:$0xff]
        %v4282 = vld [vmem:[#allocation3 + $0xf8] sm:$0xff]
        %s4283 = scalar_lea.vmem [#allocation2], 24
        %v4284 = vld [vmem:[%s4283] sm:$0xf]
        %v4285 = vld [vmem:[%s4283 + $0x4] sm:$0xf]
        %v4286 = vld [vmem:[%s4283 + $0xc] sm:$0xf]
        %v4287 = vld [vmem:[%s4283 + $0x10] sm:$0xf]
        %v4288 = vld [vmem:[%s4283 + $0x18] sm:$0xf]
        %v4289 = vld [vmem:[%s4283 + $0x1c] sm:$0xf]
        %v4290 = vld [vmem:[%s4283 + $0x24] sm:$0xf]
        %v4291 = vld [vmem:[%s4283 + $0x28] sm:$0xf]
        %v4292 = vld [vmem:[%s4283 + $0x30] sm:$0xf]
        %v4293 = vld [vmem:[%s4283 + $0x34] sm:$0xf]
        %v4294 = vld [vmem:[%s4283 + $0x3c] sm:$0xf]
        %v4295 = vld [vmem:[%s4283 + $0x40] sm:$0xf]
        %v4296 = vld [vmem:[%s4283 + $0x48] sm:$0xf]
        %v4297 = vld [vmem:[%s4283 + $0x4c] sm:$0xf]
        %v4298 = vld [vmem:[%s4283 + $0x54] sm:$0xf]
        %v4299 = vld [vmem:[%s4283 + $0x58] sm:$0xf]
        %v4300 = vld [vmem:[%s4283 + $0x60] sm:$0xf]
        %v4301 = vld [vmem:[%s4283 + $0x64] sm:$0xf]
        %v4302 = vld [vmem:[%s4283 + $0x6c] sm:$0xf]
        %v4303 = vld [vmem:[%s4283 + $0x70] sm:$0xf]
        %v4304 = vld [vmem:[%s4283 + $0x78] sm:$0xf]
        %v4305 = vld [vmem:[%s4283 + $0x7c] sm:$0xf]
        %v4306 = vld [vmem:[%s4283 + $0x84] sm:$0xf]
        %v4307 = vld [vmem:[%s4283 + $0x88] sm:$0xf]
        %v4308 = vld [vmem:[%s4283 + $0x90] sm:$0xf]
        %v4309 = vld [vmem:[%s4283 + $0x94] sm:$0xf]
        %v4310 = vld [vmem:[%s4283 + $0x9c] sm:$0xf]
        %v4311 = vld [vmem:[%s4283 + $0xa0] sm:$0xf]
        %v4312 = vld [vmem:[%s4283 + $0xa8] sm:$0xf]
        %v4313 = vld [vmem:[%s4283 + $0xac] sm:$0xf]
        %v4314 = vld [vmem:[%s4283 + $0xb4] sm:$0xf]
        %v4315 = vld [vmem:[%s4283 + $0xb8] sm:$0xf]
        %s4316 = scalar_lea.vmem %s3, 384
        %v4317 = vld [vmem:[%s4316] sm:$0xf]
        %v4318 = vld [vmem:[%s4316 + $0x4] sm:$0xf]
        %v4319 = vld [vmem:[%s4316 + $0x8] sm:$0xf]
        %v4320 = vld [vmem:[%s4316 + $0xc] sm:$0xf]
        %v4321 = vld [vmem:[%s4316 + $0x10] sm:$0xf]
        %v4322 = vld [vmem:[%s4316 + $0x14] sm:$0xf]
        %v4323 = vld [vmem:[%s4316 + $0x18] sm:$0xf]
        %v4324 = vld [vmem:[%s4316 + $0x1c] sm:$0xf]
        %v4325 = vld [vmem:[%s4316 + $0x20] sm:$0xf]
        %v4326 = vld [vmem:[%s4316 + $0x24] sm:$0xf]
        %v4327 = vld [vmem:[%s4316 + $0x28] sm:$0xf]
        %v4328 = vld [vmem:[%s4316 + $0x2c] sm:$0xf]
        %v4329 = vld [vmem:[%s4316 + $0x30] sm:$0xf]
        %v4330 = vld [vmem:[%s4316 + $0x34] sm:$0xf]
        %v4331 = vld [vmem:[%s4316 + $0x38] sm:$0xf]
        %v4332 = vld [vmem:[%s4316 + $0x3c] sm:$0xf]
        %v4365 = vunpack.c.l.b16 %v4284
        %v4366 = vunpack.c.l.b16 %v4285
        %v4367 = vunpack.c.l.b16 %v4286
        %v4368 = vunpack.c.l.b16 %v4287
        %v4369 = vunpack.c.l.b16 %v4288
        %v4370 = vunpack.c.l.b16 %v4289
        %v4371 = vunpack.c.l.b16 %v4290
        %v4372 = vunpack.c.l.b16 %v4291
        %v4373 = vunpack.c.l.b16 %v4292
        %v4374 = vunpack.c.l.b16 %v4293
        %v4375 = vunpack.c.l.b16 %v4294
        %v4376 = vunpack.c.l.b16 %v4295
        %v4377 = vunpack.c.l.b16 %v4296
        %v4378 = vunpack.c.l.b16 %v4297
        %v4379 = vunpack.c.l.b16 %v4298
        %v4380 = vunpack.c.l.b16 %v4299
        %v4381 = vunpack.c.l.b16 %v4300
        %v4382 = vunpack.c.l.b16 %v4301
        %v4383 = vunpack.c.l.b16 %v4302
        %v4384 = vunpack.c.l.b16 %v4303
        %v4385 = vunpack.c.l.b16 %v4304
        %v4386 = vunpack.c.l.b16 %v4305
        %v4387 = vunpack.c.l.b16 %v4306
        %v4388 = vunpack.c.l.b16 %v4307
        %v4389 = vunpack.c.l.b16 %v4308
        %v4390 = vunpack.c.l.b16 %v4309
        %v4391 = vunpack.c.l.b16 %v4310
        %v4392 = vunpack.c.l.b16 %v4311
        %v4393 = vunpack.c.l.b16 %v4312
        %v4394 = vunpack.c.l.b16 %v4313
        %v4395 = vunpack.c.l.b16 %v4314
        %v4396 = vunpack.c.l.b16 %v4315
        %v4397 = vpack.c.b16 %v4366, %v4365
        %v4398 = vpack.c.b16 %v4368, %v4367
        %v4399 = vpack.c.b16 %v4370, %v4369
        %v4400 = vpack.c.b16 %v4372, %v4371
        %v4401 = vpack.c.b16 %v4374, %v4373
        %v4402 = vpack.c.b16 %v4376, %v4375
        %v4403 = vpack.c.b16 %v4378, %v4377
        %v4404 = vpack.c.b16 %v4380, %v4379
        %v4405 = vpack.c.b16 %v4382, %v4381
        %v4406 = vpack.c.b16 %v4384, %v4383
        %v4407 = vpack.c.b16 %v4386, %v4385
        %v4408 = vpack.c.b16 %v4388, %v4387
        %v4409 = vpack.c.b16 %v4390, %v4389
        %v4410 = vpack.c.b16 %v4392, %v4391
        %v4411 = vpack.c.b16 %v4394, %v4393
        %v4412 = vpack.c.b16 %v4396, %v4395
        %v4445 = vunpack.c.l.b16 %v4317
        %v4446 = vunpack.c.l.b16 %v4318
        %v4447 = vunpack.c.l.b16 %v4319
        %v4448 = vunpack.c.l.b16 %v4320
        %v4449 = vunpack.c.l.b16 %v4321
        %v4450 = vunpack.c.l.b16 %v4322
        %v4451 = vunpack.c.l.b16 %v4323
        %v4452 = vunpack.c.l.b16 %v4324
        %v4453 = vunpack.c.l.b16 %v4325
        %v4454 = vunpack.c.l.b16 %v4326
        %v4455 = vunpack.c.l.b16 %v4327
        %v4456 = vunpack.c.l.b16 %v4328
        %v4457 = vunpack.c.l.b16 %v4329
        %v4458 = vunpack.c.l.b16 %v4330
        %v4459 = vunpack.c.l.b16 %v4331
        %v4460 = vunpack.c.l.b16 %v4332
        %v4461 = vpack.c.b16 %v4446, %v4445
        %v4462 = vpack.c.b16 %v4448, %v4447
        %v4463 = vpack.c.b16 %v4450, %v4449
        %v4464 = vpack.c.b16 %v4452, %v4451
        %v4465 = vpack.c.b16 %v4454, %v4453
        %v4466 = vpack.c.b16 %v4456, %v4455
        %v4467 = vpack.c.b16 %v4458, %v4457
        %v4468 = vpack.c.b16 %v4460, %v4459
        %4477 = vmatprep.subr.bf16.mxu0 0
        %4478 = vmatpush1.bf16.msra.mxu0 %v4461
        %4479 = vmatprep.subr.bf16.mxu0 0
        %4480 = vmatpush1.bf16.msra.mxu0 %v4462
        %4481 = vmatprep.subr.bf16.mxu0 0
        %4482 = vmatpush1.bf16.msra.mxu0 %v4463
        %4483 = vmatprep.subr.bf16.mxu0 0
        %4484 = vmatpush1.bf16.msra.mxu0 %v4464
        %4485 = vmatprep.subr.bf16.mxu0 0
        %4486 = vmatpush1.bf16.msra.mxu0 %v4465
        %4487 = vmatprep.subr.bf16.mxu0 0
        %4488 = vmatpush1.bf16.msra.mxu0 %v4466
        %4489 = vmatprep.subr.bf16.mxu0 0
        %4490 = vmatpush1.bf16.msra.mxu0 %v4467
        %4491 = vmatprep.subr.bf16.mxu0 0
        %4492 = vmatpush1.bf16.msra.mxu0 %v4468
        %4493 = vmatprep.subr.bf16.mxu0 0
        %4494 = vmatpush1.bf16.msra.mxu0 0
        %4495 = vmatprep.subr.bf16.mxu0 0
        %4496 = vmatpush1.bf16.msra.mxu0 0
        %4497 = vmatprep.subr.bf16.mxu0 0
        %4498 = vmatpush1.bf16.msra.mxu0 0
        %4499 = vmatprep.subr.bf16.mxu0 0
        %4500 = vmatpush1.bf16.msra.mxu0 0
        %4501 = vmatprep.subr.bf16.mxu0 0
        %4502 = vmatpush1.bf16.msra.mxu0 0
        %4503 = vmatprep.subr.bf16.mxu0 0
        %4504 = vmatpush1.bf16.msra.mxu0 0
        %4505 = vmatprep.subr.bf16.mxu0 0
        %4506 = vmatpush1.bf16.msra.mxu0 0
        %4507 = vmatprep.subr.bf16.mxu0 0
        %4508 = vmatpush1.bf16.msra.mxu0 0
        %4509 = vmatprep.mubr.bf16.mxu0 0
        %4510 = vmatmul.mubr.bf16.gmra.mrb[0].mxu0 %v4397
        %v4511 = vpop.f32.mrb[0].mxu0
        %v4512 = vadd.f32 0.0, %v4511
        %v4513 = vpop.f32.mrb[0].mxu0
        %v4514 = vpop.f32.mrb[0].mxu0
        %v4515 = vadd.f32 0.0, %v4514
        %v4516 = vpop.f32.mrb[0].mxu0
        %4517 = vmatprep.mubr.bf16.mxu0 0
        %4518 = vmatmul.mubr.bf16.gmra.mrb[0].mxu0 %v4398
        %v4519 = vpop.f32.mrb[0].mxu0
        %v4520 = vadd.f32 0.0, %v4519
        %v4521 = vpop.f32.mrb[0].mxu0
        %v4522 = vpop.f32.mrb[0].mxu0
        %v4523 = vadd.f32 0.0, %v4522
        %v4524 = vpop.f32.mrb[0].mxu0
        %4525 = vmatprep.mubr.bf16.mxu0 0
        %4526 = vmatmul.mubr.bf16.gmra.mrb[0].mxu0 %v4399
        %v4527 = vpop.f32.mrb[0].mxu0
        %v4528 = vadd.f32 0.0, %v4527
        %v4529 = vpop.f32.mrb[0].mxu0
        %v4530 = vpop.f32.mrb[0].mxu0
        %v4531 = vadd.f32 0.0, %v4530
        %v4532 = vpop.f32.mrb[0].mxu0
        %4533 = vmatprep.mubr.bf16.mxu0 0
        %4534 = vmatmul.mubr.bf16.gmra.mrb[0].mxu0 %v4400
        %v4535 = vpop.f32.mrb[0].mxu0
        %v4536 = vadd.f32 0.0, %v4535
        %v4537 = vpop.f32.mrb[0].mxu0
        %v4538 = vpop.f32.mrb[0].mxu0
        %v4539 = vadd.f32 0.0, %v4538
        %v4540 = vpop.f32.mrb[0].mxu0
        %4541 = vmatprep.mubr.bf16.mxu0 0
        %4542 = vmatmul.mubr.bf16.gmra.mrb[0].mxu0 %v4401
        %v4543 = vpop.f32.mrb[0].mxu0
        %v4544 = vadd.f32 0.0, %v4543
        %v4545 = vpop.f32.mrb[0].mxu0
        %v4546 = vpop.f32.mrb[0].mxu0
        %v4547 = vadd.f32 0.0, %v4546
        %v4548 = vpop.f32.mrb[0].mxu0
        %4549 = vmatprep.mubr.bf16.mxu0 0
        %4550 = vmatmul.mubr.bf16.gmra.mrb[0].mxu0 %v4402
        %v4551 = vpop.f32.mrb[0].mxu0
        %v4552 = vadd.f32 0.0, %v4551
        %v4553 = vpop.f32.mrb[0].mxu0
        %v4554 = vpop.f32.mrb[0].mxu0
        %v4555 = vadd.f32 0.0, %v4554
        %v4556 = vpop.f32.mrb[0].mxu0
        %4557 = vmatprep.mubr.bf16.mxu0 0
        %4558 = vmatmul.mubr.bf16.gmra.mrb[0].mxu0 %v4403
        %v4559 = vpop.f32.mrb[0].mxu0
        %v4560 = vadd.f32 0.0, %v4559
        %v4561 = vpop.f32.mrb[0].mxu0
        %v4562 = vpop.f32.mrb[0].mxu0
        %v4563 = vadd.f32 0.0, %v4562
        %v4564 = vpop.f32.mrb[0].mxu0
        %4565 = vmatprep.mubr.bf16.mxu0 0
        %4566 = vmatmul.mubr.bf16.gmra.mrb[0].mxu0 %v4404
        %v4567 = vpop.f32.mrb[0].mxu0
        %v4568 = vadd.f32 0.0, %v4567
        %v4569 = vpop.f32.mrb[0].mxu0
        %v4570 = vpop.f32.mrb[0].mxu0
        %v4571 = vadd.f32 0.0, %v4570
        %v4572 = vpop.f32.mrb[0].mxu0
        %4573 = vmatprep.mubr.bf16.mxu0 0
        %4574 = vmatmul.mubr.bf16.gmra.mrb[0].mxu0 %v4405
        %v4575 = vpop.f32.mrb[0].mxu0
        %v4576 = vadd.f32 0.0, %v4575
        %v4577 = vpop.f32.mrb[0].mxu0
        %v4578 = vpop.f32.mrb[0].mxu0
        %v4579 = vadd.f32 0.0, %v4578
        %v4580 = vpop.f32.mrb[0].mxu0
        %4581 = vmatprep.mubr.bf16.mxu0 0
        %4582 = vmatmul.mubr.bf16.gmra.mrb[0].mxu0 %v4406
        %v4583 = vpop.f32.mrb[0].mxu0
        %v4584 = vadd.f32 0.0, %v4583
        %v4585 = vpop.f32.mrb[0].mxu0
        %v4586 = vpop.f32.mrb[0].mxu0
        %v4587 = vadd.f32 0.0, %v4586
        %v4588 = vpop.f32.mrb[0].mxu0
        %4589 = vmatprep.mubr.bf16.mxu0 0
        %4590 = vmatmul.mubr.bf16.gmra.mrb[0].mxu0 %v4407
        %v4591 = vpop.f32.mrb[0].mxu0
        %v4592 = vadd.f32 0.0, %v4591
        %v4593 = vpop.f32.mrb[0].mxu0
        %v4594 = vpop.f32.mrb[0].mxu0
        %v4595 = vadd.f32 0.0, %v4594
        %v4596 = vpop.f32.mrb[0].mxu0
        %4597 = vmatprep.mubr.bf16.mxu0 0
        %4598 = vmatmul.mubr.bf16.gmra.mrb[0].mxu0 %v4408
        %v4599 = vpop.f32.mrb[0].mxu0
        %v4600 = vadd.f32 0.0, %v4599
        %v4601 = vpop.f32.mrb[0].mxu0
        %v4602 = vpop.f32.mrb[0].mxu0
        %v4603 = vadd.f32 0.0, %v4602
        %v4604 = vpop.f32.mrb[0].mxu0
        %4605 = vmatprep.mubr.bf16.mxu0 0
        %4606 = vmatmul.mubr.bf16.gmra.mrb[0].mxu0 %v4409
        %v4607 = vpop.f32.mrb[0].mxu0
        %v4608 = vadd.f32 0.0, %v4607
        %v4609 = vpop.f32.mrb[0].mxu0
        %v4610 = vpop.f32.mrb[0].mxu0
        %v4611 = vadd.f32 0.0, %v4610
        %v4612 = vpop.f32.mrb[0].mxu0
        %4613 = vmatprep.mubr.bf16.mxu0 0
        %4614 = vmatmul.mubr.bf16.gmra.mrb[0].mxu0 %v4410
        %v4615 = vpop.f32.mrb[0].mxu0
        %v4616 = vadd.f32 0.0, %v4615
        %v4617 = vpop.f32.mrb[0].mxu0
        %v4618 = vpop.f32.mrb[0].mxu0
        %v4619 = vadd.f32 0.0, %v4618
        %v4620 = vpop.f32.mrb[0].mxu0
        %4621 = vmatprep.mubr.bf16.mxu0 0
        %4622 = vmatmul.mubr.bf16.gmra.mrb[0].mxu0 %v4411
        %v4623 = vpop.f32.mrb[0].mxu0
        %v4624 = vadd.f32 0.0, %v4623
        %v4625 = vpop.f32.mrb[0].mxu0
        %v4626 = vpop.f32.mrb[0].mxu0
        %v4627 = vadd.f32 0.0, %v4626
        %v4628 = vpop.f32.mrb[0].mxu0
        %4629 = vmatprep.mubr.bf16.mxu0 0
        %4630 = vmatmul.mubr.bf16.gmra.mrb[0].mxu0 %v4412
        %v4631 = vpop.f32.mrb[0].mxu0
        %v4632 = vadd.f32 0.0, %v4631
        %v4633 = vpop.f32.mrb[0].mxu0
        %v4634 = vpop.f32.mrb[0].mxu0
        %v4635 = vadd.f32 0.0, %v4634
        %v4636 = vpop.f32.mrb[0].mxu0
        %4637 = vdwg.mxu0
        %v4638 = vadd.f32 %v4251, %v4512
        %v4639 = vadd.f32 %v4252, %v4515
        %v4640 = vadd.f32 %v4253, %v4520
        %v4641 = vadd.f32 %v4254, %v4523
        %v4642 = vadd.f32 %v4255, %v4528
        %v4643 = vadd.f32 %v4256, %v4531
        %v4644 = vadd.f32 %v4257, %v4536
        %v4645 = vadd.f32 %v4258, %v4539
        %v4646 = vadd.f32 %v4259, %v4544
        %v4647 = vadd.f32 %v4260, %v4547
        %v4648 = vadd.f32 %v4261, %v4552
        %v4649 = vadd.f32 %v4262, %v4555
        %v4650 = vadd.f32 %v4263, %v4560
        %v4651 = vadd.f32 %v4264, %v4563
        %v4652 = vadd.f32 %v4265, %v4568
        %v4653 = vadd.f32 %v4266, %v4571
        %v4654 = vadd.f32 %v4267, %v4576
        %v4655 = vadd.f32 %v4268, %v4579
        %v4656 = vadd.f32 %v4269, %v4584
        %v4657 = vadd.f32 %v4270, %v4587
        %v4658 = vadd.f32 %v4271, %v4592
        %v4659 = vadd.f32 %v4272, %v4595
        %v4660 = vadd.f32 %v4273, %v4600
        %v4661 = vadd.f32 %v4274, %v4603
        %v4662 = vadd.f32 %v4275, %v4608
        %v4663 = vadd.f32 %v4276, %v4611
        %v4664 = vadd.f32 %v4277, %v4616
        %v4665 = vadd.f32 %v4278, %v4619
        %v4666 = vadd.f32 %v4279, %v4624
        %v4667 = vadd.f32 %v4280, %v4627
        %v4668 = vadd.f32 %v4281, %v4632
        %v4669 = vadd.f32 %v4282, %v4635
        %4670 = vst [vmem:[#allocation3] sm:$0xff] %v4638
        %4671 = vst [vmem:[#allocation3 + $0x8] sm:$0xff] %v4639
        %4672 = vst [vmem:[#allocation3 + $0x10] sm:$0xff] %v4640
        %4673 = vst [vmem:[#allocation3 + $0x18] sm:$0xff] %v4641
        %4674 = vst [vmem:[#allocation3 + $0x20] sm:$0xff] %v4642
        %4675 = vst [vmem:[#allocation3 + $0x28] sm:$0xff] %v4643
        %4676 = vst [vmem:[#allocation3 + $0x30] sm:$0xff] %v4644
        %4677 = vst [vmem:[#allocation3 + $0x38] sm:$0xff] %v4645
        %4678 = vst [vmem:[#allocation3 + $0x40] sm:$0xff] %v4646
        %4679 = vst [vmem:[#allocation3 + $0x48] sm:$0xff] %v4647
        %4680 = vst [vmem:[#allocation3 + $0x50] sm:$0xff] %v4648
        %4681 = vst [vmem:[#allocation3 + $0x58] sm:$0xff] %v4649
        %4682 = vst [vmem:[#allocation3 + $0x60] sm:$0xff] %v4650
        %4683 = vst [vmem:[#allocation3 + $0x68] sm:$0xff] %v4651
        %4684 = vst [vmem:[#allocation3 + $0x70] sm:$0xff] %v4652
        %4685 = vst [vmem:[#allocation3 + $0x78] sm:$0xff] %v4653
        %4686 = vst [vmem:[#allocation3 + $0x80] sm:$0xff] %v4654
        %4687 = vst [vmem:[#allocation3 + $0x88] sm:$0xff] %v4655
        %4688 = vst [vmem:[#allocation3 + $0x90] sm:$0xff] %v4656
        %4689 = vst [vmem:[#allocation3 + $0x98] sm:$0xff] %v4657
        %4690 = vst [vmem:[#allocation3 + $0xa0] sm:$0xff] %v4658
        %4691 = vst [vmem:[#allocation3 + $0xa8] sm:$0xff] %v4659
        %4692 = vst [vmem:[#allocation3 + $0xb0] sm:$0xff] %v4660
        %4693 = vst [vmem:[#allocation3 + $0xb8] sm:$0xff] %v4661
        %4694 = vst [vmem:[#allocation3 + $0xc0] sm:$0xff] %v4662
        %4695 = vst [vmem:[#allocation3 + $0xc8] sm:$0xff] %v4663
        %4696 = vst [vmem:[#allocation3 + $0xd0] sm:$0xff] %v4664
        %4697 = vst [vmem:[#allocation3 + $0xd8] sm:$0xff] %v4665
        %4698 = vst [vmem:[#allocation3 + $0xe0] sm:$0xff] %v4666
        %4699 = vst [vmem:[#allocation3 + $0xe8] sm:$0xff] %v4667
        %4700 = vst [vmem:[#allocation3 + $0xf0] sm:$0xff] %v4668
        %4701 = vst [vmem:[#allocation3 + $0xf8] sm:$0xff] %v4669
        %v4702 = vld [vmem:[#allocation3] sm:$0xff]
        %v4703 = vld [vmem:[#allocation3 + $0x8] sm:$0xff]
        %v4704 = vld [vmem:[#allocation3 + $0x10] sm:$0xff]
        %v4705 = vld [vmem:[#allocation3 + $0x18] sm:$0xff]
        %v4706 = vld [vmem:[#allocation3 + $0x20] sm:$0xff]
        %v4707 = vld [vmem:[#allocation3 + $0x28] sm:$0xff]
        %v4708 = vld [vmem:[#allocation3 + $0x30] sm:$0xff]
        %v4709 = vld [vmem:[#allocation3 + $0x38] sm:$0xff]
        %v4710 = vld [vmem:[#allocation3 + $0x40] sm:$0xff]
        %v4711 = vld [vmem:[#allocation3 + $0x48] sm:$0xff]
        %v4712 = vld [vmem:[#allocation3 + $0x50] sm:$0xff]
        %v4713 = vld [vmem:[#allocation3 + $0x58] sm:$0xff]
        %v4714 = vld [vmem:[#allocation3 + $0x60] sm:$0xff]
        %v4715 = vld [vmem:[#allocation3 + $0x68] sm:$0xff]
        %v4716 = vld [vmem:[#allocation3 + $0x70] sm:$0xff]
        %v4717 = vld [vmem:[#allocation3 + $0x78] sm:$0xff]
        %v4718 = vld [vmem:[#allocation3 + $0x80] sm:$0xff]
        %v4719 = vld [vmem:[#allocation3 + $0x88] sm:$0xff]
        %v4720 = vld [vmem:[#allocation3 + $0x90] sm:$0xff]
        %v4721 = vld [vmem:[#allocation3 + $0x98] sm:$0xff]
        %v4722 = vld [vmem:[#allocation3 + $0xa0] sm:$0xff]
        %v4723 = vld [vmem:[#allocation3 + $0xa8] sm:$0xff]
        %v4724 = vld [vmem:[#allocation3 + $0xb0] sm:$0xff]
        %v4725 = vld [vmem:[#allocation3 + $0xb8] sm:$0xff]
        %v4726 = vld [vmem:[#allocation3 + $0xc0] sm:$0xff]
        %v4727 = vld [vmem:[#allocation3 + $0xc8] sm:$0xff]
        %v4728 = vld [vmem:[#allocation3 + $0xd0] sm:$0xff]
        %v4729 = vld [vmem:[#allocation3 + $0xd8] sm:$0xff]
        %v4730 = vld [vmem:[#allocation3 + $0xe0] sm:$0xff]
        %v4731 = vld [vmem:[#allocation3 + $0xe8] sm:$0xff]
        %v4732 = vld [vmem:[#allocation3 + $0xf0] sm:$0xff]
        %v4733 = vld [vmem:[#allocation3 + $0xf8] sm:$0xff]
        %v4734 = vld [vmem:[%s4283] sm:$0xf]
        %v4735 = vld [vmem:[%s4283 + $0x4] sm:$0xf]
        %v4736 = vld [vmem:[%s4283 + $0x8] sm:$0x1]
        %v4737 = vld [vmem:[%s4283 + $0xc] sm:$0xf]
        %v4738 = vld [vmem:[%s4283 + $0x10] sm:$0xf]
        %v4739 = vld [vmem:[%s4283 + $0x14] sm:$0x1]
        %v4740 = vld [vmem:[%s4283 + $0x18] sm:$0xf]
        %v4741 = vld [vmem:[%s4283 + $0x1c] sm:$0xf]
        %v4742 = vld [vmem:[%s4283 + $0x20] sm:$0x1]
        %v4743 = vld [vmem:[%s4283 + $0x24] sm:$0xf]
        %v4744 = vld [vmem:[%s4283 + $0x28] sm:$0xf]
        %v4745 = vld [vmem:[%s4283 + $0x2c] sm:$0x1]
        %v4746 = vld [vmem:[%s4283 + $0x30] sm:$0xf]
        %v4747 = vld [vmem:[%s4283 + $0x34] sm:$0xf]
        %v4748 = vld [vmem:[%s4283 + $0x38] sm:$0x1]
        %v4749 = vld [vmem:[%s4283 + $0x3c] sm:$0xf]
        %v4750 = vld [vmem:[%s4283 + $0x40] sm:$0xf]
        %v4751 = vld [vmem:[%s4283 + $0x44] sm:$0x1]
        %v4752 = vld [vmem:[%s4283 + $0x48] sm:$0xf]
        %v4753 = vld [vmem:[%s4283 + $0x4c] sm:$0xf]
        %v4754 = vld [vmem:[%s4283 + $0x50] sm:$0x1]
        %v4755 = vld [vmem:[%s4283 + $0x54] sm:$0xf]
        %v4756 = vld [vmem:[%s4283 + $0x58] sm:$0xf]
        %v4757 = vld [vmem:[%s4283 + $0x5c] sm:$0x1]
        %v4758 = vld [vmem:[%s4283 + $0x60] sm:$0xf]
        %v4759 = vld [vmem:[%s4283 + $0x64] sm:$0xf]
        %v4760 = vld [vmem:[%s4283 + $0x68] sm:$0x1]
        %v4761 = vld [vmem:[%s4283 + $0x6c] sm:$0xf]
        %v4762 = vld [vmem:[%s4283 + $0x70] sm:$0xf]
        %v4763 = vld [vmem:[%s4283 + $0x74] sm:$0x1]
        %v4764 = vld [vmem:[%s4283 + $0x78] sm:$0xf]
        %v4765 = vld [vmem:[%s4283 + $0x7c] sm:$0xf]
        %v4766 = vld [vmem:[%s4283 + $0x80] sm:$0x1]
        %v4767 = vld [vmem:[%s4283 + $0x84] sm:$0xf]
        %v4768 = vld [vmem:[%s4283 + $0x88] sm:$0xf]
        %v4769 = vld [vmem:[%s4283 + $0x8c] sm:$0x1]
        %v4770 = vld [vmem:[%s4283 + $0x90] sm:$0xf]
        %v4771 = vld [vmem:[%s4283 + $0x94] sm:$0xf]
        %v4772 = vld [vmem:[%s4283 + $0x98] sm:$0x1]
        %v4773 = vld [vmem:[%s4283 + $0x9c] sm:$0xf]
        %v4774 = vld [vmem:[%s4283 + $0xa0] sm:$0xf]
        %v4775 = vld [vmem:[%s4283 + $0xa4] sm:$0x1]
        %v4776 = vld [vmem:[%s4283 + $0xa8] sm:$0xf]
        %v4777 = vld [vmem:[%s4283 + $0xac] sm:$0xf]
        %v4778 = vld [vmem:[%s4283 + $0xb0] sm:$0x1]
        %v4779 = vld [vmem:[%s4283 + $0xb4] sm:$0xf]
        %v4780 = vld [vmem:[%s4283 + $0xb8] sm:$0xf]
        %v4781 = vld [vmem:[%s4283 + $0xbc] sm:$0x1]
        %v4783 = vshrl.u32 %v4734, 16
        %v4785 = vrot.slane %v4783, 4
        %v4786 = vshll.u32 %v4734, 16
        %v4788 = vrot.slane %v4786, 5
        %v4789 = vor.u32 %v4785, %v4788
        %v4790 = vrot.slane %v4789, 4
        %v4792 = vshll.u32 %v4735, 16
        %v4794 = vrot.slane %v4792, 5
        %v4795 = vsel %vm1053, %v4790, %v4794
        %v4796 = vshrl.u32 %v4735, 16
        %v4798 = vrot.slane %v4796, 4
        %v4799 = vor.u32 %v4798, %v4794
        %v4800 = vrot.slane %v4799, 4
        %v4802 = vshll.u32 %v4736, 16
        %v4804 = vrot.slane %v4802, 5
        %v4805 = vsel %vm1053, %v4800, %v4804
        %v4807 = vshrl.u32 %v4737, 16
        %v4809 = vrot.slane %v4807, 4
        %v4810 = vshll.u32 %v4737, 16
        %v4812 = vrot.slane %v4810, 5
        %v4813 = vor.u32 %v4809, %v4812
        %v4814 = vrot.slane %v4813, 4
        %v4816 = vshll.u32 %v4738, 16
        %v4818 = vrot.slane %v4816, 5
        %v4819 = vsel %vm1053, %v4814, %v4818
        %v4820 = vshrl.u32 %v4738, 16
        %v4822 = vrot.slane %v4820, 4
        %v4823 = vor.u32 %v4822, %v4818
        %v4824 = vrot.slane %v4823, 4
        %v4826 = vshll.u32 %v4739, 16
        %v4828 = vrot.slane %v4826, 5
        %v4829 = vsel %vm1053, %v4824, %v4828
        %v4831 = vshrl.u32 %v4740, 16
        %v4833 = vrot.slane %v4831, 4
        %v4834 = vshll.u32 %v4740, 16
        %v4836 = vrot.slane %v4834, 5
        %v4837 = vor.u32 %v4833, %v4836
        %v4838 = vrot.slane %v4837, 4
        %v4840 = vshll.u32 %v4741, 16
        %v4842 = vrot.slane %v4840, 5
        %v4843 = vsel %vm1053, %v4838, %v4842
        %v4844 = vshrl.u32 %v4741, 16
        %v4846 = vrot.slane %v4844, 4
        %v4847 = vor.u32 %v4846, %v4842
        %v4848 = vrot.slane %v4847, 4
        %v4850 = vshll.u32 %v4742, 16
        %v4852 = vrot.slane %v4850, 5
        %v4853 = vsel %vm1053, %v4848, %v4852
        %v4855 = vshrl.u32 %v4743, 16
        %v4857 = vrot.slane %v4855, 4
        %v4858 = vshll.u32 %v4743, 16
        %v4860 = vrot.slane %v4858, 5
        %v4861 = vor.u32 %v4857, %v4860
        %v4862 = vrot.slane %v4861, 4
        %v4864 = vshll.u32 %v4744, 16
        %v4866 = vrot.slane %v4864, 5
        %v4867 = vsel %vm1053, %v4862, %v4866
        %v4868 = vshrl.u32 %v4744, 16
        %v4870 = vrot.slane %v4868, 4
        %v4871 = vor.u32 %v4870, %v4866
        %v4872 = vrot.slane %v4871, 4
        %v4874 = vshll.u32 %v4745, 16
        %v4876 = vrot.slane %v4874, 5
        %v4877 = vsel %vm1053, %v4872, %v4876
        %v4879 = vshrl.u32 %v4746, 16
        %v4881 = vrot.slane %v4879, 4
        %v4882 = vshll.u32 %v4746, 16
        %v4884 = vrot.slane %v4882, 5
        %v4885 = vor.u32 %v4881, %v4884
        %v4886 = vrot.slane %v4885, 4
        %v4888 = vshll.u32 %v4747, 16
        %v4890 = vrot.slane %v4888, 5
        %v4891 = vsel %vm1053, %v4886, %v4890
        %v4892 = vshrl.u32 %v4747, 16
        %v4894 = vrot.slane %v4892, 4
        %v4895 = vor.u32 %v4894, %v4890
        %v4896 = vrot.slane %v4895, 4
        %v4898 = vshll.u32 %v4748, 16
        %v4900 = vrot.slane %v4898, 5
        %v4901 = vsel %vm1053, %v4896, %v4900
        %v4903 = vshrl.u32 %v4749, 16
        %v4905 = vrot.slane %v4903, 4
        %v4906 = vshll.u32 %v4749, 16
        %v4908 = vrot.slane %v4906, 5
        %v4909 = vor.u32 %v4905, %v4908
        %v4910 = vrot.slane %v4909, 4
        %v4912 = vshll.u32 %v4750, 16
        %v4914 = vrot.slane %v4912, 5
        %v4915 = vsel %vm1053, %v4910, %v4914
        %v4916 = vshrl.u32 %v4750, 16
        %v4918 = vrot.slane %v4916, 4
        %v4919 = vor.u32 %v4918, %v4914
        %v4920 = vrot.slane %v4919, 4
        %v4922 = vshll.u32 %v4751, 16
        %v4924 = vrot.slane %v4922, 5
        %v4925 = vsel %vm1053, %v4920, %v4924
        %v4927 = vshrl.u32 %v4752, 16
        %v4929 = vrot.slane %v4927, 4
        %v4930 = vshll.u32 %v4752, 16
        %v4932 = vrot.slane %v4930, 5
        %v4933 = vor.u32 %v4929, %v4932
        %v4934 = vrot.slane %v4933, 4
        %v4936 = vshll.u32 %v4753, 16
        %v4938 = vrot.slane %v4936, 5
        %v4939 = vsel %vm1053, %v4934, %v4938
        %v4940 = vshrl.u32 %v4753, 16
        %v4942 = vrot.slane %v4940, 4
        %v4943 = vor.u32 %v4942, %v4938
        %v4944 = vrot.slane %v4943, 4
        %v4946 = vshll.u32 %v4754, 16
        %v4948 = vrot.slane %v4946, 5
        %v4949 = vsel %vm1053, %v4944, %v4948
        %v4951 = vshrl.u32 %v4755, 16
        %v4953 = vrot.slane %v4951, 4
        %v4954 = vshll.u32 %v4755, 16
        %v4956 = vrot.slane %v4954, 5
        %v4957 = vor.u32 %v4953, %v4956
        %v4958 = vrot.slane %v4957, 4
        %v4960 = vshll.u32 %v4756, 16
        %v4962 = vrot.slane %v4960, 5
        %v4963 = vsel %vm1053, %v4958, %v4962
        %v4964 = vshrl.u32 %v4756, 16
        %v4966 = vrot.slane %v4964, 4
        %v4967 = vor.u32 %v4966, %v4962
        %v4968 = vrot.slane %v4967, 4
        %v4970 = vshll.u32 %v4757, 16
        %v4972 = vrot.slane %v4970, 5
        %v4973 = vsel %vm1053, %v4968, %v4972
        %v4975 = vshrl.u32 %v4758, 16
        %v4977 = vrot.slane %v4975, 4
        %v4978 = vshll.u32 %v4758, 16
        %v4980 = vrot.slane %v4978, 5
        %v4981 = vor.u32 %v4977, %v4980
        %v4982 = vrot.slane %v4981, 4
        %v4984 = vshll.u32 %v4759, 16
        %v4986 = vrot.slane %v4984, 5
        %v4987 = vsel %vm1053, %v4982, %v4986
        %v4988 = vshrl.u32 %v4759, 16
        %v4990 = vrot.slane %v4988, 4
        %v4991 = vor.u32 %v4990, %v4986
        %v4992 = vrot.slane %v4991, 4
        %v4994 = vshll.u32 %v4760, 16
        %v4996 = vrot.slane %v4994, 5
        %v4997 = vsel %vm1053, %v4992, %v4996
        %v4999 = vshrl.u32 %v4761, 16
        %v5001 = vrot.slane %v4999, 4
        %v5002 = vshll.u32 %v4761, 16
        %v5004 = vrot.slane %v5002, 5
        %v5005 = vor.u32 %v5001, %v5004
        %v5006 = vrot.slane %v5005, 4
        %v5008 = vshll.u32 %v4762, 16
        %v5010 = vrot.slane %v5008, 5
        %v5011 = vsel %vm1053, %v5006, %v5010
        %v5012 = vshrl.u32 %v4762, 16
        %v5014 = vrot.slane %v5012, 4
        %v5015 = vor.u32 %v5014, %v5010
        %v5016 = vrot.slane %v5015, 4
        %v5018 = vshll.u32 %v4763, 16
        %v5020 = vrot.slane %v5018, 5
        %v5021 = vsel %vm1053, %v5016, %v5020
        %v5023 = vshrl.u32 %v4764, 16
        %v5025 = vrot.slane %v5023, 4
        %v5026 = vshll.u32 %v4764, 16
        %v5028 = vrot.slane %v5026, 5
        %v5029 = vor.u32 %v5025, %v5028
        %v5030 = vrot.slane %v5029, 4
        %v5032 = vshll.u32 %v4765, 16
        %v5034 = vrot.slane %v5032, 5
        %v5035 = vsel %vm1053, %v5030, %v5034
        %v5036 = vshrl.u32 %v4765, 16
        %v5038 = vrot.slane %v5036, 4
        %v5039 = vor.u32 %v5038, %v5034
        %v5040 = vrot.slane %v5039, 4
        %v5042 = vshll.u32 %v4766, 16
        %v5044 = vrot.slane %v5042, 5
        %v5045 = vsel %vm1053, %v5040, %v5044
        %v5047 = vshrl.u32 %v4767, 16
        %v5049 = vrot.slane %v5047, 4
        %v5050 = vshll.u32 %v4767, 16
        %v5052 = vrot.slane %v5050, 5
        %v5053 = vor.u32 %v5049, %v5052
        %v5054 = vrot.slane %v5053, 4
        %v5056 = vshll.u32 %v4768, 16
        %v5058 = vrot.slane %v5056, 5
        %v5059 = vsel %vm1053, %v5054, %v5058
        %v5060 = vshrl.u32 %v4768, 16
        %v5062 = vrot.slane %v5060, 4
        %v5063 = vor.u32 %v5062, %v5058
        %v5064 = vrot.slane %v5063, 4
        %v5066 = vshll.u32 %v4769, 16
        %v5068 = vrot.slane %v5066, 5
        %v5069 = vsel %vm1053, %v5064, %v5068
        %v5071 = vshrl.u32 %v4770, 16
        %v5073 = vrot.slane %v5071, 4
        %v5074 = vshll.u32 %v4770, 16
        %v5076 = vrot.slane %v5074, 5
        %v5077 = vor.u32 %v5073, %v5076
        %v5078 = vrot.slane %v5077, 4
        %v5080 = vshll.u32 %v4771, 16
        %v5082 = vrot.slane %v5080, 5
        %v5083 = vsel %vm1053, %v5078, %v5082
        %v5084 = vshrl.u32 %v4771, 16
        %v5086 = vrot.slane %v5084, 4
        %v5087 = vor.u32 %v5086, %v5082
        %v5088 = vrot.slane %v5087, 4
        %v5090 = vshll.u32 %v4772, 16
        %v5092 = vrot.slane %v5090, 5
        %v5093 = vsel %vm1053, %v5088, %v5092
        %v5095 = vshrl.u32 %v4773, 16
        %v5097 = vrot.slane %v5095, 4
        %v5098 = vshll.u32 %v4773, 16
        %v5100 = vrot.slane %v5098, 5
        %v5101 = vor.u32 %v5097, %v5100
        %v5102 = vrot.slane %v5101, 4
        %v5104 = vshll.u32 %v4774, 16
        %v5106 = vrot.slane %v5104, 5
        %v5107 = vsel %vm1053, %v5102, %v5106
        %v5108 = vshrl.u32 %v4774, 16
        %v5110 = vrot.slane %v5108, 4
        %v5111 = vor.u32 %v5110, %v5106
        %v5112 = vrot.slane %v5111, 4
        %v5114 = vshll.u32 %v4775, 16
        %v5116 = vrot.slane %v5114, 5
        %v5117 = vsel %vm1053, %v5112, %v5116
        %v5119 = vshrl.u32 %v4776, 16
        %v5121 = vrot.slane %v5119, 4
        %v5122 = vshll.u32 %v4776, 16
        %v5124 = vrot.slane %v5122, 5
        %v5125 = vor.u32 %v5121, %v5124
        %v5126 = vrot.slane %v5125, 4
        %v5128 = vshll.u32 %v4777, 16
        %v5130 = vrot.slane %v5128, 5
        %v5131 = vsel %vm1053, %v5126, %v5130
        %v5132 = vshrl.u32 %v4777, 16
        %v5134 = vrot.slane %v5132, 4
        %v5135 = vor.u32 %v5134, %v5130
        %v5136 = vrot.slane %v5135, 4
        %v5138 = vshll.u32 %v4778, 16
        %v5140 = vrot.slane %v5138, 5
        %v5141 = vsel %vm1053, %v5136, %v5140
        %v5143 = vshrl.u32 %v4779, 16
        %v5145 = vrot.slane %v5143, 4
        %v5146 = vshll.u32 %v4779, 16
        %v5148 = vrot.slane %v5146, 5
        %v5149 = vor.u32 %v5145, %v5148
        %v5150 = vrot.slane %v5149, 4
        %v5152 = vshll.u32 %v4780, 16
        %v5154 = vrot.slane %v5152, 5
        %v5155 = vsel %vm1053, %v5150, %v5154
        %v5156 = vshrl.u32 %v4780, 16
        %v5158 = vrot.slane %v5156, 4
        %v5159 = vor.u32 %v5158, %v5154
        %v5160 = vrot.slane %v5159, 4
        %v5162 = vshll.u32 %v4781, 16
        %v5164 = vrot.slane %v5162, 5
        %v5165 = vsel %vm1053, %v5160, %v5164
        %s5166 = scalar_lea.vmem %s3, 448
        %v5167 = vld [vmem:[%s5166] sm:$0xf]
        %v5168 = vld [vmem:[%s5166 + $0x4] sm:$0xf]
        %v5169 = vld [vmem:[%s5166 + $0x8] sm:$0xf]
        %v5170 = vld [vmem:[%s5166 + $0xc] sm:$0xf]
        %v5171 = vld [vmem:[%s5166 + $0x10] sm:$0xf]
        %v5172 = vld [vmem:[%s5166 + $0x14] sm:$0xf]
        %v5173 = vld [vmem:[%s5166 + $0x18] sm:$0xf]
        %v5174 = vld [vmem:[%s5166 + $0x1c] sm:$0xf]
        %v5175 = vld [vmem:[%s5166 + $0x20] sm:$0xf]
        %v5176 = vld [vmem:[%s5166 + $0x24] sm:$0xf]
        %v5177 = vld [vmem:[%s5166 + $0x28] sm:$0xf]
        %v5178 = vld [vmem:[%s5166 + $0x2c] sm:$0xf]
        %v5179 = vld [vmem:[%s5166 + $0x30] sm:$0xf]
        %v5180 = vld [vmem:[%s5166 + $0x34] sm:$0xf]
        %v5181 = vld [vmem:[%s5166 + $0x38] sm:$0xf]
        %v5182 = vld [vmem:[%s5166 + $0x3c] sm:$0xf]
        %v5183 = vunpack.c.l.b16 %v4795
        %v5184 = vunpack.c.l.b16 %v4805
        %v5185 = vunpack.c.l.b16 %v4819
        %v5186 = vunpack.c.l.b16 %v4829
        %v5187 = vunpack.c.l.b16 %v4843
        %v5188 = vunpack.c.l.b16 %v4853
        %v5189 = vunpack.c.l.b16 %v4867
        %v5190 = vunpack.c.l.b16 %v4877
        %v5191 = vunpack.c.l.b16 %v4891
        %v5192 = vunpack.c.l.b16 %v4901
        %v5193 = vunpack.c.l.b16 %v4915
        %v5194 = vunpack.c.l.b16 %v4925
        %v5195 = vunpack.c.l.b16 %v4939
        %v5196 = vunpack.c.l.b16 %v4949
        %v5197 = vunpack.c.l.b16 %v4963
        %v5198 = vunpack.c.l.b16 %v4973
        %v5199 = vunpack.c.l.b16 %v4987
        %v5200 = vunpack.c.l.b16 %v4997
        %v5201 = vunpack.c.l.b16 %v5011
        %v5202 = vunpack.c.l.b16 %v5021
        %v5203 = vunpack.c.l.b16 %v5035
        %v5204 = vunpack.c.l.b16 %v5045
        %v5205 = vunpack.c.l.b16 %v5059
        %v5206 = vunpack.c.l.b16 %v5069
        %v5207 = vunpack.c.l.b16 %v5083
        %v5208 = vunpack.c.l.b16 %v5093
        %v5209 = vunpack.c.l.b16 %v5107
        %v5210 = vunpack.c.l.b16 %v5117
        %v5211 = vunpack.c.l.b16 %v5131
        %v5212 = vunpack.c.l.b16 %v5141
        %v5213 = vunpack.c.l.b16 %v5155
        %v5214 = vunpack.c.l.b16 %v5165
        %v5215 = vpack.c.b16 %v5184, %v5183
        %v5216 = vpack.c.b16 %v5186, %v5185
        %v5217 = vpack.c.b16 %v5188, %v5187
        %v5218 = vpack.c.b16 %v5190, %v5189
        %v5219 = vpack.c.b16 %v5192, %v5191
        %v5220 = vpack.c.b16 %v5194, %v5193
        %v5221 = vpack.c.b16 %v5196, %v5195
        %v5222 = vpack.c.b16 %v5198, %v5197
        %v5223 = vpack.c.b16 %v5200, %v5199
        %v5224 = vpack.c.b16 %v5202, %v5201
        %v5225 = vpack.c.b16 %v5204, %v5203
        %v5226 = vpack.c.b16 %v5206, %v5205
        %v5227 = vpack.c.b16 %v5208, %v5207
        %v5228 = vpack.c.b16 %v5210, %v5209
        %v5229 = vpack.c.b16 %v5212, %v5211
        %v5230 = vpack.c.b16 %v5214, %v5213
        %v5263 = vunpack.c.l.b16 %v5167
        %v5264 = vunpack.c.l.b16 %v5168
        %v5265 = vunpack.c.l.b16 %v5169
        %v5266 = vunpack.c.l.b16 %v5170
        %v5267 = vunpack.c.l.b16 %v5171
        %v5268 = vunpack.c.l.b16 %v5172
        %v5269 = vunpack.c.l.b16 %v5173
        %v5270 = vunpack.c.l.b16 %v5174
        %v5271 = vunpack.c.l.b16 %v5175
        %v5272 = vunpack.c.l.b16 %v5176
        %v5273 = vunpack.c.l.b16 %v5177
        %v5274 = vunpack.c.l.b16 %v5178
        %v5275 = vunpack.c.l.b16 %v5179
        %v5276 = vunpack.c.l.b16 %v5180
        %v5277 = vunpack.c.l.b16 %v5181
        %v5278 = vunpack.c.l.b16 %v5182
        %v5279 = vpack.c.b16 %v5264, %v5263
        %v5280 = vpack.c.b16 %v5266, %v5265
        %v5281 = vpack.c.b16 %v5268, %v5267
        %v5282 = vpack.c.b16 %v5270, %v5269
        %v5283 = vpack.c.b16 %v5272, %v5271
        %v5284 = vpack.c.b16 %v5274, %v5273
        %v5285 = vpack.c.b16 %v5276, %v5275
        %v5286 = vpack.c.b16 %v5278, %v5277
        %5295 = vmatprep.subr.bf16.mxu0 0
        %5296 = vmatpush1.bf16.msra.mxu0 %v5279
        %5297 = vmatprep.subr.bf16.mxu0 0
        %5298 = vmatpush1.bf16.msra.mxu0 %v5280
        %5299 = vmatprep.subr.bf16.mxu0 0
        %5300 = vmatpush1.bf16.msra.mxu0 %v5281
        %5301 = vmatprep.subr.bf16.mxu0 0
        %5302 = vmatpush1.bf16.msra.mxu0 %v5282
        %5303 = vmatprep.subr.bf16.mxu0 0
        %5304 = vmatpush1.bf16.msra.mxu0 %v5283
        %5305 = vmatprep.subr.bf16.mxu0 0
        %5306 = vmatpush1.bf16.msra.mxu0 %v5284
        %5307 = vmatprep.subr.bf16.mxu0 0
        %5308 = vmatpush1.bf16.msra.mxu0 %v5285
        %5309 = vmatprep.subr.bf16.mxu0 0
        %5310 = vmatpush1.bf16.msra.mxu0 %v5286
        %5311 = vmatprep.subr.bf16.mxu0 0
        %5312 = vmatpush1.bf16.msra.mxu0 0
        %5313 = vmatprep.subr.bf16.mxu0 0
        %5314 = vmatpush1.bf16.msra.mxu0 0
        %5315 = vmatprep.subr.bf16.mxu0 0
        %5316 = vmatpush1.bf16.msra.mxu0 0
        %5317 = vmatprep.subr.bf16.mxu0 0
        %5318 = vmatpush1.bf16.msra.mxu0 0
        %5319 = vmatprep.subr.bf16.mxu0 0
        %5320 = vmatpush1.bf16.msra.mxu0 0
        %5321 = vmatprep.subr.bf16.mxu0 0
        %5322 = vmatpush1.bf16.msra.mxu0 0
        %5323 = vmatprep.subr.bf16.mxu0 0
        %5324 = vmatpush1.bf16.msra.mxu0 0
        %5325 = vmatprep.subr.bf16.mxu0 0
        %5326 = vmatpush1.bf16.msra.mxu0 0
        %5327 = vmatprep.mubr.bf16.mxu0 0
        %5328 = vmatmul.mubr.bf16.gmra.mrb[0].mxu0 %v5215
        %v5329 = vpop.f32.mrb[0].mxu0
        %v5330 = vadd.f32 0.0, %v5329
        %v5331 = vpop.f32.mrb[0].mxu0
        %v5332 = vpop.f32.mrb[0].mxu0
        %v5333 = vadd.f32 0.0, %v5332
        %v5334 = vpop.f32.mrb[0].mxu0
        %5335 = vmatprep.mubr.bf16.mxu0 0
        %5336 = vmatmul.mubr.bf16.gmra.mrb[0].mxu0 %v5216
        %v5337 = vpop.f32.mrb[0].mxu0
        %v5338 = vadd.f32 0.0, %v5337
        %v5339 = vpop.f32.mrb[0].mxu0
        %v5340 = vpop.f32.mrb[0].mxu0
        %v5341 = vadd.f32 0.0, %v5340
        %v5342 = vpop.f32.mrb[0].mxu0
        %5343 = vmatprep.mubr.bf16.mxu0 0
        %5344 = vmatmul.mubr.bf16.gmra.mrb[0].mxu0 %v5217
        %v5345 = vpop.f32.mrb[0].mxu0
        %v5346 = vadd.f32 0.0, %v5345
        %v5347 = vpop.f32.mrb[0].mxu0
        %v5348 = vpop.f32.mrb[0].mxu0
        %v5349 = vadd.f32 0.0, %v5348
        %v5350 = vpop.f32.mrb[0].mxu0
        %5351 = vmatprep.mubr.bf16.mxu0 0
        %5352 = vmatmul.mubr.bf16.gmra.mrb[0].mxu0 %v5218
        %v5353 = vpop.f32.mrb[0].mxu0
        %v5354 = vadd.f32 0.0, %v5353
        %v5355 = vpop.f32.mrb[0].mxu0
        %v5356 = vpop.f32.mrb[0].mxu0
        %v5357 = vadd.f32 0.0, %v5356
        %v5358 = vpop.f32.mrb[0].mxu0
        %5359 = vmatprep.mubr.bf16.mxu0 0
        %5360 = vmatmul.mubr.bf16.gmra.mrb[0].mxu0 %v5219
        %v5361 = vpop.f32.mrb[0].mxu0
        %v5362 = vadd.f32 0.0, %v5361
        %v5363 = vpop.f32.mrb[0].mxu0
        %v5364 = vpop.f32.mrb[0].mxu0
        %v5365 = vadd.f32 0.0, %v5364
        %v5366 = vpop.f32.mrb[0].mxu0
        %5367 = vmatprep.mubr.bf16.mxu0 0
        %5368 = vmatmul.mubr.bf16.gmra.mrb[0].mxu0 %v5220
        %v5369 = vpop.f32.mrb[0].mxu0
        %v5370 = vadd.f32 0.0, %v5369
        %v5371 = vpop.f32.mrb[0].mxu0
        %v5372 = vpop.f32.mrb[0].mxu0
        %v5373 = vadd.f32 0.0, %v5372
        %v5374 = vpop.f32.mrb[0].mxu0
        %5375 = vmatprep.mubr.bf16.mxu0 0
        %5376 = vmatmul.mubr.bf16.gmra.mrb[0].mxu0 %v5221
        %v5377 = vpop.f32.mrb[0].mxu0
        %v5378 = vadd.f32 0.0, %v5377
        %v5379 = vpop.f32.mrb[0].mxu0
        %v5380 = vpop.f32.mrb[0].mxu0
        %v5381 = vadd.f32 0.0, %v5380
        %v5382 = vpop.f32.mrb[0].mxu0
        %5383 = vmatprep.mubr.bf16.mxu0 0
        %5384 = vmatmul.mubr.bf16.gmra.mrb[0].mxu0 %v5222
        %v5385 = vpop.f32.mrb[0].mxu0
        %v5386 = vadd.f32 0.0, %v5385
        %v5387 = vpop.f32.mrb[0].mxu0
        %v5388 = vpop.f32.mrb[0].mxu0
        %v5389 = vadd.f32 0.0, %v5388
        %v5390 = vpop.f32.mrb[0].mxu0
        %5391 = vmatprep.mubr.bf16.mxu0 0
        %5392 = vmatmul.mubr.bf16.gmra.mrb[0].mxu0 %v5223
        %v5393 = vpop.f32.mrb[0].mxu0
        %v5394 = vadd.f32 0.0, %v5393
        %v5395 = vpop.f32.mrb[0].mxu0
        %v5396 = vpop.f32.mrb[0].mxu0
        %v5397 = vadd.f32 0.0, %v5396
        %v5398 = vpop.f32.mrb[0].mxu0
        %5399 = vmatprep.mubr.bf16.mxu0 0
        %5400 = vmatmul.mubr.bf16.gmra.mrb[0].mxu0 %v5224
        %v5401 = vpop.f32.mrb[0].mxu0
        %v5402 = vadd.f32 0.0, %v5401
        %v5403 = vpop.f32.mrb[0].mxu0
        %v5404 = vpop.f32.mrb[0].mxu0
        %v5405 = vadd.f32 0.0, %v5404
        %v5406 = vpop.f32.mrb[0].mxu0
        %5407 = vmatprep.mubr.bf16.mxu0 0
        %5408 = vmatmul.mubr.bf16.gmra.mrb[0].mxu0 %v5225
        %v5409 = vpop.f32.mrb[0].mxu0
        %v5410 = vadd.f32 0.0, %v5409
        %v5411 = vpop.f32.mrb[0].mxu0
        %v5412 = vpop.f32.mrb[0].mxu0
        %v5413 = vadd.f32 0.0, %v5412
        %v5414 = vpop.f32.mrb[0].mxu0
        %5415 = vmatprep.mubr.bf16.mxu0 0
        %5416 = vmatmul.mubr.bf16.gmra.mrb[0].mxu0 %v5226
        %v5417 = vpop.f32.mrb[0].mxu0
        %v5418 = vadd.f32 0.0, %v5417
        %v5419 = vpop.f32.mrb[0].mxu0
        %v5420 = vpop.f32.mrb[0].mxu0
        %v5421 = vadd.f32 0.0, %v5420
        %v5422 = vpop.f32.mrb[0].mxu0
        %5423 = vmatprep.mubr.bf16.mxu0 0
        %5424 = vmatmul.mubr.bf16.gmra.mrb[0].mxu0 %v5227
        %v5425 = vpop.f32.mrb[0].mxu0
        %v5426 = vadd.f32 0.0, %v5425
        %v5427 = vpop.f32.mrb[0].mxu0
        %v5428 = vpop.f32.mrb[0].mxu0
        %v5429 = vadd.f32 0.0, %v5428
        %v5430 = vpop.f32.mrb[0].mxu0
        %5431 = vmatprep.mubr.bf16.mxu0 0
        %5432 = vmatmul.mubr.bf16.gmra.mrb[0].mxu0 %v5228
        %v5433 = vpop.f32.mrb[0].mxu0
        %v5434 = vadd.f32 0.0, %v5433
        %v5435 = vpop.f32.mrb[0].mxu0
        %v5436 = vpop.f32.mrb[0].mxu0
        %v5437 = vadd.f32 0.0, %v5436
        %v5438 = vpop.f32.mrb[0].mxu0
        %5439 = vmatprep.mubr.bf16.mxu0 0
        %5440 = vmatmul.mubr.bf16.gmra.mrb[0].mxu0 %v5229
        %v5441 = vpop.f32.mrb[0].mxu0
        %v5442 = vadd.f32 0.0, %v5441
        %v5443 = vpop.f32.mrb[0].mxu0
        %v5444 = vpop.f32.mrb[0].mxu0
        %v5445 = vadd.f32 0.0, %v5444
        %v5446 = vpop.f32.mrb[0].mxu0
        %5447 = vmatprep.mubr.bf16.mxu0 0
        %5448 = vmatmul.mubr.bf16.gmra.mrb[0].mxu0 %v5230
        %v5449 = vpop.f32.mrb[0].mxu0
        %v5450 = vadd.f32 0.0, %v5449
        %v5451 = vpop.f32.mrb[0].mxu0
        %v5452 = vpop.f32.mrb[0].mxu0
        %v5453 = vadd.f32 0.0, %v5452
        %v5454 = vpop.f32.mrb[0].mxu0
        %5455 = vdwg.mxu0
        %v5456 = vadd.f32 %v4702, %v5330
        %v5457 = vadd.f32 %v4703, %v5333
        %v5458 = vadd.f32 %v4704, %v5338
        %v5459 = vadd.f32 %v4705, %v5341
        %v5460 = vadd.f32 %v4706, %v5346
        %v5461 = vadd.f32 %v4707, %v5349
        %v5462 = vadd.f32 %v4708, %v5354
        %v5463 = vadd.f32 %v4709, %v5357
        %v5464 = vadd.f32 %v4710, %v5362
        %v5465 = vadd.f32 %v4711, %v5365
        %v5466 = vadd.f32 %v4712, %v5370
        %v5467 = vadd.f32 %v4713, %v5373
        %v5468 = vadd.f32 %v4714, %v5378
        %v5469 = vadd.f32 %v4715, %v5381
        %v5470 = vadd.f32 %v4716, %v5386
        %v5471 = vadd.f32 %v4717, %v5389
        %v5472 = vadd.f32 %v4718, %v5394
        %v5473 = vadd.f32 %v4719, %v5397
        %v5474 = vadd.f32 %v4720, %v5402
        %v5475 = vadd.f32 %v4721, %v5405
        %v5476 = vadd.f32 %v4722, %v5410
        %v5477 = vadd.f32 %v4723, %v5413
        %v5478 = vadd.f32 %v4724, %v5418
        %v5479 = vadd.f32 %v4725, %v5421
        %v5480 = vadd.f32 %v4726, %v5426
        %v5481 = vadd.f32 %v4727, %v5429
        %v5482 = vadd.f32 %v4728, %v5434
        %v5483 = vadd.f32 %v4729, %v5437
        %v5484 = vadd.f32 %v4730, %v5442
        %v5485 = vadd.f32 %v4731, %v5445
        %v5486 = vadd.f32 %v4732, %v5450
        %v5487 = vadd.f32 %v4733, %v5453
        %5488 = vst [vmem:[#allocation3] sm:$0xff] %v5456
        %5489 = vst [vmem:[#allocation3 + $0x8] sm:$0xff] %v5457
        %5490 = vst [vmem:[#allocation3 + $0x10] sm:$0xff] %v5458
        %5491 = vst [vmem:[#allocation3 + $0x18] sm:$0xff] %v5459
        %5492 = vst [vmem:[#allocation3 + $0x20] sm:$0xff] %v5460
        %5493 = vst [vmem:[#allocation3 + $0x28] sm:$0xff] %v5461
        %5494 = vst [vmem:[#allocation3 + $0x30] sm:$0xff] %v5462
        %5495 = vst [vmem:[#allocation3 + $0x38] sm:$0xff] %v5463
        %5496 = vst [vmem:[#allocation3 + $0x40] sm:$0xff] %v5464
        %5497 = vst [vmem:[#allocation3 + $0x48] sm:$0xff] %v5465
        %5498 = vst [vmem:[#allocation3 + $0x50] sm:$0xff] %v5466
        %5499 = vst [vmem:[#allocation3 + $0x58] sm:$0xff] %v5467
        %5500 = vst [vmem:[#allocation3 + $0x60] sm:$0xff] %v5468
        %5501 = vst [vmem:[#allocation3 + $0x68] sm:$0xff] %v5469
        %5502 = vst [vmem:[#allocation3 + $0x70] sm:$0xff] %v5470
        %5503 = vst [vmem:[#allocation3 + $0x78] sm:$0xff] %v5471
        %5504 = vst [vmem:[#allocation3 + $0x80] sm:$0xff] %v5472
        %5505 = vst [vmem:[#allocation3 + $0x88] sm:$0xff] %v5473
        %5506 = vst [vmem:[#allocation3 + $0x90] sm:$0xff] %v5474
        %5507 = vst [vmem:[#allocation3 + $0x98] sm:$0xff] %v5475
        %5508 = vst [vmem:[#allocation3 + $0xa0] sm:$0xff] %v5476
        %5509 = vst [vmem:[#allocation3 + $0xa8] sm:$0xff] %v5477
        %5510 = vst [vmem:[#allocation3 + $0xb0] sm:$0xff] %v5478
        %5511 = vst [vmem:[#allocation3 + $0xb8] sm:$0xff] %v5479
        %5512 = vst [vmem:[#allocation3 + $0xc0] sm:$0xff] %v5480
        %5513 = vst [vmem:[#allocation3 + $0xc8] sm:$0xff] %v5481
        %5514 = vst [vmem:[#allocation3 + $0xd0] sm:$0xff] %v5482
        %5515 = vst [vmem:[#allocation3 + $0xd8] sm:$0xff] %v5483
        %5516 = vst [vmem:[#allocation3 + $0xe0] sm:$0xff] %v5484
        %5517 = vst [vmem:[#allocation3 + $0xe8] sm:$0xff] %v5485
        %5518 = vst [vmem:[#allocation3 + $0xf0] sm:$0xff] %v5486
        %5519 = vst [vmem:[#allocation3 + $0xf8] sm:$0xff] %v5487
        %v5520 = vld [vmem:[#allocation3] sm:$0xff]
        %v5521 = vld [vmem:[#allocation3 + $0x8] sm:$0xff]
        %v5522 = vld [vmem:[#allocation3 + $0x10] sm:$0xff]
        %v5523 = vld [vmem:[#allocation3 + $0x18] sm:$0xff]
        %v5524 = vld [vmem:[#allocation3 + $0x20] sm:$0xff]
        %v5525 = vld [vmem:[#allocation3 + $0x28] sm:$0xff]
        %v5526 = vld [vmem:[#allocation3 + $0x30] sm:$0xff]
        %v5527 = vld [vmem:[#allocation3 + $0x38] sm:$0xff]
        %v5528 = vld [vmem:[#allocation3 + $0x40] sm:$0xff]
        %v5529 = vld [vmem:[#allocation3 + $0x48] sm:$0xff]
        %v5530 = vld [vmem:[#allocation3 + $0x50] sm:$0xff]
        %v5531 = vld [vmem:[#allocation3 + $0x58] sm:$0xff]
        %v5532 = vld [vmem:[#allocation3 + $0x60] sm:$0xff]
        %v5533 = vld [vmem:[#allocation3 + $0x68] sm:$0xff]
        %v5534 = vld [vmem:[#allocation3 + $0x70] sm:$0xff]
        %v5535 = vld [vmem:[#allocation3 + $0x78] sm:$0xff]
        %v5536 = vld [vmem:[#allocation3 + $0x80] sm:$0xff]
        %v5537 = vld [vmem:[#allocation3 + $0x88] sm:$0xff]
        %v5538 = vld [vmem:[#allocation3 + $0x90] sm:$0xff]
        %v5539 = vld [vmem:[#allocation3 + $0x98] sm:$0xff]
        %v5540 = vld [vmem:[#allocation3 + $0xa0] sm:$0xff]
        %v5541 = vld [vmem:[#allocation3 + $0xa8] sm:$0xff]
        %v5542 = vld [vmem:[#allocation3 + $0xb0] sm:$0xff]
        %v5543 = vld [vmem:[#allocation3 + $0xb8] sm:$0xff]
        %v5544 = vld [vmem:[#allocation3 + $0xc0] sm:$0xff]
        %v5545 = vld [vmem:[#allocation3 + $0xc8] sm:$0xff]
        %v5546 = vld [vmem:[#allocation3 + $0xd0] sm:$0xff]
        %v5547 = vld [vmem:[#allocation3 + $0xd8] sm:$0xff]
        %v5548 = vld [vmem:[#allocation3 + $0xe0] sm:$0xff]
        %v5549 = vld [vmem:[#allocation3 + $0xe8] sm:$0xff]
        %v5550 = vld [vmem:[#allocation3 + $0xf0] sm:$0xff]
        %v5551 = vld [vmem:[#allocation3 + $0xf8] sm:$0xff]
        %v5552 = vld [vmem:[%s4283] sm:$0xe]
        %v5553 = vld [vmem:[%s4283 + $0x4] sm:$0xf]
        %v5554 = vld [vmem:[%s4283 + $0x8] sm:$0x1]
        %v5555 = vld [vmem:[%s4283 + $0xc] sm:$0xe]
        %v5556 = vld [vmem:[%s4283 + $0x10] sm:$0xf]
        %v5557 = vld [vmem:[%s4283 + $0x14] sm:$0x1]
        %v5558 = vld [vmem:[%s4283 + $0x18] sm:$0xe]
        %v5559 = vld [vmem:[%s4283 + $0x1c] sm:$0xf]
        %v5560 = vld [vmem:[%s4283 + $0x20] sm:$0x1]
        %v5561 = vld [vmem:[%s4283 + $0x24] sm:$0xe]
        %v5562 = vld [vmem:[%s4283 + $0x28] sm:$0xf]
        %v5563 = vld [vmem:[%s4283 + $0x2c] sm:$0x1]
        %v5564 = vld [vmem:[%s4283 + $0x30] sm:$0xe]
        %v5565 = vld [vmem:[%s4283 + $0x34] sm:$0xf]
        %v5566 = vld [vmem:[%s4283 + $0x38] sm:$0x1]
        %v5567 = vld [vmem:[%s4283 + $0x3c] sm:$0xe]
        %v5568 = vld [vmem:[%s4283 + $0x40] sm:$0xf]
        %v5569 = vld [vmem:[%s4283 + $0x44] sm:$0x1]
        %v5570 = vld [vmem:[%s4283 + $0x48] sm:$0xe]
        %v5571 = vld [vmem:[%s4283 + $0x4c] sm:$0xf]
        %v5572 = vld [vmem:[%s4283 + $0x50] sm:$0x1]
        %v5573 = vld [vmem:[%s4283 + $0x54] sm:$0xe]
        %v5574 = vld [vmem:[%s4283 + $0x58] sm:$0xf]
        %v5575 = vld [vmem:[%s4283 + $0x5c] sm:$0x1]
        %v5576 = vld [vmem:[%s4283 + $0x60] sm:$0xe]
        %v5577 = vld [vmem:[%s4283 + $0x64] sm:$0xf]
        %v5578 = vld [vmem:[%s4283 + $0x68] sm:$0x1]
        %v5579 = vld [vmem:[%s4283 + $0x6c] sm:$0xe]
        %v5580 = vld [vmem:[%s4283 + $0x70] sm:$0xf]
        %v5581 = vld [vmem:[%s4283 + $0x74] sm:$0x1]
        %v5582 = vld [vmem:[%s4283 + $0x78] sm:$0xe]
        %v5583 = vld [vmem:[%s4283 + $0x7c] sm:$0xf]
        %v5584 = vld [vmem:[%s4283 + $0x80] sm:$0x1]
        %v5585 = vld [vmem:[%s4283 + $0x84] sm:$0xe]
        %v5586 = vld [vmem:[%s4283 + $0x88] sm:$0xf]
        %v5587 = vld [vmem:[%s4283 + $0x8c] sm:$0x1]
        %v5588 = vld [vmem:[%s4283 + $0x90] sm:$0xe]
        %v5589 = vld [vmem:[%s4283 + $0x94] sm:$0xf]
        %v5590 = vld [vmem:[%s4283 + $0x98] sm:$0x1]
        %v5591 = vld [vmem:[%s4283 + $0x9c] sm:$0xe]
        %v5592 = vld [vmem:[%s4283 + $0xa0] sm:$0xf]
        %v5593 = vld [vmem:[%s4283 + $0xa4] sm:$0x1]
        %v5594 = vld [vmem:[%s4283 + $0xa8] sm:$0xe]
        %v5595 = vld [vmem:[%s4283 + $0xac] sm:$0xf]
        %v5596 = vld [vmem:[%s4283 + $0xb0] sm:$0x1]
        %v5597 = vld [vmem:[%s4283 + $0xb4] sm:$0xe]
        %v5598 = vld [vmem:[%s4283 + $0xb8] sm:$0xf]
        %v5599 = vld [vmem:[%s4283 + $0xbc] sm:$0x1]
        %v5648 = vrot.slane %v5552, 5
        %v5649 = vrot.slane %v5648, 4
        %v5650 = vrot.slane %v5553, 5
        %v5651 = vsel %vm1922, %v5649, %v5650
        %v5652 = vrot.slane %v5650, 4
        %v5653 = vrot.slane %v5554, 5
        %v5654 = vsel %vm1922, %v5652, %v5653
        %v5655 = vrot.slane %v5555, 5
        %v5656 = vrot.slane %v5655, 4
        %v5657 = vrot.slane %v5556, 5
        %v5658 = vsel %vm1922, %v5656, %v5657
        %v5659 = vrot.slane %v5657, 4
        %v5660 = vrot.slane %v5557, 5
        %v5661 = vsel %vm1922, %v5659, %v5660
        %v5662 = vrot.slane %v5558, 5
        %v5663 = vrot.slane %v5662, 4
        %v5664 = vrot.slane %v5559, 5
        %v5665 = vsel %vm1922, %v5663, %v5664
        %v5666 = vrot.slane %v5664, 4
        %v5667 = vrot.slane %v5560, 5
        %v5668 = vsel %vm1922, %v5666, %v5667
        %v5669 = vrot.slane %v5561, 5
        %v5670 = vrot.slane %v5669, 4
        %v5671 = vrot.slane %v5562, 5
        %v5672 = vsel %vm1922, %v5670, %v5671
        %v5673 = vrot.slane %v5671, 4
        %v5674 = vrot.slane %v5563, 5
        %v5675 = vsel %vm1922, %v5673, %v5674
        %v5676 = vrot.slane %v5564, 5
        %v5677 = vrot.slane %v5676, 4
        %v5678 = vrot.slane %v5565, 5
        %v5679 = vsel %vm1922, %v5677, %v5678
        %v5680 = vrot.slane %v5678, 4
        %v5681 = vrot.slane %v5566, 5
        %v5682 = vsel %vm1922, %v5680, %v5681
        %v5683 = vrot.slane %v5567, 5
        %v5684 = vrot.slane %v5683, 4
        %v5685 = vrot.slane %v5568, 5
        %v5686 = vsel %vm1922, %v5684, %v5685
        %v5687 = vrot.slane %v5685, 4
        %v5688 = vrot.slane %v5569, 5
        %v5689 = vsel %vm1922, %v5687, %v5688
        %v5690 = vrot.slane %v5570, 5
        %v5691 = vrot.slane %v5690, 4
        %v5692 = vrot.slane %v5571, 5
        %v5693 = vsel %vm1922, %v5691, %v5692
        %v5694 = vrot.slane %v5692, 4
        %v5695 = vrot.slane %v5572, 5
        %v5696 = vsel %vm1922, %v5694, %v5695
        %v5697 = vrot.slane %v5573, 5
        %v5698 = vrot.slane %v5697, 4
        %v5699 = vrot.slane %v5574, 5
        %v5700 = vsel %vm1922, %v5698, %v5699
        %v5701 = vrot.slane %v5699, 4
        %v5702 = vrot.slane %v5575, 5
        %v5703 = vsel %vm1922, %v5701, %v5702
        %v5704 = vrot.slane %v5576, 5
        %v5705 = vrot.slane %v5704, 4
        %v5706 = vrot.slane %v5577, 5
        %v5707 = vsel %vm1922, %v5705, %v5706
        %v5708 = vrot.slane %v5706, 4
        %v5709 = vrot.slane %v5578, 5
        %v5710 = vsel %vm1922, %v5708, %v5709
        %v5711 = vrot.slane %v5579, 5
        %v5712 = vrot.slane %v5711, 4
        %v5713 = vrot.slane %v5580, 5
        %v5714 = vsel %vm1922, %v5712, %v5713
        %v5715 = vrot.slane %v5713, 4
        %v5716 = vrot.slane %v5581, 5
        %v5717 = vsel %vm1922, %v5715, %v5716
        %v5718 = vrot.slane %v5582, 5
        %v5719 = vrot.slane %v5718, 4
        %v5720 = vrot.slane %v5583, 5
        %v5721 = vsel %vm1922, %v5719, %v5720
        %v5722 = vrot.slane %v5720, 4
        %v5723 = vrot.slane %v5584, 5
        %v5724 = vsel %vm1922, %v5722, %v5723
        %v5725 = vrot.slane %v5585, 5
        %v5726 = vrot.slane %v5725, 4
        %v5727 = vrot.slane %v5586, 5
        %v5728 = vsel %vm1922, %v5726, %v5727
        %v5729 = vrot.slane %v5727, 4
        %v5730 = vrot.slane %v5587, 5
        %v5731 = vsel %vm1922, %v5729, %v5730
        %v5732 = vrot.slane %v5588, 5
        %v5733 = vrot.slane %v5732, 4
        %v5734 = vrot.slane %v5589, 5
        %v5735 = vsel %vm1922, %v5733, %v5734
        %v5736 = vrot.slane %v5734, 4
        %v5737 = vrot.slane %v5590, 5
        %v5738 = vsel %vm1922, %v5736, %v5737
        %v5739 = vrot.slane %v5591, 5
        %v5740 = vrot.slane %v5739, 4
        %v5741 = vrot.slane %v5592, 5
        %v5742 = vsel %vm1922, %v5740, %v5741
        %v5743 = vrot.slane %v5741, 4
        %v5744 = vrot.slane %v5593, 5
        %v5745 = vsel %vm1922, %v5743, %v5744
        %v5746 = vrot.slane %v5594, 5
        %v5747 = vrot.slane %v5746, 4
        %v5748 = vrot.slane %v5595, 5
        %v5749 = vsel %vm1922, %v5747, %v5748
        %v5750 = vrot.slane %v5748, 4
        %v5751 = vrot.slane %v5596, 5
        %v5752 = vsel %vm1922, %v5750, %v5751
        %v5753 = vrot.slane %v5597, 5
        %v5754 = vrot.slane %v5753, 4
        %v5755 = vrot.slane %v5598, 5
        %v5756 = vsel %vm1922, %v5754, %v5755
        %v5757 = vrot.slane %v5755, 4
        %v5758 = vrot.slane %v5599, 5
        %v5759 = vsel %vm1922, %v5757, %v5758
        %s5760 = scalar_lea.vmem %s3, 512
        %v5761 = vld [vmem:[%s5760] sm:$0xf]
        %v5762 = vld [vmem:[%s5760 + $0x4] sm:$0xf]
        %v5763 = vld [vmem:[%s5760 + $0x8] sm:$0xf]
        %v5764 = vld [vmem:[%s5760 + $0xc] sm:$0xf]
        %v5765 = vld [vmem:[%s5760 + $0x10] sm:$0xf]
        %v5766 = vld [vmem:[%s5760 + $0x14] sm:$0xf]
        %v5767 = vld [vmem:[%s5760 + $0x18] sm:$0xf]
        %v5768 = vld [vmem:[%s5760 + $0x1c] sm:$0xf]
        %v5769 = vld [vmem:[%s5760 + $0x20] sm:$0xf]
        %v5770 = vld [vmem:[%s5760 + $0x24] sm:$0xf]
        %v5771 = vld [vmem:[%s5760 + $0x28] sm:$0xf]
        %v5772 = vld [vmem:[%s5760 + $0x2c] sm:$0xf]
        %v5773 = vld [vmem:[%s5760 + $0x30] sm:$0xf]
        %v5774 = vld [vmem:[%s5760 + $0x34] sm:$0xf]
        %v5775 = vld [vmem:[%s5760 + $0x38] sm:$0xf]
        %v5776 = vld [vmem:[%s5760 + $0x3c] sm:$0xf]
        %v5777 = vunpack.c.l.b16 %v5651
        %v5778 = vunpack.c.l.b16 %v5654
        %v5779 = vunpack.c.l.b16 %v5658
        %v5780 = vunpack.c.l.b16 %v5661
        %v5781 = vunpack.c.l.b16 %v5665
        %v5782 = vunpack.c.l.b16 %v5668
        %v5783 = vunpack.c.l.b16 %v5672
        %v5784 = vunpack.c.l.b16 %v5675
        %v5785 = vunpack.c.l.b16 %v5679
        %v5786 = vunpack.c.l.b16 %v5682
        %v5787 = vunpack.c.l.b16 %v5686
        %v5788 = vunpack.c.l.b16 %v5689
        %v5789 = vunpack.c.l.b16 %v5693
        %v5790 = vunpack.c.l.b16 %v5696
        %v5791 = vunpack.c.l.b16 %v5700
        %v5792 = vunpack.c.l.b16 %v5703
        %v5793 = vunpack.c.l.b16 %v5707
        %v5794 = vunpack.c.l.b16 %v5710
        %v5795 = vunpack.c.l.b16 %v5714
        %v5796 = vunpack.c.l.b16 %v5717
        %v5797 = vunpack.c.l.b16 %v5721
        %v5798 = vunpack.c.l.b16 %v5724
        %v5799 = vunpack.c.l.b16 %v5728
        %v5800 = vunpack.c.l.b16 %v5731
        %v5801 = vunpack.c.l.b16 %v5735
        %v5802 = vunpack.c.l.b16 %v5738
        %v5803 = vunpack.c.l.b16 %v5742
        %v5804 = vunpack.c.l.b16 %v5745
        %v5805 = vunpack.c.l.b16 %v5749
        %v5806 = vunpack.c.l.b16 %v5752
        %v5807 = vunpack.c.l.b16 %v5756
        %v5808 = vunpack.c.l.b16 %v5759
        %v5809 = vpack.c.b16 %v5778, %v5777
        %v5810 = vpack.c.b16 %v5780, %v5779
        %v5811 = vpack.c.b16 %v5782, %v5781
        %v5812 = vpack.c.b16 %v5784, %v5783
        %v5813 = vpack.c.b16 %v5786, %v5785
        %v5814 = vpack.c.b16 %v5788, %v5787
        %v5815 = vpack.c.b16 %v5790, %v5789
        %v5816 = vpack.c.b16 %v5792, %v5791
        %v5817 = vpack.c.b16 %v5794, %v5793
        %v5818 = vpack.c.b16 %v5796, %v5795
        %v5819 = vpack.c.b16 %v5798, %v5797
        %v5820 = vpack.c.b16 %v5800, %v5799
        %v5821 = vpack.c.b16 %v5802, %v5801
        %v5822 = vpack.c.b16 %v5804, %v5803
        %v5823 = vpack.c.b16 %v5806, %v5805
        %v5824 = vpack.c.b16 %v5808, %v5807
        %v5857 = vunpack.c.l.b16 %v5761
        %v5858 = vunpack.c.l.b16 %v5762
        %v5859 = vunpack.c.l.b16 %v5763
        %v5860 = vunpack.c.l.b16 %v5764
        %v5861 = vunpack.c.l.b16 %v5765
        %v5862 = vunpack.c.l.b16 %v5766
        %v5863 = vunpack.c.l.b16 %v5767
        %v5864 = vunpack.c.l.b16 %v5768
        %v5865 = vunpack.c.l.b16 %v5769
        %v5866 = vunpack.c.l.b16 %v5770
        %v5867 = vunpack.c.l.b16 %v5771
        %v5868 = vunpack.c.l.b16 %v5772
        %v5869 = vunpack.c.l.b16 %v5773
        %v5870 = vunpack.c.l.b16 %v5774
        %v5871 = vunpack.c.l.b16 %v5775
        %v5872 = vunpack.c.l.b16 %v5776
        %v5873 = vpack.c.b16 %v5858, %v5857
        %v5874 = vpack.c.b16 %v5860, %v5859
        %v5875 = vpack.c.b16 %v5862, %v5861
        %v5876 = vpack.c.b16 %v5864, %v5863
        %v5877 = vpack.c.b16 %v5866, %v5865
        %v5878 = vpack.c.b16 %v5868, %v5867
        %v5879 = vpack.c.b16 %v5870, %v5869
        %v5880 = vpack.c.b16 %v5872, %v5871
        %5889 = vmatprep.subr.bf16.mxu0 0
        %5890 = vmatpush1.bf16.msra.mxu0 %v5873
        %5891 = vmatprep.subr.bf16.mxu0 0
        %5892 = vmatpush1.bf16.msra.mxu0 %v5874
        %5893 = vmatprep.subr.bf16.mxu0 0
        %5894 = vmatpush1.bf16.msra.mxu0 %v5875
        %5895 = vmatprep.subr.bf16.mxu0 0
        %5896 = vmatpush1.bf16.msra.mxu0 %v5876
        %5897 = vmatprep.subr.bf16.mxu0 0
        %5898 = vmatpush1.bf16.msra.mxu0 %v5877
        %5899 = vmatprep.subr.bf16.mxu0 0
        %5900 = vmatpush1.bf16.msra.mxu0 %v5878
        %5901 = vmatprep.subr.bf16.mxu0 0
        %5902 = vmatpush1.bf16.msra.mxu0 %v5879
        %5903 = vmatprep.subr.bf16.mxu0 0
        %5904 = vmatpush1.bf16.msra.mxu0 %v5880
        %5905 = vmatprep.subr.bf16.mxu0 0
        %5906 = vmatpush1.bf16.msra.mxu0 0
        %5907 = vmatprep.subr.bf16.mxu0 0
        %5908 = vmatpush1.bf16.msra.mxu0 0
        %5909 = vmatprep.subr.bf16.mxu0 0
        %5910 = vmatpush1.bf16.msra.mxu0 0
        %5911 = vmatprep.subr.bf16.mxu0 0
        %5912 = vmatpush1.bf16.msra.mxu0 0
        %5913 = vmatprep.subr.bf16.mxu0 0
        %5914 = vmatpush1.bf16.msra.mxu0 0
        %5915 = vmatprep.subr.bf16.mxu0 0
        %5916 = vmatpush1.bf16.msra.mxu0 0
        %5917 = vmatprep.subr.bf16.mxu0 0
        %5918 = vmatpush1.bf16.msra.mxu0 0
        %5919 = vmatprep.subr.bf16.mxu0 0
        %5920 = vmatpush1.bf16.msra.mxu0 0
        %5921 = vmatprep.mubr.bf16.mxu0 0
        %5922 = vmatmul.mubr.bf16.gmra.mrb[0].mxu0 %v5809
        %v5923 = vpop.f32.mrb[0].mxu0
        %v5924 = vadd.f32 0.0, %v5923
        %v5925 = vpop.f32.mrb[0].mxu0
        %v5926 = vpop.f32.mrb[0].mxu0
        %v5927 = vadd.f32 0.0, %v5926
        %v5928 = vpop.f32.mrb[0].mxu0
        %5929 = vmatprep.mubr.bf16.mxu0 0
        %5930 = vmatmul.mubr.bf16.gmra.mrb[0].mxu0 %v5810
        %v5931 = vpop.f32.mrb[0].mxu0
        %v5932 = vadd.f32 0.0, %v5931
        %v5933 = vpop.f32.mrb[0].mxu0
        %v5934 = vpop.f32.mrb[0].mxu0
        %v5935 = vadd.f32 0.0, %v5934
        %v5936 = vpop.f32.mrb[0].mxu0
        %5937 = vmatprep.mubr.bf16.mxu0 0
        %5938 = vmatmul.mubr.bf16.gmra.mrb[0].mxu0 %v5811
        %v5939 = vpop.f32.mrb[0].mxu0
        %v5940 = vadd.f32 0.0, %v5939
        %v5941 = vpop.f32.mrb[0].mxu0
        %v5942 = vpop.f32.mrb[0].mxu0
        %v5943 = vadd.f32 0.0, %v5942
        %v5944 = vpop.f32.mrb[0].mxu0
        %5945 = vmatprep.mubr.bf16.mxu0 0
        %5946 = vmatmul.mubr.bf16.gmra.mrb[0].mxu0 %v5812
        %v5947 = vpop.f32.mrb[0].mxu0
        %v5948 = vadd.f32 0.0, %v5947
        %v5949 = vpop.f32.mrb[0].mxu0
        %v5950 = vpop.f32.mrb[0].mxu0
        %v5951 = vadd.f32 0.0, %v5950
        %v5952 = vpop.f32.mrb[0].mxu0
        %5953 = vmatprep.mubr.bf16.mxu0 0
        %5954 = vmatmul.mubr.bf16.gmra.mrb[0].mxu0 %v5813
        %v5955 = vpop.f32.mrb[0].mxu0
        %v5956 = vadd.f32 0.0, %v5955
        %v5957 = vpop.f32.mrb[0].mxu0
        %v5958 = vpop.f32.mrb[0].mxu0
        %v5959 = vadd.f32 0.0, %v5958
        %v5960 = vpop.f32.mrb[0].mxu0
        %5961 = vmatprep.mubr.bf16.mxu0 0
        %5962 = vmatmul.mubr.bf16.gmra.mrb[0].mxu0 %v5814
        %v5963 = vpop.f32.mrb[0].mxu0
        %v5964 = vadd.f32 0.0, %v5963
        %v5965 = vpop.f32.mrb[0].mxu0
        %v5966 = vpop.f32.mrb[0].mxu0
        %v5967 = vadd.f32 0.0, %v5966
        %v5968 = vpop.f32.mrb[0].mxu0
        %5969 = vmatprep.mubr.bf16.mxu0 0
        %5970 = vmatmul.mubr.bf16.gmra.mrb[0].mxu0 %v5815
        %v5971 = vpop.f32.mrb[0].mxu0
        %v5972 = vadd.f32 0.0, %v5971
        %v5973 = vpop.f32.mrb[0].mxu0
        %v5974 = vpop.f32.mrb[0].mxu0
        %v5975 = vadd.f32 0.0, %v5974
        %v5976 = vpop.f32.mrb[0].mxu0
        %5977 = vmatprep.mubr.bf16.mxu0 0
        %5978 = vmatmul.mubr.bf16.gmra.mrb[0].mxu0 %v5816
        %v5979 = vpop.f32.mrb[0].mxu0
        %v5980 = vadd.f32 0.0, %v5979
        %v5981 = vpop.f32.mrb[0].mxu0
        %v5982 = vpop.f32.mrb[0].mxu0
        %v5983 = vadd.f32 0.0, %v5982
        %v5984 = vpop.f32.mrb[0].mxu0
        %5985 = vmatprep.mubr.bf16.mxu0 0
        %5986 = vmatmul.mubr.bf16.gmra.mrb[0].mxu0 %v5817
        %v5987 = vpop.f32.mrb[0].mxu0
        %v5988 = vadd.f32 0.0, %v5987
        %v5989 = vpop.f32.mrb[0].mxu0
        %v5990 = vpop.f32.mrb[0].mxu0
        %v5991 = vadd.f32 0.0, %v5990
        %v5992 = vpop.f32.mrb[0].mxu0
        %5993 = vmatprep.mubr.bf16.mxu0 0
        %5994 = vmatmul.mubr.bf16.gmra.mrb[0].mxu0 %v5818
        %v5995 = vpop.f32.mrb[0].mxu0
        %v5996 = vadd.f32 0.0, %v5995
        %v5997 = vpop.f32.mrb[0].mxu0
        %v5998 = vpop.f32.mrb[0].mxu0
        %v5999 = vadd.f32 0.0, %v5998
        %v6000 = vpop.f32.mrb[0].mxu0
        %6001 = vmatprep.mubr.bf16.mxu0 0
        %6002 = vmatmul.mubr.bf16.gmra.mrb[0].mxu0 %v5819
        %v6003 = vpop.f32.mrb[0].mxu0
        %v6004 = vadd.f32 0.0, %v6003
        %v6005 = vpop.f32.mrb[0].mxu0
        %v6006 = vpop.f32.mrb[0].mxu0
        %v6007 = vadd.f32 0.0, %v6006
        %v6008 = vpop.f32.mrb[0].mxu0
        %6009 = vmatprep.mubr.bf16.mxu0 0
        %6010 = vmatmul.mubr.bf16.gmra.mrb[0].mxu0 %v5820
        %v6011 = vpop.f32.mrb[0].mxu0
        %v6012 = vadd.f32 0.0, %v6011
        %v6013 = vpop.f32.mrb[0].mxu0
        %v6014 = vpop.f32.mrb[0].mxu0
        %v6015 = vadd.f32 0.0, %v6014
        %v6016 = vpop.f32.mrb[0].mxu0
        %6017 = vmatprep.mubr.bf16.mxu0 0
        %6018 = vmatmul.mubr.bf16.gmra.mrb[0].mxu0 %v5821
        %v6019 = vpop.f32.mrb[0].mxu0
        %v6020 = vadd.f32 0.0, %v6019
        %v6021 = vpop.f32.mrb[0].mxu0
        %v6022 = vpop.f32.mrb[0].mxu0
        %v6023 = vadd.f32 0.0, %v6022
        %v6024 = vpop.f32.mrb[0].mxu0
        %6025 = vmatprep.mubr.bf16.mxu0 0
        %6026 = vmatmul.mubr.bf16.gmra.mrb[0].mxu0 %v5822
        %v6027 = vpop.f32.mrb[0].mxu0
        %v6028 = vadd.f32 0.0, %v6027
        %v6029 = vpop.f32.mrb[0].mxu0
        %v6030 = vpop.f32.mrb[0].mxu0
        %v6031 = vadd.f32 0.0, %v6030
        %v6032 = vpop.f32.mrb[0].mxu0
        %6033 = vmatprep.mubr.bf16.mxu0 0
        %6034 = vmatmul.mubr.bf16.gmra.mrb[0].mxu0 %v5823
        %v6035 = vpop.f32.mrb[0].mxu0
        %v6036 = vadd.f32 0.0, %v6035
        %v6037 = vpop.f32.mrb[0].mxu0
        %v6038 = vpop.f32.mrb[0].mxu0
        %v6039 = vadd.f32 0.0, %v6038
        %v6040 = vpop.f32.mrb[0].mxu0
        %6041 = vmatprep.mubr.bf16.mxu0 0
        %6042 = vmatmul.mubr.bf16.gmra.mrb[0].mxu0 %v5824
        %v6043 = vpop.f32.mrb[0].mxu0
        %v6044 = vadd.f32 0.0, %v6043
        %v6045 = vpop.f32.mrb[0].mxu0
        %v6046 = vpop.f32.mrb[0].mxu0
        %v6047 = vadd.f32 0.0, %v6046
        %v6048 = vpop.f32.mrb[0].mxu0
        %6049 = vdwg.mxu0
        %v6050 = vadd.f32 %v5520, %v5924
        %v6051 = vadd.f32 %v5521, %v5927
        %v6052 = vadd.f32 %v5522, %v5932
        %v6053 = vadd.f32 %v5523, %v5935
        %v6054 = vadd.f32 %v5524, %v5940
        %v6055 = vadd.f32 %v5525, %v5943
        %v6056 = vadd.f32 %v5526, %v5948
        %v6057 = vadd.f32 %v5527, %v5951
        %v6058 = vadd.f32 %v5528, %v5956
        %v6059 = vadd.f32 %v5529, %v5959
        %v6060 = vadd.f32 %v5530, %v5964
        %v6061 = vadd.f32 %v5531, %v5967
        %v6062 = vadd.f32 %v5532, %v5972
        %v6063 = vadd.f32 %v5533, %v5975
        %v6064 = vadd.f32 %v5534, %v5980
        %v6065 = vadd.f32 %v5535, %v5983
        %v6066 = vadd.f32 %v5536, %v5988
        %v6067 = vadd.f32 %v5537, %v5991
        %v6068 = vadd.f32 %v5538, %v5996
        %v6069 = vadd.f32 %v5539, %v5999
        %v6070 = vadd.f32 %v5540, %v6004
        %v6071 = vadd.f32 %v5541, %v6007
        %v6072 = vadd.f32 %v5542, %v6012
        %v6073 = vadd.f32 %v5543, %v6015
        %v6074 = vadd.f32 %v5544, %v6020
        %v6075 = vadd.f32 %v5545, %v6023
        %v6076 = vadd.f32 %v5546, %v6028
        %v6077 = vadd.f32 %v5547, %v6031
        %v6078 = vadd.f32 %v5548, %v6036
        %v6079 = vadd.f32 %v5549, %v6039
        %v6080 = vadd.f32 %v5550, %v6044
        %v6081 = vadd.f32 %v5551, %v6047
        %6082 = vst [vmem:[#allocation3] sm:$0xff] %v6050
        %6083 = vst [vmem:[#allocation3 + $0x8] sm:$0xff] %v6051
        %6084 = vst [vmem:[#allocation3 + $0x10] sm:$0xff] %v6052
        %6085 = vst [vmem:[#allocation3 + $0x18] sm:$0xff] %v6053
        %6086 = vst [vmem:[#allocation3 + $0x20] sm:$0xff] %v6054
        %6087 = vst [vmem:[#allocation3 + $0x28] sm:$0xff] %v6055
        %6088 = vst [vmem:[#allocation3 + $0x30] sm:$0xff] %v6056
        %6089 = vst [vmem:[#allocation3 + $0x38] sm:$0xff] %v6057
        %6090 = vst [vmem:[#allocation3 + $0x40] sm:$0xff] %v6058
        %6091 = vst [vmem:[#allocation3 + $0x48] sm:$0xff] %v6059
        %6092 = vst [vmem:[#allocation3 + $0x50] sm:$0xff] %v6060
        %6093 = vst [vmem:[#allocation3 + $0x58] sm:$0xff] %v6061
        %6094 = vst [vmem:[#allocation3 + $0x60] sm:$0xff] %v6062
        %6095 = vst [vmem:[#allocation3 + $0x68] sm:$0xff] %v6063
        %6096 = vst [vmem:[#allocation3 + $0x70] sm:$0xff] %v6064
        %6097 = vst [vmem:[#allocation3 + $0x78] sm:$0xff] %v6065
        %6098 = vst [vmem:[#allocation3 + $0x80] sm:$0xff] %v6066
        %6099 = vst [vmem:[#allocation3 + $0x88] sm:$0xff] %v6067
        %6100 = vst [vmem:[#allocation3 + $0x90] sm:$0xff] %v6068
        %6101 = vst [vmem:[#allocation3 + $0x98] sm:$0xff] %v6069
        %6102 = vst [vmem:[#allocation3 + $0xa0] sm:$0xff] %v6070
        %6103 = vst [vmem:[#allocation3 + $0xa8] sm:$0xff] %v6071
        %6104 = vst [vmem:[#allocation3 + $0xb0] sm:$0xff] %v6072
        %6105 = vst [vmem:[#allocation3 + $0xb8] sm:$0xff] %v6073
        %6106 = vst [vmem:[#allocation3 + $0xc0] sm:$0xff] %v6074
        %6107 = vst [vmem:[#allocation3 + $0xc8] sm:$0xff] %v6075
        %6108 = vst [vmem:[#allocation3 + $0xd0] sm:$0xff] %v6076
        %6109 = vst [vmem:[#allocation3 + $0xd8] sm:$0xff] %v6077
        %6110 = vst [vmem:[#allocation3 + $0xe0] sm:$0xff] %v6078
        %6111 = vst [vmem:[#allocation3 + $0xe8] sm:$0xff] %v6079
        %6112 = vst [vmem:[#allocation3 + $0xf0] sm:$0xff] %v6080
        %6113 = vst [vmem:[#allocation3 + $0xf8] sm:$0xff] %v6081
        %v6114 = vld [vmem:[#allocation3] sm:$0xff]
        %v6115 = vld [vmem:[#allocation3 + $0x8] sm:$0xff]
        %v6116 = vld [vmem:[#allocation3 + $0x10] sm:$0xff]
        %v6117 = vld [vmem:[#allocation3 + $0x18] sm:$0xff]
        %v6118 = vld [vmem:[#allocation3 + $0x20] sm:$0xff]
        %v6119 = vld [vmem:[#allocation3 + $0x28] sm:$0xff]
        %v6120 = vld [vmem:[#allocation3 + $0x30] sm:$0xff]
        %v6121 = vld [vmem:[#allocation3 + $0x38] sm:$0xff]
        %v6122 = vld [vmem:[#allocation3 + $0x40] sm:$0xff]
        %v6123 = vld [vmem:[#allocation3 + $0x48] sm:$0xff]
        %v6124 = vld [vmem:[#allocation3 + $0x50] sm:$0xff]
        %v6125 = vld [vmem:[#allocation3 + $0x58] sm:$0xff]
        %v6126 = vld [vmem:[#allocation3 + $0x60] sm:$0xff]
        %v6127 = vld [vmem:[#allocation3 + $0x68] sm:$0xff]
        %v6128 = vld [vmem:[#allocation3 + $0x70] sm:$0xff]
        %v6129 = vld [vmem:[#allocation3 + $0x78] sm:$0xff]
        %v6130 = vld [vmem:[#allocation3 + $0x80] sm:$0xff]
        %v6131 = vld [vmem:[#allocation3 + $0x88] sm:$0xff]
        %v6132 = vld [vmem:[#allocation3 + $0x90] sm:$0xff]
        %v6133 = vld [vmem:[#allocation3 + $0x98] sm:$0xff]
        %v6134 = vld [vmem:[#allocation3 + $0xa0] sm:$0xff]
        %v6135 = vld [vmem:[#allocation3 + $0xa8] sm:$0xff]
        %v6136 = vld [vmem:[#allocation3 + $0xb0] sm:$0xff]
        %v6137 = vld [vmem:[#allocation3 + $0xb8] sm:$0xff]
        %v6138 = vld [vmem:[#allocation3 + $0xc0] sm:$0xff]
        %v6139 = vld [vmem:[#allocation3 + $0xc8] sm:$0xff]
        %v6140 = vld [vmem:[#allocation3 + $0xd0] sm:$0xff]
        %v6141 = vld [vmem:[#allocation3 + $0xd8] sm:$0xff]
        %v6142 = vld [vmem:[#allocation3 + $0xe0] sm:$0xff]
        %v6143 = vld [vmem:[#allocation3 + $0xe8] sm:$0xff]
        %v6144 = vld [vmem:[#allocation3 + $0xf0] sm:$0xff]
        %v6145 = vld [vmem:[#allocation3 + $0xf8] sm:$0xff]
        %v6146 = vmax.f32 %v6114, 0.0
        %v6147 = vmax.f32 %v6115, 0.0
        %v6148 = vmax.f32 %v6116, 0.0
        %v6149 = vmax.f32 %v6117, 0.0
        %v6150 = vmax.f32 %v6118, 0.0
        %v6151 = vmax.f32 %v6119, 0.0
        %v6152 = vmax.f32 %v6120, 0.0
        %v6153 = vmax.f32 %v6121, 0.0
        %v6154 = vmax.f32 %v6122, 0.0
        %v6155 = vmax.f32 %v6123, 0.0
        %v6156 = vmax.f32 %v6124, 0.0
        %v6157 = vmax.f32 %v6125, 0.0
        %v6158 = vmax.f32 %v6126, 0.0
        %v6159 = vmax.f32 %v6127, 0.0
        %v6160 = vmax.f32 %v6128, 0.0
        %v6161 = vmax.f32 %v6129, 0.0
        %v6162 = vmax.f32 %v6130, 0.0
        %v6163 = vmax.f32 %v6131, 0.0
        %v6164 = vmax.f32 %v6132, 0.0
        %v6165 = vmax.f32 %v6133, 0.0
        %v6166 = vmax.f32 %v6134, 0.0
        %v6167 = vmax.f32 %v6135, 0.0
        %v6168 = vmax.f32 %v6136, 0.0
        %v6169 = vmax.f32 %v6137, 0.0
        %v6170 = vmax.f32 %v6138, 0.0
        %v6171 = vmax.f32 %v6139, 0.0
        %v6172 = vmax.f32 %v6140, 0.0
        %v6173 = vmax.f32 %v6141, 0.0
        %v6174 = vmax.f32 %v6142, 0.0
        %v6175 = vmax.f32 %v6143, 0.0
        %v6176 = vmax.f32 %v6144, 0.0
        %v6177 = vmax.f32 %v6145, 0.0
        %v6178 = vpack.c.bf16 %v6147, %v6146
        %v6179 = vpack.c.bf16 %v6149, %v6148
        %v6180 = vpack.c.bf16 %v6151, %v6150
        %v6181 = vpack.c.bf16 %v6153, %v6152
        %v6182 = vpack.c.bf16 %v6155, %v6154
        %v6183 = vpack.c.bf16 %v6157, %v6156
        %v6184 = vpack.c.bf16 %v6159, %v6158
        %v6185 = vpack.c.bf16 %v6161, %v6160
        %v6186 = vpack.c.bf16 %v6163, %v6162
        %v6187 = vpack.c.bf16 %v6165, %v6164
        %v6188 = vpack.c.bf16 %v6167, %v6166
        %v6189 = vpack.c.bf16 %v6169, %v6168
        %v6190 = vpack.c.bf16 %v6171, %v6170
        %v6191 = vpack.c.bf16 %v6173, %v6172
        %v6192 = vpack.c.bf16 %v6175, %v6174
        %v6193 = vpack.c.bf16 %v6177, %v6176
        %v6194 = vld [vmem:[%s4] sm:$0xf]
        %v6195 = vld [vmem:[%s4 + $0x4] sm:$0xf]
        %v6196 = vld [vmem:[%s4 + $0x8] sm:$0xf]
        %v6197 = vld [vmem:[%s4 + $0xc] sm:$0xf]
        %v6198 = vld [vmem:[%s4 + $0x10] sm:$0xf]
        %v6199 = vld [vmem:[%s4 + $0x14] sm:$0xf]
        %v6200 = vld [vmem:[%s4 + $0x18] sm:$0xf]
        %v6201 = vld [vmem:[%s4 + $0x1c] sm:$0xf]
        %v6202 = vld [vmem:[%s4 + $0x20] sm:$0xf]
        %v6203 = vld [vmem:[%s4 + $0x24] sm:$0xf]
        %v6204 = vld [vmem:[%s4 + $0x28] sm:$0xf]
        %v6205 = vld [vmem:[%s4 + $0x2c] sm:$0xf]
        %v6206 = vld [vmem:[%s4 + $0x30] sm:$0xf]
        %v6207 = vld [vmem:[%s4 + $0x34] sm:$0xf]
        %v6208 = vld [vmem:[%s4 + $0x38] sm:$0xf]
        %v6209 = vld [vmem:[%s4 + $0x3c] sm:$0xf]
        %v6226 = vunpack.c.l.b16 %v6194
        %v6227 = vunpack.c.l.b16 %v6195
        %v6228 = vunpack.c.l.b16 %v6196
        %v6229 = vunpack.c.l.b16 %v6197
        %v6230 = vunpack.c.l.b16 %v6198
        %v6231 = vunpack.c.l.b16 %v6199
        %v6232 = vunpack.c.l.b16 %v6200
        %v6233 = vunpack.c.l.b16 %v6201
        %v6234 = vunpack.c.l.b16 %v6202
        %v6235 = vunpack.c.l.b16 %v6203
        %v6236 = vunpack.c.l.b16 %v6204
        %v6237 = vunpack.c.l.b16 %v6205
        %v6238 = vunpack.c.l.b16 %v6206
        %v6239 = vunpack.c.l.b16 %v6207
        %v6240 = vunpack.c.l.b16 %v6208
        %v6241 = vunpack.c.l.b16 %v6209
        %v6242 = vpack.c.b16 %v6227, %v6226
        %v6243 = vpack.c.b16 %v6229, %v6228
        %v6244 = vpack.c.b16 %v6231, %v6230
        %v6245 = vpack.c.b16 %v6233, %v6232
        %v6246 = vpack.c.b16 %v6235, %v6234
        %v6247 = vpack.c.b16 %v6237, %v6236
        %v6248 = vpack.c.b16 %v6239, %v6238
        %v6249 = vpack.c.b16 %v6241, %v6240
        %6258 = vmatprep.subr.bf16.mxu0 0
        %6259 = vmatpush1.bf16.msra.mxu0 %v6242
        %6260 = vmatprep.subr.bf16.mxu0 0
        %6261 = vmatpush1.bf16.msra.mxu0 %v6243
        %6262 = vmatprep.subr.bf16.mxu0 0
        %6263 = vmatpush1.bf16.msra.mxu0 %v6244
        %6264 = vmatprep.subr.bf16.mxu0 0
        %6265 = vmatpush1.bf16.msra.mxu0 %v6245
        %6266 = vmatprep.subr.bf16.mxu0 0
        %6267 = vmatpush1.bf16.msra.mxu0 %v6246
        %6268 = vmatprep.subr.bf16.mxu0 0
        %6269 = vmatpush1.bf16.msra.mxu0 %v6247
        %6270 = vmatprep.subr.bf16.mxu0 0
        %6271 = vmatpush1.bf16.msra.mxu0 %v6248
        %6272 = vmatprep.subr.bf16.mxu0 0
        %6273 = vmatpush1.bf16.msra.mxu0 %v6249
        %6274 = vmatprep.subr.bf16.mxu0 0
        %6275 = vmatpush1.bf16.msra.mxu0 0
        %6276 = vmatprep.subr.bf16.mxu0 0
        %6277 = vmatpush1.bf16.msra.mxu0 0
        %6278 = vmatprep.subr.bf16.mxu0 0
        %6279 = vmatpush1.bf16.msra.mxu0 0
        %6280 = vmatprep.subr.bf16.mxu0 0
        %6281 = vmatpush1.bf16.msra.mxu0 0
        %6282 = vmatprep.subr.bf16.mxu0 0
        %6283 = vmatpush1.bf16.msra.mxu0 0
        %6284 = vmatprep.subr.bf16.mxu0 0
        %6285 = vmatpush1.bf16.msra.mxu0 0
        %6286 = vmatprep.subr.bf16.mxu0 0
        %6287 = vmatpush1.bf16.msra.mxu0 0
        %6288 = vmatprep.subr.bf16.mxu0 0
        %6289 = vmatpush1.bf16.msra.mxu0 0
        %6290 = vmatprep.mubr.bf16.mxu0 0
        %6291 = vmatmul.mubr.bf16.gmra.mrb[0].mxu0 %v6178
        %v6292 = vpop.f32.mrb[0].mxu0
        %v6293 = vadd.f32 0.0, %v6292
        %v6294 = vpop.f32.mrb[0].mxu0
        %v6295 = vpop.f32.mrb[0].mxu0
        %v6296 = vadd.f32 0.0, %v6295
        %v6297 = vpop.f32.mrb[0].mxu0
        %6298 = vmatprep.mubr.bf16.mxu0 0
        %6299 = vmatmul.mubr.bf16.gmra.mrb[0].mxu0 %v6179
        %v6300 = vpop.f32.mrb[0].mxu0
        %v6301 = vadd.f32 0.0, %v6300
        %v6302 = vpop.f32.mrb[0].mxu0
        %v6303 = vpop.f32.mrb[0].mxu0
        %v6304 = vadd.f32 0.0, %v6303
        %v6305 = vpop.f32.mrb[0].mxu0
        %6306 = vmatprep.mubr.bf16.mxu0 0
        %6307 = vmatmul.mubr.bf16.gmra.mrb[0].mxu0 %v6180
        %v6308 = vpop.f32.mrb[0].mxu0
        %v6309 = vadd.f32 0.0, %v6308
        %v6310 = vpop.f32.mrb[0].mxu0
        %v6311 = vpop.f32.mrb[0].mxu0
        %v6312 = vadd.f32 0.0, %v6311
        %v6313 = vpop.f32.mrb[0].mxu0
        %6314 = vmatprep.mubr.bf16.mxu0 0
        %6315 = vmatmul.mubr.bf16.gmra.mrb[0].mxu0 %v6181
        %v6316 = vpop.f32.mrb[0].mxu0
        %v6317 = vadd.f32 0.0, %v6316
        %v6318 = vpop.f32.mrb[0].mxu0
        %v6319 = vpop.f32.mrb[0].mxu0
        %v6320 = vadd.f32 0.0, %v6319
        %v6321 = vpop.f32.mrb[0].mxu0
        %6322 = vmatprep.mubr.bf16.mxu0 0
        %6323 = vmatmul.mubr.bf16.gmra.mrb[0].mxu0 %v6182
        %v6324 = vpop.f32.mrb[0].mxu0
        %v6325 = vadd.f32 0.0, %v6324
        %v6326 = vpop.f32.mrb[0].mxu0
        %v6327 = vpop.f32.mrb[0].mxu0
        %v6328 = vadd.f32 0.0, %v6327
        %v6329 = vpop.f32.mrb[0].mxu0
        %6330 = vmatprep.mubr.bf16.mxu0 0
        %6331 = vmatmul.mubr.bf16.gmra.mrb[0].mxu0 %v6183
        %v6332 = vpop.f32.mrb[0].mxu0
        %v6333 = vadd.f32 0.0, %v6332
        %v6334 = vpop.f32.mrb[0].mxu0
        %v6335 = vpop.f32.mrb[0].mxu0
        %v6336 = vadd.f32 0.0, %v6335
        %v6337 = vpop.f32.mrb[0].mxu0
        %6338 = vmatprep.mubr.bf16.mxu0 0
        %6339 = vmatmul.mubr.bf16.gmra.mrb[0].mxu0 %v6184
        %v6340 = vpop.f32.mrb[0].mxu0
        %v6341 = vadd.f32 0.0, %v6340
        %v6342 = vpop.f32.mrb[0].mxu0
        %v6343 = vpop.f32.mrb[0].mxu0
        %v6344 = vadd.f32 0.0, %v6343
        %v6345 = vpop.f32.mrb[0].mxu0
        %6346 = vmatprep.mubr.bf16.mxu0 0
        %6347 = vmatmul.mubr.bf16.gmra.mrb[0].mxu0 %v6185
        %v6348 = vpop.f32.mrb[0].mxu0
        %v6349 = vadd.f32 0.0, %v6348
        %v6350 = vpop.f32.mrb[0].mxu0
        %v6351 = vpop.f32.mrb[0].mxu0
        %v6352 = vadd.f32 0.0, %v6351
        %v6353 = vpop.f32.mrb[0].mxu0
        %6354 = vmatprep.mubr.bf16.mxu0 0
        %6355 = vmatmul.mubr.bf16.gmra.mrb[0].mxu0 %v6186
        %v6356 = vpop.f32.mrb[0].mxu0
        %v6357 = vadd.f32 0.0, %v6356
        %v6358 = vpop.f32.mrb[0].mxu0
        %v6359 = vpop.f32.mrb[0].mxu0
        %v6360 = vadd.f32 0.0, %v6359
        %v6361 = vpop.f32.mrb[0].mxu0
        %6362 = vmatprep.mubr.bf16.mxu0 0
        %6363 = vmatmul.mubr.bf16.gmra.mrb[0].mxu0 %v6187
        %v6364 = vpop.f32.mrb[0].mxu0
        %v6365 = vadd.f32 0.0, %v6364
        %v6366 = vpop.f32.mrb[0].mxu0
        %v6367 = vpop.f32.mrb[0].mxu0
        %v6368 = vadd.f32 0.0, %v6367
        %v6369 = vpop.f32.mrb[0].mxu0
        %6370 = vmatprep.mubr.bf16.mxu0 0
        %6371 = vmatmul.mubr.bf16.gmra.mrb[0].mxu0 %v6188
        %v6372 = vpop.f32.mrb[0].mxu0
        %v6373 = vadd.f32 0.0, %v6372
        %v6374 = vpop.f32.mrb[0].mxu0
        %v6375 = vpop.f32.mrb[0].mxu0
        %v6376 = vadd.f32 0.0, %v6375
        %v6377 = vpop.f32.mrb[0].mxu0
        %6378 = vmatprep.mubr.bf16.mxu0 0
        %6379 = vmatmul.mubr.bf16.gmra.mrb[0].mxu0 %v6189
        %v6380 = vpop.f32.mrb[0].mxu0
        %v6381 = vadd.f32 0.0, %v6380
        %v6382 = vpop.f32.mrb[0].mxu0
        %v6383 = vpop.f32.mrb[0].mxu0
        %v6384 = vadd.f32 0.0, %v6383
        %v6385 = vpop.f32.mrb[0].mxu0
        %6386 = vmatprep.mubr.bf16.mxu0 0
        %6387 = vmatmul.mubr.bf16.gmra.mrb[0].mxu0 %v6190
        %v6388 = vpop.f32.mrb[0].mxu0
        %v6389 = vadd.f32 0.0, %v6388
        %v6390 = vpop.f32.mrb[0].mxu0
        %v6391 = vpop.f32.mrb[0].mxu0
        %v6392 = vadd.f32 0.0, %v6391
        %v6393 = vpop.f32.mrb[0].mxu0
        %6394 = vmatprep.mubr.bf16.mxu0 0
        %6395 = vmatmul.mubr.bf16.gmra.mrb[0].mxu0 %v6191
        %v6396 = vpop.f32.mrb[0].mxu0
        %v6397 = vadd.f32 0.0, %v6396
        %v6398 = vpop.f32.mrb[0].mxu0
        %v6399 = vpop.f32.mrb[0].mxu0
        %v6400 = vadd.f32 0.0, %v6399
        %v6401 = vpop.f32.mrb[0].mxu0
        %6402 = vmatprep.mubr.bf16.mxu0 0
        %6403 = vmatmul.mubr.bf16.gmra.mrb[0].mxu0 %v6192
        %v6404 = vpop.f32.mrb[0].mxu0
        %v6405 = vadd.f32 0.0, %v6404
        %v6406 = vpop.f32.mrb[0].mxu0
        %v6407 = vpop.f32.mrb[0].mxu0
        %v6408 = vadd.f32 0.0, %v6407
        %v6409 = vpop.f32.mrb[0].mxu0
        %6410 = vmatprep.mubr.bf16.mxu0 0
        %6411 = vmatmul.mubr.bf16.gmra.mrb[0].mxu0 %v6193
        %v6412 = vpop.f32.mrb[0].mxu0
        %v6413 = vadd.f32 0.0, %v6412
        %v6414 = vpop.f32.mrb[0].mxu0
        %v6415 = vpop.f32.mrb[0].mxu0
        %v6416 = vadd.f32 0.0, %v6415
        %v6417 = vpop.f32.mrb[0].mxu0
        %6418 = vdwg.mxu0
        %v6419 = vmax.f32 %v6293, 0.0
        %v6420 = vmax.f32 %v6296, 0.0
        %v6421 = vmax.f32 %v6301, 0.0
        %v6422 = vmax.f32 %v6304, 0.0
        %v6423 = vmax.f32 %v6309, 0.0
        %v6424 = vmax.f32 %v6312, 0.0
        %v6425 = vmax.f32 %v6317, 0.0
        %v6426 = vmax.f32 %v6320, 0.0
        %v6427 = vmax.f32 %v6325, 0.0
        %v6428 = vmax.f32 %v6328, 0.0
        %v6429 = vmax.f32 %v6333, 0.0
        %v6430 = vmax.f32 %v6336, 0.0
        %v6431 = vmax.f32 %v6341, 0.0
        %v6432 = vmax.f32 %v6344, 0.0
        %v6433 = vmax.f32 %v6349, 0.0
        %v6434 = vmax.f32 %v6352, 0.0
        %v6435 = vmax.f32 %v6357, 0.0
        %v6436 = vmax.f32 %v6360, 0.0
        %v6437 = vmax.f32 %v6365, 0.0
        %v6438 = vmax.f32 %v6368, 0.0
        %v6439 = vmax.f32 %v6373, 0.0
        %v6440 = vmax.f32 %v6376, 0.0
        %v6441 = vmax.f32 %v6381, 0.0
        %v6442 = vmax.f32 %v6384, 0.0
        %v6443 = vmax.f32 %v6389, 0.0
        %v6444 = vmax.f32 %v6392, 0.0
        %v6445 = vmax.f32 %v6397, 0.0
        %v6446 = vmax.f32 %v6400, 0.0
        %v6447 = vmax.f32 %v6405, 0.0
        %v6448 = vmax.f32 %v6408, 0.0
        %v6449 = vmax.f32 %v6413, 0.0
        %v6450 = vmax.f32 %v6416, 0.0
        %v6451 = vld [vmem:[%s484] sm:$0xf]
        %v6452 = vld [vmem:[%s484 + $0x4] sm:$0xf]
        %v6453 = vld [vmem:[%s484 + $0x8] sm:$0x1]
        %v6454 = vld [vmem:[%s484 + $0xc] sm:$0xf]
        %v6455 = vld [vmem:[%s484 + $0x10] sm:$0xf]
        %v6456 = vld [vmem:[%s484 + $0x14] sm:$0x1]
        %v6457 = vld [vmem:[%s484 + $0x18] sm:$0xf]
        %v6458 = vld [vmem:[%s484 + $0x1c] sm:$0xf]
        %v6459 = vld [vmem:[%s484 + $0x20] sm:$0x1]
        %v6460 = vld [vmem:[%s484 + $0x24] sm:$0xf]
        %v6461 = vld [vmem:[%s484 + $0x28] sm:$0xf]
        %v6462 = vld [vmem:[%s484 + $0x2c] sm:$0x1]
        %v6463 = vld [vmem:[%s484 + $0x30] sm:$0xf]
        %v6464 = vld [vmem:[%s484 + $0x34] sm:$0xf]
        %v6465 = vld [vmem:[%s484 + $0x38] sm:$0x1]
        %v6466 = vld [vmem:[%s484 + $0x3c] sm:$0xf]
        %v6467 = vld [vmem:[%s484 + $0x40] sm:$0xf]
        %v6468 = vld [vmem:[%s484 + $0x44] sm:$0x1]
        %v6469 = vld [vmem:[%s484 + $0x48] sm:$0xf]
        %v6470 = vld [vmem:[%s484 + $0x4c] sm:$0xf]
        %v6471 = vld [vmem:[%s484 + $0x50] sm:$0x1]
        %v6472 = vld [vmem:[%s484 + $0x54] sm:$0xf]
        %v6473 = vld [vmem:[%s484 + $0x58] sm:$0xf]
        %v6474 = vld [vmem:[%s484 + $0x5c] sm:$0x1]
        %v6475 = vld [vmem:[%s484 + $0x60] sm:$0xf]
        %v6476 = vld [vmem:[%s484 + $0x64] sm:$0xf]
        %v6477 = vld [vmem:[%s484 + $0x68] sm:$0x1]
        %v6478 = vld [vmem:[%s484 + $0x6c] sm:$0xf]
        %v6479 = vld [vmem:[%s484 + $0x70] sm:$0xf]
        %v6480 = vld [vmem:[%s484 + $0x74] sm:$0x1]
        %v6481 = vld [vmem:[%s484 + $0x78] sm:$0xf]
        %v6482 = vld [vmem:[%s484 + $0x7c] sm:$0xf]
        %v6483 = vld [vmem:[%s484 + $0x80] sm:$0x1]
        %v6484 = vld [vmem:[%s484 + $0x84] sm:$0xf]
        %v6485 = vld [vmem:[%s484 + $0x88] sm:$0xf]
        %v6486 = vld [vmem:[%s484 + $0x8c] sm:$0x1]
        %v6487 = vld [vmem:[%s484 + $0x90] sm:$0xf]
        %v6488 = vld [vmem:[%s484 + $0x94] sm:$0xf]
        %v6489 = vld [vmem:[%s484 + $0x98] sm:$0x1]
        %v6490 = vld [vmem:[%s484 + $0x9c] sm:$0xf]
        %v6491 = vld [vmem:[%s484 + $0xa0] sm:$0xf]
        %v6492 = vld [vmem:[%s484 + $0xa4] sm:$0x1]
        %v6493 = vld [vmem:[%s484 + $0xa8] sm:$0xf]
        %v6494 = vld [vmem:[%s484 + $0xac] sm:$0xf]
        %v6495 = vld [vmem:[%s484 + $0xb0] sm:$0x1]
        %v6496 = vld [vmem:[%s484 + $0xb4] sm:$0xf]
        %v6497 = vld [vmem:[%s484 + $0xb8] sm:$0xf]
        %v6498 = vld [vmem:[%s484 + $0xbc] sm:$0x1]
        %v6500 = vshrl.u32 %v6451, 16
        %v6502 = vrot.slane %v6500, 4
        %v6503 = vshll.u32 %v6451, 16
        %v6505 = vrot.slane %v6503, 5
        %v6506 = vor.u32 %v6502, %v6505
        %v6507 = vrot.slane %v6506, 4
        %v6509 = vshll.u32 %v6452, 16
        %v6511 = vrot.slane %v6509, 5
        %v6512 = vsel %vm1053, %v6507, %v6511
        %v6513 = vshrl.u32 %v6452, 16
        %v6515 = vrot.slane %v6513, 4
        %v6516 = vor.u32 %v6515, %v6511
        %v6517 = vrot.slane %v6516, 4
        %v6519 = vshll.u32 %v6453, 16
        %v6521 = vrot.slane %v6519, 5
        %v6522 = vsel %vm1053, %v6517, %v6521
        %v6524 = vshrl.u32 %v6454, 16
        %v6526 = vrot.slane %v6524, 4
        %v6527 = vshll.u32 %v6454, 16
        %v6529 = vrot.slane %v6527, 5
        %v6530 = vor.u32 %v6526, %v6529
        %v6531 = vrot.slane %v6530, 4
        %v6533 = vshll.u32 %v6455, 16
        %v6535 = vrot.slane %v6533, 5
        %v6536 = vsel %vm1053, %v6531, %v6535
        %v6537 = vshrl.u32 %v6455, 16
        %v6539 = vrot.slane %v6537, 4
        %v6540 = vor.u32 %v6539, %v6535
        %v6541 = vrot.slane %v6540, 4
        %v6543 = vshll.u32 %v6456, 16
        %v6545 = vrot.slane %v6543, 5
        %v6546 = vsel %vm1053, %v6541, %v6545
        %v6548 = vshrl.u32 %v6457, 16
        %v6550 = vrot.slane %v6548, 4
        %v6551 = vshll.u32 %v6457, 16
        %v6553 = vrot.slane %v6551, 5
        %v6554 = vor.u32 %v6550, %v6553
        %v6555 = vrot.slane %v6554, 4
        %v6557 = vshll.u32 %v6458, 16
        %v6559 = vrot.slane %v6557, 5
        %v6560 = vsel %vm1053, %v6555, %v6559
        %v6561 = vshrl.u32 %v6458, 16
        %v6563 = vrot.slane %v6561, 4
        %v6564 = vor.u32 %v6563, %v6559
        %v6565 = vrot.slane %v6564, 4
        %v6567 = vshll.u32 %v6459, 16
        %v6569 = vrot.slane %v6567, 5
        %v6570 = vsel %vm1053, %v6565, %v6569
        %v6572 = vshrl.u32 %v6460, 16
        %v6574 = vrot.slane %v6572, 4
        %v6575 = vshll.u32 %v6460, 16
        %v6577 = vrot.slane %v6575, 5
        %v6578 = vor.u32 %v6574, %v6577
        %v6579 = vrot.slane %v6578, 4
        %v6581 = vshll.u32 %v6461, 16
        %v6583 = vrot.slane %v6581, 5
        %v6584 = vsel %vm1053, %v6579, %v6583
        %v6585 = vshrl.u32 %v6461, 16
        %v6587 = vrot.slane %v6585, 4
        %v6588 = vor.u32 %v6587, %v6583
        %v6589 = vrot.slane %v6588, 4
        %v6591 = vshll.u32 %v6462, 16
        %v6593 = vrot.slane %v6591, 5
        %v6594 = vsel %vm1053, %v6589, %v6593
        %v6596 = vshrl.u32 %v6463, 16
        %v6598 = vrot.slane %v6596, 4
        %v6599 = vshll.u32 %v6463, 16
        %v6601 = vrot.slane %v6599, 5
        %v6602 = vor.u32 %v6598, %v6601
        %v6603 = vrot.slane %v6602, 4
        %v6605 = vshll.u32 %v6464, 16
        %v6607 = vrot.slane %v6605, 5
        %v6608 = vsel %vm1053, %v6603, %v6607
        %v6609 = vshrl.u32 %v6464, 16
        %v6611 = vrot.slane %v6609, 4
        %v6612 = vor.u32 %v6611, %v6607
        %v6613 = vrot.slane %v6612, 4
        %v6615 = vshll.u32 %v6465, 16
        %v6617 = vrot.slane %v6615, 5
        %v6618 = vsel %vm1053, %v6613, %v6617
        %v6620 = vshrl.u32 %v6466, 16
        %v6622 = vrot.slane %v6620, 4
        %v6623 = vshll.u32 %v6466, 16
        %v6625 = vrot.slane %v6623, 5
        %v6626 = vor.u32 %v6622, %v6625
        %v6627 = vrot.slane %v6626, 4
        %v6629 = vshll.u32 %v6467, 16
        %v6631 = vrot.slane %v6629, 5
        %v6632 = vsel %vm1053, %v6627, %v6631
        %v6633 = vshrl.u32 %v6467, 16
        %v6635 = vrot.slane %v6633, 4
        %v6636 = vor.u32 %v6635, %v6631
        %v6637 = vrot.slane %v6636, 4
        %v6639 = vshll.u32 %v6468, 16
        %v6641 = vrot.slane %v6639, 5
        %v6642 = vsel %vm1053, %v6637, %v6641
        %v6644 = vshrl.u32 %v6469, 16
        %v6646 = vrot.slane %v6644, 4
        %v6647 = vshll.u32 %v6469, 16
        %v6649 = vrot.slane %v6647, 5
        %v6650 = vor.u32 %v6646, %v6649
        %v6651 = vrot.slane %v6650, 4
        %v6653 = vshll.u32 %v6470, 16
        %v6655 = vrot.slane %v6653, 5
        %v6656 = vsel %vm1053, %v6651, %v6655
        %v6657 = vshrl.u32 %v6470, 16
        %v6659 = vrot.slane %v6657, 4
        %v6660 = vor.u32 %v6659, %v6655
        %v6661 = vrot.slane %v6660, 4
        %v6663 = vshll.u32 %v6471, 16
        %v6665 = vrot.slane %v6663, 5
        %v6666 = vsel %vm1053, %v6661, %v6665
        %v6668 = vshrl.u32 %v6472, 16
        %v6670 = vrot.slane %v6668, 4
        %v6671 = vshll.u32 %v6472, 16
        %v6673 = vrot.slane %v6671, 5
        %v6674 = vor.u32 %v6670, %v6673
        %v6675 = vrot.slane %v6674, 4
        %v6677 = vshll.u32 %v6473, 16
        %v6679 = vrot.slane %v6677, 5
        %v6680 = vsel %vm1053, %v6675, %v6679
        %v6681 = vshrl.u32 %v6473, 16
        %v6683 = vrot.slane %v6681, 4
        %v6684 = vor.u32 %v6683, %v6679
        %v6685 = vrot.slane %v6684, 4
        %v6687 = vshll.u32 %v6474, 16
        %v6689 = vrot.slane %v6687, 5
        %v6690 = vsel %vm1053, %v6685, %v6689
        %v6692 = vshrl.u32 %v6475, 16
        %v6694 = vrot.slane %v6692, 4
        %v6695 = vshll.u32 %v6475, 16
        %v6697 = vrot.slane %v6695, 5
        %v6698 = vor.u32 %v6694, %v6697
        %v6699 = vrot.slane %v6698, 4
        %v6701 = vshll.u32 %v6476, 16
        %v6703 = vrot.slane %v6701, 5
        %v6704 = vsel %vm1053, %v6699, %v6703
        %v6705 = vshrl.u32 %v6476, 16
        %v6707 = vrot.slane %v6705, 4
        %v6708 = vor.u32 %v6707, %v6703
        %v6709 = vrot.slane %v6708, 4
        %v6711 = vshll.u32 %v6477, 16
        %v6713 = vrot.slane %v6711, 5
        %v6714 = vsel %vm1053, %v6709, %v6713
        %v6716 = vshrl.u32 %v6478, 16
        %v6718 = vrot.slane %v6716, 4
        %v6719 = vshll.u32 %v6478, 16
        %v6721 = vrot.slane %v6719, 5
        %v6722 = vor.u32 %v6718, %v6721
        %v6723 = vrot.slane %v6722, 4
        %v6725 = vshll.u32 %v6479, 16
        %v6727 = vrot.slane %v6725, 5
        %v6728 = vsel %vm1053, %v6723, %v6727
        %v6729 = vshrl.u32 %v6479, 16
        %v6731 = vrot.slane %v6729, 4
        %v6732 = vor.u32 %v6731, %v6727
        %v6733 = vrot.slane %v6732, 4
        %v6735 = vshll.u32 %v6480, 16
        %v6737 = vrot.slane %v6735, 5
        %v6738 = vsel %vm1053, %v6733, %v6737
        %v6740 = vshrl.u32 %v6481, 16
        %v6742 = vrot.slane %v6740, 4
        %v6743 = vshll.u32 %v6481, 16
        %v6745 = vrot.slane %v6743, 5
        %v6746 = vor.u32 %v6742, %v6745
        %v6747 = vrot.slane %v6746, 4
        %v6749 = vshll.u32 %v6482, 16
        %v6751 = vrot.slane %v6749, 5
        %v6752 = vsel %vm1053, %v6747, %v6751
        %v6753 = vshrl.u32 %v6482, 16
        %v6755 = vrot.slane %v6753, 4
        %v6756 = vor.u32 %v6755, %v6751
        %v6757 = vrot.slane %v6756, 4
        %v6759 = vshll.u32 %v6483, 16
        %v6761 = vrot.slane %v6759, 5
        %v6762 = vsel %vm1053, %v6757, %v6761
        %v6764 = vshrl.u32 %v6484, 16
        %v6766 = vrot.slane %v6764, 4
        %v6767 = vshll.u32 %v6484, 16
        %v6769 = vrot.slane %v6767, 5
        %v6770 = vor.u32 %v6766, %v6769
        %v6771 = vrot.slane %v6770, 4
        %v6773 = vshll.u32 %v6485, 16
        %v6775 = vrot.slane %v6773, 5
        %v6776 = vsel %vm1053, %v6771, %v6775
        %v6777 = vshrl.u32 %v6485, 16
        %v6779 = vrot.slane %v6777, 4
        %v6780 = vor.u32 %v6779, %v6775
        %v6781 = vrot.slane %v6780, 4
        %v6783 = vshll.u32 %v6486, 16
        %v6785 = vrot.slane %v6783, 5
        %v6786 = vsel %vm1053, %v6781, %v6785
        %v6788 = vshrl.u32 %v6487, 16
        %v6790 = vrot.slane %v6788, 4
        %v6791 = vshll.u32 %v6487, 16
        %v6793 = vrot.slane %v6791, 5
        %v6794 = vor.u32 %v6790, %v6793
        %v6795 = vrot.slane %v6794, 4
        %v6797 = vshll.u32 %v6488, 16
        %v6799 = vrot.slane %v6797, 5
        %v6800 = vsel %vm1053, %v6795, %v6799
        %v6801 = vshrl.u32 %v6488, 16
        %v6803 = vrot.slane %v6801, 4
        %v6804 = vor.u32 %v6803, %v6799
        %v6805 = vrot.slane %v6804, 4
        %v6807 = vshll.u32 %v6489, 16
        %v6809 = vrot.slane %v6807, 5
        %v6810 = vsel %vm1053, %v6805, %v6809
        %v6812 = vshrl.u32 %v6490, 16
        %v6814 = vrot.slane %v6812, 4
        %v6815 = vshll.u32 %v6490, 16
        %v6817 = vrot.slane %v6815, 5
        %v6818 = vor.u32 %v6814, %v6817
        %v6819 = vrot.slane %v6818, 4
        %v6821 = vshll.u32 %v6491, 16
        %v6823 = vrot.slane %v6821, 5
        %v6824 = vsel %vm1053, %v6819, %v6823
        %v6825 = vshrl.u32 %v6491, 16
        %v6827 = vrot.slane %v6825, 4
        %v6828 = vor.u32 %v6827, %v6823
        %v6829 = vrot.slane %v6828, 4
        %v6831 = vshll.u32 %v6492, 16
        %v6833 = vrot.slane %v6831, 5
        %v6834 = vsel %vm1053, %v6829, %v6833
        %v6836 = vshrl.u32 %v6493, 16
        %v6838 = vrot.slane %v6836, 4
        %v6839 = vshll.u32 %v6493, 16
        %v6841 = vrot.slane %v6839, 5
        %v6842 = vor.u32 %v6838, %v6841
        %v6843 = vrot.slane %v6842, 4
        %v6845 = vshll.u32 %v6494, 16
        %v6847 = vrot.slane %v6845, 5
        %v6848 = vsel %vm1053, %v6843, %v6847
        %v6849 = vshrl.u32 %v6494, 16
        %v6851 = vrot.slane %v6849, 4
        %v6852 = vor.u32 %v6851, %v6847
        %v6853 = vrot.slane %v6852, 4
        %v6855 = vshll.u32 %v6495, 16
        %v6857 = vrot.slane %v6855, 5
        %v6858 = vsel %vm1053, %v6853, %v6857
        %v6860 = vshrl.u32 %v6496, 16
        %v6862 = vrot.slane %v6860, 4
        %v6863 = vshll.u32 %v6496, 16
        %v6865 = vrot.slane %v6863, 5
        %v6866 = vor.u32 %v6862, %v6865
        %v6867 = vrot.slane %v6866, 4
        %v6869 = vshll.u32 %v6497, 16
        %v6871 = vrot.slane %v6869, 5
        %v6872 = vsel %vm1053, %v6867, %v6871
        %v6873 = vshrl.u32 %v6497, 16
        %v6875 = vrot.slane %v6873, 4
        %v6876 = vor.u32 %v6875, %v6871
        %v6877 = vrot.slane %v6876, 4
        %v6879 = vshll.u32 %v6498, 16
        %v6881 = vrot.slane %v6879, 5
        %v6882 = vsel %vm1053, %v6877, %v6881
        %v6883 = vld [vmem:[%s5] sm:$0xf]
        %v6884 = vld [vmem:[%s5 + $0x4] sm:$0xf]
        %v6885 = vld [vmem:[%s5 + $0x8] sm:$0xf]
        %v6886 = vld [vmem:[%s5 + $0xc] sm:$0xf]
        %v6887 = vld [vmem:[%s5 + $0x10] sm:$0xf]
        %v6888 = vld [vmem:[%s5 + $0x14] sm:$0xf]
        %v6889 = vld [vmem:[%s5 + $0x18] sm:$0xf]
        %v6890 = vld [vmem:[%s5 + $0x1c] sm:$0xf]
        %v6891 = vld [vmem:[%s5 + $0x20] sm:$0xf]
        %v6892 = vld [vmem:[%s5 + $0x24] sm:$0xf]
        %v6893 = vld [vmem:[%s5 + $0x28] sm:$0xf]
        %v6894 = vld [vmem:[%s5 + $0x2c] sm:$0xf]
        %v6895 = vld [vmem:[%s5 + $0x30] sm:$0xf]
        %v6896 = vld [vmem:[%s5 + $0x34] sm:$0xf]
        %v6897 = vld [vmem:[%s5 + $0x38] sm:$0xf]
        %v6898 = vld [vmem:[%s5 + $0x3c] sm:$0xf]
        %v6899 = vld [vmem:[%s6] sm:$0x1]
        %v6901 = vlaneseq
        %v6902 = vshrl.u32 %v6901, 7
        %v6903 = vsub.s32 0, %v6902
        %v6904 = vrot.slane %v6899, %v6903
        %v6906 = vunpack.c.l.b16 %v6512
        %v6907 = vunpack.c.l.b16 %v6522
        %v6908 = vunpack.c.l.b16 %v6536
        %v6909 = vunpack.c.l.b16 %v6546
        %v6910 = vunpack.c.l.b16 %v6560
        %v6911 = vunpack.c.l.b16 %v6570
        %v6912 = vunpack.c.l.b16 %v6584
        %v6913 = vunpack.c.l.b16 %v6594
        %v6914 = vunpack.c.l.b16 %v6608
        %v6915 = vunpack.c.l.b16 %v6618
        %v6916 = vunpack.c.l.b16 %v6632
        %v6917 = vunpack.c.l.b16 %v6642
        %v6918 = vunpack.c.l.b16 %v6656
        %v6919 = vunpack.c.l.b16 %v6666
        %v6920 = vunpack.c.l.b16 %v6680
        %v6921 = vunpack.c.l.b16 %v6690
        %v6922 = vunpack.c.l.b16 %v6704
        %v6923 = vunpack.c.l.b16 %v6714
        %v6924 = vunpack.c.l.b16 %v6728
        %v6925 = vunpack.c.l.b16 %v6738
        %v6926 = vunpack.c.l.b16 %v6752
        %v6927 = vunpack.c.l.b16 %v6762
        %v6928 = vunpack.c.l.b16 %v6776
        %v6929 = vunpack.c.l.b16 %v6786
        %v6930 = vunpack.c.l.b16 %v6800
        %v6931 = vunpack.c.l.b16 %v6810
        %v6932 = vunpack.c.l.b16 %v6824
        %v6933 = vunpack.c.l.b16 %v6834
        %v6934 = vunpack.c.l.b16 %v6848
        %v6935 = vunpack.c.l.b16 %v6858
        %v6936 = vunpack.c.l.b16 %v6872
        %v6937 = vunpack.c.l.b16 %v6882
        %v6938 = vpack.c.b16 %v6907, %v6906
        %v6939 = vpack.c.b16 %v6909, %v6908
        %v6940 = vpack.c.b16 %v6911, %v6910
        %v6941 = vpack.c.b16 %v6913, %v6912
        %v6942 = vpack.c.b16 %v6915, %v6914
        %v6943 = vpack.c.b16 %v6917, %v6916
        %v6944 = vpack.c.b16 %v6919, %v6918
        %v6945 = vpack.c.b16 %v6921, %v6920
        %v6946 = vpack.c.b16 %v6923, %v6922
        %v6947 = vpack.c.b16 %v6925, %v6924
        %v6948 = vpack.c.b16 %v6927, %v6926
        %v6949 = vpack.c.b16 %v6929, %v6928
        %v6950 = vpack.c.b16 %v6931, %v6930
        %v6951 = vpack.c.b16 %v6933, %v6932
        %v6952 = vpack.c.b16 %v6935, %v6934
        %v6953 = vpack.c.b16 %v6937, %v6936
        %v6986 = vunpack.c.l.b16 %v6883
        %v6987 = vunpack.c.l.b16 %v6884
        %v6988 = vunpack.c.l.b16 %v6885
        %v6989 = vunpack.c.l.b16 %v6886
        %v6990 = vunpack.c.l.b16 %v6887
        %v6991 = vunpack.c.l.b16 %v6888
        %v6992 = vunpack.c.l.b16 %v6889
        %v6993 = vunpack.c.l.b16 %v6890
        %v6994 = vunpack.c.l.b16 %v6891
        %v6995 = vunpack.c.l.b16 %v6892
        %v6996 = vunpack.c.l.b16 %v6893
        %v6997 = vunpack.c.l.b16 %v6894
        %v6998 = vunpack.c.l.b16 %v6895
        %v6999 = vunpack.c.l.b16 %v6896
        %v7000 = vunpack.c.l.b16 %v6897
        %v7001 = vunpack.c.l.b16 %v6898
        %v7002 = vpack.c.b16 %v6987, %v6986
        %v7003 = vpack.c.b16 %v6989, %v6988
        %v7004 = vpack.c.b16 %v6991, %v6990
        %v7005 = vpack.c.b16 %v6993, %v6992
        %v7006 = vpack.c.b16 %v6995, %v6994
        %v7007 = vpack.c.b16 %v6997, %v6996
        %v7008 = vpack.c.b16 %v6999, %v6998
        %v7009 = vpack.c.b16 %v7001, %v7000
        %7018 = vmatprep.subr.bf16.mxu0 0
        %7019 = vmatpush1.bf16.msra.mxu0 %v7002
        %7020 = vmatprep.subr.bf16.mxu0 0
        %7021 = vmatpush1.bf16.msra.mxu0 %v7003
        %7022 = vmatprep.subr.bf16.mxu0 0
        %7023 = vmatpush1.bf16.msra.mxu0 %v7004
        %7024 = vmatprep.subr.bf16.mxu0 0
        %7025 = vmatpush1.bf16.msra.mxu0 %v7005
        %7026 = vmatprep.subr.bf16.mxu0 0
        %7027 = vmatpush1.bf16.msra.mxu0 %v7006
        %7028 = vmatprep.subr.bf16.mxu0 0
        %7029 = vmatpush1.bf16.msra.mxu0 %v7007
        %7030 = vmatprep.subr.bf16.mxu0 0
        %7031 = vmatpush1.bf16.msra.mxu0 %v7008
        %7032 = vmatprep.subr.bf16.mxu0 0
        %7033 = vmatpush1.bf16.msra.mxu0 %v7009
        %7034 = vmatprep.subr.bf16.mxu0 0
        %7035 = vmatpush1.bf16.msra.mxu0 0
        %7036 = vmatprep.subr.bf16.mxu0 0
        %7037 = vmatpush1.bf16.msra.mxu0 0
        %7038 = vmatprep.subr.bf16.mxu0 0
        %7039 = vmatpush1.bf16.msra.mxu0 0
        %7040 = vmatprep.subr.bf16.mxu0 0
        %7041 = vmatpush1.bf16.msra.mxu0 0
        %7042 = vmatprep.subr.bf16.mxu0 0
        %7043 = vmatpush1.bf16.msra.mxu0 0
        %7044 = vmatprep.subr.bf16.mxu0 0
        %7045 = vmatpush1.bf16.msra.mxu0 0
        %7046 = vmatprep.subr.bf16.mxu0 0
        %7047 = vmatpush1.bf16.msra.mxu0 0
        %7048 = vmatprep.subr.bf16.mxu0 0
        %7049 = vmatpush1.bf16.msra.mxu0 0
        %7050 = vmatprep.mubr.bf16.mxu0 0
        %7051 = vmatmul.mubr.bf16.gmra.mrb[0].mxu0 %v6938
        %v7052 = vpop.f32.mrb[0].mxu0
        %v7053 = vadd.f32 %v6904, %v7052
        %v7054 = vpop.f32.mrb[0].mxu0
        %v7055 = vpop.f32.mrb[0].mxu0
        %v7056 = vadd.f32 %v6904, %v7055
        %v7057 = vpop.f32.mrb[0].mxu0
        %7058 = vmatprep.mubr.bf16.mxu0 0
        %7059 = vmatmul.mubr.bf16.gmra.mrb[0].mxu0 %v6939
        %v7060 = vpop.f32.mrb[0].mxu0
        %v7061 = vadd.f32 %v6904, %v7060
        %v7062 = vpop.f32.mrb[0].mxu0
        %v7063 = vpop.f32.mrb[0].mxu0
        %v7064 = vadd.f32 %v6904, %v7063
        %v7065 = vpop.f32.mrb[0].mxu0
        %7066 = vmatprep.mubr.bf16.mxu0 0
        %7067 = vmatmul.mubr.bf16.gmra.mrb[0].mxu0 %v6940
        %v7068 = vpop.f32.mrb[0].mxu0
        %v7069 = vadd.f32 %v6904, %v7068
        %v7070 = vpop.f32.mrb[0].mxu0
        %v7071 = vpop.f32.mrb[0].mxu0
        %v7072 = vadd.f32 %v6904, %v7071
        %v7073 = vpop.f32.mrb[0].mxu0
        %7074 = vmatprep.mubr.bf16.mxu0 0
        %7075 = vmatmul.mubr.bf16.gmra.mrb[0].mxu0 %v6941
        %v7076 = vpop.f32.mrb[0].mxu0
        %v7077 = vadd.f32 %v6904, %v7076
        %v7078 = vpop.f32.mrb[0].mxu0
        %v7079 = vpop.f32.mrb[0].mxu0
        %v7080 = vadd.f32 %v6904, %v7079
        %v7081 = vpop.f32.mrb[0].mxu0
        %7082 = vmatprep.mubr.bf16.mxu0 0
        %7083 = vmatmul.mubr.bf16.gmra.mrb[0].mxu0 %v6942
        %v7084 = vpop.f32.mrb[0].mxu0
        %v7085 = vadd.f32 %v6904, %v7084
        %v7086 = vpop.f32.mrb[0].mxu0
        %v7087 = vpop.f32.mrb[0].mxu0
        %v7088 = vadd.f32 %v6904, %v7087
        %v7089 = vpop.f32.mrb[0].mxu0
        %7090 = vmatprep.mubr.bf16.mxu0 0
        %7091 = vmatmul.mubr.bf16.gmra.mrb[0].mxu0 %v6943
        %v7092 = vpop.f32.mrb[0].mxu0
        %v7093 = vadd.f32 %v6904, %v7092
        %v7094 = vpop.f32.mrb[0].mxu0
        %v7095 = vpop.f32.mrb[0].mxu0
        %v7096 = vadd.f32 %v6904, %v7095
        %v7097 = vpop.f32.mrb[0].mxu0
        %7098 = vmatprep.mubr.bf16.mxu0 0
        %7099 = vmatmul.mubr.bf16.gmra.mrb[0].mxu0 %v6944
        %v7100 = vpop.f32.mrb[0].mxu0
        %v7101 = vadd.f32 %v6904, %v7100
        %v7102 = vpop.f32.mrb[0].mxu0
        %v7103 = vpop.f32.mrb[0].mxu0
        %v7104 = vadd.f32 %v6904, %v7103
        %v7105 = vpop.f32.mrb[0].mxu0
        %7106 = vmatprep.mubr.bf16.mxu0 0
        %7107 = vmatmul.mubr.bf16.gmra.mrb[0].mxu0 %v6945
        %v7108 = vpop.f32.mrb[0].mxu0
        %v7109 = vadd.f32 %v6904, %v7108
        %v7110 = vpop.f32.mrb[0].mxu0
        %v7111 = vpop.f32.mrb[0].mxu0
        %v7112 = vadd.f32 %v6904, %v7111
        %v7113 = vpop.f32.mrb[0].mxu0
        %7114 = vmatprep.mubr.bf16.mxu0 0
        %7115 = vmatmul.mubr.bf16.gmra.mrb[0].mxu0 %v6946
        %v7116 = vpop.f32.mrb[0].mxu0
        %v7117 = vadd.f32 %v6904, %v7116
        %v7118 = vpop.f32.mrb[0].mxu0
        %v7119 = vpop.f32.mrb[0].mxu0
        %v7120 = vadd.f32 %v6904, %v7119
        %v7121 = vpop.f32.mrb[0].mxu0
        %7122 = vmatprep.mubr.bf16.mxu0 0
        %7123 = vmatmul.mubr.bf16.gmra.mrb[0].mxu0 %v6947
        %v7124 = vpop.f32.mrb[0].mxu0
        %v7125 = vadd.f32 %v6904, %v7124
        %v7126 = vpop.f32.mrb[0].mxu0
        %v7127 = vpop.f32.mrb[0].mxu0
        %v7128 = vadd.f32 %v6904, %v7127
        %v7129 = vpop.f32.mrb[0].mxu0
        %7130 = vmatprep.mubr.bf16.mxu0 0
        %7131 = vmatmul.mubr.bf16.gmra.mrb[0].mxu0 %v6948
        %v7132 = vpop.f32.mrb[0].mxu0
        %v7133 = vadd.f32 %v6904, %v7132
        %v7134 = vpop.f32.mrb[0].mxu0
        %v7135 = vpop.f32.mrb[0].mxu0
        %v7136 = vadd.f32 %v6904, %v7135
        %v7137 = vpop.f32.mrb[0].mxu0
        %7138 = vmatprep.mubr.bf16.mxu0 0
        %7139 = vmatmul.mubr.bf16.gmra.mrb[0].mxu0 %v6949
        %v7140 = vpop.f32.mrb[0].mxu0
        %v7141 = vadd.f32 %v6904, %v7140
        %v7142 = vpop.f32.mrb[0].mxu0
        %v7143 = vpop.f32.mrb[0].mxu0
        %v7144 = vadd.f32 %v6904, %v7143
        %v7145 = vpop.f32.mrb[0].mxu0
        %7146 = vmatprep.mubr.bf16.mxu0 0
        %7147 = vmatmul.mubr.bf16.gmra.mrb[0].mxu0 %v6950
        %v7148 = vpop.f32.mrb[0].mxu0
        %v7149 = vadd.f32 %v6904, %v7148
        %v7150 = vpop.f32.mrb[0].mxu0
        %v7151 = vpop.f32.mrb[0].mxu0
        %v7152 = vadd.f32 %v6904, %v7151
        %v7153 = vpop.f32.mrb[0].mxu0
        %7154 = vmatprep.mubr.bf16.mxu0 0
        %7155 = vmatmul.mubr.bf16.gmra.mrb[0].mxu0 %v6951
        %v7156 = vpop.f32.mrb[0].mxu0
        %v7157 = vadd.f32 %v6904, %v7156
        %v7158 = vpop.f32.mrb[0].mxu0
        %v7159 = vpop.f32.mrb[0].mxu0
        %v7160 = vadd.f32 %v6904, %v7159
        %v7161 = vpop.f32.mrb[0].mxu0
        %7162 = vmatprep.mubr.bf16.mxu0 0
        %7163 = vmatmul.mubr.bf16.gmra.mrb[0].mxu0 %v6952
        %v7164 = vpop.f32.mrb[0].mxu0
        %v7165 = vadd.f32 %v6904, %v7164
        %v7166 = vpop.f32.mrb[0].mxu0
        %v7167 = vpop.f32.mrb[0].mxu0
        %v7168 = vadd.f32 %v6904, %v7167
        %v7169 = vpop.f32.mrb[0].mxu0
        %7170 = vmatprep.mubr.bf16.mxu0 0
        %7171 = vmatmul.mubr.bf16.gmra.mrb[0].mxu0 %v6953
        %v7172 = vpop.f32.mrb[0].mxu0
        %v7173 = vadd.f32 %v6904, %v7172
        %v7174 = vpop.f32.mrb[0].mxu0
        %v7175 = vpop.f32.mrb[0].mxu0
        %v7176 = vadd.f32 %v6904, %v7175
        %v7177 = vpop.f32.mrb[0].mxu0
        %7178 = vdwg.mxu0
        %v7179 = vmax.f32 %v7053, 0.0
        %v7180 = vmax.f32 %v7056, 0.0
        %v7181 = vmax.f32 %v7061, 0.0
        %v7182 = vmax.f32 %v7064, 0.0
        %v7183 = vmax.f32 %v7069, 0.0
        %v7184 = vmax.f32 %v7072, 0.0
        %v7185 = vmax.f32 %v7077, 0.0
        %v7186 = vmax.f32 %v7080, 0.0
        %v7187 = vmax.f32 %v7085, 0.0
        %v7188 = vmax.f32 %v7088, 0.0
        %v7189 = vmax.f32 %v7093, 0.0
        %v7190 = vmax.f32 %v7096, 0.0
        %v7191 = vmax.f32 %v7101, 0.0
        %v7192 = vmax.f32 %v7104, 0.0
        %v7193 = vmax.f32 %v7109, 0.0
        %v7194 = vmax.f32 %v7112, 0.0
        %v7195 = vmax.f32 %v7117, 0.0
        %v7196 = vmax.f32 %v7120, 0.0
        %v7197 = vmax.f32 %v7125, 0.0
        %v7198 = vmax.f32 %v7128, 0.0
        %v7199 = vmax.f32 %v7133, 0.0
        %v7200 = vmax.f32 %v7136, 0.0
        %v7201 = vmax.f32 %v7141, 0.0
        %v7202 = vmax.f32 %v7144, 0.0
        %v7203 = vmax.f32 %v7149, 0.0
        %v7204 = vmax.f32 %v7152, 0.0
        %v7205 = vmax.f32 %v7157, 0.0
        %v7206 = vmax.f32 %v7160, 0.0
        %v7207 = vmax.f32 %v7165, 0.0
        %v7208 = vmax.f32 %v7168, 0.0
        %v7209 = vmax.f32 %v7173, 0.0
        %v7210 = vmax.f32 %v7176, 0.0
        %v7211 = vadd.f32 %v6419, %v7179
        %v7212 = vadd.f32 %v6420, %v7180
        %v7213 = vadd.f32 %v6421, %v7181
        %v7214 = vadd.f32 %v6422, %v7182
        %v7215 = vadd.f32 %v6423, %v7183
        %v7216 = vadd.f32 %v6424, %v7184
        %v7217 = vadd.f32 %v6425, %v7185
        %v7218 = vadd.f32 %v6426, %v7186
        %v7219 = vadd.f32 %v6427, %v7187
        %v7220 = vadd.f32 %v6428, %v7188
        %v7221 = vadd.f32 %v6429, %v7189
        %v7222 = vadd.f32 %v6430, %v7190
        %v7223 = vadd.f32 %v6431, %v7191
        %v7224 = vadd.f32 %v6432, %v7192
        %v7225 = vadd.f32 %v6433, %v7193
        %v7226 = vadd.f32 %v6434, %v7194
        %v7227 = vadd.f32 %v6435, %v7195
        %v7228 = vadd.f32 %v6436, %v7196
        %v7229 = vadd.f32 %v6437, %v7197
        %v7230 = vadd.f32 %v6438, %v7198
        %v7231 = vadd.f32 %v6439, %v7199
        %v7232 = vadd.f32 %v6440, %v7200
        %v7233 = vadd.f32 %v6441, %v7201
        %v7234 = vadd.f32 %v6442, %v7202
        %v7235 = vadd.f32 %v6443, %v7203
        %v7236 = vadd.f32 %v6444, %v7204
        %v7237 = vadd.f32 %v6445, %v7205
        %v7238 = vadd.f32 %v6446, %v7206
        %v7239 = vadd.f32 %v6447, %v7207
        %v7240 = vadd.f32 %v6448, %v7208
        %v7241 = vadd.f32 %v6449, %v7209
        %v7242 = vadd.f32 %v6450, %v7210
        %v7243 = vmax.f32 %v7211, 0.0
        %v7244 = vmax.f32 %v7212, 0.0
        %v7245 = vmax.f32 %v7213, 0.0
        %v7246 = vmax.f32 %v7214, 0.0
        %v7247 = vmax.f32 %v7215, 0.0
        %v7248 = vmax.f32 %v7216, 0.0
        %v7249 = vmax.f32 %v7217, 0.0
        %v7250 = vmax.f32 %v7218, 0.0
        %v7251 = vmax.f32 %v7219, 0.0
        %v7252 = vmax.f32 %v7220, 0.0
        %v7253 = vmax.f32 %v7221, 0.0
        %v7254 = vmax.f32 %v7222, 0.0
        %v7255 = vmax.f32 %v7223, 0.0
        %v7256 = vmax.f32 %v7224, 0.0
        %v7257 = vmax.f32 %v7225, 0.0
        %v7258 = vmax.f32 %v7226, 0.0
        %v7259 = vmax.f32 %v7227, 0.0
        %v7260 = vmax.f32 %v7228, 0.0
        %v7261 = vmax.f32 %v7229, 0.0
        %v7262 = vmax.f32 %v7230, 0.0
        %v7263 = vmax.f32 %v7231, 0.0
        %v7264 = vmax.f32 %v7232, 0.0
        %v7265 = vmax.f32 %v7233, 0.0
        %v7266 = vmax.f32 %v7234, 0.0
        %v7267 = vmax.f32 %v7235, 0.0
        %v7268 = vmax.f32 %v7236, 0.0
        %v7269 = vmax.f32 %v7237, 0.0
        %v7270 = vmax.f32 %v7238, 0.0
        %v7271 = vmax.f32 %v7239, 0.0
        %v7272 = vmax.f32 %v7240, 0.0
        %v7273 = vmax.f32 %v7241, 0.0
        %v7274 = vmax.f32 %v7242, 0.0
        %7275 = vst [vmem:[%s388] sm:$0xff] %v7243
        %7276 = vst [vmem:[%s388 + $0x8] sm:$0xff] %v7244
        %7277 = vst [vmem:[%s388 + $0x10] sm:$0xff] %v7245
        %7278 = vst [vmem:[%s388 + $0x18] sm:$0xff] %v7246
        %7279 = vst [vmem:[%s388 + $0x20] sm:$0xff] %v7247
        %7280 = vst [vmem:[%s388 + $0x28] sm:$0xff] %v7248
        %7281 = vst [vmem:[%s388 + $0x30] sm:$0xff] %v7249
        %7282 = vst [vmem:[%s388 + $0x38] sm:$0xff] %v7250
        %7283 = vst [vmem:[%s388 + $0x40] sm:$0xff] %v7251
        %7284 = vst [vmem:[%s388 + $0x48] sm:$0xff] %v7252
        %7285 = vst [vmem:[%s388 + $0x50] sm:$0xff] %v7253
        %7286 = vst [vmem:[%s388 + $0x58] sm:$0xff] %v7254
        %7287 = vst [vmem:[%s388 + $0x60] sm:$0xff] %v7255
        %7288 = vst [vmem:[%s388 + $0x68] sm:$0xff] %v7256
        %7289 = vst [vmem:[%s388 + $0x70] sm:$0xff] %v7257
        %7290 = vst [vmem:[%s388 + $0x78] sm:$0xff] %v7258
        %7291 = vst [vmem:[%s388 + $0x80] sm:$0xff] %v7259
        %7292 = vst [vmem:[%s388 + $0x88] sm:$0xff] %v7260
        %7293 = vst [vmem:[%s388 + $0x90] sm:$0xff] %v7261
        %7294 = vst [vmem:[%s388 + $0x98] sm:$0xff] %v7262
        %7295 = vst [vmem:[%s388 + $0xa0] sm:$0xff] %v7263
        %7296 = vst [vmem:[%s388 + $0xa8] sm:$0xff] %v7264
        %7297 = vst [vmem:[%s388 + $0xb0] sm:$0xff] %v7265
        %7298 = vst [vmem:[%s388 + $0xb8] sm:$0xff] %v7266
        %7299 = vst [vmem:[%s388 + $0xc0] sm:$0xff] %v7267
        %7300 = vst [vmem:[%s388 + $0xc8] sm:$0xff] %v7268
        %7301 = vst [vmem:[%s388 + $0xd0] sm:$0xff] %v7269
        %7302 = vst [vmem:[%s388 + $0xd8] sm:$0xff] %v7270
        %7303 = vst [vmem:[%s388 + $0xe0] sm:$0xff] %v7271
        %7304 = vst [vmem:[%s388 + $0xe8] sm:$0xff] %v7272
        %7305 = vst [vmem:[%s388 + $0xf0] sm:$0xff] %v7273
        %7306 = vst [vmem:[%s388 + $0xf8] sm:$0xff] %v7274
        %s7307 = sand.u32 %s227, 1
        %s7308 = scalar_lea.sflag [#allocation5], %s7307
        %s7309 = sand.u32 %s227, 1
        %s7310 = smul.addr %s7309, 256
        %s7311 = scalar_lea.vmem [#allocation4], %s7310
        // Predicated region
        $region49: #{tpu_custom_call.1} parent=47 // pred_check
          %p7312 = pneg %p237
        $region50: #{tpu_custom_call.1} parent=47 // pred_check_branch
          %7314 = sbr.rel (%p7312) target = $region52
        $region51: #{tpu_custom_call.1} parent=47 // pred_region
          %s7315 = smul.u32 16, %s26
          %s7317 = ssub.s32 4096, 4096
          %7318 = vsyncadd %s7308, %s7317
          %s7319 = smul.addr %s7315, 2
          %s7320 = smul.addr %s25, 32
          %s7321 = sadd.s32 %s7319, %s7320
          %s7322 = smul.addr %s7321, 128
          %s7323 = scalar_lea.hbm %s7, %s7322
          %s7324 = sshll.u32 %s7311, 4
          %s7325 = int_to_ptr.vmem [resolvable:$true] %s7324
          %7330 = dma.vmem_to_hbm [thread:$0]  %s7325, 4096, %s7323, %s7308, 128, 128, 8
        $region52: #{tpu_custom_call.1} parent=47 // pred_fallthru
          _
      $region48: #{tpu_custom_call.1} parent=5 // pred_fallthru
        _
      %p7331 = scmp.le.s32.totalorder 2, %s16
      // Predicated region
      $region53: #{tpu_custom_call.1} parent=5 // pred_check
        %p7332 = pneg %p7331
      $region54: #{tpu_custom_call.1} parent=5 // pred_check_branch
        %7334 = sbr.rel (%p7332) target = $region56
      $region55: #{tpu_custom_call.1} parent=5 // pred_region
        %s7335 = ssub.s32 %s16, 2
        // Predicated region
        $region57: #{tpu_custom_call.1} parent=55 // pred_check
          %p7336 = pneg %p243
        $region58: #{tpu_custom_call.1} parent=55 // pred_check_branch
          %7338 = sbr.rel (%p7336) target = $region60
        $region59: #{tpu_custom_call.1} parent=55 // pred_region
          %s7339 = sand.u32 %s228, 1
          %s7340 = scalar_lea.sflag [#allocation5], %s7339
          %s7341 = sand.u32 %s228, 1
          %s7342 = smul.addr %s7341, 256
          %s7343 = scalar_lea.vmem [#allocation4], %s7342
          %7344 = dma.done %s7340, 4096
        $region60: #{tpu_custom_call.1} parent=55 // pred_fallthru
          _
      $region56: #{tpu_custom_call.1} parent=5 // pred_fallthru
        _
    $region6: #{tpu_custom_call.1} parent=1 // loop_footer
      %s20 = sadd.s32 1, %s16
    $region7: #{tpu_custom_call.1} parent=1 // loop_footer_branch
      %15 = sbr.rel target = $region3
    $region8: #{tpu_custom_call.1} parent=1 // loop_exit
      _
    %7345 = vsyncpa [#allocation5], 1
    %s7346 = scalar_lea.sflag [#allocation5], 1
    %7347 = vsyncpa %s7346, 1

</llo_original>
